<compile_context>
chip_gen: v7x
topology: tpu7x:2x2x1
jax: 0.10.0
libtpu: 0.0.40
codegen_flags: <defaults>
</compile_context>

<pallas_src>
import jax
import jax.numpy as jnp
from jax.experimental import pallas as pl
from jax.experimental.pallas import tpu as pltpu

IN_DIM = 8
H1, H2, H3 = 51, 100, 100
H1P = H2P = H3P = 128          # per-gate lane padding (multiple of 128)
T = 8                          # demo sequence length (== input.size(0))

# Re-pack PyTorch's (i, f, g, o) gate order into (i, f, o, g) so the three
# sigmoid gates are contiguous and take a single transcendental issue.
_IFOG = (0, 1, 3, 2)


def _full_spec(shape):
    """Whole-array block (grid is empty, so index_map takes no args)."""
    zeros = (0,) * len(shape)
    return pl.BlockSpec(shape, lambda: zeros)


def _make_kernel(seq_len):
    """Single-invocation kernel: unrolled time loop, fused-gate LSTM cells."""

    def kernel(x_ref,
               wx1_ref, wh1_ref, b1_ref,
               wx2_ref, wh2_ref, b2_ref,
               wx3_ref, wh3_ref, b3_ref,
               wl_ref, bl_ref,
               out_ref, h3_out_ref, c3_out_ref):
        f32 = jnp.float32

        # Hoisted, time-independent layer-1 input projection: (T, 4*H1P).
        xp1 = (jnp.dot(x_ref[...], wx1_ref[...], preferred_element_type=f32)
               + b1_ref[...])

        def cell(pre_x, h, c, wh_ref, hp):
            """Fused-gate LSTM cell, gate order (i, f, o, g).

            pre_x = x @ W_x + b, shape (1, 4*hp).  The weight ref is indexed
            at the dot site so the operand streams from VMEM (no vreg pin).
            """
            pre = pre_x + jnp.dot(h, wh_ref[...], preferred_element_type=f32)
            sg = jax.nn.sigmoid(pre[:, 0:3 * hp])      # one EUP issue: i|f|o
            g = jnp.tanh(pre[:, 3 * hp:4 * hp])        # one EUP issue: g
            i = sg[:, 0 * hp:1 * hp]
            f = sg[:, 1 * hp:2 * hp]
            o = sg[:, 2 * hp:3 * hp]
            c_new = f * c + i * g
            h_new = o * jnp.tanh(c_new)
            return h_new, c_new

        h1 = jnp.zeros((1, H1P), f32)
        c1 = jnp.zeros((1, H1P), f32)
        h2 = jnp.zeros((1, H2P), f32)
        c2 = jnp.zeros((1, H2P), f32)
        h3 = jnp.zeros((1, H3P), f32)
        c3 = jnp.zeros((1, H3P), f32)

        h3_steps = []                                  # trace-time collection

        for t in range(seq_len):                       # static unroll (T small)
            h1, c1 = cell(xp1[t:t + 1, :], h1, c1, wh1_ref, H1P)
            pre2 = (jnp.dot(h1, wx2_ref[...], preferred_element_type=f32)
                    + b2_ref[...])
            h2, c2 = cell(pre2, h2, c2, wh2_ref, H2P)
            pre3 = (jnp.dot(h2, wx3_ref[...], preferred_element_type=f32)
                    + b3_ref[...])
            h3, c3 = cell(pre3, h3, c3, wh3_ref, H3P)
            h3_steps.append(h3)

        # Linear head applied once, off the recurrence critical path:
        # (1, H3P) x (T, H3P) contracting on the hidden axis -> (1, T).
        h3_stack = jnp.concatenate(h3_steps, axis=0)   # (T, H3P)
        out_ref[...] = jax.lax.dot_general(
            wl_ref[...], h3_stack,
            dimension_numbers=(((1,), (1,)), ((), ())),
            preferred_element_type=f32) + bl_ref[...]

        h3_out_ref[...] = h3                           # written once, at the end
        c3_out_ref[...] = c3

    return kernel


# ------------------------- wrapper-side param packing -------------------------

def _pad2d(w, rows, cols):
    w = jnp.asarray(w, jnp.float32)
    out = jnp.zeros((rows, cols), jnp.float32)
    return out.at[:w.shape[0], :w.shape[1]].set(w)


def _fuse_lstm(ps, in_pad, hid_pad):
    """ps = (wxi, wxf, wxg, wxo, whi, whf, whg, who, bi, bf, bg, bo),
    weights stored as (in_features, out_features); biases are b_ih + b_hh.
    Gates are re-packed in (i, f, o, g) order."""
    wx = jnp.concatenate([_pad2d(ps[0 + k], in_pad, hid_pad) for k in _IFOG],
                         axis=1)
    wh = jnp.concatenate([_pad2d(ps[4 + k], hid_pad, hid_pad) for k in _IFOG],
                         axis=1)
    b = jnp.concatenate([_pad2d(ps[8 + k], 1, hid_pad) for k in _IFOG],
                        axis=1)
    return wx, wh, b


def pack_params(params):
    wx1, wh1, b1 = _fuse_lstm(params[0:12], IN_DIM, H1P)   # LSTMCell(8, 51)
    wx2, wh2, b2 = _fuse_lstm(params[12:24], H1P, H2P)     # LSTMCell(51, 100)
    wx3, wh3, b3 = _fuse_lstm(params[24:36], H2P, H3P)     # LSTMCell(100, 100)
    wl = _pad2d(params[36], 1, H3P)                        # Linear weight row
    bl = jnp.asarray(params[37], jnp.float32)              # Linear bias (1, 1)
    return (wx1, wh1, b1, wx2, wh2, b2, wx3, wh3, b3, wl, bl)


def encoder_forward(x, params):
    x = jnp.asarray(x, jnp.float32)
    seq_len = x.shape[0]
    packed = pack_params(params)

    out_shape = (
        jax.ShapeDtypeStruct((1, seq_len), jnp.float32),
        jax.ShapeDtypeStruct((1, H3P), jnp.float32),
        jax.ShapeDtypeStruct((1, H3P), jnp.float32),
    )
    in_specs = [_full_spec(x.shape)] + [_full_spec(p.shape) for p in packed]
    out_specs = (
        _full_spec((1, seq_len)),
        _full_spec((1, H3P)),
        _full_spec((1, H3P)),
    )

    outs, h3p, c3p = pl.pallas_call(
        _make_kernel(seq_len),
        out_shape=out_shape,
        in_specs=in_specs,
        out_specs=out_specs,
        # ~1.6 MB resident weights + <100 KB activations: well under the
        # scoped VMEM default on every generation (v5e/v6e 128 MiB, v7x
        # 64 MiB).  8 MiB documents ample headroom; no retiling needed for
        # v7x's smaller VMEM.
        compiler_params=pltpu.CompilerParams(vmem_limit_bytes=8 * 1024 * 1024),
    )(x, *packed)

    # Strip lane padding off the returned states.
    return outs, h3p[:, :H3], c3p[:, :H3]


# ------------------------------ test scaffolding ------------------------------

def init_params(key):
    """Deterministic synthetic params matching the PyTorch module's shapes."""
    keys = iter(jax.random.split(key, 64))

    def uniform(shape, k):
        return jax.random.uniform(next(keys), shape, jnp.float32, -k, k)

    def lstm(in_dim, hidden):
        k = float(hidden) ** -0.5
        ps = [uniform((in_dim, hidden), k) for _ in range(4)]      # W_x per gate
        ps += [uniform((hidden, hidden), k) for _ in range(4)]     # W_h per gate
        ps += [uniform((1, hidden), k) + uniform((1, hidden), k)   # b_ih + b_hh
               for _ in range(4)]
        return ps

    params = []
    params += lstm(IN_DIM, H1)   # lstm1: LSTMCell(8, 51)
    params += lstm(H1, H2)       # lstm2: LSTMCell(51, 100)
    params += lstm(H2, H3)       # lstm3: LSTMCell(100, 100)
    k = float(H3) ** -0.5
    params.append(uniform((1, H3), k))   # linear1 weight (stored as a row)
    params.append(uniform((1, 1), k))    # linear1 bias
    return params


def encoder_ref(x, params):
    """Pure-JAX reference (lax.scan) of the same forward pass.

    Uses PyTorch's native per-gate (i, f, g, o) parameter layout; the kernel's
    (i, f, o, g) re-packing is wrapper-only and numerically identical."""
    hi = jax.lax.Precision.HIGHEST

    def cell(x_t, h, c, ps):
        wxi, wxf, wxg, wxo, whi, whf, whg, who, bi, bf, bg, bo = ps

        def gate(wx, wh, b):
            return (jnp.dot(x_t, wx, precision=hi)
                    + jnp.dot(h, wh, precision=hi) + b)

        i = jax.nn.sigmoid(gate(wxi, whi, bi))
        f = jax.nn.sigmoid(gate(wxf, whf, bf))
        g = jnp.tanh(gate(wxg, whg, bg))
        o = jax.nn.sigmoid(gate(wxo, who, bo))
        c_new = f * c + i * g
        return o * jnp.tanh(c_new), c_new

    p1, p2, p3 = params[0:12], params[12:24], params[24:36]
    wl, bl = params[36], params[37]

    def step(carry, x_t):
        h1, c1, h2, c2, h3, c3 = carry
        x_t = x_t[None, :]
        h1, c1 = cell(x_t, h1, c1, p1)
        h2, c2 = cell(h1, h2, c2, p2)
        h3, c3 = cell(h2, h3, c3, p3)
        y = jnp.sum(h3 * wl, axis=-1, keepdims=True) + bl
        return (h1, c1, h2, c2, h3, c3), y[0, 0]

    init = (jnp.zeros((1, H1)), jnp.zeros((1, H1)),
            jnp.zeros((1, H2)), jnp.zeros((1, H2)),
            jnp.zeros((1, H3)), jnp.zeros((1, H3)))
    carry, ys = jax.lax.scan(step, init, x)
    return ys[None, :], carry[4], carry[5]


if __name__ == "__main__":
    key = jax.random.PRNGKey(0)
    kx, kp = jax.random.split(key)
    x = jax.random.normal(kx, (T, IN_DIM), jnp.float32)
    params = init_params(kp)

    outs, h3, c3 = jax.block_until_ready(encoder_forward(x, params))

    ref_outs, ref_h3, ref_c3 = encoder_ref(x, params)
    assert outs.shape == (1, T) and h3.shape == (1, H3) and c3.shape == (1, H3)
    assert jnp.allclose(outs, ref_outs, atol=1e-4, rtol=1e-4)
    assert jnp.allclose(h3, ref_h3, atol=1e-4, rtol=1e-4)
    assert jnp.allclose(c3, ref_c3, atol=1e-4, rtol=1e-4)

    print("KERNEL_OK")
</pallas_src>

<mosaic_0001>
module attributes {stable_mosaic.version = 11 : i64} {
  func.func @kernel(%arg0: memref<8x8xf32, #tpu.memory_space<vmem>>, %arg1: memref<8x512xf32, #tpu.memory_space<vmem>>, %arg2: memref<128x512xf32, #tpu.memory_space<vmem>>, %arg3: memref<1x512xf32, #tpu.memory_space<vmem>>, %arg4: memref<128x512xf32, #tpu.memory_space<vmem>>, %arg5: memref<128x512xf32, #tpu.memory_space<vmem>>, %arg6: memref<1x512xf32, #tpu.memory_space<vmem>>, %arg7: memref<128x512xf32, #tpu.memory_space<vmem>>, %arg8: memref<128x512xf32, #tpu.memory_space<vmem>>, %arg9: memref<1x512xf32, #tpu.memory_space<vmem>>, %arg10: memref<1x128xf32, #tpu.memory_space<vmem>>, %arg11: memref<1x1xf32, #tpu.memory_space<vmem>>, %arg12: memref<1x8xf32, #tpu.memory_space<vmem>>, %arg13: memref<1x128xf32, #tpu.memory_space<vmem>>, %arg14: memref<1x128xf32, #tpu.memory_space<vmem>>) attributes {dimension_semantics = [], scalar_prefetch = 0 : i64, scratch_operands = 0 : i64, tpu.core_type = #tpu.core_type<tc>} {
    %c0 = arith.constant 0 : index
    %c0_0 = arith.constant 0 : index
    %0 = vector.load %arg0[%c0, %c0_0] : memref<8x8xf32, #tpu.memory_space<vmem>>, vector<8x8xf32>
    %c0_1 = arith.constant 0 : index
    %c0_2 = arith.constant 0 : index
    %1 = vector.load %arg1[%c0_1, %c0_2] : memref<8x512xf32, #tpu.memory_space<vmem>>, vector<8x512xf32>
    %cst = arith.constant dense<0.000000e+00> : vector<8x512xf32>
    %2 = tpu.matmul %0, %1, %cst {dimension_numbers = #tpu.dot_dimension_numbers<[1], [0], [0], [1], [0, 0, 1, 1], [], []>} : vector<8x8xf32>, vector<8x512xf32>, vector<8x512xf32> -> vector<8x512xf32>
    %c0_3 = arith.constant 0 : index
    %c0_4 = arith.constant 0 : index
    %3 = vector.load %arg3[%c0_3, %c0_4] : memref<1x512xf32, #tpu.memory_space<vmem>>, vector<1x512xf32>
    %4 = vector.broadcast %3 : vector<1x512xf32> to vector<8x512xf32>
    %5 = arith.addf %2, %4 : vector<8x512xf32>
    %cst_5 = arith.constant 0.000000e+00 : f32
    %6 = vector.broadcast %cst_5 : f32 to vector<1x128xf32>
    %cst_6 = arith.constant 0.000000e+00 : f32
    %7 = vector.broadcast %cst_6 : f32 to vector<1x128xf32>
    %cst_7 = arith.constant 0.000000e+00 : f32
    %8 = vector.broadcast %cst_7 : f32 to vector<1x128xf32>
    %cst_8 = arith.constant 0.000000e+00 : f32
    %9 = vector.broadcast %cst_8 : f32 to vector<1x128xf32>
    %cst_9 = arith.constant 0.000000e+00 : f32
    %10 = vector.broadcast %cst_9 : f32 to vector<1x128xf32>
    %cst_10 = arith.constant 0.000000e+00 : f32
    %11 = vector.broadcast %cst_10 : f32 to vector<1x128xf32>
    %12 = vector.extract_strided_slice %5 {offsets = [0, 0], sizes = [1, 512], strides = [1, 1]} : vector<8x512xf32> to vector<1x512xf32>
    %c0_11 = arith.constant 0 : index
    %c0_12 = arith.constant 0 : index
    %13 = vector.load %arg2[%c0_11, %c0_12] : memref<128x512xf32, #tpu.memory_space<vmem>>, vector<128x512xf32>
    %cst_13 = arith.constant dense<0.000000e+00> : vector<1x512xf32>
    %14 = tpu.matmul %6, %13, %cst_13 {dimension_numbers = #tpu.dot_dimension_numbers<[1], [0], [0], [1], [0, 0, 1, 1], [], []>} : vector<1x128xf32>, vector<128x512xf32>, vector<1x512xf32> -> vector<1x512xf32>
    %15 = arith.addf %12, %14 : vector<1x512xf32>
    %16 = vector.extract_strided_slice %15 {offsets = [0, 0], sizes = [1, 384], strides = [1, 1]} : vector<1x512xf32> to vector<1x384xf32>
    %17 = arith.negf %16 : vector<1x384xf32>
    %18 = math.exp %17 : vector<1x384xf32>
    %cst_14 = arith.constant 1.000000e+00 : f32
    %19 = vector.broadcast %cst_14 : f32 to vector<1x384xf32>
    %20 = arith.addf %19, %18 : vector<1x384xf32>
    %21 = arith.divf %19, %20 : vector<1x384xf32>
    %22 = vector.extract_strided_slice %15 {offsets = [0, 384], sizes = [1, 128], strides = [1, 1]} : vector<1x512xf32> to vector<1x128xf32>
    %23 = math.tanh %22 : vector<1x128xf32>
    %24 = vector.extract_strided_slice %21 {offsets = [0, 0], sizes = [1, 128], strides = [1, 1]} : vector<1x384xf32> to vector<1x128xf32>
    %25 = vector.extract_strided_slice %21 {offsets = [0, 128], sizes = [1, 128], strides = [1, 1]} : vector<1x384xf32> to vector<1x128xf32>
    %26 = vector.extract_strided_slice %21 {offsets = [0, 256], sizes = [1, 128], strides = [1, 1]} : vector<1x384xf32> to vector<1x128xf32>
    %27 = arith.mulf %25, %7 : vector<1x128xf32>
    %28 = arith.mulf %24, %23 : vector<1x128xf32>
    %29 = arith.addf %27, %28 : vector<1x128xf32>
    %30 = math.tanh %29 : vector<1x128xf32>
    %31 = arith.mulf %26, %30 : vector<1x128xf32>
    %c0_15 = arith.constant 0 : index
    %c0_16 = arith.constant 0 : index
    %32 = vector.load %arg4[%c0_15, %c0_16] : memref<128x512xf32, #tpu.memory_space<vmem>>, vector<128x512xf32>
    %cst_17 = arith.constant dense<0.000000e+00> : vector<1x512xf32>
    %33 = tpu.matmul %31, %32, %cst_17 {dimension_numbers = #tpu.dot_dimension_numbers<[1], [0], [0], [1], [0, 0, 1, 1], [], []>} : vector<1x128xf32>, vector<128x512xf32>, vector<1x512xf32> -> vector<1x512xf32>
    %c0_18 = arith.constant 0 : index
    %c0_19 = arith.constant 0 : index
    %34 = vector.load %arg6[%c0_18, %c0_19] : memref<1x512xf32, #tpu.memory_space<vmem>>, vector<1x512xf32>
    %35 = arith.addf %33, %34 : vector<1x512xf32>
    %c0_20 = arith.constant 0 : index
    %c0_21 = arith.constant 0 : index
    %36 = vector.load %arg5[%c0_20, %c0_21] : memref<128x512xf32, #tpu.memory_space<vmem>>, vector<128x512xf32>
    %cst_22 = arith.constant dense<0.000000e+00> : vector<1x512xf32>
    %37 = tpu.matmul %8, %36, %cst_22 {dimension_numbers = #tpu.dot_dimension_numbers<[1], [0], [0], [1], [0, 0, 1, 1], [], []>} : vector<1x128xf32>, vector<128x512xf32>, vector<1x512xf32> -> vector<1x512xf32>
    %38 = arith.addf %35, %37 : vector<1x512xf32>
    %39 = vector.extract_strided_slice %38 {offsets = [0, 0], sizes = [1, 384], strides = [1, 1]} : vector<1x512xf32> to vector<1x384xf32>
    %40 = arith.negf %39 : vector<1x384xf32>
    %41 = math.exp %40 : vector<1x384xf32>
    %cst_23 = arith.constant 1.000000e+00 : f32
    %42 = vector.broadcast %cst_23 : f32 to vector<1x384xf32>
    %43 = arith.addf %42, %41 : vector<1x384xf32>
    %44 = arith.divf %42, %43 : vector<1x384xf32>
    %45 = vector.extract_strided_slice %38 {offsets = [0, 384], sizes = [1, 128], strides = [1, 1]} : vector<1x512xf32> to vector<1x128xf32>
    %46 = math.tanh %45 : vector<1x128xf32>
    %47 = vector.extract_strided_slice %44 {offsets = [0, 0], sizes = [1, 128], strides = [1, 1]} : vector<1x384xf32> to vector<1x128xf32>
    %48 = vector.extract_strided_slice %44 {offsets = [0, 128], sizes = [1, 128], strides = [1, 1]} : vector<1x384xf32> to vector<1x128xf32>
    %49 = vector.extract_strided_slice %44 {offsets = [0, 256], sizes = [1, 128], strides = [1, 1]} : vector<1x384xf32> to vector<1x128xf32>
    %50 = arith.mulf %48, %9 : vector<1x128xf32>
    %51 = arith.mulf %47, %46 : vector<1x128xf32>
    %52 = arith.addf %50, %51 : vector<1x128xf32>
    %53 = math.tanh %52 : vector<1x128xf32>
    %54 = arith.mulf %49, %53 : vector<1x128xf32>
    %c0_24 = arith.constant 0 : index
    %c0_25 = arith.constant 0 : index
    %55 = vector.load %arg7[%c0_24, %c0_25] : memref<128x512xf32, #tpu.memory_space<vmem>>, vector<128x512xf32>
    %cst_26 = arith.constant dense<0.000000e+00> : vector<1x512xf32>
    %56 = tpu.matmul %54, %55, %cst_26 {dimension_numbers = #tpu.dot_dimension_numbers<[1], [0], [0], [1], [0, 0, 1, 1], [], []>} : vector<1x128xf32>, vector<128x512xf32>, vector<1x512xf32> -> vector<1x512xf32>
    %c0_27 = arith.constant 0 : index
    %c0_28 = arith.constant 0 : index
    %57 = vector.load %arg9[%c0_27, %c0_28] : memref<1x512xf32, #tpu.memory_space<vmem>>, vector<1x512xf32>
    %58 = arith.addf %56, %57 : vector<1x512xf32>
    %c0_29 = arith.constant 0 : index
    %c0_30 = arith.constant 0 : index
    %59 = vector.load %arg8[%c0_29, %c0_30] : memref<128x512xf32, #tpu.memory_space<vmem>>, vector<128x512xf32>
    %cst_31 = arith.constant dense<0.000000e+00> : vector<1x512xf32>
    %60 = tpu.matmul %10, %59, %cst_31 {dimension_numbers = #tpu.dot_dimension_numbers<[1], [0], [0], [1], [0, 0, 1, 1], [], []>} : vector<1x128xf32>, vector<128x512xf32>, vector<1x512xf32> -> vector<1x512xf32>
    %61 = arith.addf %58, %60 : vector<1x512xf32>
    %62 = vector.extract_strided_slice %61 {offsets = [0, 0], sizes = [1, 384], strides = [1, 1]} : vector<1x512xf32> to vector<1x384xf32>
    %63 = arith.negf %62 : vector<1x384xf32>
    %64 = math.exp %63 : vector<1x384xf32>
    %cst_32 = arith.constant 1.000000e+00 : f32
    %65 = vector.broadcast %cst_32 : f32 to vector<1x384xf32>
    %66 = arith.addf %65, %64 : vector<1x384xf32>
    %67 = arith.divf %65, %66 : vector<1x384xf32>
    %68 = vector.extract_strided_slice %61 {offsets = [0, 384], sizes = [1, 128], strides = [1, 1]} : vector<1x512xf32> to vector<1x128xf32>
    %69 = math.tanh %68 : vector<1x128xf32>
    %70 = vector.extract_strided_slice %67 {offsets = [0, 0], sizes = [1, 128], strides = [1, 1]} : vector<1x384xf32> to vector<1x128xf32>
    %71 = vector.extract_strided_slice %67 {offsets = [0, 128], sizes = [1, 128], strides = [1, 1]} : vector<1x384xf32> to vector<1x128xf32>
    %72 = vector.extract_strided_slice %67 {offsets = [0, 256], sizes = [1, 128], strides = [1, 1]} : vector<1x384xf32> to vector<1x128xf32>
    %73 = arith.mulf %71, %11 : vector<1x128xf32>
    %74 = arith.mulf %70, %69 : vector<1x128xf32>
    %75 = arith.addf %73, %74 : vector<1x128xf32>
    %76 = math.tanh %75 : vector<1x128xf32>
    %77 = arith.mulf %72, %76 : vector<1x128xf32>
    %78 = vector.extract_strided_slice %5 {offsets = [1, 0], sizes = [1, 512], strides = [1, 1]} : vector<8x512xf32> to vector<1x512xf32>
    %c0_33 = arith.constant 0 : index
    %c0_34 = arith.constant 0 : index
    %79 = vector.load %arg2[%c0_33, %c0_34] : memref<128x512xf32, #tpu.memory_space<vmem>>, vector<128x512xf32>
    %cst_35 = arith.constant dense<0.000000e+00> : vector<1x512xf32>
    %80 = tpu.matmul %31, %79, %cst_35 {dimension_numbers = #tpu.dot_dimension_numbers<[1], [0], [0], [1], [0, 0, 1, 1], [], []>} : vector<1x128xf32>, vector<128x512xf32>, vector<1x512xf32> -> vector<1x512xf32>
    %81 = arith.addf %78, %80 : vector<1x512xf32>
    %82 = vector.extract_strided_slice %81 {offsets = [0, 0], sizes = [1, 384], strides = [1, 1]} : vector<1x512xf32> to vector<1x384xf32>
    %83 = arith.negf %82 : vector<1x384xf32>
    %84 = math.exp %83 : vector<1x384xf32>
    %cst_36 = arith.constant 1.000000e+00 : f32
    %85 = vector.broadcast %cst_36 : f32 to vector<1x384xf32>
    %86 = arith.addf %85, %84 : vector<1x384xf32>
    %87 = arith.divf %85, %86 : vector<1x384xf32>
    %88 = vector.extract_strided_slice %81 {offsets = [0, 384], sizes = [1, 128], strides = [1, 1]} : vector<1x512xf32> to vector<1x128xf32>
    %89 = math.tanh %88 : vector<1x128xf32>
    %90 = vector.extract_strided_slice %87 {offsets = [0, 0], sizes = [1, 128], strides = [1, 1]} : vector<1x384xf32> to vector<1x128xf32>
    %91 = vector.extract_strided_slice %87 {offsets = [0, 128], sizes = [1, 128], strides = [1, 1]} : vector<1x384xf32> to vector<1x128xf32>
    %92 = vector.extract_strided_slice %87 {offsets = [0, 256], sizes = [1, 128], strides = [1, 1]} : vector<1x384xf32> to vector<1x128xf32>
    %93 = arith.mulf %91, %29 : vector<1x128xf32>
    %94 = arith.mulf %90, %89 : vector<1x128xf32>
    %95 = arith.addf %93, %94 : vector<1x128xf32>
    %96 = math.tanh %95 : vector<1x128xf32>
    %97 = arith.mulf %92, %96 : vector<1x128xf32>
    %c0_37 = arith.constant 0 : index
    %c0_38 = arith.constant 0 : index
    %98 = vector.load %arg4[%c0_37, %c0_38] : memref<128x512xf32, #tpu.memory_space<vmem>>, vector<128x512xf32>
    %cst_39 = arith.constant dense<0.000000e+00> : vector<1x512xf32>
    %99 = tpu.matmul %97, %98, %cst_39 {dimension_numbers = #tpu.dot_dimension_numbers<[1], [0], [0], [1], [0, 0, 1, 1], [], []>} : vector<1x128xf32>, vector<128x512xf32>, vector<1x512xf32> -> vector<1x512xf32>
    %c0_40 = arith.constant 0 : index
    %c0_41 = arith.constant 0 : index
    %100 = vector.load %arg6[%c0_40, %c0_41] : memref<1x512xf32, #tpu.memory_space<vmem>>, vector<1x512xf32>
    %101 = arith.addf %99, %100 : vector<1x512xf32>
    %c0_42 = arith.constant 0 : index
    %c0_43 = arith.constant 0 : index
    %102 = vector.load %arg5[%c0_42, %c0_43] : memref<128x512xf32, #tpu.memory_space<vmem>>, vector<128x512xf32>
    %cst_44 = arith.constant dense<0.000000e+00> : vector<1x512xf32>
    %103 = tpu.matmul %54, %102, %cst_44 {dimension_numbers = #tpu.dot_dimension_numbers<[1], [0], [0], [1], [0, 0, 1, 1], [], []>} : vector<1x128xf32>, vector<128x512xf32>, vector<1x512xf32> -> vector<1x512xf32>
    %104 = arith.addf %101, %103 : vector<1x512xf32>
    %105 = vector.extract_strided_slice %104 {offsets = [0, 0], sizes = [1, 384], strides = [1, 1]} : vector<1x512xf32> to vector<1x384xf32>
    %106 = arith.negf %105 : vector<1x384xf32>
    %107 = math.exp %106 : vector<1x384xf32>
    %cst_45 = arith.constant 1.000000e+00 : f32
    %108 = vector.broadcast %cst_45 : f32 to vector<1x384xf32>
    %109 = arith.addf %108, %107 : vector<1x384xf32>
    %110 = arith.divf %108, %109 : vector<1x384xf32>
    %111 = vector.extract_strided_slice %104 {offsets = [0, 384], sizes = [1, 128], strides = [1, 1]} : vector<1x512xf32> to vector<1x128xf32>
    %112 = math.tanh %111 : vector<1x128xf32>
    %113 = vector.extract_strided_slice %110 {offsets = [0, 0], sizes = [1, 128], strides = [1, 1]} : vector<1x384xf32> to vector<1x128xf32>
    %114 = vector.extract_strided_slice %110 {offsets = [0, 128], sizes = [1, 128], strides = [1, 1]} : vector<1x384xf32> to vector<1x128xf32>
    %115 = vector.extract_strided_slice %110 {offsets = [0, 256], sizes = [1, 128], strides = [1, 1]} : vector<1x384xf32> to vector<1x128xf32>
    %116 = arith.mulf %114, %52 : vector<1x128xf32>
    %117 = arith.mulf %113, %112 : vector<1x128xf32>
    %118 = arith.addf %116, %117 : vector<1x128xf32>
    %119 = math.tanh %118 : vector<1x128xf32>
    %120 = arith.mulf %115, %119 : vector<1x128xf32>
    %c0_46 = arith.constant 0 : index
    %c0_47 = arith.constant 0 : index
    %121 = vector.load %arg7[%c0_46, %c0_47] : memref<128x512xf32, #tpu.memory_space<vmem>>, vector<128x512xf32>
    %cst_48 = arith.constant dense<0.000000e+00> : vector<1x512xf32>
    %122 = tpu.matmul %120, %121, %cst_48 {dimension_numbers = #tpu.dot_dimension_numbers<[1], [0], [0], [1], [0, 0, 1, 1], [], []>} : vector<1x128xf32>, vector<128x512xf32>, vector<1x512xf32> -> vector<1x512xf32>
    %c0_49 = arith.constant 0 : index
    %c0_50 = arith.constant 0 : index
    %123 = vector.load %arg9[%c0_49, %c0_50] : memref<1x512xf32, #tpu.memory_space<vmem>>, vector<1x512xf32>
    %124 = arith.addf %122, %123 : vector<1x512xf32>
    %c0_51 = arith.constant 0 : index
    %c0_52 = arith.constant 0 : index
    %125 = vector.load %arg8[%c0_51, %c0_52] : memref<128x512xf32, #tpu.memory_space<vmem>>, vector<128x512xf32>
    %cst_53 = arith.constant dense<0.000000e+00> : vector<1x512xf32>
    %126 = tpu.matmul %77, %125, %cst_53 {dimension_numbers = #tpu.dot_dimension_numbers<[1], [0], [0], [1], [0, 0, 1, 1], [], []>} : vector<1x128xf32>, vector<128x512xf32>, vector<1x512xf32> -> vector<1x512xf32>
    %127 = arith.addf %124, %126 : vector<1x512xf32>
    %128 = vector.extract_strided_slice %127 {offsets = [0, 0], sizes = [1, 384], strides = [1, 1]} : vector<1x512xf32> to vector<1x384xf32>
    %129 = arith.negf %128 : vector<1x384xf32>
    %130 = math.exp %129 : vector<1x384xf32>
    %cst_54 = arith.constant 1.000000e+00 : f32
    %131 = vector.broadcast %cst_54 : f32 to vector<1x384xf32>
    %132 = arith.addf %131, %130 : vector<1x384xf32>
    %133 = arith.divf %131, %132 : vector<1x384xf32>
    %134 = vector.extract_strided_slice %127 {offsets = [0, 384], sizes = [1, 128], strides = [1, 1]} : vector<1x512xf32> to vector<1x128xf32>
    %135 = math.tanh %134 : vector<1x128xf32>
    %136 = vector.extract_strided_slice %133 {offsets = [0, 0], sizes = [1, 128], strides = [1, 1]} : vector<1x384xf32> to vector<1x128xf32>
    %137 = vector.extract_strided_slice %133 {offsets = [0, 128], sizes = [1, 128], strides = [1, 1]} : vector<1x384xf32> to vector<1x128xf32>
    %138 = vector.extract_strided_slice %133 {offsets = [0, 256], sizes = [1, 128], strides = [1, 1]} : vector<1x384xf32> to vector<1x128xf32>
    %139 = arith.mulf %137, %75 : vector<1x128xf32>
    %140 = arith.mulf %136, %135 : vector<1x128xf32>
    %141 = arith.addf %139, %140 : vector<1x128xf32>
    %142 = math.tanh %141 : vector<1x128xf32>
    %143 = arith.mulf %138, %142 : vector<1x128xf32>
    %144 = vector.extract_strided_slice %5 {offsets = [2, 0], sizes = [1, 512], strides = [1, 1]} : vector<8x512xf32> to vector<1x512xf32>
    %c0_55 = arith.constant 0 : index
    %c0_56 = arith.constant 0 : index
    %145 = vector.load %arg2[%c0_55, %c0_56] : memref<128x512xf32, #tpu.memory_space<vmem>>, vector<128x512xf32>
    %cst_57 = arith.constant dense<0.000000e+00> : vector<1x512xf32>
    %146 = tpu.matmul %97, %145, %cst_57 {dimension_numbers = #tpu.dot_dimension_numbers<[1], [0], [0], [1], [0, 0, 1, 1], [], []>} : vector<1x128xf32>, vector<128x512xf32>, vector<1x512xf32> -> vector<1x512xf32>
    %147 = arith.addf %144, %146 : vector<1x512xf32>
    %148 = vector.extract_strided_slice %147 {offsets = [0, 0], sizes = [1, 384], strides = [1, 1]} : vector<1x512xf32> to vector<1x384xf32>
    %149 = arith.negf %148 : vector<1x384xf32>
    %150 = math.exp %149 : vector<1x384xf32>
    %cst_58 = arith.constant 1.000000e+00 : f32
    %151 = vector.broadcast %cst_58 : f32 to vector<1x384xf32>
    %152 = arith.addf %151, %150 : vector<1x384xf32>
    %153 = arith.divf %151, %152 : vector<1x384xf32>
    %154 = vector.extract_strided_slice %147 {offsets = [0, 384], sizes = [1, 128], strides = [1, 1]} : vector<1x512xf32> to vector<1x128xf32>
    %155 = math.tanh %154 : vector<1x128xf32>
    %156 = vector.extract_strided_slice %153 {offsets = [0, 0], sizes = [1, 128], strides = [1, 1]} : vector<1x384xf32> to vector<1x128xf32>
    %157 = vector.extract_strided_slice %153 {offsets = [0, 128], sizes = [1, 128], strides = [1, 1]} : vector<1x384xf32> to vector<1x128xf32>
    %158 = vector.extract_strided_slice %153 {offsets = [0, 256], sizes = [1, 128], strides = [1, 1]} : vector<1x384xf32> to vector<1x128xf32>
    %159 = arith.mulf %157, %95 : vector<1x128xf32>
    %160 = arith.mulf %156, %155 : vector<1x128xf32>
    %161 = arith.addf %159, %160 : vector<1x128xf32>
    %162 = math.tanh %161 : vector<1x128xf32>
    %163 = arith.mulf %158, %162 : vector<1x128xf32>
    %c0_59 = arith.constant 0 : index
    %c0_60 = arith.constant 0 : index
    %164 = vector.load %arg4[%c0_59, %c0_60] : memref<128x512xf32, #tpu.memory_space<vmem>>, vector<128x512xf32>
    %cst_61 = arith.constant dense<0.000000e+00> : vector<1x512xf32>
    %165 = tpu.matmul %163, %164, %cst_61 {dimension_numbers = #tpu.dot_dimension_numbers<[1], [0], [0], [1], [0, 0, 1, 1], [], []>} : vector<1x128xf32>, vector<128x512xf32>, vector<1x512xf32> -> vector<1x512xf32>
    %c0_62 = arith.constant 0 : index
    %c0_63 = arith.constant 0 : index
    %166 = vector.load %arg6[%c0_62, %c0_63] : memref<1x512xf32, #tpu.memory_space<vmem>>, vector<1x512xf32>
    %167 = arith.addf %165, %166 : vector<1x512xf32>
    %c0_64 = arith.constant 0 : index
    %c0_65 = arith.constant 0 : index
    %168 = vector.load %arg5[%c0_64, %c0_65] : memref<128x512xf32, #tpu.memory_space<vmem>>, vector<128x512xf32>
    %cst_66 = arith.constant dense<0.000000e+00> : vector<1x512xf32>
    %169 = tpu.matmul %120, %168, %cst_66 {dimension_numbers = #tpu.dot_dimension_numbers<[1], [0], [0], [1], [0, 0, 1, 1], [], []>} : vector<1x128xf32>, vector<128x512xf32>, vector<1x512xf32> -> vector<1x512xf32>
    %170 = arith.addf %167, %169 : vector<1x512xf32>
    %171 = vector.extract_strided_slice %170 {offsets = [0, 0], sizes = [1, 384], strides = [1, 1]} : vector<1x512xf32> to vector<1x384xf32>
    %172 = arith.negf %171 : vector<1x384xf32>
    %173 = math.exp %172 : vector<1x384xf32>
    %cst_67 = arith.constant 1.000000e+00 : f32
    %174 = vector.broadcast %cst_67 : f32 to vector<1x384xf32>
    %175 = arith.addf %174, %173 : vector<1x384xf32>
    %176 = arith.divf %174, %175 : vector<1x384xf32>
    %177 = vector.extract_strided_slice %170 {offsets = [0, 384], sizes = [1, 128], strides = [1, 1]} : vector<1x512xf32> to vector<1x128xf32>
    %178 = math.tanh %177 : vector<1x128xf32>
    %179 = vector.extract_strided_slice %176 {offsets = [0, 0], sizes = [1, 128], strides = [1, 1]} : vector<1x384xf32> to vector<1x128xf32>
    %180 = vector.extract_strided_slice %176 {offsets = [0, 128], sizes = [1, 128], strides = [1, 1]} : vector<1x384xf32> to vector<1x128xf32>
    %181 = vector.extract_strided_slice %176 {offsets = [0, 256], sizes = [1, 128], strides = [1, 1]} : vector<1x384xf32> to vector<1x128xf32>
    %182 = arith.mulf %180, %118 : vector<1x128xf32>
    %183 = arith.mulf %179, %178 : vector<1x128xf32>
    %184 = arith.addf %182, %183 : vector<1x128xf32>
    %185 = math.tanh %184 : vector<1x128xf32>
    %186 = arith.mulf %181, %185 : vector<1x128xf32>
    %c0_68 = arith.constant 0 : index
    %c0_69 = arith.constant 0 : index
    %187 = vector.load %arg7[%c0_68, %c0_69] : memref<128x512xf32, #tpu.memory_space<vmem>>, vector<128x512xf32>
    %cst_70 = arith.constant dense<0.000000e+00> : vector<1x512xf32>
    %188 = tpu.matmul %186, %187, %cst_70 {dimension_numbers = #tpu.dot_dimension_numbers<[1], [0], [0], [1], [0, 0, 1, 1], [], []>} : vector<1x128xf32>, vector<128x512xf32>, vector<1x512xf32> -> vector<1x512xf32>
    %c0_71 = arith.constant 0 : index
    %c0_72 = arith.constant 0 : index
    %189 = vector.load %arg9[%c0_71, %c0_72] : memref<1x512xf32, #tpu.memory_space<vmem>>, vector<1x512xf32>
    %190 = arith.addf %188, %189 : vector<1x512xf32>
    %c0_73 = arith.constant 0 : index
    %c0_74 = arith.constant 0 : index
    %191 = vector.load %arg8[%c0_73, %c0_74] : memref<128x512xf32, #tpu.memory_space<vmem>>, vector<128x512xf32>
    %cst_75 = arith.constant dense<0.000000e+00> : vector<1x512xf32>
    %192 = tpu.matmul %143, %191, %cst_75 {dimension_numbers = #tpu.dot_dimension_numbers<[1], [0], [0], [1], [0, 0, 1, 1], [], []>} : vector<1x128xf32>, vector<128x512xf32>, vector<1x512xf32> -> vector<1x512xf32>
    %193 = arith.addf %190, %192 : vector<1x512xf32>
    %194 = vector.extract_strided_slice %193 {offsets = [0, 0], sizes = [1, 384], strides = [1, 1]} : vector<1x512xf32> to vector<1x384xf32>
    %195 = arith.negf %194 : vector<1x384xf32>
    %196 = math.exp %195 : vector<1x384xf32>
    %cst_76 = arith.constant 1.000000e+00 : f32
    %197 = vector.broadcast %cst_76 : f32 to vector<1x384xf32>
    %198 = arith.addf %197, %196 : vector<1x384xf32>
    %199 = arith.divf %197, %198 : vector<1x384xf32>
    %200 = vector.extract_strided_slice %193 {offsets = [0, 384], sizes = [1, 128], strides = [1, 1]} : vector<1x512xf32> to vector<1x128xf32>
    %201 = math.tanh %200 : vector<1x128xf32>
    %202 = vector.extract_strided_slice %199 {offsets = [0, 0], sizes = [1, 128], strides = [1, 1]} : vector<1x384xf32> to vector<1x128xf32>
    %203 = vector.extract_strided_slice %199 {offsets = [0, 128], sizes = [1, 128], strides = [1, 1]} : vector<1x384xf32> to vector<1x128xf32>
    %204 = vector.extract_strided_slice %199 {offsets = [0, 256], sizes = [1, 128], strides = [1, 1]} : vector<1x384xf32> to vector<1x128xf32>
    %205 = arith.mulf %203, %141 : vector<1x128xf32>
    %206 = arith.mulf %202, %201 : vector<1x128xf32>
    %207 = arith.addf %205, %206 : vector<1x128xf32>
    %208 = math.tanh %207 : vector<1x128xf32>
    %209 = arith.mulf %204, %208 : vector<1x128xf32>
    %210 = vector.extract_strided_slice %5 {offsets = [3, 0], sizes = [1, 512], strides = [1, 1]} : vector<8x512xf32> to vector<1x512xf32>
    %c0_77 = arith.constant 0 : index
    %c0_78 = arith.constant 0 : index
    %211 = vector.load %arg2[%c0_77, %c0_78] : memref<128x512xf32, #tpu.memory_space<vmem>>, vector<128x512xf32>
    %cst_79 = arith.constant dense<0.000000e+00> : vector<1x512xf32>
    %212 = tpu.matmul %163, %211, %cst_79 {dimension_numbers = #tpu.dot_dimension_numbers<[1], [0], [0], [1], [0, 0, 1, 1], [], []>} : vector<1x128xf32>, vector<128x512xf32>, vector<1x512xf32> -> vector<1x512xf32>
    %213 = arith.addf %210, %212 : vector<1x512xf32>
    %214 = vector.extract_strided_slice %213 {offsets = [0, 0], sizes = [1, 384], strides = [1, 1]} : vector<1x512xf32> to vector<1x384xf32>
    %215 = arith.negf %214 : vector<1x384xf32>
    %216 = math.exp %215 : vector<1x384xf32>
    %cst_80 = arith.constant 1.000000e+00 : f32
    %217 = vector.broadcast %cst_80 : f32 to vector<1x384xf32>
    %218 = arith.addf %217, %216 : vector<1x384xf32>
    %219 = arith.divf %217, %218 : vector<1x384xf32>
    %220 = vector.extract_strided_slice %213 {offsets = [0, 384], sizes = [1, 128], strides = [1, 1]} : vector<1x512xf32> to vector<1x128xf32>
    %221 = math.tanh %220 : vector<1x128xf32>
    %222 = vector.extract_strided_slice %219 {offsets = [0, 0], sizes = [1, 128], strides = [1, 1]} : vector<1x384xf32> to vector<1x128xf32>
    %223 = vector.extract_strided_slice %219 {offsets = [0, 128], sizes = [1, 128], strides = [1, 1]} : vector<1x384xf32> to vector<1x128xf32>
    %224 = vector.extract_strided_slice %219 {offsets = [0, 256], sizes = [1, 128], strides = [1, 1]} : vector<1x384xf32> to vector<1x128xf32>
    %225 = arith.mulf %223, %161 : vector<1x128xf32>
    %226 = arith.mulf %222, %221 : vector<1x128xf32>
    %227 = arith.addf %225, %226 : vector<1x128xf32>
    %228 = math.tanh %227 : vector<1x128xf32>
    %229 = arith.mulf %224, %228 : vector<1x128xf32>
    %c0_81 = arith.constant 0 : index
    %c0_82 = arith.constant 0 : index
    %230 = vector.load %arg4[%c0_81, %c0_82] : memref<128x512xf32, #tpu.memory_space<vmem>>, vector<128x512xf32>
    %cst_83 = arith.constant dense<0.000000e+00> : vector<1x512xf32>
    %231 = tpu.matmul %229, %230, %cst_83 {dimension_numbers = #tpu.dot_dimension_numbers<[1], [0], [0], [1], [0, 0, 1, 1], [], []>} : vector<1x128xf32>, vector<128x512xf32>, vector<1x512xf32> -> vector<1x512xf32>
    %c0_84 = arith.constant 0 : index
    %c0_85 = arith.constant 0 : index
    %232 = vector.load %arg6[%c0_84, %c0_85] : memref<1x512xf32, #tpu.memory_space<vmem>>, vector<1x512xf32>
    %233 = arith.addf %231, %232 : vector<1x512xf32>
    %c0_86 = arith.constant 0 : index
    %c0_87 = arith.constant 0 : index
    %234 = vector.load %arg5[%c0_86, %c0_87] : memref<128x512xf32, #tpu.memory_space<vmem>>, vector<128x512xf32>
    %cst_88 = arith.constant dense<0.000000e+00> : vector<1x512xf32>
    %235 = tpu.matmul %186, %234, %cst_88 {dimension_numbers = #tpu.dot_dimension_numbers<[1], [0], [0], [1], [0, 0, 1, 1], [], []>} : vector<1x128xf32>, vector<128x512xf32>, vector<1x512xf32> -> vector<1x512xf32>
    %236 = arith.addf %233, %235 : vector<1x512xf32>
    %237 = vector.extract_strided_slice %236 {offsets = [0, 0], sizes = [1, 384], strides = [1, 1]} : vector<1x512xf32> to vector<1x384xf32>
    %238 = arith.negf %237 : vector<1x384xf32>
    %239 = math.exp %238 : vector<1x384xf32>
    %cst_89 = arith.constant 1.000000e+00 : f32
    %240 = vector.broadcast %cst_89 : f32 to vector<1x384xf32>
    %241 = arith.addf %240, %239 : vector<1x384xf32>
    %242 = arith.divf %240, %241 : vector<1x384xf32>
    %243 = vector.extract_strided_slice %236 {offsets = [0, 384], sizes = [1, 128], strides = [1, 1]} : vector<1x512xf32> to vector<1x128xf32>
    %244 = math.tanh %243 : vector<1x128xf32>
    %245 = vector.extract_strided_slice %242 {offsets = [0, 0], sizes = [1, 128], strides = [1, 1]} : vector<1x384xf32> to vector<1x128xf32>
    %246 = vector.extract_strided_slice %242 {offsets = [0, 128], sizes = [1, 128], strides = [1, 1]} : vector<1x384xf32> to vector<1x128xf32>
    %247 = vector.extract_strided_slice %242 {offsets = [0, 256], sizes = [1, 128], strides = [1, 1]} : vector<1x384xf32> to vector<1x128xf32>
    %248 = arith.mulf %246, %184 : vector<1x128xf32>
    %249 = arith.mulf %245, %244 : vector<1x128xf32>
    %250 = arith.addf %248, %249 : vector<1x128xf32>
    %251 = math.tanh %250 : vector<1x128xf32>
    %252 = arith.mulf %247, %251 : vector<1x128xf32>
    %c0_90 = arith.constant 0 : index
    %c0_91 = arith.constant 0 : index
    %253 = vector.load %arg7[%c0_90, %c0_91] : memref<128x512xf32, #tpu.memory_space<vmem>>, vector<128x512xf32>
    %cst_92 = arith.constant dense<0.000000e+00> : vector<1x512xf32>
    %254 = tpu.matmul %252, %253, %cst_92 {dimension_numbers = #tpu.dot_dimension_numbers<[1], [0], [0], [1], [0, 0, 1, 1], [], []>} : vector<1x128xf32>, vector<128x512xf32>, vector<1x512xf32> -> vector<1x512xf32>
    %c0_93 = arith.constant 0 : index
    %c0_94 = arith.constant 0 : index
    %255 = vector.load %arg9[%c0_93, %c0_94] : memref<1x512xf32, #tpu.memory_space<vmem>>, vector<1x512xf32>
    %256 = arith.addf %254, %255 : vector<1x512xf32>
    %c0_95 = arith.constant 0 : index
    %c0_96 = arith.constant 0 : index
    %257 = vector.load %arg8[%c0_95, %c0_96] : memref<128x512xf32, #tpu.memory_space<vmem>>, vector<128x512xf32>
    %cst_97 = arith.constant dense<0.000000e+00> : vector<1x512xf32>
    %258 = tpu.matmul %209, %257, %cst_97 {dimension_numbers = #tpu.dot_dimension_numbers<[1], [0], [0], [1], [0, 0, 1, 1], [], []>} : vector<1x128xf32>, vector<128x512xf32>, vector<1x512xf32> -> vector<1x512xf32>
    %259 = arith.addf %256, %258 : vector<1x512xf32>
    %260 = vector.extract_strided_slice %259 {offsets = [0, 0], sizes = [1, 384], strides = [1, 1]} : vector<1x512xf32> to vector<1x384xf32>
    %261 = arith.negf %260 : vector<1x384xf32>
    %262 = math.exp %261 : vector<1x384xf32>
    %cst_98 = arith.constant 1.000000e+00 : f32
    %263 = vector.broadcast %cst_98 : f32 to vector<1x384xf32>
    %264 = arith.addf %263, %262 : vector<1x384xf32>
    %265 = arith.divf %263, %264 : vector<1x384xf32>
    %266 = vector.extract_strided_slice %259 {offsets = [0, 384], sizes = [1, 128], strides = [1, 1]} : vector<1x512xf32> to vector<1x128xf32>
    %267 = math.tanh %266 : vector<1x128xf32>
    %268 = vector.extract_strided_slice %265 {offsets = [0, 0], sizes = [1, 128], strides = [1, 1]} : vector<1x384xf32> to vector<1x128xf32>
    %269 = vector.extract_strided_slice %265 {offsets = [0, 128], sizes = [1, 128], strides = [1, 1]} : vector<1x384xf32> to vector<1x128xf32>
    %270 = vector.extract_strided_slice %265 {offsets = [0, 256], sizes = [1, 128], strides = [1, 1]} : vector<1x384xf32> to vector<1x128xf32>
    %271 = arith.mulf %269, %207 : vector<1x128xf32>
    %272 = arith.mulf %268, %267 : vector<1x128xf32>
    %273 = arith.addf %271, %272 : vector<1x128xf32>
    %274 = math.tanh %273 : vector<1x128xf32>
    %275 = arith.mulf %270, %274 : vector<1x128xf32>
    %276 = vector.extract_strided_slice %5 {offsets = [4, 0], sizes = [1, 512], strides = [1, 1]} : vector<8x512xf32> to vector<1x512xf32>
    %c0_99 = arith.constant 0 : index
    %c0_100 = arith.constant 0 : index
    %277 = vector.load %arg2[%c0_99, %c0_100] : memref<128x512xf32, #tpu.memory_space<vmem>>, vector<128x512xf32>
    %cst_101 = arith.constant dense<0.000000e+00> : vector<1x512xf32>
    %278 = tpu.matmul %229, %277, %cst_101 {dimension_numbers = #tpu.dot_dimension_numbers<[1], [0], [0], [1], [0, 0, 1, 1], [], []>} : vector<1x128xf32>, vector<128x512xf32>, vector<1x512xf32> -> vector<1x512xf32>
    %279 = arith.addf %276, %278 : vector<1x512xf32>
    %280 = vector.extract_strided_slice %279 {offsets = [0, 0], sizes = [1, 384], strides = [1, 1]} : vector<1x512xf32> to vector<1x384xf32>
    %281 = arith.negf %280 : vector<1x384xf32>
    %282 = math.exp %281 : vector<1x384xf32>
    %cst_102 = arith.constant 1.000000e+00 : f32
    %283 = vector.broadcast %cst_102 : f32 to vector<1x384xf32>
    %284 = arith.addf %283, %282 : vector<1x384xf32>
    %285 = arith.divf %283, %284 : vector<1x384xf32>
    %286 = vector.extract_strided_slice %279 {offsets = [0, 384], sizes = [1, 128], strides = [1, 1]} : vector<1x512xf32> to vector<1x128xf32>
    %287 = math.tanh %286 : vector<1x128xf32>
    %288 = vector.extract_strided_slice %285 {offsets = [0, 0], sizes = [1, 128], strides = [1, 1]} : vector<1x384xf32> to vector<1x128xf32>
    %289 = vector.extract_strided_slice %285 {offsets = [0, 128], sizes = [1, 128], strides = [1, 1]} : vector<1x384xf32> to vector<1x128xf32>
    %290 = vector.extract_strided_slice %285 {offsets = [0, 256], sizes = [1, 128], strides = [1, 1]} : vector<1x384xf32> to vector<1x128xf32>
    %291 = arith.mulf %289, %227 : vector<1x128xf32>
    %292 = arith.mulf %288, %287 : vector<1x128xf32>
    %293 = arith.addf %291, %292 : vector<1x128xf32>
    %294 = math.tanh %293 : vector<1x128xf32>
    %295 = arith.mulf %290, %294 : vector<1x128xf32>
    %c0_103 = arith.constant 0 : index
    %c0_104 = arith.constant 0 : index
    %296 = vector.load %arg4[%c0_103, %c0_104] : memref<128x512xf32, #tpu.memory_space<vmem>>, vector<128x512xf32>
    %cst_105 = arith.constant dense<0.000000e+00> : vector<1x512xf32>
    %297 = tpu.matmul %295, %296, %cst_105 {dimension_numbers = #tpu.dot_dimension_numbers<[1], [0], [0], [1], [0, 0, 1, 1], [], []>} : vector<1x128xf32>, vector<128x512xf32>, vector<1x512xf32> -> vector<1x512xf32>
    %c0_106 = arith.constant 0 : index
    %c0_107 = arith.constant 0 : index
    %298 = vector.load %arg6[%c0_106, %c0_107] : memref<1x512xf32, #tpu.memory_space<vmem>>, vector<1x512xf32>
    %299 = arith.addf %297, %298 : vector<1x512xf32>
    %c0_108 = arith.constant 0 : index
    %c0_109 = arith.constant 0 : index
    %300 = vector.load %arg5[%c0_108, %c0_109] : memref<128x512xf32, #tpu.memory_space<vmem>>, vector<128x512xf32>
    %cst_110 = arith.constant dense<0.000000e+00> : vector<1x512xf32>
    %301 = tpu.matmul %252, %300, %cst_110 {dimension_numbers = #tpu.dot_dimension_numbers<[1], [0], [0], [1], [0, 0, 1, 1], [], []>} : vector<1x128xf32>, vector<128x512xf32>, vector<1x512xf32> -> vector<1x512xf32>
    %302 = arith.addf %299, %301 : vector<1x512xf32>
    %303 = vector.extract_strided_slice %302 {offsets = [0, 0], sizes = [1, 384], strides = [1, 1]} : vector<1x512xf32> to vector<1x384xf32>
    %304 = arith.negf %303 : vector<1x384xf32>
    %305 = math.exp %304 : vector<1x384xf32>
    %cst_111 = arith.constant 1.000000e+00 : f32
    %306 = vector.broadcast %cst_111 : f32 to vector<1x384xf32>
    %307 = arith.addf %306, %305 : vector<1x384xf32>
    %308 = arith.divf %306, %307 : vector<1x384xf32>
    %309 = vector.extract_strided_slice %302 {offsets = [0, 384], sizes = [1, 128], strides = [1, 1]} : vector<1x512xf32> to vector<1x128xf32>
    %310 = math.tanh %309 : vector<1x128xf32>
    %311 = vector.extract_strided_slice %308 {offsets = [0, 0], sizes = [1, 128], strides = [1, 1]} : vector<1x384xf32> to vector<1x128xf32>
    %312 = vector.extract_strided_slice %308 {offsets = [0, 128], sizes = [1, 128], strides = [1, 1]} : vector<1x384xf32> to vector<1x128xf32>
    %313 = vector.extract_strided_slice %308 {offsets = [0, 256], sizes = [1, 128], strides = [1, 1]} : vector<1x384xf32> to vector<1x128xf32>
    %314 = arith.mulf %312, %250 : vector<1x128xf32>
    %315 = arith.mulf %311, %310 : vector<1x128xf32>
    %316 = arith.addf %314, %315 : vector<1x128xf32>
    %317 = math.tanh %316 : vector<1x128xf32>
    %318 = arith.mulf %313, %317 : vector<1x128xf32>
    %c0_112 = arith.constant 0 : index
    %c0_113 = arith.constant 0 : index
    %319 = vector.load %arg7[%c0_112, %c0_113] : memref<128x512xf32, #tpu.memory_space<vmem>>, vector<128x512xf32>
    %cst_114 = arith.constant dense<0.000000e+00> : vector<1x512xf32>
    %320 = tpu.matmul %318, %319, %cst_114 {dimension_numbers = #tpu.dot_dimension_numbers<[1], [0], [0], [1], [0, 0, 1, 1], [], []>} : vector<1x128xf32>, vector<128x512xf32>, vector<1x512xf32> -> vector<1x512xf32>
    %c0_115 = arith.constant 0 : index
    %c0_116 = arith.constant 0 : index
    %321 = vector.load %arg9[%c0_115, %c0_116] : memref<1x512xf32, #tpu.memory_space<vmem>>, vector<1x512xf32>
    %322 = arith.addf %320, %321 : vector<1x512xf32>
    %c0_117 = arith.constant 0 : index
    %c0_118 = arith.constant 0 : index
    %323 = vector.load %arg8[%c0_117, %c0_118] : memref<128x512xf32, #tpu.memory_space<vmem>>, vector<128x512xf32>
    %cst_119 = arith.constant dense<0.000000e+00> : vector<1x512xf32>
    %324 = tpu.matmul %275, %323, %cst_119 {dimension_numbers = #tpu.dot_dimension_numbers<[1], [0], [0], [1], [0, 0, 1, 1], [], []>} : vector<1x128xf32>, vector<128x512xf32>, vector<1x512xf32> -> vector<1x512xf32>
    %325 = arith.addf %322, %324 : vector<1x512xf32>
    %326 = vector.extract_strided_slice %325 {offsets = [0, 0], sizes = [1, 384], strides = [1, 1]} : vector<1x512xf32> to vector<1x384xf32>
    %327 = arith.negf %326 : vector<1x384xf32>
    %328 = math.exp %327 : vector<1x384xf32>
    %cst_120 = arith.constant 1.000000e+00 : f32
    %329 = vector.broadcast %cst_120 : f32 to vector<1x384xf32>
    %330 = arith.addf %329, %328 : vector<1x384xf32>
    %331 = arith.divf %329, %330 : vector<1x384xf32>
    %332 = vector.extract_strided_slice %325 {offsets = [0, 384], sizes = [1, 128], strides = [1, 1]} : vector<1x512xf32> to vector<1x128xf32>
    %333 = math.tanh %332 : vector<1x128xf32>
    %334 = vector.extract_strided_slice %331 {offsets = [0, 0], sizes = [1, 128], strides = [1, 1]} : vector<1x384xf32> to vector<1x128xf32>
    %335 = vector.extract_strided_slice %331 {offsets = [0, 128], sizes = [1, 128], strides = [1, 1]} : vector<1x384xf32> to vector<1x128xf32>
    %336 = vector.extract_strided_slice %331 {offsets = [0, 256], sizes = [1, 128], strides = [1, 1]} : vector<1x384xf32> to vector<1x128xf32>
    %337 = arith.mulf %335, %273 : vector<1x128xf32>
    %338 = arith.mulf %334, %333 : vector<1x128xf32>
    %339 = arith.addf %337, %338 : vector<1x128xf32>
    %340 = math.tanh %339 : vector<1x128xf32>
    %341 = arith.mulf %336, %340 : vector<1x128xf32>
    %342 = vector.extract_strided_slice %5 {offsets = [5, 0], sizes = [1, 512], strides = [1, 1]} : vector<8x512xf32> to vector<1x512xf32>
    %c0_121 = arith.constant 0 : index
    %c0_122 = arith.constant 0 : index
    %343 = vector.load %arg2[%c0_121, %c0_122] : memref<128x512xf32, #tpu.memory_space<vmem>>, vector<128x512xf32>
    %cst_123 = arith.constant dense<0.000000e+00> : vector<1x512xf32>
    %344 = tpu.matmul %295, %343, %cst_123 {dimension_numbers = #tpu.dot_dimension_numbers<[1], [0], [0], [1], [0, 0, 1, 1], [], []>} : vector<1x128xf32>, vector<128x512xf32>, vector<1x512xf32> -> vector<1x512xf32>
    %345 = arith.addf %342, %344 : vector<1x512xf32>
    %346 = vector.extract_strided_slice %345 {offsets = [0, 0], sizes = [1, 384], strides = [1, 1]} : vector<1x512xf32> to vector<1x384xf32>
    %347 = arith.negf %346 : vector<1x384xf32>
    %348 = math.exp %347 : vector<1x384xf32>
    %cst_124 = arith.constant 1.000000e+00 : f32
    %349 = vector.broadcast %cst_124 : f32 to vector<1x384xf32>
    %350 = arith.addf %349, %348 : vector<1x384xf32>
    %351 = arith.divf %349, %350 : vector<1x384xf32>
    %352 = vector.extract_strided_slice %345 {offsets = [0, 384], sizes = [1, 128], strides = [1, 1]} : vector<1x512xf32> to vector<1x128xf32>
    %353 = math.tanh %352 : vector<1x128xf32>
    %354 = vector.extract_strided_slice %351 {offsets = [0, 0], sizes = [1, 128], strides = [1, 1]} : vector<1x384xf32> to vector<1x128xf32>
    %355 = vector.extract_strided_slice %351 {offsets = [0, 128], sizes = [1, 128], strides = [1, 1]} : vector<1x384xf32> to vector<1x128xf32>
    %356 = vector.extract_strided_slice %351 {offsets = [0, 256], sizes = [1, 128], strides = [1, 1]} : vector<1x384xf32> to vector<1x128xf32>
    %357 = arith.mulf %355, %293 : vector<1x128xf32>
    %358 = arith.mulf %354, %353 : vector<1x128xf32>
    %359 = arith.addf %357, %358 : vector<1x128xf32>
    %360 = math.tanh %359 : vector<1x128xf32>
    %361 = arith.mulf %356, %360 : vector<1x128xf32>
    %c0_125 = arith.constant 0 : index
    %c0_126 = arith.constant 0 : index
    %362 = vector.load %arg4[%c0_125, %c0_126] : memref<128x512xf32, #tpu.memory_space<vmem>>, vector<128x512xf32>
    %cst_127 = arith.constant dense<0.000000e+00> : vector<1x512xf32>
    %363 = tpu.matmul %361, %362, %cst_127 {dimension_numbers = #tpu.dot_dimension_numbers<[1], [0], [0], [1], [0, 0, 1, 1], [], []>} : vector<1x128xf32>, vector<128x512xf32>, vector<1x512xf32> -> vector<1x512xf32>
    %c0_128 = arith.constant 0 : index
    %c0_129 = arith.constant 0 : index
    %364 = vector.load %arg6[%c0_128, %c0_129] : memref<1x512xf32, #tpu.memory_space<vmem>>, vector<1x512xf32>
    %365 = arith.addf %363, %364 : vector<1x512xf32>
    %c0_130 = arith.constant 0 : index
    %c0_131 = arith.constant 0 : index
    %366 = vector.load %arg5[%c0_130, %c0_131] : memref<128x512xf32, #tpu.memory_space<vmem>>, vector<128x512xf32>
    %cst_132 = arith.constant dense<0.000000e+00> : vector<1x512xf32>
    %367 = tpu.matmul %318, %366, %cst_132 {dimension_numbers = #tpu.dot_dimension_numbers<[1], [0], [0], [1], [0, 0, 1, 1], [], []>} : vector<1x128xf32>, vector<128x512xf32>, vector<1x512xf32> -> vector<1x512xf32>
    %368 = arith.addf %365, %367 : vector<1x512xf32>
    %369 = vector.extract_strided_slice %368 {offsets = [0, 0], sizes = [1, 384], strides = [1, 1]} : vector<1x512xf32> to vector<1x384xf32>
    %370 = arith.negf %369 : vector<1x384xf32>
    %371 = math.exp %370 : vector<1x384xf32>
    %cst_133 = arith.constant 1.000000e+00 : f32
    %372 = vector.broadcast %cst_133 : f32 to vector<1x384xf32>
    %373 = arith.addf %372, %371 : vector<1x384xf32>
    %374 = arith.divf %372, %373 : vector<1x384xf32>
    %375 = vector.extract_strided_slice %368 {offsets = [0, 384], sizes = [1, 128], strides = [1, 1]} : vector<1x512xf32> to vector<1x128xf32>
    %376 = math.tanh %375 : vector<1x128xf32>
    %377 = vector.extract_strided_slice %374 {offsets = [0, 0], sizes = [1, 128], strides = [1, 1]} : vector<1x384xf32> to vector<1x128xf32>
    %378 = vector.extract_strided_slice %374 {offsets = [0, 128], sizes = [1, 128], strides = [1, 1]} : vector<1x384xf32> to vector<1x128xf32>
    %379 = vector.extract_strided_slice %374 {offsets = [0, 256], sizes = [1, 128], strides = [1, 1]} : vector<1x384xf32> to vector<1x128xf32>
    %380 = arith.mulf %378, %316 : vector<1x128xf32>
    %381 = arith.mulf %377, %376 : vector<1x128xf32>
    %382 = arith.addf %380, %381 : vector<1x128xf32>
    %383 = math.tanh %382 : vector<1x128xf32>
    %384 = arith.mulf %379, %383 : vector<1x128xf32>
    %c0_134 = arith.constant 0 : index
    %c0_135 = arith.constant 0 : index
    %385 = vector.load %arg7[%c0_134, %c0_135] : memref<128x512xf32, #tpu.memory_space<vmem>>, vector<128x512xf32>
    %cst_136 = arith.constant dense<0.000000e+00> : vector<1x512xf32>
    %386 = tpu.matmul %384, %385, %cst_136 {dimension_numbers = #tpu.dot_dimension_numbers<[1], [0], [0], [1], [0, 0, 1, 1], [], []>} : vector<1x128xf32>, vector<128x512xf32>, vector<1x512xf32> -> vector<1x512xf32>
    %c0_137 = arith.constant 0 : index
    %c0_138 = arith.constant 0 : index
    %387 = vector.load %arg9[%c0_137, %c0_138] : memref<1x512xf32, #tpu.memory_space<vmem>>, vector<1x512xf32>
    %388 = arith.addf %386, %387 : vector<1x512xf32>
    %c0_139 = arith.constant 0 : index
    %c0_140 = arith.constant 0 : index
    %389 = vector.load %arg8[%c0_139, %c0_140] : memref<128x512xf32, #tpu.memory_space<vmem>>, vector<128x512xf32>
    %cst_141 = arith.constant dense<0.000000e+00> : vector<1x512xf32>
    %390 = tpu.matmul %341, %389, %cst_141 {dimension_numbers = #tpu.dot_dimension_numbers<[1], [0], [0], [1], [0, 0, 1, 1], [], []>} : vector<1x128xf32>, vector<128x512xf32>, vector<1x512xf32> -> vector<1x512xf32>
    %391 = arith.addf %388, %390 : vector<1x512xf32>
    %392 = vector.extract_strided_slice %391 {offsets = [0, 0], sizes = [1, 384], strides = [1, 1]} : vector<1x512xf32> to vector<1x384xf32>
    %393 = arith.negf %392 : vector<1x384xf32>
    %394 = math.exp %393 : vector<1x384xf32>
    %cst_142 = arith.constant 1.000000e+00 : f32
    %395 = vector.broadcast %cst_142 : f32 to vector<1x384xf32>
    %396 = arith.addf %395, %394 : vector<1x384xf32>
    %397 = arith.divf %395, %396 : vector<1x384xf32>
    %398 = vector.extract_strided_slice %391 {offsets = [0, 384], sizes = [1, 128], strides = [1, 1]} : vector<1x512xf32> to vector<1x128xf32>
    %399 = math.tanh %398 : vector<1x128xf32>
    %400 = vector.extract_strided_slice %397 {offsets = [0, 0], sizes = [1, 128], strides = [1, 1]} : vector<1x384xf32> to vector<1x128xf32>
    %401 = vector.extract_strided_slice %397 {offsets = [0, 128], sizes = [1, 128], strides = [1, 1]} : vector<1x384xf32> to vector<1x128xf32>
    %402 = vector.extract_strided_slice %397 {offsets = [0, 256], sizes = [1, 128], strides = [1, 1]} : vector<1x384xf32> to vector<1x128xf32>
    %403 = arith.mulf %401, %339 : vector<1x128xf32>
    %404 = arith.mulf %400, %399 : vector<1x128xf32>
    %405 = arith.addf %403, %404 : vector<1x128xf32>
    %406 = math.tanh %405 : vector<1x128xf32>
    %407 = arith.mulf %402, %406 : vector<1x128xf32>
    %408 = vector.extract_strided_slice %5 {offsets = [6, 0], sizes = [1, 512], strides = [1, 1]} : vector<8x512xf32> to vector<1x512xf32>
    %c0_143 = arith.constant 0 : index
    %c0_144 = arith.constant 0 : index
    %409 = vector.load %arg2[%c0_143, %c0_144] : memref<128x512xf32, #tpu.memory_space<vmem>>, vector<128x512xf32>
    %cst_145 = arith.constant dense<0.000000e+00> : vector<1x512xf32>
    %410 = tpu.matmul %361, %409, %cst_145 {dimension_numbers = #tpu.dot_dimension_numbers<[1], [0], [0], [1], [0, 0, 1, 1], [], []>} : vector<1x128xf32>, vector<128x512xf32>, vector<1x512xf32> -> vector<1x512xf32>
    %411 = arith.addf %408, %410 : vector<1x512xf32>
    %412 = vector.extract_strided_slice %411 {offsets = [0, 0], sizes = [1, 384], strides = [1, 1]} : vector<1x512xf32> to vector<1x384xf32>
    %413 = arith.negf %412 : vector<1x384xf32>
    %414 = math.exp %413 : vector<1x384xf32>
    %cst_146 = arith.constant 1.000000e+00 : f32
    %415 = vector.broadcast %cst_146 : f32 to vector<1x384xf32>
    %416 = arith.addf %415, %414 : vector<1x384xf32>
    %417 = arith.divf %415, %416 : vector<1x384xf32>
    %418 = vector.extract_strided_slice %411 {offsets = [0, 384], sizes = [1, 128], strides = [1, 1]} : vector<1x512xf32> to vector<1x128xf32>
    %419 = math.tanh %418 : vector<1x128xf32>
    %420 = vector.extract_strided_slice %417 {offsets = [0, 0], sizes = [1, 128], strides = [1, 1]} : vector<1x384xf32> to vector<1x128xf32>
    %421 = vector.extract_strided_slice %417 {offsets = [0, 128], sizes = [1, 128], strides = [1, 1]} : vector<1x384xf32> to vector<1x128xf32>
    %422 = vector.extract_strided_slice %417 {offsets = [0, 256], sizes = [1, 128], strides = [1, 1]} : vector<1x384xf32> to vector<1x128xf32>
    %423 = arith.mulf %421, %359 : vector<1x128xf32>
    %424 = arith.mulf %420, %419 : vector<1x128xf32>
    %425 = arith.addf %423, %424 : vector<1x128xf32>
    %426 = math.tanh %425 : vector<1x128xf32>
    %427 = arith.mulf %422, %426 : vector<1x128xf32>
    %c0_147 = arith.constant 0 : index
    %c0_148 = arith.constant 0 : index
    %428 = vector.load %arg4[%c0_147, %c0_148] : memref<128x512xf32, #tpu.memory_space<vmem>>, vector<128x512xf32>
    %cst_149 = arith.constant dense<0.000000e+00> : vector<1x512xf32>
    %429 = tpu.matmul %427, %428, %cst_149 {dimension_numbers = #tpu.dot_dimension_numbers<[1], [0], [0], [1], [0, 0, 1, 1], [], []>} : vector<1x128xf32>, vector<128x512xf32>, vector<1x512xf32> -> vector<1x512xf32>
    %c0_150 = arith.constant 0 : index
    %c0_151 = arith.constant 0 : index
    %430 = vector.load %arg6[%c0_150, %c0_151] : memref<1x512xf32, #tpu.memory_space<vmem>>, vector<1x512xf32>
    %431 = arith.addf %429, %430 : vector<1x512xf32>
    %c0_152 = arith.constant 0 : index
    %c0_153 = arith.constant 0 : index
    %432 = vector.load %arg5[%c0_152, %c0_153] : memref<128x512xf32, #tpu.memory_space<vmem>>, vector<128x512xf32>
    %cst_154 = arith.constant dense<0.000000e+00> : vector<1x512xf32>
    %433 = tpu.matmul %384, %432, %cst_154 {dimension_numbers = #tpu.dot_dimension_numbers<[1], [0], [0], [1], [0, 0, 1, 1], [], []>} : vector<1x128xf32>, vector<128x512xf32>, vector<1x512xf32> -> vector<1x512xf32>
    %434 = arith.addf %431, %433 : vector<1x512xf32>
    %435 = vector.extract_strided_slice %434 {offsets = [0, 0], sizes = [1, 384], strides = [1, 1]} : vector<1x512xf32> to vector<1x384xf32>
    %436 = arith.negf %435 : vector<1x384xf32>
    %437 = math.exp %436 : vector<1x384xf32>
    %cst_155 = arith.constant 1.000000e+00 : f32
    %438 = vector.broadcast %cst_155 : f32 to vector<1x384xf32>
    %439 = arith.addf %438, %437 : vector<1x384xf32>
    %440 = arith.divf %438, %439 : vector<1x384xf32>
    %441 = vector.extract_strided_slice %434 {offsets = [0, 384], sizes = [1, 128], strides = [1, 1]} : vector<1x512xf32> to vector<1x128xf32>
    %442 = math.tanh %441 : vector<1x128xf32>
    %443 = vector.extract_strided_slice %440 {offsets = [0, 0], sizes = [1, 128], strides = [1, 1]} : vector<1x384xf32> to vector<1x128xf32>
    %444 = vector.extract_strided_slice %440 {offsets = [0, 128], sizes = [1, 128], strides = [1, 1]} : vector<1x384xf32> to vector<1x128xf32>
    %445 = vector.extract_strided_slice %440 {offsets = [0, 256], sizes = [1, 128], strides = [1, 1]} : vector<1x384xf32> to vector<1x128xf32>
    %446 = arith.mulf %444, %382 : vector<1x128xf32>
    %447 = arith.mulf %443, %442 : vector<1x128xf32>
    %448 = arith.addf %446, %447 : vector<1x128xf32>
    %449 = math.tanh %448 : vector<1x128xf32>
    %450 = arith.mulf %445, %449 : vector<1x128xf32>
    %c0_156 = arith.constant 0 : index
    %c0_157 = arith.constant 0 : index
    %451 = vector.load %arg7[%c0_156, %c0_157] : memref<128x512xf32, #tpu.memory_space<vmem>>, vector<128x512xf32>
    %cst_158 = arith.constant dense<0.000000e+00> : vector<1x512xf32>
    %452 = tpu.matmul %450, %451, %cst_158 {dimension_numbers = #tpu.dot_dimension_numbers<[1], [0], [0], [1], [0, 0, 1, 1], [], []>} : vector<1x128xf32>, vector<128x512xf32>, vector<1x512xf32> -> vector<1x512xf32>
    %c0_159 = arith.constant 0 : index
    %c0_160 = arith.constant 0 : index
    %453 = vector.load %arg9[%c0_159, %c0_160] : memref<1x512xf32, #tpu.memory_space<vmem>>, vector<1x512xf32>
    %454 = arith.addf %452, %453 : vector<1x512xf32>
    %c0_161 = arith.constant 0 : index
    %c0_162 = arith.constant 0 : index
    %455 = vector.load %arg8[%c0_161, %c0_162] : memref<128x512xf32, #tpu.memory_space<vmem>>, vector<128x512xf32>
    %cst_163 = arith.constant dense<0.000000e+00> : vector<1x512xf32>
    %456 = tpu.matmul %407, %455, %cst_163 {dimension_numbers = #tpu.dot_dimension_numbers<[1], [0], [0], [1], [0, 0, 1, 1], [], []>} : vector<1x128xf32>, vector<128x512xf32>, vector<1x512xf32> -> vector<1x512xf32>
    %457 = arith.addf %454, %456 : vector<1x512xf32>
    %458 = vector.extract_strided_slice %457 {offsets = [0, 0], sizes = [1, 384], strides = [1, 1]} : vector<1x512xf32> to vector<1x384xf32>
    %459 = arith.negf %458 : vector<1x384xf32>
    %460 = math.exp %459 : vector<1x384xf32>
    %cst_164 = arith.constant 1.000000e+00 : f32
    %461 = vector.broadcast %cst_164 : f32 to vector<1x384xf32>
    %462 = arith.addf %461, %460 : vector<1x384xf32>
    %463 = arith.divf %461, %462 : vector<1x384xf32>
    %464 = vector.extract_strided_slice %457 {offsets = [0, 384], sizes = [1, 128], strides = [1, 1]} : vector<1x512xf32> to vector<1x128xf32>
    %465 = math.tanh %464 : vector<1x128xf32>
    %466 = vector.extract_strided_slice %463 {offsets = [0, 0], sizes = [1, 128], strides = [1, 1]} : vector<1x384xf32> to vector<1x128xf32>
    %467 = vector.extract_strided_slice %463 {offsets = [0, 128], sizes = [1, 128], strides = [1, 1]} : vector<1x384xf32> to vector<1x128xf32>
    %468 = vector.extract_strided_slice %463 {offsets = [0, 256], sizes = [1, 128], strides = [1, 1]} : vector<1x384xf32> to vector<1x128xf32>
    %469 = arith.mulf %467, %405 : vector<1x128xf32>
    %470 = arith.mulf %466, %465 : vector<1x128xf32>
    %471 = arith.addf %469, %470 : vector<1x128xf32>
    %472 = math.tanh %471 : vector<1x128xf32>
    %473 = arith.mulf %468, %472 : vector<1x128xf32>
    %474 = vector.extract_strided_slice %5 {offsets = [7, 0], sizes = [1, 512], strides = [1, 1]} : vector<8x512xf32> to vector<1x512xf32>
    %c0_165 = arith.constant 0 : index
    %c0_166 = arith.constant 0 : index
    %475 = vector.load %arg2[%c0_165, %c0_166] : memref<128x512xf32, #tpu.memory_space<vmem>>, vector<128x512xf32>
    %cst_167 = arith.constant dense<0.000000e+00> : vector<1x512xf32>
    %476 = tpu.matmul %427, %475, %cst_167 {dimension_numbers = #tpu.dot_dimension_numbers<[1], [0], [0], [1], [0, 0, 1, 1], [], []>} : vector<1x128xf32>, vector<128x512xf32>, vector<1x512xf32> -> vector<1x512xf32>
    %477 = arith.addf %474, %476 : vector<1x512xf32>
    %478 = vector.extract_strided_slice %477 {offsets = [0, 0], sizes = [1, 384], strides = [1, 1]} : vector<1x512xf32> to vector<1x384xf32>
    %479 = arith.negf %478 : vector<1x384xf32>
    %480 = math.exp %479 : vector<1x384xf32>
    %cst_168 = arith.constant 1.000000e+00 : f32
    %481 = vector.broadcast %cst_168 : f32 to vector<1x384xf32>
    %482 = arith.addf %481, %480 : vector<1x384xf32>
    %483 = arith.divf %481, %482 : vector<1x384xf32>
    %484 = vector.extract_strided_slice %477 {offsets = [0, 384], sizes = [1, 128], strides = [1, 1]} : vector<1x512xf32> to vector<1x128xf32>
    %485 = math.tanh %484 : vector<1x128xf32>
    %486 = vector.extract_strided_slice %483 {offsets = [0, 0], sizes = [1, 128], strides = [1, 1]} : vector<1x384xf32> to vector<1x128xf32>
    %487 = vector.extract_strided_slice %483 {offsets = [0, 128], sizes = [1, 128], strides = [1, 1]} : vector<1x384xf32> to vector<1x128xf32>
    %488 = vector.extract_strided_slice %483 {offsets = [0, 256], sizes = [1, 128], strides = [1, 1]} : vector<1x384xf32> to vector<1x128xf32>
    %489 = arith.mulf %487, %425 : vector<1x128xf32>
    %490 = arith.mulf %486, %485 : vector<1x128xf32>
    %491 = arith.addf %489, %490 : vector<1x128xf32>
    %492 = math.tanh %491 : vector<1x128xf32>
    %493 = arith.mulf %488, %492 : vector<1x128xf32>
    %c0_169 = arith.constant 0 : index
    %c0_170 = arith.constant 0 : index
    %494 = vector.load %arg4[%c0_169, %c0_170] : memref<128x512xf32, #tpu.memory_space<vmem>>, vector<128x512xf32>
    %cst_171 = arith.constant dense<0.000000e+00> : vector<1x512xf32>
    %495 = tpu.matmul %493, %494, %cst_171 {dimension_numbers = #tpu.dot_dimension_numbers<[1], [0], [0], [1], [0, 0, 1, 1], [], []>} : vector<1x128xf32>, vector<128x512xf32>, vector<1x512xf32> -> vector<1x512xf32>
    %c0_172 = arith.constant 0 : index
    %c0_173 = arith.constant 0 : index
    %496 = vector.load %arg6[%c0_172, %c0_173] : memref<1x512xf32, #tpu.memory_space<vmem>>, vector<1x512xf32>
    %497 = arith.addf %495, %496 : vector<1x512xf32>
    %c0_174 = arith.constant 0 : index
    %c0_175 = arith.constant 0 : index
    %498 = vector.load %arg5[%c0_174, %c0_175] : memref<128x512xf32, #tpu.memory_space<vmem>>, vector<128x512xf32>
    %cst_176 = arith.constant dense<0.000000e+00> : vector<1x512xf32>
    %499 = tpu.matmul %450, %498, %cst_176 {dimension_numbers = #tpu.dot_dimension_numbers<[1], [0], [0], [1], [0, 0, 1, 1], [], []>} : vector<1x128xf32>, vector<128x512xf32>, vector<1x512xf32> -> vector<1x512xf32>
    %500 = arith.addf %497, %499 : vector<1x512xf32>
    %501 = vector.extract_strided_slice %500 {offsets = [0, 0], sizes = [1, 384], strides = [1, 1]} : vector<1x512xf32> to vector<1x384xf32>
    %502 = arith.negf %501 : vector<1x384xf32>
    %503 = math.exp %502 : vector<1x384xf32>
    %cst_177 = arith.constant 1.000000e+00 : f32
    %504 = vector.broadcast %cst_177 : f32 to vector<1x384xf32>
    %505 = arith.addf %504, %503 : vector<1x384xf32>
    %506 = arith.divf %504, %505 : vector<1x384xf32>
    %507 = vector.extract_strided_slice %500 {offsets = [0, 384], sizes = [1, 128], strides = [1, 1]} : vector<1x512xf32> to vector<1x128xf32>
    %508 = math.tanh %507 : vector<1x128xf32>
    %509 = vector.extract_strided_slice %506 {offsets = [0, 0], sizes = [1, 128], strides = [1, 1]} : vector<1x384xf32> to vector<1x128xf32>
    %510 = vector.extract_strided_slice %506 {offsets = [0, 128], sizes = [1, 128], strides = [1, 1]} : vector<1x384xf32> to vector<1x128xf32>
    %511 = vector.extract_strided_slice %506 {offsets = [0, 256], sizes = [1, 128], strides = [1, 1]} : vector<1x384xf32> to vector<1x128xf32>
    %512 = arith.mulf %510, %448 : vector<1x128xf32>
    %513 = arith.mulf %509, %508 : vector<1x128xf32>
    %514 = arith.addf %512, %513 : vector<1x128xf32>
    %515 = math.tanh %514 : vector<1x128xf32>
    %516 = arith.mulf %511, %515 : vector<1x128xf32>
    %c0_178 = arith.constant 0 : index
    %c0_179 = arith.constant 0 : index
    %517 = vector.load %arg7[%c0_178, %c0_179] : memref<128x512xf32, #tpu.memory_space<vmem>>, vector<128x512xf32>
    %cst_180 = arith.constant dense<0.000000e+00> : vector<1x512xf32>
    %518 = tpu.matmul %516, %517, %cst_180 {dimension_numbers = #tpu.dot_dimension_numbers<[1], [0], [0], [1], [0, 0, 1, 1], [], []>} : vector<1x128xf32>, vector<128x512xf32>, vector<1x512xf32> -> vector<1x512xf32>
    %c0_181 = arith.constant 0 : index
    %c0_182 = arith.constant 0 : index
    %519 = vector.load %arg9[%c0_181, %c0_182] : memref<1x512xf32, #tpu.memory_space<vmem>>, vector<1x512xf32>
    %520 = arith.addf %518, %519 : vector<1x512xf32>
    %c0_183 = arith.constant 0 : index
    %c0_184 = arith.constant 0 : index
    %521 = vector.load %arg8[%c0_183, %c0_184] : memref<128x512xf32, #tpu.memory_space<vmem>>, vector<128x512xf32>
    %cst_185 = arith.constant dense<0.000000e+00> : vector<1x512xf32>
    %522 = tpu.matmul %473, %521, %cst_185 {dimension_numbers = #tpu.dot_dimension_numbers<[1], [0], [0], [1], [0, 0, 1, 1], [], []>} : vector<1x128xf32>, vector<128x512xf32>, vector<1x512xf32> -> vector<1x512xf32>
    %523 = arith.addf %520, %522 : vector<1x512xf32>
    %524 = vector.extract_strided_slice %523 {offsets = [0, 0], sizes = [1, 384], strides = [1, 1]} : vector<1x512xf32> to vector<1x384xf32>
    %525 = arith.negf %524 : vector<1x384xf32>
    %526 = math.exp %525 : vector<1x384xf32>
    %cst_186 = arith.constant 1.000000e+00 : f32
    %527 = vector.broadcast %cst_186 : f32 to vector<1x384xf32>
    %528 = arith.addf %527, %526 : vector<1x384xf32>
    %529 = arith.divf %527, %528 : vector<1x384xf32>
    %530 = vector.extract_strided_slice %523 {offsets = [0, 384], sizes = [1, 128], strides = [1, 1]} : vector<1x512xf32> to vector<1x128xf32>
    %531 = math.tanh %530 : vector<1x128xf32>
    %532 = vector.extract_strided_slice %529 {offsets = [0, 0], sizes = [1, 128], strides = [1, 1]} : vector<1x384xf32> to vector<1x128xf32>
    %533 = vector.extract_strided_slice %529 {offsets = [0, 128], sizes = [1, 128], strides = [1, 1]} : vector<1x384xf32> to vector<1x128xf32>
    %534 = vector.extract_strided_slice %529 {offsets = [0, 256], sizes = [1, 128], strides = [1, 1]} : vector<1x384xf32> to vector<1x128xf32>
    %535 = arith.mulf %533, %471 : vector<1x128xf32>
    %536 = arith.mulf %532, %531 : vector<1x128xf32>
    %537 = arith.addf %535, %536 : vector<1x128xf32>
    %538 = math.tanh %537 : vector<1x128xf32>
    %539 = arith.mulf %534, %538 : vector<1x128xf32>
    %540 = tpu.concatenate %77, %143, %209, %275, %341, %407, %473, %539 in 0 : vector<1x128xf32>, vector<1x128xf32>, vector<1x128xf32>, vector<1x128xf32>, vector<1x128xf32>, vector<1x128xf32>, vector<1x128xf32>, vector<1x128xf32> -> vector<8x128xf32>
    %c0_187 = arith.constant 0 : index
    %c0_188 = arith.constant 0 : index
    %541 = vector.load %arg10[%c0_187, %c0_188] : memref<1x128xf32, #tpu.memory_space<vmem>>, vector<1x128xf32>
    %cst_189 = arith.constant dense<0.000000e+00> : vector<1x8xf32>
    %542 = tpu.matmul %541, %540, %cst_189 {dimension_numbers = #tpu.dot_dimension_numbers<[1], [1], [0], [0], [0, 0, 1, 0], [], []>} : vector<1x128xf32>, vector<8x128xf32>, vector<1x8xf32> -> vector<1x8xf32>
    %c0_190 = arith.constant 0 : index
    %c0_191 = arith.constant 0 : index
    %543 = vector.load %arg11[%c0_190, %c0_191] : memref<1x1xf32, #tpu.memory_space<vmem>>, vector<1x1xf32>
    %544 = vector.broadcast %543 : vector<1x1xf32> to vector<1x8xf32>
    %545 = arith.addf %542, %544 : vector<1x8xf32>
    %c0_192 = arith.constant 0 : index
    %c0_193 = arith.constant 0 : index
    %546 = vector.load %arg12[%c0_192, %c0_193] : memref<1x8xf32, #tpu.memory_space<vmem>>, vector<1x8xf32>
    tpu.vector_store %arg12[%c0_192, %c0_193], %545 {strides = array<i32>} : memref<1x8xf32, #tpu.memory_space<vmem>>, vector<1x8xf32>,
    %c0_194 = arith.constant 0 : index
    %c0_195 = arith.constant 0 : index
    %547 = vector.load %arg13[%c0_194, %c0_195] : memref<1x128xf32, #tpu.memory_space<vmem>>, vector<1x128xf32>
    tpu.vector_store %arg13[%c0_194, %c0_195], %539 {strides = array<i32>} : memref<1x128xf32, #tpu.memory_space<vmem>>, vector<1x128xf32>,
    %c0_196 = arith.constant 0 : index
    %c0_197 = arith.constant 0 : index
    %548 = vector.load %arg14[%c0_196, %c0_197] : memref<1x128xf32, #tpu.memory_space<vmem>>, vector<1x128xf32>
    tpu.vector_store %arg14[%c0_196, %c0_197], %537 {strides = array<i32>} : memref<1x128xf32, #tpu.memory_space<vmem>>, vector<1x128xf32>,
    return
  }
}

</mosaic_0001>

<llo_original>
// kernel: tpu_custom_call.1
$region0: #{tpu_custom_call.1}
  #allocation0 [shape = 'u32[]', space=smem, size = 0x4, offset = 0x4, fixed_abs, tag = 'smem constant byte address 0x4 - core index']
  #allocation1 [shape = 'u32[144,128]{1,0:T(1,128)}', space=vmem, size = 0x12000, scoped, tag = 'internal scratch']
  #allocation2 [shape = 'f32[1,1]{1,0:T(1,128)S(1)}', space=vmem, size = 0x200, scoped, tag = 'scoped memory for tpu_custom_call.1']
  %s0 = inlined_call_operand.hbm [shape: f32[8,8], index: 0, kind: input, shape index: {}]
  %s1 = inlined_call_operand.hbm [shape: f32[8,512], index: 1, kind: input, shape index: {}]
  %s2 = inlined_call_operand.hbm [shape: f32[128,512], index: 2, kind: input, shape index: {}]
  %s3 = inlined_call_operand.vmem [shape: f32[1,512], index: 3, kind: input, shape index: {}]
  %s4 = inlined_call_operand.hbm [shape: f32[128,512], index: 4, kind: input, shape index: {}]
  %s5 = inlined_call_operand.hbm [shape: f32[128,512], index: 5, kind: input, shape index: {}]
  %s6 = inlined_call_operand.vmem [shape: f32[1,512], index: 6, kind: input, shape index: {}]
  %s7 = inlined_call_operand.hbm [shape: f32[128,512], index: 7, kind: input, shape index: {}]
  %s8 = inlined_call_operand.hbm [shape: f32[128,512], index: 8, kind: input, shape index: {}]
  %s9 = inlined_call_operand.vmem [shape: f32[1,512], index: 9, kind: input, shape index: {}]
  %s10 = inlined_call_operand.vmem [shape: f32[1,128], index: 10, kind: input, shape index: {}]
  %s11 = inlined_call_operand.<no memory space> [shape: f32[1,1], index: 11, kind: input, shape index: {}]
  %s12 = inlined_call_operand.hbm [shape: f32[1,8], index: 12, kind: output, shape index: {0}]
  %s13 = inlined_call_operand.hbm [shape: f32[1,128], index: 13, kind: output, shape index: {1}]
  %s14 = inlined_call_operand.hbm [shape: f32[1,128], index: 14, kind: output, shape index: {2}]
  %15 = xla_tuple %s12, %s13, %s14
  %s16 = sld [smem:[#allocation0]]
  $region102: #{tpu_custom_call.1} parent=0
    _
  %s18 = ssub.s32 1, %s16
  %s19 = scalar_select 0, %s18, %s16
  %v20 = vstv %s11
  %21 = vst [vmem:[#allocation2] sm:$0x1] %v20
  $region1: #{tpu_custom_call.1} parent=0
    #allocation3 [shape = 'u8[4096]{0}', space=vmem, size = 0x1000, scoped, tag = 'input window, operand 0, single buffered']
    #allocation4 [shape = 's32[1]{0}', space=sflag, size = 0x4, scoped, tag = 'scoped memory for tpu_custom_call.1']
    #allocation5 [shape = 's32[1]{0}', space=sflag, size = 0x4, scoped, tag = 'scoped memory for tpu_custom_call.1']
    #allocation6 [shape = 'u8[16384]{0}', space=vmem, size = 0x4000, scoped, tag = 'input window, operand 1, single buffered']
    #allocation7 [shape = 's32[1]{0}', space=sflag, size = 0x4, scoped, tag = 'scoped memory for tpu_custom_call.1']
    #allocation8 [shape = 'u8[262144]{0}', space=vmem, size = 0x40000, scoped, tag = 'input window, operand 2, single buffered']
    #allocation9 [shape = 'u8[262144]{0}', space=vmem, size = 0x40000, scoped, tag = 'input window, operand 4, single buffered']
    #allocation10 [shape = 's32[1]{0}', space=sflag, size = 0x4, scoped, tag = 'scoped memory for tpu_custom_call.1']
    #allocation11 [shape = 'u8[262144]{0}', space=vmem, size = 0x40000, scoped, tag = 'input window, operand 5, single buffered']
    #allocation12 [shape = 'u8[262144]{0}', space=vmem, size = 0x40000, scoped, tag = 'input window, operand 7, single buffered']
    #allocation13 [shape = 's32[1]{0}', space=sflag, size = 0x4, scoped, tag = 'scoped memory for tpu_custom_call.1']
    #allocation14 [shape = 'u8[262144]{0}', space=vmem, size = 0x40000, scoped, tag = 'input window, operand 8, single buffered']
    #allocation15 [shape = 'u8[512]{0}', space=vmem, size = 0x400, scoped, tag = 'output window, operand 0, single buffered']
    #allocation16 [shape = 'u8[512]{0}', space=vmem, size = 0x400, scoped, tag = 'output window, operand 1, single buffered']
    #allocation17 [shape = 's32[1]{0}', space=sflag, size = 0x4, scoped, tag = 'scoped memory for tpu_custom_call.1']
    #allocation18 [shape = 'u8[512]{0}', space=vmem, size = 0x400, scoped, tag = 'output window, operand 2, single buffered']
    %22 = vsyncpa [#allocation4], 0
    %23 = vsyncpa [#allocation7], 0
    %24 = vsyncpa [#allocation10], 0
    %25 = vsyncpa [#allocation13], 0
    %26 = vsyncpa [#allocation5], 0
    %27 = vsyncpa [#allocation17], 0
    // Predicated region
    $region2: #{tpu_custom_call.1} parent=1 // pred_check
      _
    $region3: #{tpu_custom_call.1} parent=1 // pred_check_branch
      %29 = sbr.rel (0) target = $region5
    $region4: #{tpu_custom_call.1} parent=1 // pred_region
      %s31 = ssub.s32 128, 128
      %32 = vsyncadd [#allocation4], %s31
      %s34 = sshll.u32 [#allocation3], 4
      %s35 = int_to_ptr.vmem [resolvable:$true] %s34
      %37 = dma.hbm_to_vmem [thread:$0]  %s0, 128, %s35, [#allocation4]
    $region5: #{tpu_custom_call.1} parent=1 // pred_fallthru
      _
    // Predicated region
    $region6: #{tpu_custom_call.1} parent=1 // pred_check
      _
    $region7: #{tpu_custom_call.1} parent=1 // pred_check_branch
      %39 = sbr.rel (0) target = $region9
    $region8: #{tpu_custom_call.1} parent=1 // pred_region
      %s41 = ssub.s32 512, 512
      %42 = vsyncadd [#allocation7], %s41
      %s44 = sshll.u32 [#allocation6], 4
      %s45 = int_to_ptr.vmem [resolvable:$true] %s44
      %47 = dma.hbm_to_vmem [thread:$0]  %s1, 512, %s45, [#allocation7]
    $region9: #{tpu_custom_call.1} parent=1 // pred_fallthru
      _
    // Predicated region
    $region10: #{tpu_custom_call.1} parent=1 // pred_check
      _
    $region11: #{tpu_custom_call.1} parent=1 // pred_check_branch
      %49 = sbr.rel (0) target = $region13
    $region12: #{tpu_custom_call.1} parent=1 // pred_region
      %s51 = ssub.s32 8192, 8192
      %52 = vsyncadd [#allocation7], %s51
      %s53 = sshll.u32 [#allocation8], 4
      %s54 = int_to_ptr.vmem [resolvable:$true] %s53
      %59 = dma.hbm_to_vmem [thread:$0]  %s2, 8192, %s54, [#allocation7], 512, 512, 32
    $region13: #{tpu_custom_call.1} parent=1 // pred_fallthru
      _
    // Predicated region
    $region14: #{tpu_custom_call.1} parent=1 // pred_check
      _
    $region15: #{tpu_custom_call.1} parent=1 // pred_check_branch
      %61 = sbr.rel (0) target = $region17
    $region16: #{tpu_custom_call.1} parent=1 // pred_region
      _
    $region17: #{tpu_custom_call.1} parent=1 // pred_fallthru
      _
    // Predicated region
    $region18: #{tpu_custom_call.1} parent=1 // pred_check
      _
    $region19: #{tpu_custom_call.1} parent=1 // pred_check_branch
      %63 = sbr.rel (0) target = $region21
    $region20: #{tpu_custom_call.1} parent=1 // pred_region
      %s65 = ssub.s32 8192, 8192
      %66 = vsyncadd [#allocation10], %s65
      %s67 = sshll.u32 [#allocation9], 4
      %s68 = int_to_ptr.vmem [resolvable:$true] %s67
      %73 = dma.hbm_to_vmem [thread:$0]  %s4, 8192, %s68, [#allocation10], 512, 512, 32
    $region21: #{tpu_custom_call.1} parent=1 // pred_fallthru
      _
    // Predicated region
    $region22: #{tpu_custom_call.1} parent=1 // pred_check
      _
    $region23: #{tpu_custom_call.1} parent=1 // pred_check_branch
      %75 = sbr.rel (0) target = $region25
    $region24: #{tpu_custom_call.1} parent=1 // pred_region
      %s77 = ssub.s32 8192, 8192
      %78 = vsyncadd [#allocation10], %s77
      %s79 = sshll.u32 [#allocation11], 4
      %s80 = int_to_ptr.vmem [resolvable:$true] %s79
      %85 = dma.hbm_to_vmem [thread:$0]  %s5, 8192, %s80, [#allocation10], 512, 512, 32
    $region25: #{tpu_custom_call.1} parent=1 // pred_fallthru
      _
    // Predicated region
    $region26: #{tpu_custom_call.1} parent=1 // pred_check
      _
    $region27: #{tpu_custom_call.1} parent=1 // pred_check_branch
      %87 = sbr.rel (0) target = $region29
    $region28: #{tpu_custom_call.1} parent=1 // pred_region
      _
    $region29: #{tpu_custom_call.1} parent=1 // pred_fallthru
      _
    // Predicated region
    $region30: #{tpu_custom_call.1} parent=1 // pred_check
      _
    $region31: #{tpu_custom_call.1} parent=1 // pred_check_branch
      %89 = sbr.rel (0) target = $region33
    $region32: #{tpu_custom_call.1} parent=1 // pred_region
      %s91 = ssub.s32 8192, 8192
      %92 = vsyncadd [#allocation13], %s91
      %s93 = sshll.u32 [#allocation12], 4
      %s94 = int_to_ptr.vmem [resolvable:$true] %s93
      %99 = dma.hbm_to_vmem [thread:$0]  %s7, 8192, %s94, [#allocation13], 512, 512, 32
    $region33: #{tpu_custom_call.1} parent=1 // pred_fallthru
      _
    // Predicated region
    $region34: #{tpu_custom_call.1} parent=1 // pred_check
      _
    $region35: #{tpu_custom_call.1} parent=1 // pred_check_branch
      %101 = sbr.rel (0) target = $region37
    $region36: #{tpu_custom_call.1} parent=1 // pred_region
      %s103 = ssub.s32 8192, 8192
      %104 = vsyncadd [#allocation13], %s103
      %s105 = sshll.u32 [#allocation14], 4
      %s106 = int_to_ptr.vmem [resolvable:$true] %s105
      %111 = dma.hbm_to_vmem [thread:$0]  %s8, 8192, %s106, [#allocation13], 512, 512, 32
    $region37: #{tpu_custom_call.1} parent=1 // pred_fallthru
      _
    // Predicated region
    $region38: #{tpu_custom_call.1} parent=1 // pred_check
      _
    $region39: #{tpu_custom_call.1} parent=1 // pred_check_branch
      %113 = sbr.rel (0) target = $region41
    $region40: #{tpu_custom_call.1} parent=1 // pred_region
      _
    $region41: #{tpu_custom_call.1} parent=1 // pred_fallthru
      _
    // Predicated region
    $region42: #{tpu_custom_call.1} parent=1 // pred_check
      _
    $region43: #{tpu_custom_call.1} parent=1 // pred_check_branch
      %115 = sbr.rel (0) target = $region45
    $region44: #{tpu_custom_call.1} parent=1 // pred_region
      _
    $region45: #{tpu_custom_call.1} parent=1 // pred_fallthru
      _
    // Predicated region
    $region46: #{tpu_custom_call.1} parent=1 // pred_check
      _
    $region47: #{tpu_custom_call.1} parent=1 // pred_check_branch
      %117 = sbr.rel (0) target = $region49
    $region48: #{tpu_custom_call.1} parent=1 // pred_region
      _
    $region49: #{tpu_custom_call.1} parent=1 // pred_fallthru
      _
    // Predicated region
    $region50: #{tpu_custom_call.1} parent=1 // pred_check
      _
    $region51: #{tpu_custom_call.1} parent=1 // pred_check_branch
      %119 = sbr.rel (0) target = $region53
    $region52: #{tpu_custom_call.1} parent=1 // pred_region
      %120 = dma.done [#allocation4], 128
    $region53: #{tpu_custom_call.1} parent=1 // pred_fallthru
      _
    // Predicated region
    $region54: #{tpu_custom_call.1} parent=1 // pred_check
      _
    $region55: #{tpu_custom_call.1} parent=1 // pred_check_branch
      %122 = sbr.rel (0) target = $region57
    $region56: #{tpu_custom_call.1} parent=1 // pred_region
      %123 = dma.done [#allocation7], 512
    $region57: #{tpu_custom_call.1} parent=1 // pred_fallthru
      _
    // Predicated region
    $region58: #{tpu_custom_call.1} parent=1 // pred_check
      _
    $region59: #{tpu_custom_call.1} parent=1 // pred_check_branch
      %125 = sbr.rel (0) target = $region61
    $region60: #{tpu_custom_call.1} parent=1 // pred_region
      %126 = dma.done [#allocation7], 8192
    $region61: #{tpu_custom_call.1} parent=1 // pred_fallthru
      _
    // Predicated region
    $region62: #{tpu_custom_call.1} parent=1 // pred_check
      _
    $region63: #{tpu_custom_call.1} parent=1 // pred_check_branch
      %128 = sbr.rel (0) target = $region65
    $region64: #{tpu_custom_call.1} parent=1 // pred_region
      %129 = dma.done [#allocation10], 8192
    $region65: #{tpu_custom_call.1} parent=1 // pred_fallthru
      _
    // Predicated region
    $region66: #{tpu_custom_call.1} parent=1 // pred_check
      _
    $region67: #{tpu_custom_call.1} parent=1 // pred_check_branch
      %131 = sbr.rel (0) target = $region69
    $region68: #{tpu_custom_call.1} parent=1 // pred_region
      %132 = dma.done [#allocation10], 8192
    $region69: #{tpu_custom_call.1} parent=1 // pred_fallthru
      _
    // Predicated region
    $region70: #{tpu_custom_call.1} parent=1 // pred_check
      _
    $region71: #{tpu_custom_call.1} parent=1 // pred_check_branch
      %134 = sbr.rel (0) target = $region73
    $region72: #{tpu_custom_call.1} parent=1 // pred_region
      %135 = dma.done [#allocation13], 8192
    $region73: #{tpu_custom_call.1} parent=1 // pred_fallthru
      _
    // Predicated region
    $region74: #{tpu_custom_call.1} parent=1 // pred_check
      _
    $region75: #{tpu_custom_call.1} parent=1 // pred_check_branch
      %137 = sbr.rel (0) target = $region77
    $region76: #{tpu_custom_call.1} parent=1 // pred_region
      %138 = dma.done [#allocation13], 8192
    $region77: #{tpu_custom_call.1} parent=1 // pred_fallthru
      _
    %v139 = vld [vmem:[#allocation3] sm:$0xff]
    %v140 = vld [vmem:[#allocation6] sm:$0xff]
    %v141 = vld [vmem:[#allocation6 + $0x8] sm:$0xff]
    %v142 = vld [vmem:[#allocation6 + $0x10] sm:$0xff]
    %v143 = vld [vmem:[#allocation6 + $0x18] sm:$0xff]
    %v144 = vld [vmem:[%s3] sm:$0xf]
    %v146 = vlaneseq
    %v147 = vshrl.u32 %v146, 7
    %v148 = vsub.s32 0, %v147
    %v149 = vrot.slane %v144, %v148
    %v150 = vlaneseq
    %v151 = vshrl.u32 %v150, 7
    %v152 = vsub.s32 1, %v151
    %v153 = vrot.slane %v144, %v152
    %v154 = vlaneseq
    %v155 = vshrl.u32 %v154, 7
    %v156 = vsub.s32 2, %v155
    %v157 = vrot.slane %v144, %v156
    %v158 = vlaneseq
    %v159 = vshrl.u32 %v158, 7
    %v160 = vsub.s32 3, %v159
    %v161 = vrot.slane %v144, %v160
    %vm166 = vcmask 64512
    %v168 = vsel %vm166, %v139, 0
    %170 = vmatprep.subr.mxu0 %v141
    %171 = vmatpush1.msra.mxu0 %v140
    %172 = vmatprep.subr.mxu0 0.0
    %173 = vmatpush1.msra.mxu0 0.0
    %174 = vmatprep.subr.mxu0 0.0
    %175 = vmatpush1.msra.mxu0 0.0
    %176 = vmatprep.subr.mxu0 0.0
    %177 = vmatpush1.msra.mxu0 0.0
    %178 = vmatprep.subr.mxu0 0.0
    %179 = vmatpush1.msra.mxu0 0.0
    %180 = vmatprep.subr.mxu0 0.0
    %181 = vmatpush1.msra.mxu0 0.0
    %182 = vmatprep.subr.mxu0 0.0
    %183 = vmatpush1.msra.mxu0 0.0
    %184 = vmatprep.subr.mxu0 0.0
    %185 = vmatpush1.msra.mxu0 0.0
    %186 = vmatprep.subr.mxu0 0.0
    %187 = vmatpush1.msra.mxu0 0.0
    %188 = vmatprep.subr.mxu0 0.0
    %189 = vmatpush1.msra.mxu0 0.0
    %190 = vmatprep.subr.mxu0 0.0
    %191 = vmatpush1.msra.mxu0 0.0
    %192 = vmatprep.subr.mxu0 0.0
    %193 = vmatpush1.msra.mxu0 0.0
    %194 = vmatprep.subr.mxu0 0.0
    %195 = vmatpush1.msra.mxu0 0.0
    %196 = vmatprep.subr.mxu0 0.0
    %197 = vmatpush1.msra.mxu0 0.0
    %198 = vmatprep.subr.mxu0 0.0
    %199 = vmatpush1.msra.mxu0 0.0
    %200 = vmatprep.subr.mxu0 0.0
    %201 = vmatpush1.msra.mxu0 0.0
    %202 = vmatprep.subr.mxu0 0.0
    %203 = vmatpush1.msra.mxu0 0.0
    %204 = vmatprep.subr.mxu0 0.0
    %205 = vmatpush1.msra.mxu0 0.0
    %206 = vmatprep.subr.mxu0 0.0
    %207 = vmatpush1.msra.mxu0 0.0
    %208 = vmatprep.subr.mxu0 0.0
    %209 = vmatpush1.msra.mxu0 0.0
    %210 = vmatprep.subr.mxu0 0.0
    %211 = vmatpush1.msra.mxu0 0.0
    %212 = vmatprep.subr.mxu0 0.0
    %213 = vmatpush1.msra.mxu0 0.0
    %214 = vmatprep.subr.mxu0 0.0
    %215 = vmatpush1.msra.mxu0 0.0
    %216 = vmatprep.subr.mxu0 0.0
    %217 = vmatpush1.msra.mxu0 0.0
    %218 = vmatprep.subr.mxu0 0.0
    %219 = vmatpush1.msra.mxu0 0.0
    %220 = vmatprep.subr.mxu0 0.0
    %221 = vmatpush1.msra.mxu0 0.0
    %222 = vmatprep.subr.mxu0 0.0
    %223 = vmatpush1.msra.mxu0 0.0
    %224 = vmatprep.subr.mxu0 0.0
    %225 = vmatpush1.msra.mxu0 0.0
    %226 = vmatprep.subr.mxu0 0.0
    %227 = vmatpush1.msra.mxu0 0.0
    %228 = vmatprep.subr.mxu0 0.0
    %229 = vmatpush1.msra.mxu0 0.0
    %230 = vmatprep.subr.mxu0 0.0
    %231 = vmatpush1.msra.mxu0 0.0
    %232 = vmatprep.subr.mxu0 0.0
    %233 = vmatpush1.msra.mxu0 0.0
    %234 = vmatprep.mubr.f32.mxu0 0.0
    %235 = vmatmul.mubr.f32.gmra.mrb[0].mxu0 %v168
    %v236 = vpop.f32.mrb[0].mxu0
    %v237 = vadd.f32 %v149, %v236
    %v238 = vpop.f32.mrb[0].mxu0
    %v239 = vadd.f32 %v153, %v238
    %240 = vdwg.mxu0
    %241 = vmatprep.subr.mxu0 %v143
    %242 = vmatpush1.msra.mxu0 %v142
    %243 = vmatprep.subr.mxu0 0.0
    %244 = vmatpush1.msra.mxu0 0.0
    %245 = vmatprep.subr.mxu0 0.0
    %246 = vmatpush1.msra.mxu0 0.0
    %247 = vmatprep.subr.mxu0 0.0
    %248 = vmatpush1.msra.mxu0 0.0
    %249 = vmatprep.subr.mxu0 0.0
    %250 = vmatpush1.msra.mxu0 0.0
    %251 = vmatprep.subr.mxu0 0.0
    %252 = vmatpush1.msra.mxu0 0.0
    %253 = vmatprep.subr.mxu0 0.0
    %254 = vmatpush1.msra.mxu0 0.0
    %255 = vmatprep.subr.mxu0 0.0
    %256 = vmatpush1.msra.mxu0 0.0
    %257 = vmatprep.subr.mxu0 0.0
    %258 = vmatpush1.msra.mxu0 0.0
    %259 = vmatprep.subr.mxu0 0.0
    %260 = vmatpush1.msra.mxu0 0.0
    %261 = vmatprep.subr.mxu0 0.0
    %262 = vmatpush1.msra.mxu0 0.0
    %263 = vmatprep.subr.mxu0 0.0
    %264 = vmatpush1.msra.mxu0 0.0
    %265 = vmatprep.subr.mxu0 0.0
    %266 = vmatpush1.msra.mxu0 0.0
    %267 = vmatprep.subr.mxu0 0.0
    %268 = vmatpush1.msra.mxu0 0.0
    %269 = vmatprep.subr.mxu0 0.0
    %270 = vmatpush1.msra.mxu0 0.0
    %271 = vmatprep.subr.mxu0 0.0
    %272 = vmatpush1.msra.mxu0 0.0
    %273 = vmatprep.subr.mxu0 0.0
    %274 = vmatpush1.msra.mxu0 0.0
    %275 = vmatprep.subr.mxu0 0.0
    %276 = vmatpush1.msra.mxu0 0.0
    %277 = vmatprep.subr.mxu0 0.0
    %278 = vmatpush1.msra.mxu0 0.0
    %279 = vmatprep.subr.mxu0 0.0
    %280 = vmatpush1.msra.mxu0 0.0
    %281 = vmatprep.subr.mxu0 0.0
    %282 = vmatpush1.msra.mxu0 0.0
    %283 = vmatprep.subr.mxu0 0.0
    %284 = vmatpush1.msra.mxu0 0.0
    %285 = vmatprep.subr.mxu0 0.0
    %286 = vmatpush1.msra.mxu0 0.0
    %287 = vmatprep.subr.mxu0 0.0
    %288 = vmatpush1.msra.mxu0 0.0
    %289 = vmatprep.subr.mxu0 0.0
    %290 = vmatpush1.msra.mxu0 0.0
    %291 = vmatprep.subr.mxu0 0.0
    %292 = vmatpush1.msra.mxu0 0.0
    %293 = vmatprep.subr.mxu0 0.0
    %294 = vmatpush1.msra.mxu0 0.0
    %295 = vmatprep.subr.mxu0 0.0
    %296 = vmatpush1.msra.mxu0 0.0
    %297 = vmatprep.subr.mxu0 0.0
    %298 = vmatpush1.msra.mxu0 0.0
    %299 = vmatprep.subr.mxu0 0.0
    %300 = vmatpush1.msra.mxu0 0.0
    %301 = vmatprep.subr.mxu0 0.0
    %302 = vmatpush1.msra.mxu0 0.0
    %303 = vmatprep.subr.mxu0 0.0
    %304 = vmatpush1.msra.mxu0 0.0
    %305 = vmatprep.mubr.f32.mxu0 0.0
    %306 = vmatmul.mubr.f32.gmra.mrb[0].mxu0 %v168
    %v307 = vpop.f32.mrb[0].mxu0
    %v308 = vadd.f32 %v157, %v307
    %v309 = vpop.f32.mrb[0].mxu0
    %v310 = vadd.f32 %v161, %v309
    %311 = vdwg.mxu0
    %v312 = vld [vmem:[#allocation8] sm:$0xff]
    %v313 = vld [vmem:[#allocation8 + $0x8] sm:$0xff]
    %v314 = vld [vmem:[#allocation8 + $0x10] sm:$0xff]
    %v315 = vld [vmem:[#allocation8 + $0x18] sm:$0xff]
    %v316 = vld [vmem:[#allocation8 + $0x20] sm:$0xff]
    %v317 = vld [vmem:[#allocation8 + $0x28] sm:$0xff]
    %v318 = vld [vmem:[#allocation8 + $0x30] sm:$0xff]
    %v319 = vld [vmem:[#allocation8 + $0x38] sm:$0xff]
    %v320 = vld [vmem:[#allocation8 + $0x40] sm:$0xff]
    %v321 = vld [vmem:[#allocation8 + $0x48] sm:$0xff]
    %v322 = vld [vmem:[#allocation8 + $0x50] sm:$0xff]
    %v323 = vld [vmem:[#allocation8 + $0x58] sm:$0xff]
    %v324 = vld [vmem:[#allocation8 + $0x60] sm:$0xff]
    %v325 = vld [vmem:[#allocation8 + $0x68] sm:$0xff]
    %v326 = vld [vmem:[#allocation8 + $0x70] sm:$0xff]
    %v327 = vld [vmem:[#allocation8 + $0x78] sm:$0xff]
    %v328 = vld [vmem:[#allocation8 + $0x80] sm:$0xff]
    %v329 = vld [vmem:[#allocation8 + $0x88] sm:$0xff]
    %v330 = vld [vmem:[#allocation8 + $0x90] sm:$0xff]
    %v331 = vld [vmem:[#allocation8 + $0x98] sm:$0xff]
    %v332 = vld [vmem:[#allocation8 + $0xa0] sm:$0xff]
    %v333 = vld [vmem:[#allocation8 + $0xa8] sm:$0xff]
    %v334 = vld [vmem:[#allocation8 + $0xb0] sm:$0xff]
    %v335 = vld [vmem:[#allocation8 + $0xb8] sm:$0xff]
    %v336 = vld [vmem:[#allocation8 + $0xc0] sm:$0xff]
    %v337 = vld [vmem:[#allocation8 + $0xc8] sm:$0xff]
    %v338 = vld [vmem:[#allocation8 + $0xd0] sm:$0xff]
    %v339 = vld [vmem:[#allocation8 + $0xd8] sm:$0xff]
    %v340 = vld [vmem:[#allocation8 + $0xe0] sm:$0xff]
    %v341 = vld [vmem:[#allocation8 + $0xe8] sm:$0xff]
    %v342 = vld [vmem:[#allocation8 + $0xf0] sm:$0xff]
    %v343 = vld [vmem:[#allocation8 + $0xf8] sm:$0xff]
    %v344 = vld [vmem:[#allocation8 + $0x100] sm:$0xff]
    %v345 = vld [vmem:[#allocation8 + $0x108] sm:$0xff]
    %v346 = vld [vmem:[#allocation8 + $0x110] sm:$0xff]
    %v347 = vld [vmem:[#allocation8 + $0x118] sm:$0xff]
    %v348 = vld [vmem:[#allocation8 + $0x120] sm:$0xff]
    %v349 = vld [vmem:[#allocation8 + $0x128] sm:$0xff]
    %v350 = vld [vmem:[#allocation8 + $0x130] sm:$0xff]
    %v351 = vld [vmem:[#allocation8 + $0x138] sm:$0xff]
    %v352 = vld [vmem:[#allocation8 + $0x140] sm:$0xff]
    %v353 = vld [vmem:[#allocation8 + $0x148] sm:$0xff]
    %v354 = vld [vmem:[#allocation8 + $0x150] sm:$0xff]
    %v355 = vld [vmem:[#allocation8 + $0x158] sm:$0xff]
    %v356 = vld [vmem:[#allocation8 + $0x160] sm:$0xff]
    %v357 = vld [vmem:[#allocation8 + $0x168] sm:$0xff]
    %v358 = vld [vmem:[#allocation8 + $0x170] sm:$0xff]
    %v359 = vld [vmem:[#allocation8 + $0x178] sm:$0xff]
    %v360 = vld [vmem:[#allocation8 + $0x180] sm:$0xff]
    %v361 = vld [vmem:[#allocation8 + $0x188] sm:$0xff]
    %v362 = vld [vmem:[#allocation8 + $0x190] sm:$0xff]
    %v363 = vld [vmem:[#allocation8 + $0x198] sm:$0xff]
    %v364 = vld [vmem:[#allocation8 + $0x1a0] sm:$0xff]
    %v365 = vld [vmem:[#allocation8 + $0x1a8] sm:$0xff]
    %v366 = vld [vmem:[#allocation8 + $0x1b0] sm:$0xff]
    %v367 = vld [vmem:[#allocation8 + $0x1b8] sm:$0xff]
    %v368 = vld [vmem:[#allocation8 + $0x1c0] sm:$0xff]
    %v369 = vld [vmem:[#allocation8 + $0x1c8] sm:$0xff]
    %v370 = vld [vmem:[#allocation8 + $0x1d0] sm:$0xff]
    %v371 = vld [vmem:[#allocation8 + $0x1d8] sm:$0xff]
    %v372 = vld [vmem:[#allocation8 + $0x1e0] sm:$0xff]
    %v373 = vld [vmem:[#allocation8 + $0x1e8] sm:$0xff]
    %v374 = vld [vmem:[#allocation8 + $0x1f0] sm:$0xff]
    %v375 = vld [vmem:[#allocation8 + $0x1f8] sm:$0xff]
    %376 = vmatprep.subr.mxu0 %v313
    %377 = vmatpush1.msra.mxu0 %v312
    %378 = vmatprep.subr.mxu0 %v317
    %379 = vmatpush1.msra.mxu0 %v316
    %380 = vmatprep.subr.mxu0 %v321
    %381 = vmatpush1.msra.mxu0 %v320
    %382 = vmatprep.subr.mxu0 %v325
    %383 = vmatpush1.msra.mxu0 %v324
    %384 = vmatprep.subr.mxu0 %v329
    %385 = vmatpush1.msra.mxu0 %v328
    %386 = vmatprep.subr.mxu0 %v333
    %387 = vmatpush1.msra.mxu0 %v332
    %388 = vmatprep.subr.mxu0 %v337
    %389 = vmatpush1.msra.mxu0 %v336
    %390 = vmatprep.subr.mxu0 %v341
    %391 = vmatpush1.msra.mxu0 %v340
    %392 = vmatprep.subr.mxu0 %v345
    %393 = vmatpush1.msra.mxu0 %v344
    %394 = vmatprep.subr.mxu0 %v349
    %395 = vmatpush1.msra.mxu0 %v348
    %396 = vmatprep.subr.mxu0 %v353
    %397 = vmatpush1.msra.mxu0 %v352
    %398 = vmatprep.subr.mxu0 %v357
    %399 = vmatpush1.msra.mxu0 %v356
    %400 = vmatprep.subr.mxu0 %v361
    %401 = vmatpush1.msra.mxu0 %v360
    %402 = vmatprep.subr.mxu0 %v365
    %403 = vmatpush1.msra.mxu0 %v364
    %404 = vmatprep.subr.mxu0 %v369
    %405 = vmatpush1.msra.mxu0 %v368
    %406 = vmatprep.subr.mxu0 %v373
    %407 = vmatpush1.msra.mxu0 %v372
    %408 = vmatprep.subr.mxu0 0.0
    %409 = vmatpush1.msra.mxu0 0.0
    %410 = vmatprep.subr.mxu0 0.0
    %411 = vmatpush1.msra.mxu0 0.0
    %412 = vmatprep.subr.mxu0 0.0
    %413 = vmatpush1.msra.mxu0 0.0
    %414 = vmatprep.subr.mxu0 0.0
    %415 = vmatpush1.msra.mxu0 0.0
    %416 = vmatprep.subr.mxu0 0.0
    %417 = vmatpush1.msra.mxu0 0.0
    %418 = vmatprep.subr.mxu0 0.0
    %419 = vmatpush1.msra.mxu0 0.0
    %420 = vmatprep.subr.mxu0 0.0
    %421 = vmatpush1.msra.mxu0 0.0
    %422 = vmatprep.subr.mxu0 0.0
    %423 = vmatpush1.msra.mxu0 0.0
    %424 = vmatprep.subr.mxu0 0.0
    %425 = vmatpush1.msra.mxu0 0.0
    %426 = vmatprep.subr.mxu0 0.0
    %427 = vmatpush1.msra.mxu0 0.0
    %428 = vmatprep.subr.mxu0 0.0
    %429 = vmatpush1.msra.mxu0 0.0
    %430 = vmatprep.subr.mxu0 0.0
    %431 = vmatpush1.msra.mxu0 0.0
    %432 = vmatprep.subr.mxu0 0.0
    %433 = vmatpush1.msra.mxu0 0.0
    %434 = vmatprep.subr.mxu0 0.0
    %435 = vmatpush1.msra.mxu0 0.0
    %436 = vmatprep.subr.mxu0 0.0
    %437 = vmatpush1.msra.mxu0 0.0
    %438 = vmatprep.subr.mxu0 0.0
    %439 = vmatpush1.msra.mxu0 0.0
    %440 = vmatprep.mubr.f32.mxu0 0.0
    %441 = vmatmul.mubr.f32.gmra.mrb[0].mxu0 0.0
    %v442 = vpop.f32.mrb[0].mxu0
    %v443 = vadd.f32 0.0, %v442
    %v444 = vpop.f32.mrb[0].mxu0
    %v445 = vadd.f32 0.0, %v444
    %446 = vdwg.mxu0
    %447 = vmatprep.subr.mxu0 %v315
    %448 = vmatpush1.msra.mxu0 %v314
    %449 = vmatprep.subr.mxu0 %v319
    %450 = vmatpush1.msra.mxu0 %v318
    %451 = vmatprep.subr.mxu0 %v323
    %452 = vmatpush1.msra.mxu0 %v322
    %453 = vmatprep.subr.mxu0 %v327
    %454 = vmatpush1.msra.mxu0 %v326
    %455 = vmatprep.subr.mxu0 %v331
    %456 = vmatpush1.msra.mxu0 %v330
    %457 = vmatprep.subr.mxu0 %v335
    %458 = vmatpush1.msra.mxu0 %v334
    %459 = vmatprep.subr.mxu0 %v339
    %460 = vmatpush1.msra.mxu0 %v338
    %461 = vmatprep.subr.mxu0 %v343
    %462 = vmatpush1.msra.mxu0 %v342
    %463 = vmatprep.subr.mxu0 %v347
    %464 = vmatpush1.msra.mxu0 %v346
    %465 = vmatprep.subr.mxu0 %v351
    %466 = vmatpush1.msra.mxu0 %v350
    %467 = vmatprep.subr.mxu0 %v355
    %468 = vmatpush1.msra.mxu0 %v354
    %469 = vmatprep.subr.mxu0 %v359
    %470 = vmatpush1.msra.mxu0 %v358
    %471 = vmatprep.subr.mxu0 %v363
    %472 = vmatpush1.msra.mxu0 %v362
    %473 = vmatprep.subr.mxu0 %v367
    %474 = vmatpush1.msra.mxu0 %v366
    %475 = vmatprep.subr.mxu0 %v371
    %476 = vmatpush1.msra.mxu0 %v370
    %477 = vmatprep.subr.mxu0 %v375
    %478 = vmatpush1.msra.mxu0 %v374
    %479 = vmatprep.subr.mxu0 0.0
    %480 = vmatpush1.msra.mxu0 0.0
    %481 = vmatprep.subr.mxu0 0.0
    %482 = vmatpush1.msra.mxu0 0.0
    %483 = vmatprep.subr.mxu0 0.0
    %484 = vmatpush1.msra.mxu0 0.0
    %485 = vmatprep.subr.mxu0 0.0
    %486 = vmatpush1.msra.mxu0 0.0
    %487 = vmatprep.subr.mxu0 0.0
    %488 = vmatpush1.msra.mxu0 0.0
    %489 = vmatprep.subr.mxu0 0.0
    %490 = vmatpush1.msra.mxu0 0.0
    %491 = vmatprep.subr.mxu0 0.0
    %492 = vmatpush1.msra.mxu0 0.0
    %493 = vmatprep.subr.mxu0 0.0
    %494 = vmatpush1.msra.mxu0 0.0
    %495 = vmatprep.subr.mxu0 0.0
    %496 = vmatpush1.msra.mxu0 0.0
    %497 = vmatprep.subr.mxu0 0.0
    %498 = vmatpush1.msra.mxu0 0.0
    %499 = vmatprep.subr.mxu0 0.0
    %500 = vmatpush1.msra.mxu0 0.0
    %501 = vmatprep.subr.mxu0 0.0
    %502 = vmatpush1.msra.mxu0 0.0
    %503 = vmatprep.subr.mxu0 0.0
    %504 = vmatpush1.msra.mxu0 0.0
    %505 = vmatprep.subr.mxu0 0.0
    %506 = vmatpush1.msra.mxu0 0.0
    %507 = vmatprep.subr.mxu0 0.0
    %508 = vmatpush1.msra.mxu0 0.0
    %509 = vmatprep.subr.mxu0 0.0
    %510 = vmatpush1.msra.mxu0 0.0
    %511 = vmatprep.mubr.f32.mxu0 0.0
    %512 = vmatmul.mubr.f32.gmra.mrb[0].mxu0 0.0
    %v513 = vpop.f32.mrb[0].mxu0
    %v514 = vadd.f32 0.0, %v513
    %v515 = vpop.f32.mrb[0].mxu0
    %v516 = vadd.f32 0.0, %v515
    %517 = vdwg.mxu0
    %v518 = vadd.f32 %v237, %v443
    %v519 = vadd.f32 %v239, %v445
    %v520 = vadd.f32 %v308, %v514
    %v521 = vadd.f32 %v310, %v516
    %v522 = vxor.u32 %v518, 2147483648
    %v523 = vxor.u32 %v519, 2147483648
    %v524 = vxor.u32 %v520, 2147483648
    %v525 = vmul.f32 %v522, 1.442695
    %v526 = vpow.pop %v525
    %v527 = vmul.f32 %v523, 1.442695
    %v528 = vpow.pop %v527
    %v529 = vmul.f32 %v524, 1.442695
    %v530 = vpow.pop %v529
    %v531 = vadd.f32 %v526, 1.0
    %v532 = vadd.f32 %v528, 1.0
    %v533 = vadd.f32 %v530, 1.0
    %v534 = vrcp.pop %v531
    %v535 = vmul.f32 1.0, %v534
    %v536 = vrcp.pop %v532
    %v537 = vmul.f32 1.0, %v536
    %v538 = vrcp.pop %v533
    %v539 = vmul.f32 1.0, %v538
    %v540 = vtanh.pop %v521
    %v541 = vmul.f32 %v537, 0.0
    %v542 = vmul.f32 %v535, %v540
    %v543 = vadd.f32 %v541, %v542
    %v544 = vtanh.pop %v543
    %v545 = vmul.f32 %v539, %v544
    %v546 = vld [vmem:[#allocation9] sm:$0xff]
    %v547 = vld [vmem:[#allocation9 + $0x8] sm:$0xff]
    %v548 = vld [vmem:[#allocation9 + $0x10] sm:$0xff]
    %v549 = vld [vmem:[#allocation9 + $0x18] sm:$0xff]
    %v550 = vld [vmem:[#allocation9 + $0x20] sm:$0xff]
    %v551 = vld [vmem:[#allocation9 + $0x28] sm:$0xff]
    %v552 = vld [vmem:[#allocation9 + $0x30] sm:$0xff]
    %v553 = vld [vmem:[#allocation9 + $0x38] sm:$0xff]
    %v554 = vld [vmem:[#allocation9 + $0x40] sm:$0xff]
    %v555 = vld [vmem:[#allocation9 + $0x48] sm:$0xff]
    %v556 = vld [vmem:[#allocation9 + $0x50] sm:$0xff]
    %v557 = vld [vmem:[#allocation9 + $0x58] sm:$0xff]
    %v558 = vld [vmem:[#allocation9 + $0x60] sm:$0xff]
    %v559 = vld [vmem:[#allocation9 + $0x68] sm:$0xff]
    %v560 = vld [vmem:[#allocation9 + $0x70] sm:$0xff]
    %v561 = vld [vmem:[#allocation9 + $0x78] sm:$0xff]
    %v562 = vld [vmem:[#allocation9 + $0x80] sm:$0xff]
    %v563 = vld [vmem:[#allocation9 + $0x88] sm:$0xff]
    %v564 = vld [vmem:[#allocation9 + $0x90] sm:$0xff]
    %v565 = vld [vmem:[#allocation9 + $0x98] sm:$0xff]
    %v566 = vld [vmem:[#allocation9 + $0xa0] sm:$0xff]
    %v567 = vld [vmem:[#allocation9 + $0xa8] sm:$0xff]
    %v568 = vld [vmem:[#allocation9 + $0xb0] sm:$0xff]
    %v569 = vld [vmem:[#allocation9 + $0xb8] sm:$0xff]
    %v570 = vld [vmem:[#allocation9 + $0xc0] sm:$0xff]
    %v571 = vld [vmem:[#allocation9 + $0xc8] sm:$0xff]
    %v572 = vld [vmem:[#allocation9 + $0xd0] sm:$0xff]
    %v573 = vld [vmem:[#allocation9 + $0xd8] sm:$0xff]
    %v574 = vld [vmem:[#allocation9 + $0xe0] sm:$0xff]
    %v575 = vld [vmem:[#allocation9 + $0xe8] sm:$0xff]
    %v576 = vld [vmem:[#allocation9 + $0xf0] sm:$0xff]
    %v577 = vld [vmem:[#allocation9 + $0xf8] sm:$0xff]
    %v578 = vld [vmem:[#allocation9 + $0x100] sm:$0xff]
    %v579 = vld [vmem:[#allocation9 + $0x108] sm:$0xff]
    %v580 = vld [vmem:[#allocation9 + $0x110] sm:$0xff]
    %v581 = vld [vmem:[#allocation9 + $0x118] sm:$0xff]
    %v582 = vld [vmem:[#allocation9 + $0x120] sm:$0xff]
    %v583 = vld [vmem:[#allocation9 + $0x128] sm:$0xff]
    %v584 = vld [vmem:[#allocation9 + $0x130] sm:$0xff]
    %v585 = vld [vmem:[#allocation9 + $0x138] sm:$0xff]
    %v586 = vld [vmem:[#allocation9 + $0x140] sm:$0xff]
    %v587 = vld [vmem:[#allocation9 + $0x148] sm:$0xff]
    %v588 = vld [vmem:[#allocation9 + $0x150] sm:$0xff]
    %v589 = vld [vmem:[#allocation9 + $0x158] sm:$0xff]
    %v590 = vld [vmem:[#allocation9 + $0x160] sm:$0xff]
    %v591 = vld [vmem:[#allocation9 + $0x168] sm:$0xff]
    %v592 = vld [vmem:[#allocation9 + $0x170] sm:$0xff]
    %v593 = vld [vmem:[#allocation9 + $0x178] sm:$0xff]
    %v594 = vld [vmem:[#allocation9 + $0x180] sm:$0xff]
    %v595 = vld [vmem:[#allocation9 + $0x188] sm:$0xff]
    %v596 = vld [vmem:[#allocation9 + $0x190] sm:$0xff]
    %v597 = vld [vmem:[#allocation9 + $0x198] sm:$0xff]
    %v598 = vld [vmem:[#allocation9 + $0x1a0] sm:$0xff]
    %v599 = vld [vmem:[#allocation9 + $0x1a8] sm:$0xff]
    %v600 = vld [vmem:[#allocation9 + $0x1b0] sm:$0xff]
    %v601 = vld [vmem:[#allocation9 + $0x1b8] sm:$0xff]
    %v602 = vld [vmem:[#allocation9 + $0x1c0] sm:$0xff]
    %v603 = vld [vmem:[#allocation9 + $0x1c8] sm:$0xff]
    %v604 = vld [vmem:[#allocation9 + $0x1d0] sm:$0xff]
    %v605 = vld [vmem:[#allocation9 + $0x1d8] sm:$0xff]
    %v606 = vld [vmem:[#allocation9 + $0x1e0] sm:$0xff]
    %v607 = vld [vmem:[#allocation9 + $0x1e8] sm:$0xff]
    %v608 = vld [vmem:[#allocation9 + $0x1f0] sm:$0xff]
    %v609 = vld [vmem:[#allocation9 + $0x1f8] sm:$0xff]
    %v610 = vld [vmem:[%s6] sm:$0xf]
    %v612 = vlaneseq
    %v613 = vshrl.u32 %v612, 7
    %v614 = vsub.s32 0, %v613
    %v615 = vrot.slane %v610, %v614
    %v616 = vlaneseq
    %v617 = vshrl.u32 %v616, 7
    %v618 = vsub.s32 1, %v617
    %v619 = vrot.slane %v610, %v618
    %v620 = vlaneseq
    %v621 = vshrl.u32 %v620, 7
    %v622 = vsub.s32 2, %v621
    %v623 = vrot.slane %v610, %v622
    %v624 = vlaneseq
    %v625 = vshrl.u32 %v624, 7
    %v626 = vsub.s32 3, %v625
    %v627 = vrot.slane %v610, %v626
    %632 = vmatprep.subr.mxu0 %v547
    %633 = vmatpush1.msra.mxu0 %v546
    %634 = vmatprep.subr.mxu0 %v551
    %635 = vmatpush1.msra.mxu0 %v550
    %636 = vmatprep.subr.mxu0 %v555
    %637 = vmatpush1.msra.mxu0 %v554
    %638 = vmatprep.subr.mxu0 %v559
    %639 = vmatpush1.msra.mxu0 %v558
    %640 = vmatprep.subr.mxu0 %v563
    %641 = vmatpush1.msra.mxu0 %v562
    %642 = vmatprep.subr.mxu0 %v567
    %643 = vmatpush1.msra.mxu0 %v566
    %644 = vmatprep.subr.mxu0 %v571
    %645 = vmatpush1.msra.mxu0 %v570
    %646 = vmatprep.subr.mxu0 %v575
    %647 = vmatpush1.msra.mxu0 %v574
    %648 = vmatprep.subr.mxu0 %v579
    %649 = vmatpush1.msra.mxu0 %v578
    %650 = vmatprep.subr.mxu0 %v583
    %651 = vmatpush1.msra.mxu0 %v582
    %652 = vmatprep.subr.mxu0 %v587
    %653 = vmatpush1.msra.mxu0 %v586
    %654 = vmatprep.subr.mxu0 %v591
    %655 = vmatpush1.msra.mxu0 %v590
    %656 = vmatprep.subr.mxu0 %v595
    %657 = vmatpush1.msra.mxu0 %v594
    %658 = vmatprep.subr.mxu0 %v599
    %659 = vmatpush1.msra.mxu0 %v598
    %660 = vmatprep.subr.mxu0 %v603
    %661 = vmatpush1.msra.mxu0 %v602
    %662 = vmatprep.subr.mxu0 %v607
    %663 = vmatpush1.msra.mxu0 %v606
    %664 = vmatprep.subr.mxu0 0.0
    %665 = vmatpush1.msra.mxu0 0.0
    %666 = vmatprep.subr.mxu0 0.0
    %667 = vmatpush1.msra.mxu0 0.0
    %668 = vmatprep.subr.mxu0 0.0
    %669 = vmatpush1.msra.mxu0 0.0
    %670 = vmatprep.subr.mxu0 0.0
    %671 = vmatpush1.msra.mxu0 0.0
    %672 = vmatprep.subr.mxu0 0.0
    %673 = vmatpush1.msra.mxu0 0.0
    %674 = vmatprep.subr.mxu0 0.0
    %675 = vmatpush1.msra.mxu0 0.0
    %676 = vmatprep.subr.mxu0 0.0
    %677 = vmatpush1.msra.mxu0 0.0
    %678 = vmatprep.subr.mxu0 0.0
    %679 = vmatpush1.msra.mxu0 0.0
    %680 = vmatprep.subr.mxu0 0.0
    %681 = vmatpush1.msra.mxu0 0.0
    %682 = vmatprep.subr.mxu0 0.0
    %683 = vmatpush1.msra.mxu0 0.0
    %684 = vmatprep.subr.mxu0 0.0
    %685 = vmatpush1.msra.mxu0 0.0
    %686 = vmatprep.subr.mxu0 0.0
    %687 = vmatpush1.msra.mxu0 0.0
    %688 = vmatprep.subr.mxu0 0.0
    %689 = vmatpush1.msra.mxu0 0.0
    %690 = vmatprep.subr.mxu0 0.0
    %691 = vmatpush1.msra.mxu0 0.0
    %692 = vmatprep.subr.mxu0 0.0
    %693 = vmatpush1.msra.mxu0 0.0
    %694 = vmatprep.subr.mxu0 0.0
    %695 = vmatpush1.msra.mxu0 0.0
    %696 = vmatprep.mubr.f32.mxu0 0.0
    %697 = vmatmul.mubr.f32.gmra.mrb[0].mxu0 %v545
    %v698 = vpop.f32.mrb[0].mxu0
    %v699 = vadd.f32 %v615, %v698
    %v700 = vpop.f32.mrb[0].mxu0
    %v701 = vadd.f32 %v619, %v700
    %702 = vdwg.mxu0
    %703 = vmatprep.subr.mxu0 %v549
    %704 = vmatpush1.msra.mxu0 %v548
    %705 = vmatprep.subr.mxu0 %v553
    %706 = vmatpush1.msra.mxu0 %v552
    %707 = vmatprep.subr.mxu0 %v557
    %708 = vmatpush1.msra.mxu0 %v556
    %709 = vmatprep.subr.mxu0 %v561
    %710 = vmatpush1.msra.mxu0 %v560
    %711 = vmatprep.subr.mxu0 %v565
    %712 = vmatpush1.msra.mxu0 %v564
    %713 = vmatprep.subr.mxu0 %v569
    %714 = vmatpush1.msra.mxu0 %v568
    %715 = vmatprep.subr.mxu0 %v573
    %716 = vmatpush1.msra.mxu0 %v572
    %717 = vmatprep.subr.mxu0 %v577
    %718 = vmatpush1.msra.mxu0 %v576
    %719 = vmatprep.subr.mxu0 %v581
    %720 = vmatpush1.msra.mxu0 %v580
    %721 = vmatprep.subr.mxu0 %v585
    %722 = vmatpush1.msra.mxu0 %v584
    %723 = vmatprep.subr.mxu0 %v589
    %724 = vmatpush1.msra.mxu0 %v588
    %725 = vmatprep.subr.mxu0 %v593
    %726 = vmatpush1.msra.mxu0 %v592
    %727 = vmatprep.subr.mxu0 %v597
    %728 = vmatpush1.msra.mxu0 %v596
    %729 = vmatprep.subr.mxu0 %v601
    %730 = vmatpush1.msra.mxu0 %v600
    %731 = vmatprep.subr.mxu0 %v605
    %732 = vmatpush1.msra.mxu0 %v604
    %733 = vmatprep.subr.mxu0 %v609
    %734 = vmatpush1.msra.mxu0 %v608
    %735 = vmatprep.subr.mxu0 0.0
    %736 = vmatpush1.msra.mxu0 0.0
    %737 = vmatprep.subr.mxu0 0.0
    %738 = vmatpush1.msra.mxu0 0.0
    %739 = vmatprep.subr.mxu0 0.0
    %740 = vmatpush1.msra.mxu0 0.0
    %741 = vmatprep.subr.mxu0 0.0
    %742 = vmatpush1.msra.mxu0 0.0
    %743 = vmatprep.subr.mxu0 0.0
    %744 = vmatpush1.msra.mxu0 0.0
    %745 = vmatprep.subr.mxu0 0.0
    %746 = vmatpush1.msra.mxu0 0.0
    %747 = vmatprep.subr.mxu0 0.0
    %748 = vmatpush1.msra.mxu0 0.0
    %749 = vmatprep.subr.mxu0 0.0
    %750 = vmatpush1.msra.mxu0 0.0
    %751 = vmatprep.subr.mxu0 0.0
    %752 = vmatpush1.msra.mxu0 0.0
    %753 = vmatprep.subr.mxu0 0.0
    %754 = vmatpush1.msra.mxu0 0.0
    %755 = vmatprep.subr.mxu0 0.0
    %756 = vmatpush1.msra.mxu0 0.0
    %757 = vmatprep.subr.mxu0 0.0
    %758 = vmatpush1.msra.mxu0 0.0
    %759 = vmatprep.subr.mxu0 0.0
    %760 = vmatpush1.msra.mxu0 0.0
    %761 = vmatprep.subr.mxu0 0.0
    %762 = vmatpush1.msra.mxu0 0.0
    %763 = vmatprep.subr.mxu0 0.0
    %764 = vmatpush1.msra.mxu0 0.0
    %765 = vmatprep.subr.mxu0 0.0
    %766 = vmatpush1.msra.mxu0 0.0
    %767 = vmatprep.mubr.f32.mxu0 0.0
    %768 = vmatmul.mubr.f32.gmra.mrb[0].mxu0 %v545
    %v769 = vpop.f32.mrb[0].mxu0
    %v770 = vadd.f32 %v623, %v769
    %v771 = vpop.f32.mrb[0].mxu0
    %v772 = vadd.f32 %v627, %v771
    %773 = vdwg.mxu0
    %v774 = vld [vmem:[#allocation11] sm:$0xff]
    %v775 = vld [vmem:[#allocation11 + $0x8] sm:$0xff]
    %v776 = vld [vmem:[#allocation11 + $0x10] sm:$0xff]
    %v777 = vld [vmem:[#allocation11 + $0x18] sm:$0xff]
    %v778 = vld [vmem:[#allocation11 + $0x20] sm:$0xff]
    %v779 = vld [vmem:[#allocation11 + $0x28] sm:$0xff]
    %v780 = vld [vmem:[#allocation11 + $0x30] sm:$0xff]
    %v781 = vld [vmem:[#allocation11 + $0x38] sm:$0xff]
    %v782 = vld [vmem:[#allocation11 + $0x40] sm:$0xff]
    %v783 = vld [vmem:[#allocation11 + $0x48] sm:$0xff]
    %v784 = vld [vmem:[#allocation11 + $0x50] sm:$0xff]
    %v785 = vld [vmem:[#allocation11 + $0x58] sm:$0xff]
    %v786 = vld [vmem:[#allocation11 + $0x60] sm:$0xff]
    %v787 = vld [vmem:[#allocation11 + $0x68] sm:$0xff]
    %v788 = vld [vmem:[#allocation11 + $0x70] sm:$0xff]
    %v789 = vld [vmem:[#allocation11 + $0x78] sm:$0xff]
    %v790 = vld [vmem:[#allocation11 + $0x80] sm:$0xff]
    %v791 = vld [vmem:[#allocation11 + $0x88] sm:$0xff]
    %v792 = vld [vmem:[#allocation11 + $0x90] sm:$0xff]
    %v793 = vld [vmem:[#allocation11 + $0x98] sm:$0xff]
    %v794 = vld [vmem:[#allocation11 + $0xa0] sm:$0xff]
    %v795 = vld [vmem:[#allocation11 + $0xa8] sm:$0xff]
    %v796 = vld [vmem:[#allocation11 + $0xb0] sm:$0xff]
    %v797 = vld [vmem:[#allocation11 + $0xb8] sm:$0xff]
    %v798 = vld [vmem:[#allocation11 + $0xc0] sm:$0xff]
    %v799 = vld [vmem:[#allocation11 + $0xc8] sm:$0xff]
    %v800 = vld [vmem:[#allocation11 + $0xd0] sm:$0xff]
    %v801 = vld [vmem:[#allocation11 + $0xd8] sm:$0xff]
    %v802 = vld [vmem:[#allocation11 + $0xe0] sm:$0xff]
    %v803 = vld [vmem:[#allocation11 + $0xe8] sm:$0xff]
    %v804 = vld [vmem:[#allocation11 + $0xf0] sm:$0xff]
    %v805 = vld [vmem:[#allocation11 + $0xf8] sm:$0xff]
    %v806 = vld [vmem:[#allocation11 + $0x100] sm:$0xff]
    %v807 = vld [vmem:[#allocation11 + $0x108] sm:$0xff]
    %v808 = vld [vmem:[#allocation11 + $0x110] sm:$0xff]
    %v809 = vld [vmem:[#allocation11 + $0x118] sm:$0xff]
    %v810 = vld [vmem:[#allocation11 + $0x120] sm:$0xff]
    %v811 = vld [vmem:[#allocation11 + $0x128] sm:$0xff]
    %v812 = vld [vmem:[#allocation11 + $0x130] sm:$0xff]
    %v813 = vld [vmem:[#allocation11 + $0x138] sm:$0xff]
    %v814 = vld [vmem:[#allocation11 + $0x140] sm:$0xff]
    %v815 = vld [vmem:[#allocation11 + $0x148] sm:$0xff]
    %v816 = vld [vmem:[#allocation11 + $0x150] sm:$0xff]
    %v817 = vld [vmem:[#allocation11 + $0x158] sm:$0xff]
    %v818 = vld [vmem:[#allocation11 + $0x160] sm:$0xff]
    %v819 = vld [vmem:[#allocation11 + $0x168] sm:$0xff]
    %v820 = vld [vmem:[#allocation11 + $0x170] sm:$0xff]
    %v821 = vld [vmem:[#allocation11 + $0x178] sm:$0xff]
    %v822 = vld [vmem:[#allocation11 + $0x180] sm:$0xff]
    %v823 = vld [vmem:[#allocation11 + $0x188] sm:$0xff]
    %v824 = vld [vmem:[#allocation11 + $0x190] sm:$0xff]
    %v825 = vld [vmem:[#allocation11 + $0x198] sm:$0xff]
    %v826 = vld [vmem:[#allocation11 + $0x1a0] sm:$0xff]
    %v827 = vld [vmem:[#allocation11 + $0x1a8] sm:$0xff]
    %v828 = vld [vmem:[#allocation11 + $0x1b0] sm:$0xff]
    %v829 = vld [vmem:[#allocation11 + $0x1b8] sm:$0xff]
    %v830 = vld [vmem:[#allocation11 + $0x1c0] sm:$0xff]
    %v831 = vld [vmem:[#allocation11 + $0x1c8] sm:$0xff]
    %v832 = vld [vmem:[#allocation11 + $0x1d0] sm:$0xff]
    %v833 = vld [vmem:[#allocation11 + $0x1d8] sm:$0xff]
    %v834 = vld [vmem:[#allocation11 + $0x1e0] sm:$0xff]
    %v835 = vld [vmem:[#allocation11 + $0x1e8] sm:$0xff]
    %v836 = vld [vmem:[#allocation11 + $0x1f0] sm:$0xff]
    %v837 = vld [vmem:[#allocation11 + $0x1f8] sm:$0xff]
    %838 = vmatprep.subr.mxu0 %v775
    %839 = vmatpush1.msra.mxu0 %v774
    %840 = vmatprep.subr.mxu0 %v779
    %841 = vmatpush1.msra.mxu0 %v778
    %842 = vmatprep.subr.mxu0 %v783
    %843 = vmatpush1.msra.mxu0 %v782
    %844 = vmatprep.subr.mxu0 %v787
    %845 = vmatpush1.msra.mxu0 %v786
    %846 = vmatprep.subr.mxu0 %v791
    %847 = vmatpush1.msra.mxu0 %v790
    %848 = vmatprep.subr.mxu0 %v795
    %849 = vmatpush1.msra.mxu0 %v794
    %850 = vmatprep.subr.mxu0 %v799
    %851 = vmatpush1.msra.mxu0 %v798
    %852 = vmatprep.subr.mxu0 %v803
    %853 = vmatpush1.msra.mxu0 %v802
    %854 = vmatprep.subr.mxu0 %v807
    %855 = vmatpush1.msra.mxu0 %v806
    %856 = vmatprep.subr.mxu0 %v811
    %857 = vmatpush1.msra.mxu0 %v810
    %858 = vmatprep.subr.mxu0 %v815
    %859 = vmatpush1.msra.mxu0 %v814
    %860 = vmatprep.subr.mxu0 %v819
    %861 = vmatpush1.msra.mxu0 %v818
    %862 = vmatprep.subr.mxu0 %v823
    %863 = vmatpush1.msra.mxu0 %v822
    %864 = vmatprep.subr.mxu0 %v827
    %865 = vmatpush1.msra.mxu0 %v826
    %866 = vmatprep.subr.mxu0 %v831
    %867 = vmatpush1.msra.mxu0 %v830
    %868 = vmatprep.subr.mxu0 %v835
    %869 = vmatpush1.msra.mxu0 %v834
    %870 = vmatprep.subr.mxu0 0.0
    %871 = vmatpush1.msra.mxu0 0.0
    %872 = vmatprep.subr.mxu0 0.0
    %873 = vmatpush1.msra.mxu0 0.0
    %874 = vmatprep.subr.mxu0 0.0
    %875 = vmatpush1.msra.mxu0 0.0
    %876 = vmatprep.subr.mxu0 0.0
    %877 = vmatpush1.msra.mxu0 0.0
    %878 = vmatprep.subr.mxu0 0.0
    %879 = vmatpush1.msra.mxu0 0.0
    %880 = vmatprep.subr.mxu0 0.0
    %881 = vmatpush1.msra.mxu0 0.0
    %882 = vmatprep.subr.mxu0 0.0
    %883 = vmatpush1.msra.mxu0 0.0
    %884 = vmatprep.subr.mxu0 0.0
    %885 = vmatpush1.msra.mxu0 0.0
    %886 = vmatprep.subr.mxu0 0.0
    %887 = vmatpush1.msra.mxu0 0.0
    %888 = vmatprep.subr.mxu0 0.0
    %889 = vmatpush1.msra.mxu0 0.0
    %890 = vmatprep.subr.mxu0 0.0
    %891 = vmatpush1.msra.mxu0 0.0
    %892 = vmatprep.subr.mxu0 0.0
    %893 = vmatpush1.msra.mxu0 0.0
    %894 = vmatprep.subr.mxu0 0.0
    %895 = vmatpush1.msra.mxu0 0.0
    %896 = vmatprep.subr.mxu0 0.0
    %897 = vmatpush1.msra.mxu0 0.0
    %898 = vmatprep.subr.mxu0 0.0
    %899 = vmatpush1.msra.mxu0 0.0
    %900 = vmatprep.subr.mxu0 0.0
    %901 = vmatpush1.msra.mxu0 0.0
    %902 = vmatprep.mubr.f32.mxu0 0.0
    %903 = vmatmul.mubr.f32.gmra.mrb[0].mxu0 0.0
    %v904 = vpop.f32.mrb[0].mxu0
    %v905 = vadd.f32 0.0, %v904
    %v906 = vpop.f32.mrb[0].mxu0
    %v907 = vadd.f32 0.0, %v906
    %908 = vdwg.mxu0
    %909 = vmatprep.subr.mxu0 %v777
    %910 = vmatpush1.msra.mxu0 %v776
    %911 = vmatprep.subr.mxu0 %v781
    %912 = vmatpush1.msra.mxu0 %v780
    %913 = vmatprep.subr.mxu0 %v785
    %914 = vmatpush1.msra.mxu0 %v784
    %915 = vmatprep.subr.mxu0 %v789
    %916 = vmatpush1.msra.mxu0 %v788
    %917 = vmatprep.subr.mxu0 %v793
    %918 = vmatpush1.msra.mxu0 %v792
    %919 = vmatprep.subr.mxu0 %v797
    %920 = vmatpush1.msra.mxu0 %v796
    %921 = vmatprep.subr.mxu0 %v801
    %922 = vmatpush1.msra.mxu0 %v800
    %923 = vmatprep.subr.mxu0 %v805
    %924 = vmatpush1.msra.mxu0 %v804
    %925 = vmatprep.subr.mxu0 %v809
    %926 = vmatpush1.msra.mxu0 %v808
    %927 = vmatprep.subr.mxu0 %v813
    %928 = vmatpush1.msra.mxu0 %v812
    %929 = vmatprep.subr.mxu0 %v817
    %930 = vmatpush1.msra.mxu0 %v816
    %931 = vmatprep.subr.mxu0 %v821
    %932 = vmatpush1.msra.mxu0 %v820
    %933 = vmatprep.subr.mxu0 %v825
    %934 = vmatpush1.msra.mxu0 %v824
    %935 = vmatprep.subr.mxu0 %v829
    %936 = vmatpush1.msra.mxu0 %v828
    %937 = vmatprep.subr.mxu0 %v833
    %938 = vmatpush1.msra.mxu0 %v832
    %939 = vmatprep.subr.mxu0 %v837
    %940 = vmatpush1.msra.mxu0 %v836
    %941 = vmatprep.subr.mxu0 0.0
    %942 = vmatpush1.msra.mxu0 0.0
    %943 = vmatprep.subr.mxu0 0.0
    %944 = vmatpush1.msra.mxu0 0.0
    %945 = vmatprep.subr.mxu0 0.0
    %946 = vmatpush1.msra.mxu0 0.0
    %947 = vmatprep.subr.mxu0 0.0
    %948 = vmatpush1.msra.mxu0 0.0
    %949 = vmatprep.subr.mxu0 0.0
    %950 = vmatpush1.msra.mxu0 0.0
    %951 = vmatprep.subr.mxu0 0.0
    %952 = vmatpush1.msra.mxu0 0.0
    %953 = vmatprep.subr.mxu0 0.0
    %954 = vmatpush1.msra.mxu0 0.0
    %955 = vmatprep.subr.mxu0 0.0
    %956 = vmatpush1.msra.mxu0 0.0
    %957 = vmatprep.subr.mxu0 0.0
    %958 = vmatpush1.msra.mxu0 0.0
    %959 = vmatprep.subr.mxu0 0.0
    %960 = vmatpush1.msra.mxu0 0.0
    %961 = vmatprep.subr.mxu0 0.0
    %962 = vmatpush1.msra.mxu0 0.0
    %963 = vmatprep.subr.mxu0 0.0
    %964 = vmatpush1.msra.mxu0 0.0
    %965 = vmatprep.subr.mxu0 0.0
    %966 = vmatpush1.msra.mxu0 0.0
    %967 = vmatprep.subr.mxu0 0.0
    %968 = vmatpush1.msra.mxu0 0.0
    %969 = vmatprep.subr.mxu0 0.0
    %970 = vmatpush1.msra.mxu0 0.0
    %971 = vmatprep.subr.mxu0 0.0
    %972 = vmatpush1.msra.mxu0 0.0
    %973 = vmatprep.mubr.f32.mxu0 0.0
    %974 = vmatmul.mubr.f32.gmra.mrb[0].mxu0 0.0
    %v975 = vpop.f32.mrb[0].mxu0
    %v976 = vadd.f32 0.0, %v975
    %v977 = vpop.f32.mrb[0].mxu0
    %v978 = vadd.f32 0.0, %v977
    %979 = vdwg.mxu0
    %v980 = vadd.f32 %v699, %v905
    %v981 = vadd.f32 %v701, %v907
    %v982 = vadd.f32 %v770, %v976
    %v983 = vadd.f32 %v772, %v978
    %v984 = vxor.u32 %v980, 2147483648
    %v985 = vxor.u32 %v981, 2147483648
    %v986 = vxor.u32 %v982, 2147483648
    %v987 = vmul.f32 %v984, 1.442695
    %v988 = vpow.pop %v987
    %v989 = vmul.f32 %v985, 1.442695
    %v990 = vpow.pop %v989
    %v991 = vmul.f32 %v986, 1.442695
    %v992 = vpow.pop %v991
    %v993 = vadd.f32 %v988, 1.0
    %v994 = vadd.f32 %v990, 1.0
    %v995 = vadd.f32 %v992, 1.0
    %v996 = vrcp.pop %v993
    %v997 = vmul.f32 1.0, %v996
    %v998 = vrcp.pop %v994
    %v999 = vmul.f32 1.0, %v998
    %v1000 = vrcp.pop %v995
    %v1001 = vmul.f32 1.0, %v1000
    %v1002 = vtanh.pop %v983
    %v1003 = vmul.f32 %v999, 0.0
    %v1004 = vmul.f32 %v997, %v1002
    %v1005 = vadd.f32 %v1003, %v1004
    %v1006 = vtanh.pop %v1005
    %v1007 = vmul.f32 %v1001, %v1006
    %v1008 = vld [vmem:[#allocation12] sm:$0xff]
    %v1009 = vld [vmem:[#allocation12 + $0x8] sm:$0xff]
    %v1010 = vld [vmem:[#allocation12 + $0x10] sm:$0xff]
    %v1011 = vld [vmem:[#allocation12 + $0x18] sm:$0xff]
    %v1012 = vld [vmem:[#allocation12 + $0x20] sm:$0xff]
    %v1013 = vld [vmem:[#allocation12 + $0x28] sm:$0xff]
    %v1014 = vld [vmem:[#allocation12 + $0x30] sm:$0xff]
    %v1015 = vld [vmem:[#allocation12 + $0x38] sm:$0xff]
    %v1016 = vld [vmem:[#allocation12 + $0x40] sm:$0xff]
    %v1017 = vld [vmem:[#allocation12 + $0x48] sm:$0xff]
    %v1018 = vld [vmem:[#allocation12 + $0x50] sm:$0xff]
    %v1019 = vld [vmem:[#allocation12 + $0x58] sm:$0xff]
    %v1020 = vld [vmem:[#allocation12 + $0x60] sm:$0xff]
    %v1021 = vld [vmem:[#allocation12 + $0x68] sm:$0xff]
    %v1022 = vld [vmem:[#allocation12 + $0x70] sm:$0xff]
    %v1023 = vld [vmem:[#allocation12 + $0x78] sm:$0xff]
    %v1024 = vld [vmem:[#allocation12 + $0x80] sm:$0xff]
    %v1025 = vld [vmem:[#allocation12 + $0x88] sm:$0xff]
    %v1026 = vld [vmem:[#allocation12 + $0x90] sm:$0xff]
    %v1027 = vld [vmem:[#allocation12 + $0x98] sm:$0xff]
    %v1028 = vld [vmem:[#allocation12 + $0xa0] sm:$0xff]
    %v1029 = vld [vmem:[#allocation12 + $0xa8] sm:$0xff]
    %v1030 = vld [vmem:[#allocation12 + $0xb0] sm:$0xff]
    %v1031 = vld [vmem:[#allocation12 + $0xb8] sm:$0xff]
    %v1032 = vld [vmem:[#allocation12 + $0xc0] sm:$0xff]
    %v1033 = vld [vmem:[#allocation12 + $0xc8] sm:$0xff]
    %v1034 = vld [vmem:[#allocation12 + $0xd0] sm:$0xff]
    %v1035 = vld [vmem:[#allocation12 + $0xd8] sm:$0xff]
    %v1036 = vld [vmem:[#allocation12 + $0xe0] sm:$0xff]
    %v1037 = vld [vmem:[#allocation12 + $0xe8] sm:$0xff]
    %v1038 = vld [vmem:[#allocation12 + $0xf0] sm:$0xff]
    %v1039 = vld [vmem:[#allocation12 + $0xf8] sm:$0xff]
    %v1040 = vld [vmem:[#allocation12 + $0x100] sm:$0xff]
    %v1041 = vld [vmem:[#allocation12 + $0x108] sm:$0xff]
    %v1042 = vld [vmem:[#allocation12 + $0x110] sm:$0xff]
    %v1043 = vld [vmem:[#allocation12 + $0x118] sm:$0xff]
    %v1044 = vld [vmem:[#allocation12 + $0x120] sm:$0xff]
    %v1045 = vld [vmem:[#allocation12 + $0x128] sm:$0xff]
    %v1046 = vld [vmem:[#allocation12 + $0x130] sm:$0xff]
    %v1047 = vld [vmem:[#allocation12 + $0x138] sm:$0xff]
    %v1048 = vld [vmem:[#allocation12 + $0x140] sm:$0xff]
    %v1049 = vld [vmem:[#allocation12 + $0x148] sm:$0xff]
    %v1050 = vld [vmem:[#allocation12 + $0x150] sm:$0xff]
    %v1051 = vld [vmem:[#allocation12 + $0x158] sm:$0xff]
    %v1052 = vld [vmem:[#allocation12 + $0x160] sm:$0xff]
    %v1053 = vld [vmem:[#allocation12 + $0x168] sm:$0xff]
    %v1054 = vld [vmem:[#allocation12 + $0x170] sm:$0xff]
    %v1055 = vld [vmem:[#allocation12 + $0x178] sm:$0xff]
    %v1056 = vld [vmem:[#allocation12 + $0x180] sm:$0xff]
    %v1057 = vld [vmem:[#allocation12 + $0x188] sm:$0xff]
    %v1058 = vld [vmem:[#allocation12 + $0x190] sm:$0xff]
    %v1059 = vld [vmem:[#allocation12 + $0x198] sm:$0xff]
    %v1060 = vld [vmem:[#allocation12 + $0x1a0] sm:$0xff]
    %v1061 = vld [vmem:[#allocation12 + $0x1a8] sm:$0xff]
    %v1062 = vld [vmem:[#allocation12 + $0x1b0] sm:$0xff]
    %v1063 = vld [vmem:[#allocation12 + $0x1b8] sm:$0xff]
    %v1064 = vld [vmem:[#allocation12 + $0x1c0] sm:$0xff]
    %v1065 = vld [vmem:[#allocation12 + $0x1c8] sm:$0xff]
    %v1066 = vld [vmem:[#allocation12 + $0x1d0] sm:$0xff]
    %v1067 = vld [vmem:[#allocation12 + $0x1d8] sm:$0xff]
    %v1068 = vld [vmem:[#allocation12 + $0x1e0] sm:$0xff]
    %v1069 = vld [vmem:[#allocation12 + $0x1e8] sm:$0xff]
    %v1070 = vld [vmem:[#allocation12 + $0x1f0] sm:$0xff]
    %v1071 = vld [vmem:[#allocation12 + $0x1f8] sm:$0xff]
    %v1072 = vld [vmem:[%s9] sm:$0xf]
    %v1074 = vlaneseq
    %v1075 = vshrl.u32 %v1074, 7
    %v1076 = vsub.s32 0, %v1075
    %v1077 = vrot.slane %v1072, %v1076
    %v1078 = vlaneseq
    %v1079 = vshrl.u32 %v1078, 7
    %v1080 = vsub.s32 1, %v1079
    %v1081 = vrot.slane %v1072, %v1080
    %v1082 = vlaneseq
    %v1083 = vshrl.u32 %v1082, 7
    %v1084 = vsub.s32 2, %v1083
    %v1085 = vrot.slane %v1072, %v1084
    %v1086 = vlaneseq
    %v1087 = vshrl.u32 %v1086, 7
    %v1088 = vsub.s32 3, %v1087
    %v1089 = vrot.slane %v1072, %v1088
    %1094 = vmatprep.subr.mxu0 %v1009
    %1095 = vmatpush1.msra.mxu0 %v1008
    %1096 = vmatprep.subr.mxu0 %v1013
    %1097 = vmatpush1.msra.mxu0 %v1012
    %1098 = vmatprep.subr.mxu0 %v1017
    %1099 = vmatpush1.msra.mxu0 %v1016
    %1100 = vmatprep.subr.mxu0 %v1021
    %1101 = vmatpush1.msra.mxu0 %v1020
    %1102 = vmatprep.subr.mxu0 %v1025
    %1103 = vmatpush1.msra.mxu0 %v1024
    %1104 = vmatprep.subr.mxu0 %v1029
    %1105 = vmatpush1.msra.mxu0 %v1028
    %1106 = vmatprep.subr.mxu0 %v1033
    %1107 = vmatpush1.msra.mxu0 %v1032
    %1108 = vmatprep.subr.mxu0 %v1037
    %1109 = vmatpush1.msra.mxu0 %v1036
    %1110 = vmatprep.subr.mxu0 %v1041
    %1111 = vmatpush1.msra.mxu0 %v1040
    %1112 = vmatprep.subr.mxu0 %v1045
    %1113 = vmatpush1.msra.mxu0 %v1044
    %1114 = vmatprep.subr.mxu0 %v1049
    %1115 = vmatpush1.msra.mxu0 %v1048
    %1116 = vmatprep.subr.mxu0 %v1053
    %1117 = vmatpush1.msra.mxu0 %v1052
    %1118 = vmatprep.subr.mxu0 %v1057
    %1119 = vmatpush1.msra.mxu0 %v1056
    %1120 = vmatprep.subr.mxu0 %v1061
    %1121 = vmatpush1.msra.mxu0 %v1060
    %1122 = vmatprep.subr.mxu0 %v1065
    %1123 = vmatpush1.msra.mxu0 %v1064
    %1124 = vmatprep.subr.mxu0 %v1069
    %1125 = vmatpush1.msra.mxu0 %v1068
    %1126 = vmatprep.subr.mxu0 0.0
    %1127 = vmatpush1.msra.mxu0 0.0
    %1128 = vmatprep.subr.mxu0 0.0
    %1129 = vmatpush1.msra.mxu0 0.0
    %1130 = vmatprep.subr.mxu0 0.0
    %1131 = vmatpush1.msra.mxu0 0.0
    %1132 = vmatprep.subr.mxu0 0.0
    %1133 = vmatpush1.msra.mxu0 0.0
    %1134 = vmatprep.subr.mxu0 0.0
    %1135 = vmatpush1.msra.mxu0 0.0
    %1136 = vmatprep.subr.mxu0 0.0
    %1137 = vmatpush1.msra.mxu0 0.0
    %1138 = vmatprep.subr.mxu0 0.0
    %1139 = vmatpush1.msra.mxu0 0.0
    %1140 = vmatprep.subr.mxu0 0.0
    %1141 = vmatpush1.msra.mxu0 0.0
    %1142 = vmatprep.subr.mxu0 0.0
    %1143 = vmatpush1.msra.mxu0 0.0
    %1144 = vmatprep.subr.mxu0 0.0
    %1145 = vmatpush1.msra.mxu0 0.0
    %1146 = vmatprep.subr.mxu0 0.0
    %1147 = vmatpush1.msra.mxu0 0.0
    %1148 = vmatprep.subr.mxu0 0.0
    %1149 = vmatpush1.msra.mxu0 0.0
    %1150 = vmatprep.subr.mxu0 0.0
    %1151 = vmatpush1.msra.mxu0 0.0
    %1152 = vmatprep.subr.mxu0 0.0
    %1153 = vmatpush1.msra.mxu0 0.0
    %1154 = vmatprep.subr.mxu0 0.0
    %1155 = vmatpush1.msra.mxu0 0.0
    %1156 = vmatprep.subr.mxu0 0.0
    %1157 = vmatpush1.msra.mxu0 0.0
    %1158 = vmatprep.mubr.f32.mxu0 0.0
    %1159 = vmatmul.mubr.f32.gmra.mrb[0].mxu0 %v1007
    %v1160 = vpop.f32.mrb[0].mxu0
    %v1161 = vadd.f32 %v1077, %v1160
    %v1162 = vpop.f32.mrb[0].mxu0
    %v1163 = vadd.f32 %v1081, %v1162
    %1164 = vdwg.mxu0
    %1165 = vmatprep.subr.mxu0 %v1011
    %1166 = vmatpush1.msra.mxu0 %v1010
    %1167 = vmatprep.subr.mxu0 %v1015
    %1168 = vmatpush1.msra.mxu0 %v1014
    %1169 = vmatprep.subr.mxu0 %v1019
    %1170 = vmatpush1.msra.mxu0 %v1018
    %1171 = vmatprep.subr.mxu0 %v1023
    %1172 = vmatpush1.msra.mxu0 %v1022
    %1173 = vmatprep.subr.mxu0 %v1027
    %1174 = vmatpush1.msra.mxu0 %v1026
    %1175 = vmatprep.subr.mxu0 %v1031
    %1176 = vmatpush1.msra.mxu0 %v1030
    %1177 = vmatprep.subr.mxu0 %v1035
    %1178 = vmatpush1.msra.mxu0 %v1034
    %1179 = vmatprep.subr.mxu0 %v1039
    %1180 = vmatpush1.msra.mxu0 %v1038
    %1181 = vmatprep.subr.mxu0 %v1043
    %1182 = vmatpush1.msra.mxu0 %v1042
    %1183 = vmatprep.subr.mxu0 %v1047
    %1184 = vmatpush1.msra.mxu0 %v1046
    %1185 = vmatprep.subr.mxu0 %v1051
    %1186 = vmatpush1.msra.mxu0 %v1050
    %1187 = vmatprep.subr.mxu0 %v1055
    %1188 = vmatpush1.msra.mxu0 %v1054
    %1189 = vmatprep.subr.mxu0 %v1059
    %1190 = vmatpush1.msra.mxu0 %v1058
    %1191 = vmatprep.subr.mxu0 %v1063
    %1192 = vmatpush1.msra.mxu0 %v1062
    %1193 = vmatprep.subr.mxu0 %v1067
    %1194 = vmatpush1.msra.mxu0 %v1066
    %1195 = vmatprep.subr.mxu0 %v1071
    %1196 = vmatpush1.msra.mxu0 %v1070
    %1197 = vmatprep.subr.mxu0 0.0
    %1198 = vmatpush1.msra.mxu0 0.0
    %1199 = vmatprep.subr.mxu0 0.0
    %1200 = vmatpush1.msra.mxu0 0.0
    %1201 = vmatprep.subr.mxu0 0.0
    %1202 = vmatpush1.msra.mxu0 0.0
    %1203 = vmatprep.subr.mxu0 0.0
    %1204 = vmatpush1.msra.mxu0 0.0
    %1205 = vmatprep.subr.mxu0 0.0
    %1206 = vmatpush1.msra.mxu0 0.0
    %1207 = vmatprep.subr.mxu0 0.0
    %1208 = vmatpush1.msra.mxu0 0.0
    %1209 = vmatprep.subr.mxu0 0.0
    %1210 = vmatpush1.msra.mxu0 0.0
    %1211 = vmatprep.subr.mxu0 0.0
    %1212 = vmatpush1.msra.mxu0 0.0
    %1213 = vmatprep.subr.mxu0 0.0
    %1214 = vmatpush1.msra.mxu0 0.0
    %1215 = vmatprep.subr.mxu0 0.0
    %1216 = vmatpush1.msra.mxu0 0.0
    %1217 = vmatprep.subr.mxu0 0.0
    %1218 = vmatpush1.msra.mxu0 0.0
    %1219 = vmatprep.subr.mxu0 0.0
    %1220 = vmatpush1.msra.mxu0 0.0
    %1221 = vmatprep.subr.mxu0 0.0
    %1222 = vmatpush1.msra.mxu0 0.0
    %1223 = vmatprep.subr.mxu0 0.0
    %1224 = vmatpush1.msra.mxu0 0.0
    %1225 = vmatprep.subr.mxu0 0.0
    %1226 = vmatpush1.msra.mxu0 0.0
    %1227 = vmatprep.subr.mxu0 0.0
    %1228 = vmatpush1.msra.mxu0 0.0
    %1229 = vmatprep.mubr.f32.mxu0 0.0
    %1230 = vmatmul.mubr.f32.gmra.mrb[0].mxu0 %v1007
    %v1231 = vpop.f32.mrb[0].mxu0
    %v1232 = vadd.f32 %v1085, %v1231
    %v1233 = vpop.f32.mrb[0].mxu0
    %v1234 = vadd.f32 %v1089, %v1233
    %1235 = vdwg.mxu0
    %v1236 = vld [vmem:[#allocation14] sm:$0xff]
    %v1237 = vld [vmem:[#allocation14 + $0x8] sm:$0xff]
    %v1238 = vld [vmem:[#allocation14 + $0x10] sm:$0xff]
    %v1239 = vld [vmem:[#allocation14 + $0x18] sm:$0xff]
    %v1240 = vld [vmem:[#allocation14 + $0x20] sm:$0xff]
    %v1241 = vld [vmem:[#allocation14 + $0x28] sm:$0xff]
    %v1242 = vld [vmem:[#allocation14 + $0x30] sm:$0xff]
    %v1243 = vld [vmem:[#allocation14 + $0x38] sm:$0xff]
    %v1244 = vld [vmem:[#allocation14 + $0x40] sm:$0xff]
    %v1245 = vld [vmem:[#allocation14 + $0x48] sm:$0xff]
    %v1246 = vld [vmem:[#allocation14 + $0x50] sm:$0xff]
    %v1247 = vld [vmem:[#allocation14 + $0x58] sm:$0xff]
    %v1248 = vld [vmem:[#allocation14 + $0x60] sm:$0xff]
    %v1249 = vld [vmem:[#allocation14 + $0x68] sm:$0xff]
    %v1250 = vld [vmem:[#allocation14 + $0x70] sm:$0xff]
    %v1251 = vld [vmem:[#allocation14 + $0x78] sm:$0xff]
    %v1252 = vld [vmem:[#allocation14 + $0x80] sm:$0xff]
    %v1253 = vld [vmem:[#allocation14 + $0x88] sm:$0xff]
    %v1254 = vld [vmem:[#allocation14 + $0x90] sm:$0xff]
    %v1255 = vld [vmem:[#allocation14 + $0x98] sm:$0xff]
    %v1256 = vld [vmem:[#allocation14 + $0xa0] sm:$0xff]
    %v1257 = vld [vmem:[#allocation14 + $0xa8] sm:$0xff]
    %v1258 = vld [vmem:[#allocation14 + $0xb0] sm:$0xff]
    %v1259 = vld [vmem:[#allocation14 + $0xb8] sm:$0xff]
    %v1260 = vld [vmem:[#allocation14 + $0xc0] sm:$0xff]
    %v1261 = vld [vmem:[#allocation14 + $0xc8] sm:$0xff]
    %v1262 = vld [vmem:[#allocation14 + $0xd0] sm:$0xff]
    %v1263 = vld [vmem:[#allocation14 + $0xd8] sm:$0xff]
    %v1264 = vld [vmem:[#allocation14 + $0xe0] sm:$0xff]
    %v1265 = vld [vmem:[#allocation14 + $0xe8] sm:$0xff]
    %v1266 = vld [vmem:[#allocation14 + $0xf0] sm:$0xff]
    %v1267 = vld [vmem:[#allocation14 + $0xf8] sm:$0xff]
    %v1268 = vld [vmem:[#allocation14 + $0x100] sm:$0xff]
    %v1269 = vld [vmem:[#allocation14 + $0x108] sm:$0xff]
    %v1270 = vld [vmem:[#allocation14 + $0x110] sm:$0xff]
    %v1271 = vld [vmem:[#allocation14 + $0x118] sm:$0xff]
    %v1272 = vld [vmem:[#allocation14 + $0x120] sm:$0xff]
    %v1273 = vld [vmem:[#allocation14 + $0x128] sm:$0xff]
    %v1274 = vld [vmem:[#allocation14 + $0x130] sm:$0xff]
    %v1275 = vld [vmem:[#allocation14 + $0x138] sm:$0xff]
    %v1276 = vld [vmem:[#allocation14 + $0x140] sm:$0xff]
    %v1277 = vld [vmem:[#allocation14 + $0x148] sm:$0xff]
    %v1278 = vld [vmem:[#allocation14 + $0x150] sm:$0xff]
    %v1279 = vld [vmem:[#allocation14 + $0x158] sm:$0xff]
    %v1280 = vld [vmem:[#allocation14 + $0x160] sm:$0xff]
    %v1281 = vld [vmem:[#allocation14 + $0x168] sm:$0xff]
    %v1282 = vld [vmem:[#allocation14 + $0x170] sm:$0xff]
    %v1283 = vld [vmem:[#allocation14 + $0x178] sm:$0xff]
    %v1284 = vld [vmem:[#allocation14 + $0x180] sm:$0xff]
    %v1285 = vld [vmem:[#allocation14 + $0x188] sm:$0xff]
    %v1286 = vld [vmem:[#allocation14 + $0x190] sm:$0xff]
    %v1287 = vld [vmem:[#allocation14 + $0x198] sm:$0xff]
    %v1288 = vld [vmem:[#allocation14 + $0x1a0] sm:$0xff]
    %v1289 = vld [vmem:[#allocation14 + $0x1a8] sm:$0xff]
    %v1290 = vld [vmem:[#allocation14 + $0x1b0] sm:$0xff]
    %v1291 = vld [vmem:[#allocation14 + $0x1b8] sm:$0xff]
    %v1292 = vld [vmem:[#allocation14 + $0x1c0] sm:$0xff]
    %v1293 = vld [vmem:[#allocation14 + $0x1c8] sm:$0xff]
    %v1294 = vld [vmem:[#allocation14 + $0x1d0] sm:$0xff]
    %v1295 = vld [vmem:[#allocation14 + $0x1d8] sm:$0xff]
    %v1296 = vld [vmem:[#allocation14 + $0x1e0] sm:$0xff]
    %v1297 = vld [vmem:[#allocation14 + $0x1e8] sm:$0xff]
    %v1298 = vld [vmem:[#allocation14 + $0x1f0] sm:$0xff]
    %v1299 = vld [vmem:[#allocation14 + $0x1f8] sm:$0xff]
    %1300 = vmatprep.subr.mxu0 %v1237
    %1301 = vmatpush1.msra.mxu0 %v1236
    %1302 = vmatprep.subr.mxu0 %v1241
    %1303 = vmatpush1.msra.mxu0 %v1240
    %1304 = vmatprep.subr.mxu0 %v1245
    %1305 = vmatpush1.msra.mxu0 %v1244
    %1306 = vmatprep.subr.mxu0 %v1249
    %1307 = vmatpush1.msra.mxu0 %v1248
    %1308 = vmatprep.subr.mxu0 %v1253
    %1309 = vmatpush1.msra.mxu0 %v1252
    %1310 = vmatprep.subr.mxu0 %v1257
    %1311 = vmatpush1.msra.mxu0 %v1256
    %1312 = vmatprep.subr.mxu0 %v1261
    %1313 = vmatpush1.msra.mxu0 %v1260
    %1314 = vmatprep.subr.mxu0 %v1265
    %1315 = vmatpush1.msra.mxu0 %v1264
    %1316 = vmatprep.subr.mxu0 %v1269
    %1317 = vmatpush1.msra.mxu0 %v1268
    %1318 = vmatprep.subr.mxu0 %v1273
    %1319 = vmatpush1.msra.mxu0 %v1272
    %1320 = vmatprep.subr.mxu0 %v1277
    %1321 = vmatpush1.msra.mxu0 %v1276
    %1322 = vmatprep.subr.mxu0 %v1281
    %1323 = vmatpush1.msra.mxu0 %v1280
    %1324 = vmatprep.subr.mxu0 %v1285
    %1325 = vmatpush1.msra.mxu0 %v1284
    %1326 = vmatprep.subr.mxu0 %v1289
    %1327 = vmatpush1.msra.mxu0 %v1288
    %1328 = vmatprep.subr.mxu0 %v1293
    %1329 = vmatpush1.msra.mxu0 %v1292
    %1330 = vmatprep.subr.mxu0 %v1297
    %1331 = vmatpush1.msra.mxu0 %v1296
    %1332 = vmatprep.subr.mxu0 0.0
    %1333 = vmatpush1.msra.mxu0 0.0
    %1334 = vmatprep.subr.mxu0 0.0
    %1335 = vmatpush1.msra.mxu0 0.0
    %1336 = vmatprep.subr.mxu0 0.0
    %1337 = vmatpush1.msra.mxu0 0.0
    %1338 = vmatprep.subr.mxu0 0.0
    %1339 = vmatpush1.msra.mxu0 0.0
    %1340 = vmatprep.subr.mxu0 0.0
    %1341 = vmatpush1.msra.mxu0 0.0
    %1342 = vmatprep.subr.mxu0 0.0
    %1343 = vmatpush1.msra.mxu0 0.0
    %1344 = vmatprep.subr.mxu0 0.0
    %1345 = vmatpush1.msra.mxu0 0.0
    %1346 = vmatprep.subr.mxu0 0.0
    %1347 = vmatpush1.msra.mxu0 0.0
    %1348 = vmatprep.subr.mxu0 0.0
    %1349 = vmatpush1.msra.mxu0 0.0
    %1350 = vmatprep.subr.mxu0 0.0
    %1351 = vmatpush1.msra.mxu0 0.0
    %1352 = vmatprep.subr.mxu0 0.0
    %1353 = vmatpush1.msra.mxu0 0.0
    %1354 = vmatprep.subr.mxu0 0.0
    %1355 = vmatpush1.msra.mxu0 0.0
    %1356 = vmatprep.subr.mxu0 0.0
    %1357 = vmatpush1.msra.mxu0 0.0
    %1358 = vmatprep.subr.mxu0 0.0
    %1359 = vmatpush1.msra.mxu0 0.0
    %1360 = vmatprep.subr.mxu0 0.0
    %1361 = vmatpush1.msra.mxu0 0.0
    %1362 = vmatprep.subr.mxu0 0.0
    %1363 = vmatpush1.msra.mxu0 0.0
    %1364 = vmatprep.mubr.f32.mxu0 0.0
    %1365 = vmatmul.mubr.f32.gmra.mrb[0].mxu0 0.0
    %v1366 = vpop.f32.mrb[0].mxu0
    %v1367 = vadd.f32 0.0, %v1366
    %v1368 = vpop.f32.mrb[0].mxu0
    %v1369 = vadd.f32 0.0, %v1368
    %1370 = vdwg.mxu0
    %1371 = vmatprep.subr.mxu0 %v1239
    %1372 = vmatpush1.msra.mxu0 %v1238
    %1373 = vmatprep.subr.mxu0 %v1243
    %1374 = vmatpush1.msra.mxu0 %v1242
    %1375 = vmatprep.subr.mxu0 %v1247
    %1376 = vmatpush1.msra.mxu0 %v1246
    %1377 = vmatprep.subr.mxu0 %v1251
    %1378 = vmatpush1.msra.mxu0 %v1250
    %1379 = vmatprep.subr.mxu0 %v1255
    %1380 = vmatpush1.msra.mxu0 %v1254
    %1381 = vmatprep.subr.mxu0 %v1259
    %1382 = vmatpush1.msra.mxu0 %v1258
    %1383 = vmatprep.subr.mxu0 %v1263
    %1384 = vmatpush1.msra.mxu0 %v1262
    %1385 = vmatprep.subr.mxu0 %v1267
    %1386 = vmatpush1.msra.mxu0 %v1266
    %1387 = vmatprep.subr.mxu0 %v1271
    %1388 = vmatpush1.msra.mxu0 %v1270
    %1389 = vmatprep.subr.mxu0 %v1275
    %1390 = vmatpush1.msra.mxu0 %v1274
    %1391 = vmatprep.subr.mxu0 %v1279
    %1392 = vmatpush1.msra.mxu0 %v1278
    %1393 = vmatprep.subr.mxu0 %v1283
    %1394 = vmatpush1.msra.mxu0 %v1282
    %1395 = vmatprep.subr.mxu0 %v1287
    %1396 = vmatpush1.msra.mxu0 %v1286
    %1397 = vmatprep.subr.mxu0 %v1291
    %1398 = vmatpush1.msra.mxu0 %v1290
    %1399 = vmatprep.subr.mxu0 %v1295
    %1400 = vmatpush1.msra.mxu0 %v1294
    %1401 = vmatprep.subr.mxu0 %v1299
    %1402 = vmatpush1.msra.mxu0 %v1298
    %1403 = vmatprep.subr.mxu0 0.0
    %1404 = vmatpush1.msra.mxu0 0.0
    %1405 = vmatprep.subr.mxu0 0.0
    %1406 = vmatpush1.msra.mxu0 0.0
    %1407 = vmatprep.subr.mxu0 0.0
    %1408 = vmatpush1.msra.mxu0 0.0
    %1409 = vmatprep.subr.mxu0 0.0
    %1410 = vmatpush1.msra.mxu0 0.0
    %1411 = vmatprep.subr.mxu0 0.0
    %1412 = vmatpush1.msra.mxu0 0.0
    %1413 = vmatprep.subr.mxu0 0.0
    %1414 = vmatpush1.msra.mxu0 0.0
    %1415 = vmatprep.subr.mxu0 0.0
    %1416 = vmatpush1.msra.mxu0 0.0
    %1417 = vmatprep.subr.mxu0 0.0
    %1418 = vmatpush1.msra.mxu0 0.0
    %1419 = vmatprep.subr.mxu0 0.0
    %1420 = vmatpush1.msra.mxu0 0.0
    %1421 = vmatprep.subr.mxu0 0.0
    %1422 = vmatpush1.msra.mxu0 0.0
    %1423 = vmatprep.subr.mxu0 0.0
    %1424 = vmatpush1.msra.mxu0 0.0
    %1425 = vmatprep.subr.mxu0 0.0
    %1426 = vmatpush1.msra.mxu0 0.0
    %1427 = vmatprep.subr.mxu0 0.0
    %1428 = vmatpush1.msra.mxu0 0.0
    %1429 = vmatprep.subr.mxu0 0.0
    %1430 = vmatpush1.msra.mxu0 0.0
    %1431 = vmatprep.subr.mxu0 0.0
    %1432 = vmatpush1.msra.mxu0 0.0
    %1433 = vmatprep.subr.mxu0 0.0
    %1434 = vmatpush1.msra.mxu0 0.0
    %1435 = vmatprep.mubr.f32.mxu0 0.0
    %1436 = vmatmul.mubr.f32.gmra.mrb[0].mxu0 0.0
    %v1437 = vpop.f32.mrb[0].mxu0
    %v1438 = vadd.f32 0.0, %v1437
    %v1439 = vpop.f32.mrb[0].mxu0
    %v1440 = vadd.f32 0.0, %v1439
    %1441 = vdwg.mxu0
    %v1442 = vadd.f32 %v1161, %v1367
    %v1443 = vadd.f32 %v1163, %v1369
    %v1444 = vadd.f32 %v1232, %v1438
    %v1445 = vadd.f32 %v1234, %v1440
    %v1446 = vxor.u32 %v1442, 2147483648
    %v1447 = vxor.u32 %v1443, 2147483648
    %v1448 = vxor.u32 %v1444, 2147483648
    %v1449 = vmul.f32 %v1446, 1.442695
    %v1450 = vpow.pop %v1449
    %v1451 = vmul.f32 %v1447, 1.442695
    %v1452 = vpow.pop %v1451
    %v1453 = vmul.f32 %v1448, 1.442695
    %v1454 = vpow.pop %v1453
    %v1455 = vadd.f32 %v1450, 1.0
    %v1456 = vadd.f32 %v1452, 1.0
    %v1457 = vadd.f32 %v1454, 1.0
    %v1458 = vrcp.pop %v1455
    %v1459 = vmul.f32 1.0, %v1458
    %v1460 = vrcp.pop %v1456
    %v1461 = vmul.f32 1.0, %v1460
    %v1462 = vrcp.pop %v1457
    %v1463 = vmul.f32 1.0, %v1462
    %v1464 = vtanh.pop %v1445
    %v1465 = vmul.f32 %v1461, 0.0
    %v1466 = vmul.f32 %v1459, %v1464
    %v1467 = vadd.f32 %v1465, %v1466
    %v1468 = vtanh.pop %v1467
    %v1469 = vmul.f32 %v1463, %v1468
    %1470 = vmatprep.subr.mxu0 %v313
    %1471 = vmatpush1.msra.mxu0 %v312
    %1472 = vmatprep.subr.mxu0 %v317
    %1473 = vmatpush1.msra.mxu0 %v316
    %1474 = vmatprep.subr.mxu0 %v321
    %1475 = vmatpush1.msra.mxu0 %v320
    %1476 = vmatprep.subr.mxu0 %v325
    %1477 = vmatpush1.msra.mxu0 %v324
    %1478 = vmatprep.subr.mxu0 %v329
    %1479 = vmatpush1.msra.mxu0 %v328
    %1480 = vmatprep.subr.mxu0 %v333
    %1481 = vmatpush1.msra.mxu0 %v332
    %1482 = vmatprep.subr.mxu0 %v337
    %1483 = vmatpush1.msra.mxu0 %v336
    %1484 = vmatprep.subr.mxu0 %v341
    %1485 = vmatpush1.msra.mxu0 %v340
    %1486 = vmatprep.subr.mxu0 %v345
    %1487 = vmatpush1.msra.mxu0 %v344
    %1488 = vmatprep.subr.mxu0 %v349
    %1489 = vmatpush1.msra.mxu0 %v348
    %1490 = vmatprep.subr.mxu0 %v353
    %1491 = vmatpush1.msra.mxu0 %v352
    %1492 = vmatprep.subr.mxu0 %v357
    %1493 = vmatpush1.msra.mxu0 %v356
    %1494 = vmatprep.subr.mxu0 %v361
    %1495 = vmatpush1.msra.mxu0 %v360
    %1496 = vmatprep.subr.mxu0 %v365
    %1497 = vmatpush1.msra.mxu0 %v364
    %1498 = vmatprep.subr.mxu0 %v369
    %1499 = vmatpush1.msra.mxu0 %v368
    %1500 = vmatprep.subr.mxu0 %v373
    %1501 = vmatpush1.msra.mxu0 %v372
    %1502 = vmatprep.subr.mxu0 0.0
    %1503 = vmatpush1.msra.mxu0 0.0
    %1504 = vmatprep.subr.mxu0 0.0
    %1505 = vmatpush1.msra.mxu0 0.0
    %1506 = vmatprep.subr.mxu0 0.0
    %1507 = vmatpush1.msra.mxu0 0.0
    %1508 = vmatprep.subr.mxu0 0.0
    %1509 = vmatpush1.msra.mxu0 0.0
    %1510 = vmatprep.subr.mxu0 0.0
    %1511 = vmatpush1.msra.mxu0 0.0
    %1512 = vmatprep.subr.mxu0 0.0
    %1513 = vmatpush1.msra.mxu0 0.0
    %1514 = vmatprep.subr.mxu0 0.0
    %1515 = vmatpush1.msra.mxu0 0.0
    %1516 = vmatprep.subr.mxu0 0.0
    %1517 = vmatpush1.msra.mxu0 0.0
    %1518 = vmatprep.subr.mxu0 0.0
    %1519 = vmatpush1.msra.mxu0 0.0
    %1520 = vmatprep.subr.mxu0 0.0
    %1521 = vmatpush1.msra.mxu0 0.0
    %1522 = vmatprep.subr.mxu0 0.0
    %1523 = vmatpush1.msra.mxu0 0.0
    %1524 = vmatprep.subr.mxu0 0.0
    %1525 = vmatpush1.msra.mxu0 0.0
    %1526 = vmatprep.subr.mxu0 0.0
    %1527 = vmatpush1.msra.mxu0 0.0
    %1528 = vmatprep.subr.mxu0 0.0
    %1529 = vmatpush1.msra.mxu0 0.0
    %1530 = vmatprep.subr.mxu0 0.0
    %1531 = vmatpush1.msra.mxu0 0.0
    %1532 = vmatprep.subr.mxu0 0.0
    %1533 = vmatpush1.msra.mxu0 0.0
    %1534 = vmatprep.mubr.f32.mxu0 0.0
    %1535 = vmatmul.mubr.f32.gmra.mrb[0].mxu0 %v545
    %v1536 = vpop.f32.mrb[0].mxu0
    %v1537 = vadd.f32 0.0, %v1536
    %v1538 = vpop.f32.mrb[0].mxu0
    %v1539 = vadd.f32 0.0, %v1538
    %1540 = vdwg.mxu0
    %1541 = vmatprep.subr.mxu0 %v315
    %1542 = vmatpush1.msra.mxu0 %v314
    %1543 = vmatprep.subr.mxu0 %v319
    %1544 = vmatpush1.msra.mxu0 %v318
    %1545 = vmatprep.subr.mxu0 %v323
    %1546 = vmatpush1.msra.mxu0 %v322
    %1547 = vmatprep.subr.mxu0 %v327
    %1548 = vmatpush1.msra.mxu0 %v326
    %1549 = vmatprep.subr.mxu0 %v331
    %1550 = vmatpush1.msra.mxu0 %v330
    %1551 = vmatprep.subr.mxu0 %v335
    %1552 = vmatpush1.msra.mxu0 %v334
    %1553 = vmatprep.subr.mxu0 %v339
    %1554 = vmatpush1.msra.mxu0 %v338
    %1555 = vmatprep.subr.mxu0 %v343
    %1556 = vmatpush1.msra.mxu0 %v342
    %1557 = vmatprep.subr.mxu0 %v347
    %1558 = vmatpush1.msra.mxu0 %v346
    %1559 = vmatprep.subr.mxu0 %v351
    %1560 = vmatpush1.msra.mxu0 %v350
    %1561 = vmatprep.subr.mxu0 %v355
    %1562 = vmatpush1.msra.mxu0 %v354
    %1563 = vmatprep.subr.mxu0 %v359
    %1564 = vmatpush1.msra.mxu0 %v358
    %1565 = vmatprep.subr.mxu0 %v363
    %1566 = vmatpush1.msra.mxu0 %v362
    %1567 = vmatprep.subr.mxu0 %v367
    %1568 = vmatpush1.msra.mxu0 %v366
    %1569 = vmatprep.subr.mxu0 %v371
    %1570 = vmatpush1.msra.mxu0 %v370
    %1571 = vmatprep.subr.mxu0 %v375
    %1572 = vmatpush1.msra.mxu0 %v374
    %1573 = vmatprep.subr.mxu0 0.0
    %1574 = vmatpush1.msra.mxu0 0.0
    %1575 = vmatprep.subr.mxu0 0.0
    %1576 = vmatpush1.msra.mxu0 0.0
    %1577 = vmatprep.subr.mxu0 0.0
    %1578 = vmatpush1.msra.mxu0 0.0
    %1579 = vmatprep.subr.mxu0 0.0
    %1580 = vmatpush1.msra.mxu0 0.0
    %1581 = vmatprep.subr.mxu0 0.0
    %1582 = vmatpush1.msra.mxu0 0.0
    %1583 = vmatprep.subr.mxu0 0.0
    %1584 = vmatpush1.msra.mxu0 0.0
    %1585 = vmatprep.subr.mxu0 0.0
    %1586 = vmatpush1.msra.mxu0 0.0
    %1587 = vmatprep.subr.mxu0 0.0
    %1588 = vmatpush1.msra.mxu0 0.0
    %1589 = vmatprep.subr.mxu0 0.0
    %1590 = vmatpush1.msra.mxu0 0.0
    %1591 = vmatprep.subr.mxu0 0.0
    %1592 = vmatpush1.msra.mxu0 0.0
    %1593 = vmatprep.subr.mxu0 0.0
    %1594 = vmatpush1.msra.mxu0 0.0
    %1595 = vmatprep.subr.mxu0 0.0
    %1596 = vmatpush1.msra.mxu0 0.0
    %1597 = vmatprep.subr.mxu0 0.0
    %1598 = vmatpush1.msra.mxu0 0.0
    %1599 = vmatprep.subr.mxu0 0.0
    %1600 = vmatpush1.msra.mxu0 0.0
    %1601 = vmatprep.subr.mxu0 0.0
    %1602 = vmatpush1.msra.mxu0 0.0
    %1603 = vmatprep.subr.mxu0 0.0
    %1604 = vmatpush1.msra.mxu0 0.0
    %1605 = vmatprep.mubr.f32.mxu0 0.0
    %1606 = vmatmul.mubr.f32.gmra.mrb[0].mxu0 %v545
    %v1607 = vpop.f32.mrb[0].mxu0
    %v1608 = vadd.f32 0.0, %v1607
    %v1609 = vpop.f32.mrb[0].mxu0
    %v1610 = vadd.f32 0.0, %v1609
    %1611 = vdwg.mxu0
    %v1616 = vrot.slane %v1537, 7
    %v1617 = vrot.slane %v1539, 7
    %v1618 = vrot.slane %v1608, 7
    %v1619 = vrot.slane %v1610, 7
    %v1624 = vadd.f32 %v237, %v1616
    %v1625 = vadd.f32 %v239, %v1617
    %v1626 = vadd.f32 %v308, %v1618
    %v1627 = vadd.f32 %v310, %v1619
    %v1628 = vxor.u32 %v1624, 2147483648
    %v1629 = vxor.u32 %v1625, 2147483648
    %v1630 = vxor.u32 %v1626, 2147483648
    %v1631 = vmul.f32 %v1628, 1.442695
    %v1632 = vpow.pop %v1631
    %v1633 = vmul.f32 %v1629, 1.442695
    %v1634 = vpow.pop %v1633
    %v1635 = vmul.f32 %v1630, 1.442695
    %v1636 = vpow.pop %v1635
    %v1637 = vadd.f32 %v1632, 1.0
    %v1638 = vadd.f32 %v1634, 1.0
    %v1639 = vadd.f32 %v1636, 1.0
    %v1640 = vrcp.pop %v1637
    %v1641 = vmul.f32 1.0, %v1640
    %v1642 = vrcp.pop %v1638
    %v1643 = vmul.f32 1.0, %v1642
    %v1644 = vrcp.pop %v1639
    %v1645 = vmul.f32 1.0, %v1644
    %v1646 = vtanh.pop %v1627
    %v1648 = vrot.slane %v543, 7
    %v1650 = vmul.f32 %v1643, %v1648
    %v1651 = vmul.f32 %v1641, %v1646
    %v1652 = vadd.f32 %v1650, %v1651
    %v1653 = vtanh.pop %v1652
    %v1654 = vmul.f32 %v1645, %v1653
    %v1656 = vrot.slane %v1654, 1
    %1658 = vmatprep.subr.mxu0 %v547
    %1659 = vmatpush1.msra.mxu0 %v546
    %1660 = vmatprep.subr.mxu0 %v551
    %1661 = vmatpush1.msra.mxu0 %v550
    %1662 = vmatprep.subr.mxu0 %v555
    %1663 = vmatpush1.msra.mxu0 %v554
    %1664 = vmatprep.subr.mxu0 %v559
    %1665 = vmatpush1.msra.mxu0 %v558
    %1666 = vmatprep.subr.mxu0 %v563
    %1667 = vmatpush1.msra.mxu0 %v562
    %1668 = vmatprep.subr.mxu0 %v567
    %1669 = vmatpush1.msra.mxu0 %v566
    %1670 = vmatprep.subr.mxu0 %v571
    %1671 = vmatpush1.msra.mxu0 %v570
    %1672 = vmatprep.subr.mxu0 %v575
    %1673 = vmatpush1.msra.mxu0 %v574
    %1674 = vmatprep.subr.mxu0 %v579
    %1675 = vmatpush1.msra.mxu0 %v578
    %1676 = vmatprep.subr.mxu0 %v583
    %1677 = vmatpush1.msra.mxu0 %v582
    %1678 = vmatprep.subr.mxu0 %v587
    %1679 = vmatpush1.msra.mxu0 %v586
    %1680 = vmatprep.subr.mxu0 %v591
    %1681 = vmatpush1.msra.mxu0 %v590
    %1682 = vmatprep.subr.mxu0 %v595
    %1683 = vmatpush1.msra.mxu0 %v594
    %1684 = vmatprep.subr.mxu0 %v599
    %1685 = vmatpush1.msra.mxu0 %v598
    %1686 = vmatprep.subr.mxu0 %v603
    %1687 = vmatpush1.msra.mxu0 %v602
    %1688 = vmatprep.subr.mxu0 %v607
    %1689 = vmatpush1.msra.mxu0 %v606
    %1690 = vmatprep.subr.mxu0 0.0
    %1691 = vmatpush1.msra.mxu0 0.0
    %1692 = vmatprep.subr.mxu0 0.0
    %1693 = vmatpush1.msra.mxu0 0.0
    %1694 = vmatprep.subr.mxu0 0.0
    %1695 = vmatpush1.msra.mxu0 0.0
    %1696 = vmatprep.subr.mxu0 0.0
    %1697 = vmatpush1.msra.mxu0 0.0
    %1698 = vmatprep.subr.mxu0 0.0
    %1699 = vmatpush1.msra.mxu0 0.0
    %1700 = vmatprep.subr.mxu0 0.0
    %1701 = vmatpush1.msra.mxu0 0.0
    %1702 = vmatprep.subr.mxu0 0.0
    %1703 = vmatpush1.msra.mxu0 0.0
    %1704 = vmatprep.subr.mxu0 0.0
    %1705 = vmatpush1.msra.mxu0 0.0
    %1706 = vmatprep.subr.mxu0 0.0
    %1707 = vmatpush1.msra.mxu0 0.0
    %1708 = vmatprep.subr.mxu0 0.0
    %1709 = vmatpush1.msra.mxu0 0.0
    %1710 = vmatprep.subr.mxu0 0.0
    %1711 = vmatpush1.msra.mxu0 0.0
    %1712 = vmatprep.subr.mxu0 0.0
    %1713 = vmatpush1.msra.mxu0 0.0
    %1714 = vmatprep.subr.mxu0 0.0
    %1715 = vmatpush1.msra.mxu0 0.0
    %1716 = vmatprep.subr.mxu0 0.0
    %1717 = vmatpush1.msra.mxu0 0.0
    %1718 = vmatprep.subr.mxu0 0.0
    %1719 = vmatpush1.msra.mxu0 0.0
    %1720 = vmatprep.subr.mxu0 0.0
    %1721 = vmatpush1.msra.mxu0 0.0
    %1722 = vmatprep.mubr.f32.mxu0 0.0
    %1723 = vmatmul.mubr.f32.gmra.mrb[0].mxu0 %v1656
    %v1724 = vpop.f32.mrb[0].mxu0
    %v1725 = vadd.f32 %v615, %v1724
    %v1726 = vpop.f32.mrb[0].mxu0
    %v1727 = vadd.f32 %v619, %v1726
    %1728 = vdwg.mxu0
    %1729 = vmatprep.subr.mxu0 %v549
    %1730 = vmatpush1.msra.mxu0 %v548
    %1731 = vmatprep.subr.mxu0 %v553
    %1732 = vmatpush1.msra.mxu0 %v552
    %1733 = vmatprep.subr.mxu0 %v557
    %1734 = vmatpush1.msra.mxu0 %v556
    %1735 = vmatprep.subr.mxu0 %v561
    %1736 = vmatpush1.msra.mxu0 %v560
    %1737 = vmatprep.subr.mxu0 %v565
    %1738 = vmatpush1.msra.mxu0 %v564
    %1739 = vmatprep.subr.mxu0 %v569
    %1740 = vmatpush1.msra.mxu0 %v568
    %1741 = vmatprep.subr.mxu0 %v573
    %1742 = vmatpush1.msra.mxu0 %v572
    %1743 = vmatprep.subr.mxu0 %v577
    %1744 = vmatpush1.msra.mxu0 %v576
    %1745 = vmatprep.subr.mxu0 %v581
    %1746 = vmatpush1.msra.mxu0 %v580
    %1747 = vmatprep.subr.mxu0 %v585
    %1748 = vmatpush1.msra.mxu0 %v584
    %1749 = vmatprep.subr.mxu0 %v589
    %1750 = vmatpush1.msra.mxu0 %v588
    %1751 = vmatprep.subr.mxu0 %v593
    %1752 = vmatpush1.msra.mxu0 %v592
    %1753 = vmatprep.subr.mxu0 %v597
    %1754 = vmatpush1.msra.mxu0 %v596
    %1755 = vmatprep.subr.mxu0 %v601
    %1756 = vmatpush1.msra.mxu0 %v600
    %1757 = vmatprep.subr.mxu0 %v605
    %1758 = vmatpush1.msra.mxu0 %v604
    %1759 = vmatprep.subr.mxu0 %v609
    %1760 = vmatpush1.msra.mxu0 %v608
    %1761 = vmatprep.subr.mxu0 0.0
    %1762 = vmatpush1.msra.mxu0 0.0
    %1763 = vmatprep.subr.mxu0 0.0
    %1764 = vmatpush1.msra.mxu0 0.0
    %1765 = vmatprep.subr.mxu0 0.0
    %1766 = vmatpush1.msra.mxu0 0.0
    %1767 = vmatprep.subr.mxu0 0.0
    %1768 = vmatpush1.msra.mxu0 0.0
    %1769 = vmatprep.subr.mxu0 0.0
    %1770 = vmatpush1.msra.mxu0 0.0
    %1771 = vmatprep.subr.mxu0 0.0
    %1772 = vmatpush1.msra.mxu0 0.0
    %1773 = vmatprep.subr.mxu0 0.0
    %1774 = vmatpush1.msra.mxu0 0.0
    %1775 = vmatprep.subr.mxu0 0.0
    %1776 = vmatpush1.msra.mxu0 0.0
    %1777 = vmatprep.subr.mxu0 0.0
    %1778 = vmatpush1.msra.mxu0 0.0
    %1779 = vmatprep.subr.mxu0 0.0
    %1780 = vmatpush1.msra.mxu0 0.0
    %1781 = vmatprep.subr.mxu0 0.0
    %1782 = vmatpush1.msra.mxu0 0.0
    %1783 = vmatprep.subr.mxu0 0.0
    %1784 = vmatpush1.msra.mxu0 0.0
    %1785 = vmatprep.subr.mxu0 0.0
    %1786 = vmatpush1.msra.mxu0 0.0
    %1787 = vmatprep.subr.mxu0 0.0
    %1788 = vmatpush1.msra.mxu0 0.0
    %1789 = vmatprep.subr.mxu0 0.0
    %1790 = vmatpush1.msra.mxu0 0.0
    %1791 = vmatprep.subr.mxu0 0.0
    %1792 = vmatpush1.msra.mxu0 0.0
    %1793 = vmatprep.mubr.f32.mxu0 0.0
    %1794 = vmatmul.mubr.f32.gmra.mrb[0].mxu0 %v1656
    %v1795 = vpop.f32.mrb[0].mxu0
    %v1796 = vadd.f32 %v623, %v1795
    %v1797 = vpop.f32.mrb[0].mxu0
    %v1798 = vadd.f32 %v627, %v1797
    %1799 = vdwg.mxu0
    %1800 = vmatprep.subr.mxu0 %v775
    %1801 = vmatpush1.msra.mxu0 %v774
    %1802 = vmatprep.subr.mxu0 %v779
    %1803 = vmatpush1.msra.mxu0 %v778
    %1804 = vmatprep.subr.mxu0 %v783
    %1805 = vmatpush1.msra.mxu0 %v782
    %1806 = vmatprep.subr.mxu0 %v787
    %1807 = vmatpush1.msra.mxu0 %v786
    %1808 = vmatprep.subr.mxu0 %v791
    %1809 = vmatpush1.msra.mxu0 %v790
    %1810 = vmatprep.subr.mxu0 %v795
    %1811 = vmatpush1.msra.mxu0 %v794
    %1812 = vmatprep.subr.mxu0 %v799
    %1813 = vmatpush1.msra.mxu0 %v798
    %1814 = vmatprep.subr.mxu0 %v803
    %1815 = vmatpush1.msra.mxu0 %v802
    %1816 = vmatprep.subr.mxu0 %v807
    %1817 = vmatpush1.msra.mxu0 %v806
    %1818 = vmatprep.subr.mxu0 %v811
    %1819 = vmatpush1.msra.mxu0 %v810
    %1820 = vmatprep.subr.mxu0 %v815
    %1821 = vmatpush1.msra.mxu0 %v814
    %1822 = vmatprep.subr.mxu0 %v819
    %1823 = vmatpush1.msra.mxu0 %v818
    %1824 = vmatprep.subr.mxu0 %v823
    %1825 = vmatpush1.msra.mxu0 %v822
    %1826 = vmatprep.subr.mxu0 %v827
    %1827 = vmatpush1.msra.mxu0 %v826
    %1828 = vmatprep.subr.mxu0 %v831
    %1829 = vmatpush1.msra.mxu0 %v830
    %1830 = vmatprep.subr.mxu0 %v835
    %1831 = vmatpush1.msra.mxu0 %v834
    %1832 = vmatprep.subr.mxu0 0.0
    %1833 = vmatpush1.msra.mxu0 0.0
    %1834 = vmatprep.subr.mxu0 0.0
    %1835 = vmatpush1.msra.mxu0 0.0
    %1836 = vmatprep.subr.mxu0 0.0
    %1837 = vmatpush1.msra.mxu0 0.0
    %1838 = vmatprep.subr.mxu0 0.0
    %1839 = vmatpush1.msra.mxu0 0.0
    %1840 = vmatprep.subr.mxu0 0.0
    %1841 = vmatpush1.msra.mxu0 0.0
    %1842 = vmatprep.subr.mxu0 0.0
    %1843 = vmatpush1.msra.mxu0 0.0
    %1844 = vmatprep.subr.mxu0 0.0
    %1845 = vmatpush1.msra.mxu0 0.0
    %1846 = vmatprep.subr.mxu0 0.0
    %1847 = vmatpush1.msra.mxu0 0.0
    %1848 = vmatprep.subr.mxu0 0.0
    %1849 = vmatpush1.msra.mxu0 0.0
    %1850 = vmatprep.subr.mxu0 0.0
    %1851 = vmatpush1.msra.mxu0 0.0
    %1852 = vmatprep.subr.mxu0 0.0
    %1853 = vmatpush1.msra.mxu0 0.0
    %1854 = vmatprep.subr.mxu0 0.0
    %1855 = vmatpush1.msra.mxu0 0.0
    %1856 = vmatprep.subr.mxu0 0.0
    %1857 = vmatpush1.msra.mxu0 0.0
    %1858 = vmatprep.subr.mxu0 0.0
    %1859 = vmatpush1.msra.mxu0 0.0
    %1860 = vmatprep.subr.mxu0 0.0
    %1861 = vmatpush1.msra.mxu0 0.0
    %1862 = vmatprep.subr.mxu0 0.0
    %1863 = vmatpush1.msra.mxu0 0.0
    %1864 = vmatprep.mubr.f32.mxu0 0.0
    %1865 = vmatmul.mubr.f32.gmra.mrb[0].mxu0 %v1007
    %v1866 = vpop.f32.mrb[0].mxu0
    %v1867 = vadd.f32 0.0, %v1866
    %v1868 = vpop.f32.mrb[0].mxu0
    %v1869 = vadd.f32 0.0, %v1868
    %1870 = vdwg.mxu0
    %1871 = vmatprep.subr.mxu0 %v777
    %1872 = vmatpush1.msra.mxu0 %v776
    %1873 = vmatprep.subr.mxu0 %v781
    %1874 = vmatpush1.msra.mxu0 %v780
    %1875 = vmatprep.subr.mxu0 %v785
    %1876 = vmatpush1.msra.mxu0 %v784
    %1877 = vmatprep.subr.mxu0 %v789
    %1878 = vmatpush1.msra.mxu0 %v788
    %1879 = vmatprep.subr.mxu0 %v793
    %1880 = vmatpush1.msra.mxu0 %v792
    %1881 = vmatprep.subr.mxu0 %v797
    %1882 = vmatpush1.msra.mxu0 %v796
    %1883 = vmatprep.subr.mxu0 %v801
    %1884 = vmatpush1.msra.mxu0 %v800
    %1885 = vmatprep.subr.mxu0 %v805
    %1886 = vmatpush1.msra.mxu0 %v804
    %1887 = vmatprep.subr.mxu0 %v809
    %1888 = vmatpush1.msra.mxu0 %v808
    %1889 = vmatprep.subr.mxu0 %v813
    %1890 = vmatpush1.msra.mxu0 %v812
    %1891 = vmatprep.subr.mxu0 %v817
    %1892 = vmatpush1.msra.mxu0 %v816
    %1893 = vmatprep.subr.mxu0 %v821
    %1894 = vmatpush1.msra.mxu0 %v820
    %1895 = vmatprep.subr.mxu0 %v825
    %1896 = vmatpush1.msra.mxu0 %v824
    %1897 = vmatprep.subr.mxu0 %v829
    %1898 = vmatpush1.msra.mxu0 %v828
    %1899 = vmatprep.subr.mxu0 %v833
    %1900 = vmatpush1.msra.mxu0 %v832
    %1901 = vmatprep.subr.mxu0 %v837
    %1902 = vmatpush1.msra.mxu0 %v836
    %1903 = vmatprep.subr.mxu0 0.0
    %1904 = vmatpush1.msra.mxu0 0.0
    %1905 = vmatprep.subr.mxu0 0.0
    %1906 = vmatpush1.msra.mxu0 0.0
    %1907 = vmatprep.subr.mxu0 0.0
    %1908 = vmatpush1.msra.mxu0 0.0
    %1909 = vmatprep.subr.mxu0 0.0
    %1910 = vmatpush1.msra.mxu0 0.0
    %1911 = vmatprep.subr.mxu0 0.0
    %1912 = vmatpush1.msra.mxu0 0.0
    %1913 = vmatprep.subr.mxu0 0.0
    %1914 = vmatpush1.msra.mxu0 0.0
    %1915 = vmatprep.subr.mxu0 0.0
    %1916 = vmatpush1.msra.mxu0 0.0
    %1917 = vmatprep.subr.mxu0 0.0
    %1918 = vmatpush1.msra.mxu0 0.0
    %1919 = vmatprep.subr.mxu0 0.0
    %1920 = vmatpush1.msra.mxu0 0.0
    %1921 = vmatprep.subr.mxu0 0.0
    %1922 = vmatpush1.msra.mxu0 0.0
    %1923 = vmatprep.subr.mxu0 0.0
    %1924 = vmatpush1.msra.mxu0 0.0
    %1925 = vmatprep.subr.mxu0 0.0
    %1926 = vmatpush1.msra.mxu0 0.0
    %1927 = vmatprep.subr.mxu0 0.0
    %1928 = vmatpush1.msra.mxu0 0.0
    %1929 = vmatprep.subr.mxu0 0.0
    %1930 = vmatpush1.msra.mxu0 0.0
    %1931 = vmatprep.subr.mxu0 0.0
    %1932 = vmatpush1.msra.mxu0 0.0
    %1933 = vmatprep.subr.mxu0 0.0
    %1934 = vmatpush1.msra.mxu0 0.0
    %1935 = vmatprep.mubr.f32.mxu0 0.0
    %1936 = vmatmul.mubr.f32.gmra.mrb[0].mxu0 %v1007
    %v1937 = vpop.f32.mrb[0].mxu0
    %v1938 = vadd.f32 0.0, %v1937
    %v1939 = vpop.f32.mrb[0].mxu0
    %v1940 = vadd.f32 0.0, %v1939
    %1941 = vdwg.mxu0
    %v1942 = vadd.f32 %v1725, %v1867
    %v1943 = vadd.f32 %v1727, %v1869
    %v1944 = vadd.f32 %v1796, %v1938
    %v1945 = vadd.f32 %v1798, %v1940
    %v1946 = vxor.u32 %v1942, 2147483648
    %v1947 = vxor.u32 %v1943, 2147483648
    %v1948 = vxor.u32 %v1944, 2147483648
    %v1949 = vmul.f32 %v1946, 1.442695
    %v1950 = vpow.pop %v1949
    %v1951 = vmul.f32 %v1947, 1.442695
    %v1952 = vpow.pop %v1951
    %v1953 = vmul.f32 %v1948, 1.442695
    %v1954 = vpow.pop %v1953
    %v1955 = vadd.f32 %v1950, 1.0
    %v1956 = vadd.f32 %v1952, 1.0
    %v1957 = vadd.f32 %v1954, 1.0
    %v1958 = vrcp.pop %v1955
    %v1959 = vmul.f32 1.0, %v1958
    %v1960 = vrcp.pop %v1956
    %v1961 = vmul.f32 1.0, %v1960
    %v1962 = vrcp.pop %v1957
    %v1963 = vmul.f32 1.0, %v1962
    %v1964 = vtanh.pop %v1945
    %v1965 = vmul.f32 %v1961, %v1005
    %v1966 = vmul.f32 %v1959, %v1964
    %v1967 = vadd.f32 %v1965, %v1966
    %v1968 = vtanh.pop %v1967
    %v1969 = vmul.f32 %v1963, %v1968
    %1970 = vmatprep.subr.mxu0 %v1009
    %1971 = vmatpush1.msra.mxu0 %v1008
    %1972 = vmatprep.subr.mxu0 %v1013
    %1973 = vmatpush1.msra.mxu0 %v1012
    %1974 = vmatprep.subr.mxu0 %v1017
    %1975 = vmatpush1.msra.mxu0 %v1016
    %1976 = vmatprep.subr.mxu0 %v1021
    %1977 = vmatpush1.msra.mxu0 %v1020
    %1978 = vmatprep.subr.mxu0 %v1025
    %1979 = vmatpush1.msra.mxu0 %v1024
    %1980 = vmatprep.subr.mxu0 %v1029
    %1981 = vmatpush1.msra.mxu0 %v1028
    %1982 = vmatprep.subr.mxu0 %v1033
    %1983 = vmatpush1.msra.mxu0 %v1032
    %1984 = vmatprep.subr.mxu0 %v1037
    %1985 = vmatpush1.msra.mxu0 %v1036
    %1986 = vmatprep.subr.mxu0 %v1041
    %1987 = vmatpush1.msra.mxu0 %v1040
    %1988 = vmatprep.subr.mxu0 %v1045
    %1989 = vmatpush1.msra.mxu0 %v1044
    %1990 = vmatprep.subr.mxu0 %v1049
    %1991 = vmatpush1.msra.mxu0 %v1048
    %1992 = vmatprep.subr.mxu0 %v1053
    %1993 = vmatpush1.msra.mxu0 %v1052
    %1994 = vmatprep.subr.mxu0 %v1057
    %1995 = vmatpush1.msra.mxu0 %v1056
    %1996 = vmatprep.subr.mxu0 %v1061
    %1997 = vmatpush1.msra.mxu0 %v1060
    %1998 = vmatprep.subr.mxu0 %v1065
    %1999 = vmatpush1.msra.mxu0 %v1064
    %2000 = vmatprep.subr.mxu0 %v1069
    %2001 = vmatpush1.msra.mxu0 %v1068
    %2002 = vmatprep.subr.mxu0 0.0
    %2003 = vmatpush1.msra.mxu0 0.0
    %2004 = vmatprep.subr.mxu0 0.0
    %2005 = vmatpush1.msra.mxu0 0.0
    %2006 = vmatprep.subr.mxu0 0.0
    %2007 = vmatpush1.msra.mxu0 0.0
    %2008 = vmatprep.subr.mxu0 0.0
    %2009 = vmatpush1.msra.mxu0 0.0
    %2010 = vmatprep.subr.mxu0 0.0
    %2011 = vmatpush1.msra.mxu0 0.0
    %2012 = vmatprep.subr.mxu0 0.0
    %2013 = vmatpush1.msra.mxu0 0.0
    %2014 = vmatprep.subr.mxu0 0.0
    %2015 = vmatpush1.msra.mxu0 0.0
    %2016 = vmatprep.subr.mxu0 0.0
    %2017 = vmatpush1.msra.mxu0 0.0
    %2018 = vmatprep.subr.mxu0 0.0
    %2019 = vmatpush1.msra.mxu0 0.0
    %2020 = vmatprep.subr.mxu0 0.0
    %2021 = vmatpush1.msra.mxu0 0.0
    %2022 = vmatprep.subr.mxu0 0.0
    %2023 = vmatpush1.msra.mxu0 0.0
    %2024 = vmatprep.subr.mxu0 0.0
    %2025 = vmatpush1.msra.mxu0 0.0
    %2026 = vmatprep.subr.mxu0 0.0
    %2027 = vmatpush1.msra.mxu0 0.0
    %2028 = vmatprep.subr.mxu0 0.0
    %2029 = vmatpush1.msra.mxu0 0.0
    %2030 = vmatprep.subr.mxu0 0.0
    %2031 = vmatpush1.msra.mxu0 0.0
    %2032 = vmatprep.subr.mxu0 0.0
    %2033 = vmatpush1.msra.mxu0 0.0
    %2034 = vmatprep.mubr.f32.mxu0 0.0
    %2035 = vmatmul.mubr.f32.gmra.mrb[0].mxu0 %v1969
    %v2036 = vpop.f32.mrb[0].mxu0
    %v2037 = vadd.f32 %v1077, %v2036
    %v2038 = vpop.f32.mrb[0].mxu0
    %v2039 = vadd.f32 %v1081, %v2038
    %2040 = vdwg.mxu0
    %2041 = vmatprep.subr.mxu0 %v1011
    %2042 = vmatpush1.msra.mxu0 %v1010
    %2043 = vmatprep.subr.mxu0 %v1015
    %2044 = vmatpush1.msra.mxu0 %v1014
    %2045 = vmatprep.subr.mxu0 %v1019
    %2046 = vmatpush1.msra.mxu0 %v1018
    %2047 = vmatprep.subr.mxu0 %v1023
    %2048 = vmatpush1.msra.mxu0 %v1022
    %2049 = vmatprep.subr.mxu0 %v1027
    %2050 = vmatpush1.msra.mxu0 %v1026
    %2051 = vmatprep.subr.mxu0 %v1031
    %2052 = vmatpush1.msra.mxu0 %v1030
    %2053 = vmatprep.subr.mxu0 %v1035
    %2054 = vmatpush1.msra.mxu0 %v1034
    %2055 = vmatprep.subr.mxu0 %v1039
    %2056 = vmatpush1.msra.mxu0 %v1038
    %2057 = vmatprep.subr.mxu0 %v1043
    %2058 = vmatpush1.msra.mxu0 %v1042
    %2059 = vmatprep.subr.mxu0 %v1047
    %2060 = vmatpush1.msra.mxu0 %v1046
    %2061 = vmatprep.subr.mxu0 %v1051
    %2062 = vmatpush1.msra.mxu0 %v1050
    %2063 = vmatprep.subr.mxu0 %v1055
    %2064 = vmatpush1.msra.mxu0 %v1054
    %2065 = vmatprep.subr.mxu0 %v1059
    %2066 = vmatpush1.msra.mxu0 %v1058
    %2067 = vmatprep.subr.mxu0 %v1063
    %2068 = vmatpush1.msra.mxu0 %v1062
    %2069 = vmatprep.subr.mxu0 %v1067
    %2070 = vmatpush1.msra.mxu0 %v1066
    %2071 = vmatprep.subr.mxu0 %v1071
    %2072 = vmatpush1.msra.mxu0 %v1070
    %2073 = vmatprep.subr.mxu0 0.0
    %2074 = vmatpush1.msra.mxu0 0.0
    %2075 = vmatprep.subr.mxu0 0.0
    %2076 = vmatpush1.msra.mxu0 0.0
    %2077 = vmatprep.subr.mxu0 0.0
    %2078 = vmatpush1.msra.mxu0 0.0
    %2079 = vmatprep.subr.mxu0 0.0
    %2080 = vmatpush1.msra.mxu0 0.0
    %2081 = vmatprep.subr.mxu0 0.0
    %2082 = vmatpush1.msra.mxu0 0.0
    %2083 = vmatprep.subr.mxu0 0.0
    %2084 = vmatpush1.msra.mxu0 0.0
    %2085 = vmatprep.subr.mxu0 0.0
    %2086 = vmatpush1.msra.mxu0 0.0
    %2087 = vmatprep.subr.mxu0 0.0
    %2088 = vmatpush1.msra.mxu0 0.0
    %2089 = vmatprep.subr.mxu0 0.0
    %2090 = vmatpush1.msra.mxu0 0.0
    %2091 = vmatprep.subr.mxu0 0.0
    %2092 = vmatpush1.msra.mxu0 0.0
    %2093 = vmatprep.subr.mxu0 0.0
    %2094 = vmatpush1.msra.mxu0 0.0
    %2095 = vmatprep.subr.mxu0 0.0
    %2096 = vmatpush1.msra.mxu0 0.0
    %2097 = vmatprep.subr.mxu0 0.0
    %2098 = vmatpush1.msra.mxu0 0.0
    %2099 = vmatprep.subr.mxu0 0.0
    %2100 = vmatpush1.msra.mxu0 0.0
    %2101 = vmatprep.subr.mxu0 0.0
    %2102 = vmatpush1.msra.mxu0 0.0
    %2103 = vmatprep.subr.mxu0 0.0
    %2104 = vmatpush1.msra.mxu0 0.0
    %2105 = vmatprep.mubr.f32.mxu0 0.0
    %2106 = vmatmul.mubr.f32.gmra.mrb[0].mxu0 %v1969
    %v2107 = vpop.f32.mrb[0].mxu0
    %v2108 = vadd.f32 %v1085, %v2107
    %v2109 = vpop.f32.mrb[0].mxu0
    %v2110 = vadd.f32 %v1089, %v2109
    %2111 = vdwg.mxu0
    %2112 = vmatprep.subr.mxu0 %v1237
    %2113 = vmatpush1.msra.mxu0 %v1236
    %2114 = vmatprep.subr.mxu0 %v1241
    %2115 = vmatpush1.msra.mxu0 %v1240
    %2116 = vmatprep.subr.mxu0 %v1245
    %2117 = vmatpush1.msra.mxu0 %v1244
    %2118 = vmatprep.subr.mxu0 %v1249
    %2119 = vmatpush1.msra.mxu0 %v1248
    %2120 = vmatprep.subr.mxu0 %v1253
    %2121 = vmatpush1.msra.mxu0 %v1252
    %2122 = vmatprep.subr.mxu0 %v1257
    %2123 = vmatpush1.msra.mxu0 %v1256
    %2124 = vmatprep.subr.mxu0 %v1261
    %2125 = vmatpush1.msra.mxu0 %v1260
    %2126 = vmatprep.subr.mxu0 %v1265
    %2127 = vmatpush1.msra.mxu0 %v1264
    %2128 = vmatprep.subr.mxu0 %v1269
    %2129 = vmatpush1.msra.mxu0 %v1268
    %2130 = vmatprep.subr.mxu0 %v1273
    %2131 = vmatpush1.msra.mxu0 %v1272
    %2132 = vmatprep.subr.mxu0 %v1277
    %2133 = vmatpush1.msra.mxu0 %v1276
    %2134 = vmatprep.subr.mxu0 %v1281
    %2135 = vmatpush1.msra.mxu0 %v1280
    %2136 = vmatprep.subr.mxu0 %v1285
    %2137 = vmatpush1.msra.mxu0 %v1284
    %2138 = vmatprep.subr.mxu0 %v1289
    %2139 = vmatpush1.msra.mxu0 %v1288
    %2140 = vmatprep.subr.mxu0 %v1293
    %2141 = vmatpush1.msra.mxu0 %v1292
    %2142 = vmatprep.subr.mxu0 %v1297
    %2143 = vmatpush1.msra.mxu0 %v1296
    %2144 = vmatprep.subr.mxu0 0.0
    %2145 = vmatpush1.msra.mxu0 0.0
    %2146 = vmatprep.subr.mxu0 0.0
    %2147 = vmatpush1.msra.mxu0 0.0
    %2148 = vmatprep.subr.mxu0 0.0
    %2149 = vmatpush1.msra.mxu0 0.0
    %2150 = vmatprep.subr.mxu0 0.0
    %2151 = vmatpush1.msra.mxu0 0.0
    %2152 = vmatprep.subr.mxu0 0.0
    %2153 = vmatpush1.msra.mxu0 0.0
    %2154 = vmatprep.subr.mxu0 0.0
    %2155 = vmatpush1.msra.mxu0 0.0
    %2156 = vmatprep.subr.mxu0 0.0
    %2157 = vmatpush1.msra.mxu0 0.0
    %2158 = vmatprep.subr.mxu0 0.0
    %2159 = vmatpush1.msra.mxu0 0.0
    %2160 = vmatprep.subr.mxu0 0.0
    %2161 = vmatpush1.msra.mxu0 0.0
    %2162 = vmatprep.subr.mxu0 0.0
    %2163 = vmatpush1.msra.mxu0 0.0
    %2164 = vmatprep.subr.mxu0 0.0
    %2165 = vmatpush1.msra.mxu0 0.0
    %2166 = vmatprep.subr.mxu0 0.0
    %2167 = vmatpush1.msra.mxu0 0.0
    %2168 = vmatprep.subr.mxu0 0.0
    %2169 = vmatpush1.msra.mxu0 0.0
    %2170 = vmatprep.subr.mxu0 0.0
    %2171 = vmatpush1.msra.mxu0 0.0
    %2172 = vmatprep.subr.mxu0 0.0
    %2173 = vmatpush1.msra.mxu0 0.0
    %2174 = vmatprep.subr.mxu0 0.0
    %2175 = vmatpush1.msra.mxu0 0.0
    %2176 = vmatprep.mubr.f32.mxu0 0.0
    %2177 = vmatmul.mubr.f32.gmra.mrb[0].mxu0 %v1469
    %v2178 = vpop.f32.mrb[0].mxu0
    %v2179 = vadd.f32 0.0, %v2178
    %v2180 = vpop.f32.mrb[0].mxu0
    %v2181 = vadd.f32 0.0, %v2180
    %2182 = vdwg.mxu0
    %2183 = vmatprep.subr.mxu0 %v1239
    %2184 = vmatpush1.msra.mxu0 %v1238
    %2185 = vmatprep.subr.mxu0 %v1243
    %2186 = vmatpush1.msra.mxu0 %v1242
    %2187 = vmatprep.subr.mxu0 %v1247
    %2188 = vmatpush1.msra.mxu0 %v1246
    %2189 = vmatprep.subr.mxu0 %v1251
    %2190 = vmatpush1.msra.mxu0 %v1250
    %2191 = vmatprep.subr.mxu0 %v1255
    %2192 = vmatpush1.msra.mxu0 %v1254
    %2193 = vmatprep.subr.mxu0 %v1259
    %2194 = vmatpush1.msra.mxu0 %v1258
    %2195 = vmatprep.subr.mxu0 %v1263
    %2196 = vmatpush1.msra.mxu0 %v1262
    %2197 = vmatprep.subr.mxu0 %v1267
    %2198 = vmatpush1.msra.mxu0 %v1266
    %2199 = vmatprep.subr.mxu0 %v1271
    %2200 = vmatpush1.msra.mxu0 %v1270
    %2201 = vmatprep.subr.mxu0 %v1275
    %2202 = vmatpush1.msra.mxu0 %v1274
    %2203 = vmatprep.subr.mxu0 %v1279
    %2204 = vmatpush1.msra.mxu0 %v1278
    %2205 = vmatprep.subr.mxu0 %v1283
    %2206 = vmatpush1.msra.mxu0 %v1282
    %2207 = vmatprep.subr.mxu0 %v1287
    %2208 = vmatpush1.msra.mxu0 %v1286
    %2209 = vmatprep.subr.mxu0 %v1291
    %2210 = vmatpush1.msra.mxu0 %v1290
    %2211 = vmatprep.subr.mxu0 %v1295
    %2212 = vmatpush1.msra.mxu0 %v1294
    %2213 = vmatprep.subr.mxu0 %v1299
    %2214 = vmatpush1.msra.mxu0 %v1298
    %2215 = vmatprep.subr.mxu0 0.0
    %2216 = vmatpush1.msra.mxu0 0.0
    %2217 = vmatprep.subr.mxu0 0.0
    %2218 = vmatpush1.msra.mxu0 0.0
    %2219 = vmatprep.subr.mxu0 0.0
    %2220 = vmatpush1.msra.mxu0 0.0
    %2221 = vmatprep.subr.mxu0 0.0
    %2222 = vmatpush1.msra.mxu0 0.0
    %2223 = vmatprep.subr.mxu0 0.0
    %2224 = vmatpush1.msra.mxu0 0.0
    %2225 = vmatprep.subr.mxu0 0.0
    %2226 = vmatpush1.msra.mxu0 0.0
    %2227 = vmatprep.subr.mxu0 0.0
    %2228 = vmatpush1.msra.mxu0 0.0
    %2229 = vmatprep.subr.mxu0 0.0
    %2230 = vmatpush1.msra.mxu0 0.0
    %2231 = vmatprep.subr.mxu0 0.0
    %2232 = vmatpush1.msra.mxu0 0.0
    %2233 = vmatprep.subr.mxu0 0.0
    %2234 = vmatpush1.msra.mxu0 0.0
    %2235 = vmatprep.subr.mxu0 0.0
    %2236 = vmatpush1.msra.mxu0 0.0
    %2237 = vmatprep.subr.mxu0 0.0
    %2238 = vmatpush1.msra.mxu0 0.0
    %2239 = vmatprep.subr.mxu0 0.0
    %2240 = vmatpush1.msra.mxu0 0.0
    %2241 = vmatprep.subr.mxu0 0.0
    %2242 = vmatpush1.msra.mxu0 0.0
    %2243 = vmatprep.subr.mxu0 0.0
    %2244 = vmatpush1.msra.mxu0 0.0
    %2245 = vmatprep.subr.mxu0 0.0
    %2246 = vmatpush1.msra.mxu0 0.0
    %2247 = vmatprep.mubr.f32.mxu0 0.0
    %2248 = vmatmul.mubr.f32.gmra.mrb[0].mxu0 %v1469
    %v2249 = vpop.f32.mrb[0].mxu0
    %v2250 = vadd.f32 0.0, %v2249
    %v2251 = vpop.f32.mrb[0].mxu0
    %v2252 = vadd.f32 0.0, %v2251
    %2253 = vdwg.mxu0
    %v2254 = vadd.f32 %v2037, %v2179
    %v2255 = vadd.f32 %v2039, %v2181
    %v2256 = vadd.f32 %v2108, %v2250
    %v2257 = vadd.f32 %v2110, %v2252
    %v2258 = vxor.u32 %v2254, 2147483648
    %v2259 = vxor.u32 %v2255, 2147483648
    %v2260 = vxor.u32 %v2256, 2147483648
    %v2261 = vmul.f32 %v2258, 1.442695
    %v2262 = vpow.pop %v2261
    %v2263 = vmul.f32 %v2259, 1.442695
    %v2264 = vpow.pop %v2263
    %v2265 = vmul.f32 %v2260, 1.442695
    %v2266 = vpow.pop %v2265
    %v2267 = vadd.f32 %v2262, 1.0
    %v2268 = vadd.f32 %v2264, 1.0
    %v2269 = vadd.f32 %v2266, 1.0
    %v2270 = vrcp.pop %v2267
    %v2271 = vmul.f32 1.0, %v2270
    %v2272 = vrcp.pop %v2268
    %v2273 = vmul.f32 1.0, %v2272
    %v2274 = vrcp.pop %v2269
    %v2275 = vmul.f32 1.0, %v2274
    %v2276 = vtanh.pop %v2257
    %v2277 = vmul.f32 %v2273, %v1467
    %v2278 = vmul.f32 %v2271, %v2276
    %v2279 = vadd.f32 %v2277, %v2278
    %v2280 = vtanh.pop %v2279
    %v2281 = vmul.f32 %v2275, %v2280
    %2282 = vmatprep.subr.mxu0 %v313
    %2283 = vmatpush1.msra.mxu0 %v312
    %2284 = vmatprep.subr.mxu0 %v317
    %2285 = vmatpush1.msra.mxu0 %v316
    %2286 = vmatprep.subr.mxu0 %v321
    %2287 = vmatpush1.msra.mxu0 %v320
    %2288 = vmatprep.subr.mxu0 %v325
    %2289 = vmatpush1.msra.mxu0 %v324
    %2290 = vmatprep.subr.mxu0 %v329
    %2291 = vmatpush1.msra.mxu0 %v328
    %2292 = vmatprep.subr.mxu0 %v333
    %2293 = vmatpush1.msra.mxu0 %v332
    %2294 = vmatprep.subr.mxu0 %v337
    %2295 = vmatpush1.msra.mxu0 %v336
    %2296 = vmatprep.subr.mxu0 %v341
    %2297 = vmatpush1.msra.mxu0 %v340
    %2298 = vmatprep.subr.mxu0 %v345
    %2299 = vmatpush1.msra.mxu0 %v344
    %2300 = vmatprep.subr.mxu0 %v349
    %2301 = vmatpush1.msra.mxu0 %v348
    %2302 = vmatprep.subr.mxu0 %v353
    %2303 = vmatpush1.msra.mxu0 %v352
    %2304 = vmatprep.subr.mxu0 %v357
    %2305 = vmatpush1.msra.mxu0 %v356
    %2306 = vmatprep.subr.mxu0 %v361
    %2307 = vmatpush1.msra.mxu0 %v360
    %2308 = vmatprep.subr.mxu0 %v365
    %2309 = vmatpush1.msra.mxu0 %v364
    %2310 = vmatprep.subr.mxu0 %v369
    %2311 = vmatpush1.msra.mxu0 %v368
    %2312 = vmatprep.subr.mxu0 %v373
    %2313 = vmatpush1.msra.mxu0 %v372
    %2314 = vmatprep.subr.mxu0 0.0
    %2315 = vmatpush1.msra.mxu0 0.0
    %2316 = vmatprep.subr.mxu0 0.0
    %2317 = vmatpush1.msra.mxu0 0.0
    %2318 = vmatprep.subr.mxu0 0.0
    %2319 = vmatpush1.msra.mxu0 0.0
    %2320 = vmatprep.subr.mxu0 0.0
    %2321 = vmatpush1.msra.mxu0 0.0
    %2322 = vmatprep.subr.mxu0 0.0
    %2323 = vmatpush1.msra.mxu0 0.0
    %2324 = vmatprep.subr.mxu0 0.0
    %2325 = vmatpush1.msra.mxu0 0.0
    %2326 = vmatprep.subr.mxu0 0.0
    %2327 = vmatpush1.msra.mxu0 0.0
    %2328 = vmatprep.subr.mxu0 0.0
    %2329 = vmatpush1.msra.mxu0 0.0
    %2330 = vmatprep.subr.mxu0 0.0
    %2331 = vmatpush1.msra.mxu0 0.0
    %2332 = vmatprep.subr.mxu0 0.0
    %2333 = vmatpush1.msra.mxu0 0.0
    %2334 = vmatprep.subr.mxu0 0.0
    %2335 = vmatpush1.msra.mxu0 0.0
    %2336 = vmatprep.subr.mxu0 0.0
    %2337 = vmatpush1.msra.mxu0 0.0
    %2338 = vmatprep.subr.mxu0 0.0
    %2339 = vmatpush1.msra.mxu0 0.0
    %2340 = vmatprep.subr.mxu0 0.0
    %2341 = vmatpush1.msra.mxu0 0.0
    %2342 = vmatprep.subr.mxu0 0.0
    %2343 = vmatpush1.msra.mxu0 0.0
    %2344 = vmatprep.subr.mxu0 0.0
    %2345 = vmatpush1.msra.mxu0 0.0
    %2346 = vmatprep.mubr.f32.mxu0 0.0
    %2347 = vmatmul.mubr.f32.gmra.mrb[0].mxu0 %v1656
    %v2348 = vpop.f32.mrb[0].mxu0
    %v2349 = vadd.f32 0.0, %v2348
    %v2350 = vpop.f32.mrb[0].mxu0
    %v2351 = vadd.f32 0.0, %v2350
    %2352 = vdwg.mxu0
    %2353 = vmatprep.subr.mxu0 %v315
    %2354 = vmatpush1.msra.mxu0 %v314
    %2355 = vmatprep.subr.mxu0 %v319
    %2356 = vmatpush1.msra.mxu0 %v318
    %2357 = vmatprep.subr.mxu0 %v323
    %2358 = vmatpush1.msra.mxu0 %v322
    %2359 = vmatprep.subr.mxu0 %v327
    %2360 = vmatpush1.msra.mxu0 %v326
    %2361 = vmatprep.subr.mxu0 %v331
    %2362 = vmatpush1.msra.mxu0 %v330
    %2363 = vmatprep.subr.mxu0 %v335
    %2364 = vmatpush1.msra.mxu0 %v334
    %2365 = vmatprep.subr.mxu0 %v339
    %2366 = vmatpush1.msra.mxu0 %v338
    %2367 = vmatprep.subr.mxu0 %v343
    %2368 = vmatpush1.msra.mxu0 %v342
    %2369 = vmatprep.subr.mxu0 %v347
    %2370 = vmatpush1.msra.mxu0 %v346
    %2371 = vmatprep.subr.mxu0 %v351
    %2372 = vmatpush1.msra.mxu0 %v350
    %2373 = vmatprep.subr.mxu0 %v355
    %2374 = vmatpush1.msra.mxu0 %v354
    %2375 = vmatprep.subr.mxu0 %v359
    %2376 = vmatpush1.msra.mxu0 %v358
    %2377 = vmatprep.subr.mxu0 %v363
    %2378 = vmatpush1.msra.mxu0 %v362
    %2379 = vmatprep.subr.mxu0 %v367
    %2380 = vmatpush1.msra.mxu0 %v366
    %2381 = vmatprep.subr.mxu0 %v371
    %2382 = vmatpush1.msra.mxu0 %v370
    %2383 = vmatprep.subr.mxu0 %v375
    %2384 = vmatpush1.msra.mxu0 %v374
    %2385 = vmatprep.subr.mxu0 0.0
    %2386 = vmatpush1.msra.mxu0 0.0
    %2387 = vmatprep.subr.mxu0 0.0
    %2388 = vmatpush1.msra.mxu0 0.0
    %2389 = vmatprep.subr.mxu0 0.0
    %2390 = vmatpush1.msra.mxu0 0.0
    %2391 = vmatprep.subr.mxu0 0.0
    %2392 = vmatpush1.msra.mxu0 0.0
    %2393 = vmatprep.subr.mxu0 0.0
    %2394 = vmatpush1.msra.mxu0 0.0
    %2395 = vmatprep.subr.mxu0 0.0
    %2396 = vmatpush1.msra.mxu0 0.0
    %2397 = vmatprep.subr.mxu0 0.0
    %2398 = vmatpush1.msra.mxu0 0.0
    %2399 = vmatprep.subr.mxu0 0.0
    %2400 = vmatpush1.msra.mxu0 0.0
    %2401 = vmatprep.subr.mxu0 0.0
    %2402 = vmatpush1.msra.mxu0 0.0
    %2403 = vmatprep.subr.mxu0 0.0
    %2404 = vmatpush1.msra.mxu0 0.0
    %2405 = vmatprep.subr.mxu0 0.0
    %2406 = vmatpush1.msra.mxu0 0.0
    %2407 = vmatprep.subr.mxu0 0.0
    %2408 = vmatpush1.msra.mxu0 0.0
    %2409 = vmatprep.subr.mxu0 0.0
    %2410 = vmatpush1.msra.mxu0 0.0
    %2411 = vmatprep.subr.mxu0 0.0
    %2412 = vmatpush1.msra.mxu0 0.0
    %2413 = vmatprep.subr.mxu0 0.0
    %2414 = vmatpush1.msra.mxu0 0.0
    %2415 = vmatprep.subr.mxu0 0.0
    %2416 = vmatpush1.msra.mxu0 0.0
    %2417 = vmatprep.mubr.f32.mxu0 0.0
    %2418 = vmatmul.mubr.f32.gmra.mrb[0].mxu0 %v1656
    %v2419 = vpop.f32.mrb[0].mxu0
    %v2420 = vadd.f32 0.0, %v2419
    %v2421 = vpop.f32.mrb[0].mxu0
    %v2422 = vadd.f32 0.0, %v2421
    %2423 = vdwg.mxu0
    %v2428 = vrot.slane %v2349, 6
    %v2429 = vrot.slane %v2351, 6
    %v2430 = vrot.slane %v2420, 6
    %v2431 = vrot.slane %v2422, 6
    %v2436 = vadd.f32 %v237, %v2428
    %v2437 = vadd.f32 %v239, %v2429
    %v2438 = vadd.f32 %v308, %v2430
    %v2439 = vadd.f32 %v310, %v2431
    %v2440 = vxor.u32 %v2436, 2147483648
    %v2441 = vxor.u32 %v2437, 2147483648
    %v2442 = vxor.u32 %v2438, 2147483648
    %v2443 = vmul.f32 %v2440, 1.442695
    %v2444 = vpow.pop %v2443
    %v2445 = vmul.f32 %v2441, 1.442695
    %v2446 = vpow.pop %v2445
    %v2447 = vmul.f32 %v2442, 1.442695
    %v2448 = vpow.pop %v2447
    %v2449 = vadd.f32 %v2444, 1.0
    %v2450 = vadd.f32 %v2446, 1.0
    %v2451 = vadd.f32 %v2448, 1.0
    %v2452 = vrcp.pop %v2449
    %v2453 = vmul.f32 1.0, %v2452
    %v2454 = vrcp.pop %v2450
    %v2455 = vmul.f32 1.0, %v2454
    %v2456 = vrcp.pop %v2451
    %v2457 = vmul.f32 1.0, %v2456
    %v2458 = vtanh.pop %v2439
    %v2460 = vrot.slane %v1652, 7
    %v2462 = vmul.f32 %v2455, %v2460
    %v2463 = vmul.f32 %v2453, %v2458
    %v2464 = vadd.f32 %v2462, %v2463
    %v2465 = vtanh.pop %v2464
    %v2466 = vmul.f32 %v2457, %v2465
    %v2468 = vrot.slane %v2466, 2
    %2470 = vmatprep.subr.mxu0 %v547
    %2471 = vmatpush1.msra.mxu0 %v546
    %2472 = vmatprep.subr.mxu0 %v551
    %2473 = vmatpush1.msra.mxu0 %v550
    %2474 = vmatprep.subr.mxu0 %v555
    %2475 = vmatpush1.msra.mxu0 %v554
    %2476 = vmatprep.subr.mxu0 %v559
    %2477 = vmatpush1.msra.mxu0 %v558
    %2478 = vmatprep.subr.mxu0 %v563
    %2479 = vmatpush1.msra.mxu0 %v562
    %2480 = vmatprep.subr.mxu0 %v567
    %2481 = vmatpush1.msra.mxu0 %v566
    %2482 = vmatprep.subr.mxu0 %v571
    %2483 = vmatpush1.msra.mxu0 %v570
    %2484 = vmatprep.subr.mxu0 %v575
    %2485 = vmatpush1.msra.mxu0 %v574
    %2486 = vmatprep.subr.mxu0 %v579
    %2487 = vmatpush1.msra.mxu0 %v578
    %2488 = vmatprep.subr.mxu0 %v583
    %2489 = vmatpush1.msra.mxu0 %v582
    %2490 = vmatprep.subr.mxu0 %v587
    %2491 = vmatpush1.msra.mxu0 %v586
    %2492 = vmatprep.subr.mxu0 %v591
    %2493 = vmatpush1.msra.mxu0 %v590
    %2494 = vmatprep.subr.mxu0 %v595
    %2495 = vmatpush1.msra.mxu0 %v594
    %2496 = vmatprep.subr.mxu0 %v599
    %2497 = vmatpush1.msra.mxu0 %v598
    %2498 = vmatprep.subr.mxu0 %v603
    %2499 = vmatpush1.msra.mxu0 %v602
    %2500 = vmatprep.subr.mxu0 %v607
    %2501 = vmatpush1.msra.mxu0 %v606
    %2502 = vmatprep.subr.mxu0 0.0
    %2503 = vmatpush1.msra.mxu0 0.0
    %2504 = vmatprep.subr.mxu0 0.0
    %2505 = vmatpush1.msra.mxu0 0.0
    %2506 = vmatprep.subr.mxu0 0.0
    %2507 = vmatpush1.msra.mxu0 0.0
    %2508 = vmatprep.subr.mxu0 0.0
    %2509 = vmatpush1.msra.mxu0 0.0
    %2510 = vmatprep.subr.mxu0 0.0
    %2511 = vmatpush1.msra.mxu0 0.0
    %2512 = vmatprep.subr.mxu0 0.0
    %2513 = vmatpush1.msra.mxu0 0.0
    %2514 = vmatprep.subr.mxu0 0.0
    %2515 = vmatpush1.msra.mxu0 0.0
    %2516 = vmatprep.subr.mxu0 0.0
    %2517 = vmatpush1.msra.mxu0 0.0
    %2518 = vmatprep.subr.mxu0 0.0
    %2519 = vmatpush1.msra.mxu0 0.0
    %2520 = vmatprep.subr.mxu0 0.0
    %2521 = vmatpush1.msra.mxu0 0.0
    %2522 = vmatprep.subr.mxu0 0.0
    %2523 = vmatpush1.msra.mxu0 0.0
    %2524 = vmatprep.subr.mxu0 0.0
    %2525 = vmatpush1.msra.mxu0 0.0
    %2526 = vmatprep.subr.mxu0 0.0
    %2527 = vmatpush1.msra.mxu0 0.0
    %2528 = vmatprep.subr.mxu0 0.0
    %2529 = vmatpush1.msra.mxu0 0.0
    %2530 = vmatprep.subr.mxu0 0.0
    %2531 = vmatpush1.msra.mxu0 0.0
    %2532 = vmatprep.subr.mxu0 0.0
    %2533 = vmatpush1.msra.mxu0 0.0
    %2534 = vmatprep.mubr.f32.mxu0 0.0
    %2535 = vmatmul.mubr.f32.gmra.mrb[0].mxu0 %v2468
    %v2536 = vpop.f32.mrb[0].mxu0
    %v2537 = vadd.f32 %v615, %v2536
    %v2538 = vpop.f32.mrb[0].mxu0
    %v2539 = vadd.f32 %v619, %v2538
    %2540 = vdwg.mxu0
    %2541 = vmatprep.subr.mxu0 %v549
    %2542 = vmatpush1.msra.mxu0 %v548
    %2543 = vmatprep.subr.mxu0 %v553
    %2544 = vmatpush1.msra.mxu0 %v552
    %2545 = vmatprep.subr.mxu0 %v557
    %2546 = vmatpush1.msra.mxu0 %v556
    %2547 = vmatprep.subr.mxu0 %v561
    %2548 = vmatpush1.msra.mxu0 %v560
    %2549 = vmatprep.subr.mxu0 %v565
    %2550 = vmatpush1.msra.mxu0 %v564
    %2551 = vmatprep.subr.mxu0 %v569
    %2552 = vmatpush1.msra.mxu0 %v568
    %2553 = vmatprep.subr.mxu0 %v573
    %2554 = vmatpush1.msra.mxu0 %v572
    %2555 = vmatprep.subr.mxu0 %v577
    %2556 = vmatpush1.msra.mxu0 %v576
    %2557 = vmatprep.subr.mxu0 %v581
    %2558 = vmatpush1.msra.mxu0 %v580
    %2559 = vmatprep.subr.mxu0 %v585
    %2560 = vmatpush1.msra.mxu0 %v584
    %2561 = vmatprep.subr.mxu0 %v589
    %2562 = vmatpush1.msra.mxu0 %v588
    %2563 = vmatprep.subr.mxu0 %v593
    %2564 = vmatpush1.msra.mxu0 %v592
    %2565 = vmatprep.subr.mxu0 %v597
    %2566 = vmatpush1.msra.mxu0 %v596
    %2567 = vmatprep.subr.mxu0 %v601
    %2568 = vmatpush1.msra.mxu0 %v600
    %2569 = vmatprep.subr.mxu0 %v605
    %2570 = vmatpush1.msra.mxu0 %v604
    %2571 = vmatprep.subr.mxu0 %v609
    %2572 = vmatpush1.msra.mxu0 %v608
    %2573 = vmatprep.subr.mxu0 0.0
    %2574 = vmatpush1.msra.mxu0 0.0
    %2575 = vmatprep.subr.mxu0 0.0
    %2576 = vmatpush1.msra.mxu0 0.0
    %2577 = vmatprep.subr.mxu0 0.0
    %2578 = vmatpush1.msra.mxu0 0.0
    %2579 = vmatprep.subr.mxu0 0.0
    %2580 = vmatpush1.msra.mxu0 0.0
    %2581 = vmatprep.subr.mxu0 0.0
    %2582 = vmatpush1.msra.mxu0 0.0
    %2583 = vmatprep.subr.mxu0 0.0
    %2584 = vmatpush1.msra.mxu0 0.0
    %2585 = vmatprep.subr.mxu0 0.0
    %2586 = vmatpush1.msra.mxu0 0.0
    %2587 = vmatprep.subr.mxu0 0.0
    %2588 = vmatpush1.msra.mxu0 0.0
    %2589 = vmatprep.subr.mxu0 0.0
    %2590 = vmatpush1.msra.mxu0 0.0
    %2591 = vmatprep.subr.mxu0 0.0
    %2592 = vmatpush1.msra.mxu0 0.0
    %2593 = vmatprep.subr.mxu0 0.0
    %2594 = vmatpush1.msra.mxu0 0.0
    %2595 = vmatprep.subr.mxu0 0.0
    %2596 = vmatpush1.msra.mxu0 0.0
    %2597 = vmatprep.subr.mxu0 0.0
    %2598 = vmatpush1.msra.mxu0 0.0
    %2599 = vmatprep.subr.mxu0 0.0
    %2600 = vmatpush1.msra.mxu0 0.0
    %2601 = vmatprep.subr.mxu0 0.0
    %2602 = vmatpush1.msra.mxu0 0.0
    %2603 = vmatprep.subr.mxu0 0.0
    %2604 = vmatpush1.msra.mxu0 0.0
    %2605 = vmatprep.mubr.f32.mxu0 0.0
    %2606 = vmatmul.mubr.f32.gmra.mrb[0].mxu0 %v2468
    %v2607 = vpop.f32.mrb[0].mxu0
    %v2608 = vadd.f32 %v623, %v2607
    %v2609 = vpop.f32.mrb[0].mxu0
    %v2610 = vadd.f32 %v627, %v2609
    %2611 = vdwg.mxu0
    %2612 = vmatprep.subr.mxu0 %v775
    %2613 = vmatpush1.msra.mxu0 %v774
    %2614 = vmatprep.subr.mxu0 %v779
    %2615 = vmatpush1.msra.mxu0 %v778
    %2616 = vmatprep.subr.mxu0 %v783
    %2617 = vmatpush1.msra.mxu0 %v782
    %2618 = vmatprep.subr.mxu0 %v787
    %2619 = vmatpush1.msra.mxu0 %v786
    %2620 = vmatprep.subr.mxu0 %v791
    %2621 = vmatpush1.msra.mxu0 %v790
    %2622 = vmatprep.subr.mxu0 %v795
    %2623 = vmatpush1.msra.mxu0 %v794
    %2624 = vmatprep.subr.mxu0 %v799
    %2625 = vmatpush1.msra.mxu0 %v798
    %2626 = vmatprep.subr.mxu0 %v803
    %2627 = vmatpush1.msra.mxu0 %v802
    %2628 = vmatprep.subr.mxu0 %v807
    %2629 = vmatpush1.msra.mxu0 %v806
    %2630 = vmatprep.subr.mxu0 %v811
    %2631 = vmatpush1.msra.mxu0 %v810
    %2632 = vmatprep.subr.mxu0 %v815
    %2633 = vmatpush1.msra.mxu0 %v814
    %2634 = vmatprep.subr.mxu0 %v819
    %2635 = vmatpush1.msra.mxu0 %v818
    %2636 = vmatprep.subr.mxu0 %v823
    %2637 = vmatpush1.msra.mxu0 %v822
    %2638 = vmatprep.subr.mxu0 %v827
    %2639 = vmatpush1.msra.mxu0 %v826
    %2640 = vmatprep.subr.mxu0 %v831
    %2641 = vmatpush1.msra.mxu0 %v830
    %2642 = vmatprep.subr.mxu0 %v835
    %2643 = vmatpush1.msra.mxu0 %v834
    %2644 = vmatprep.subr.mxu0 0.0
    %2645 = vmatpush1.msra.mxu0 0.0
    %2646 = vmatprep.subr.mxu0 0.0
    %2647 = vmatpush1.msra.mxu0 0.0
    %2648 = vmatprep.subr.mxu0 0.0
    %2649 = vmatpush1.msra.mxu0 0.0
    %2650 = vmatprep.subr.mxu0 0.0
    %2651 = vmatpush1.msra.mxu0 0.0
    %2652 = vmatprep.subr.mxu0 0.0
    %2653 = vmatpush1.msra.mxu0 0.0
    %2654 = vmatprep.subr.mxu0 0.0
    %2655 = vmatpush1.msra.mxu0 0.0
    %2656 = vmatprep.subr.mxu0 0.0
    %2657 = vmatpush1.msra.mxu0 0.0
    %2658 = vmatprep.subr.mxu0 0.0
    %2659 = vmatpush1.msra.mxu0 0.0
    %2660 = vmatprep.subr.mxu0 0.0
    %2661 = vmatpush1.msra.mxu0 0.0
    %2662 = vmatprep.subr.mxu0 0.0
    %2663 = vmatpush1.msra.mxu0 0.0
    %2664 = vmatprep.subr.mxu0 0.0
    %2665 = vmatpush1.msra.mxu0 0.0
    %2666 = vmatprep.subr.mxu0 0.0
    %2667 = vmatpush1.msra.mxu0 0.0
    %2668 = vmatprep.subr.mxu0 0.0
    %2669 = vmatpush1.msra.mxu0 0.0
    %2670 = vmatprep.subr.mxu0 0.0
    %2671 = vmatpush1.msra.mxu0 0.0
    %2672 = vmatprep.subr.mxu0 0.0
    %2673 = vmatpush1.msra.mxu0 0.0
    %2674 = vmatprep.subr.mxu0 0.0
    %2675 = vmatpush1.msra.mxu0 0.0
    %2676 = vmatprep.mubr.f32.mxu0 0.0
    %2677 = vmatmul.mubr.f32.gmra.mrb[0].mxu0 %v1969
    %v2678 = vpop.f32.mrb[0].mxu0
    %v2679 = vadd.f32 0.0, %v2678
    %v2680 = vpop.f32.mrb[0].mxu0
    %v2681 = vadd.f32 0.0, %v2680
    %2682 = vdwg.mxu0
    %2683 = vmatprep.subr.mxu0 %v777
    %2684 = vmatpush1.msra.mxu0 %v776
    %2685 = vmatprep.subr.mxu0 %v781
    %2686 = vmatpush1.msra.mxu0 %v780
    %2687 = vmatprep.subr.mxu0 %v785
    %2688 = vmatpush1.msra.mxu0 %v784
    %2689 = vmatprep.subr.mxu0 %v789
    %2690 = vmatpush1.msra.mxu0 %v788
    %2691 = vmatprep.subr.mxu0 %v793
    %2692 = vmatpush1.msra.mxu0 %v792
    %2693 = vmatprep.subr.mxu0 %v797
    %2694 = vmatpush1.msra.mxu0 %v796
    %2695 = vmatprep.subr.mxu0 %v801
    %2696 = vmatpush1.msra.mxu0 %v800
    %2697 = vmatprep.subr.mxu0 %v805
    %2698 = vmatpush1.msra.mxu0 %v804
    %2699 = vmatprep.subr.mxu0 %v809
    %2700 = vmatpush1.msra.mxu0 %v808
    %2701 = vmatprep.subr.mxu0 %v813
    %2702 = vmatpush1.msra.mxu0 %v812
    %2703 = vmatprep.subr.mxu0 %v817
    %2704 = vmatpush1.msra.mxu0 %v816
    %2705 = vmatprep.subr.mxu0 %v821
    %2706 = vmatpush1.msra.mxu0 %v820
    %2707 = vmatprep.subr.mxu0 %v825
    %2708 = vmatpush1.msra.mxu0 %v824
    %2709 = vmatprep.subr.mxu0 %v829
    %2710 = vmatpush1.msra.mxu0 %v828
    %2711 = vmatprep.subr.mxu0 %v833
    %2712 = vmatpush1.msra.mxu0 %v832
    %2713 = vmatprep.subr.mxu0 %v837
    %2714 = vmatpush1.msra.mxu0 %v836
    %2715 = vmatprep.subr.mxu0 0.0
    %2716 = vmatpush1.msra.mxu0 0.0
    %2717 = vmatprep.subr.mxu0 0.0
    %2718 = vmatpush1.msra.mxu0 0.0
    %2719 = vmatprep.subr.mxu0 0.0
    %2720 = vmatpush1.msra.mxu0 0.0
    %2721 = vmatprep.subr.mxu0 0.0
    %2722 = vmatpush1.msra.mxu0 0.0
    %2723 = vmatprep.subr.mxu0 0.0
    %2724 = vmatpush1.msra.mxu0 0.0
    %2725 = vmatprep.subr.mxu0 0.0
    %2726 = vmatpush1.msra.mxu0 0.0
    %2727 = vmatprep.subr.mxu0 0.0
    %2728 = vmatpush1.msra.mxu0 0.0
    %2729 = vmatprep.subr.mxu0 0.0
    %2730 = vmatpush1.msra.mxu0 0.0
    %2731 = vmatprep.subr.mxu0 0.0
    %2732 = vmatpush1.msra.mxu0 0.0
    %2733 = vmatprep.subr.mxu0 0.0
    %2734 = vmatpush1.msra.mxu0 0.0
    %2735 = vmatprep.subr.mxu0 0.0
    %2736 = vmatpush1.msra.mxu0 0.0
    %2737 = vmatprep.subr.mxu0 0.0
    %2738 = vmatpush1.msra.mxu0 0.0
    %2739 = vmatprep.subr.mxu0 0.0
    %2740 = vmatpush1.msra.mxu0 0.0
    %2741 = vmatprep.subr.mxu0 0.0
    %2742 = vmatpush1.msra.mxu0 0.0
    %2743 = vmatprep.subr.mxu0 0.0
    %2744 = vmatpush1.msra.mxu0 0.0
    %2745 = vmatprep.subr.mxu0 0.0
    %2746 = vmatpush1.msra.mxu0 0.0
    %2747 = vmatprep.mubr.f32.mxu0 0.0
    %2748 = vmatmul.mubr.f32.gmra.mrb[0].mxu0 %v1969
    %v2749 = vpop.f32.mrb[0].mxu0
    %v2750 = vadd.f32 0.0, %v2749
    %v2751 = vpop.f32.mrb[0].mxu0
    %v2752 = vadd.f32 0.0, %v2751
    %2753 = vdwg.mxu0
    %v2754 = vadd.f32 %v2537, %v2679
    %v2755 = vadd.f32 %v2539, %v2681
    %v2756 = vadd.f32 %v2608, %v2750
    %v2757 = vadd.f32 %v2610, %v2752
    %v2758 = vxor.u32 %v2754, 2147483648
    %v2759 = vxor.u32 %v2755, 2147483648
    %v2760 = vxor.u32 %v2756, 2147483648
    %v2761 = vmul.f32 %v2758, 1.442695
    %v2762 = vpow.pop %v2761
    %v2763 = vmul.f32 %v2759, 1.442695
    %v2764 = vpow.pop %v2763
    %v2765 = vmul.f32 %v2760, 1.442695
    %v2766 = vpow.pop %v2765
    %v2767 = vadd.f32 %v2762, 1.0
    %v2768 = vadd.f32 %v2764, 1.0
    %v2769 = vadd.f32 %v2766, 1.0
    %v2770 = vrcp.pop %v2767
    %v2771 = vmul.f32 1.0, %v2770
    %v2772 = vrcp.pop %v2768
    %v2773 = vmul.f32 1.0, %v2772
    %v2774 = vrcp.pop %v2769
    %v2775 = vmul.f32 1.0, %v2774
    %v2776 = vtanh.pop %v2757
    %v2777 = vmul.f32 %v2773, %v1967
    %v2778 = vmul.f32 %v2771, %v2776
    %v2779 = vadd.f32 %v2777, %v2778
    %v2780 = vtanh.pop %v2779
    %v2781 = vmul.f32 %v2775, %v2780
    %2782 = vmatprep.subr.mxu0 %v1009
    %2783 = vmatpush1.msra.mxu0 %v1008
    %2784 = vmatprep.subr.mxu0 %v1013
    %2785 = vmatpush1.msra.mxu0 %v1012
    %2786 = vmatprep.subr.mxu0 %v1017
    %2787 = vmatpush1.msra.mxu0 %v1016
    %2788 = vmatprep.subr.mxu0 %v1021
    %2789 = vmatpush1.msra.mxu0 %v1020
    %2790 = vmatprep.subr.mxu0 %v1025
    %2791 = vmatpush1.msra.mxu0 %v1024
    %2792 = vmatprep.subr.mxu0 %v1029
    %2793 = vmatpush1.msra.mxu0 %v1028
    %2794 = vmatprep.subr.mxu0 %v1033
    %2795 = vmatpush1.msra.mxu0 %v1032
    %2796 = vmatprep.subr.mxu0 %v1037
    %2797 = vmatpush1.msra.mxu0 %v1036
    %2798 = vmatprep.subr.mxu0 %v1041
    %2799 = vmatpush1.msra.mxu0 %v1040
    %2800 = vmatprep.subr.mxu0 %v1045
    %2801 = vmatpush1.msra.mxu0 %v1044
    %2802 = vmatprep.subr.mxu0 %v1049
    %2803 = vmatpush1.msra.mxu0 %v1048
    %2804 = vmatprep.subr.mxu0 %v1053
    %2805 = vmatpush1.msra.mxu0 %v1052
    %2806 = vmatprep.subr.mxu0 %v1057
    %2807 = vmatpush1.msra.mxu0 %v1056
    %2808 = vmatprep.subr.mxu0 %v1061
    %2809 = vmatpush1.msra.mxu0 %v1060
    %2810 = vmatprep.subr.mxu0 %v1065
    %2811 = vmatpush1.msra.mxu0 %v1064
    %2812 = vmatprep.subr.mxu0 %v1069
    %2813 = vmatpush1.msra.mxu0 %v1068
    %2814 = vmatprep.subr.mxu0 0.0
    %2815 = vmatpush1.msra.mxu0 0.0
    %2816 = vmatprep.subr.mxu0 0.0
    %2817 = vmatpush1.msra.mxu0 0.0
    %2818 = vmatprep.subr.mxu0 0.0
    %2819 = vmatpush1.msra.mxu0 0.0
    %2820 = vmatprep.subr.mxu0 0.0
    %2821 = vmatpush1.msra.mxu0 0.0
    %2822 = vmatprep.subr.mxu0 0.0
    %2823 = vmatpush1.msra.mxu0 0.0
    %2824 = vmatprep.subr.mxu0 0.0
    %2825 = vmatpush1.msra.mxu0 0.0
    %2826 = vmatprep.subr.mxu0 0.0
    %2827 = vmatpush1.msra.mxu0 0.0
    %2828 = vmatprep.subr.mxu0 0.0
    %2829 = vmatpush1.msra.mxu0 0.0
    %2830 = vmatprep.subr.mxu0 0.0
    %2831 = vmatpush1.msra.mxu0 0.0
    %2832 = vmatprep.subr.mxu0 0.0
    %2833 = vmatpush1.msra.mxu0 0.0
    %2834 = vmatprep.subr.mxu0 0.0
    %2835 = vmatpush1.msra.mxu0 0.0
    %2836 = vmatprep.subr.mxu0 0.0
    %2837 = vmatpush1.msra.mxu0 0.0
    %2838 = vmatprep.subr.mxu0 0.0
    %2839 = vmatpush1.msra.mxu0 0.0
    %2840 = vmatprep.subr.mxu0 0.0
    %2841 = vmatpush1.msra.mxu0 0.0
    %2842 = vmatprep.subr.mxu0 0.0
    %2843 = vmatpush1.msra.mxu0 0.0
    %2844 = vmatprep.subr.mxu0 0.0
    %2845 = vmatpush1.msra.mxu0 0.0
    %2846 = vmatprep.mubr.f32.mxu0 0.0
    %2847 = vmatmul.mubr.f32.gmra.mrb[0].mxu0 %v2781
    %v2848 = vpop.f32.mrb[0].mxu0
    %v2849 = vadd.f32 %v1077, %v2848
    %v2850 = vpop.f32.mrb[0].mxu0
    %v2851 = vadd.f32 %v1081, %v2850
    %2852 = vdwg.mxu0
    %2853 = vmatprep.subr.mxu0 %v1011
    %2854 = vmatpush1.msra.mxu0 %v1010
    %2855 = vmatprep.subr.mxu0 %v1015
    %2856 = vmatpush1.msra.mxu0 %v1014
    %2857 = vmatprep.subr.mxu0 %v1019
    %2858 = vmatpush1.msra.mxu0 %v1018
    %2859 = vmatprep.subr.mxu0 %v1023
    %2860 = vmatpush1.msra.mxu0 %v1022
    %2861 = vmatprep.subr.mxu0 %v1027
    %2862 = vmatpush1.msra.mxu0 %v1026
    %2863 = vmatprep.subr.mxu0 %v1031
    %2864 = vmatpush1.msra.mxu0 %v1030
    %2865 = vmatprep.subr.mxu0 %v1035
    %2866 = vmatpush1.msra.mxu0 %v1034
    %2867 = vmatprep.subr.mxu0 %v1039
    %2868 = vmatpush1.msra.mxu0 %v1038
    %2869 = vmatprep.subr.mxu0 %v1043
    %2870 = vmatpush1.msra.mxu0 %v1042
    %2871 = vmatprep.subr.mxu0 %v1047
    %2872 = vmatpush1.msra.mxu0 %v1046
    %2873 = vmatprep.subr.mxu0 %v1051
    %2874 = vmatpush1.msra.mxu0 %v1050
    %2875 = vmatprep.subr.mxu0 %v1055
    %2876 = vmatpush1.msra.mxu0 %v1054
    %2877 = vmatprep.subr.mxu0 %v1059
    %2878 = vmatpush1.msra.mxu0 %v1058
    %2879 = vmatprep.subr.mxu0 %v1063
    %2880 = vmatpush1.msra.mxu0 %v1062
    %2881 = vmatprep.subr.mxu0 %v1067
    %2882 = vmatpush1.msra.mxu0 %v1066
    %2883 = vmatprep.subr.mxu0 %v1071
    %2884 = vmatpush1.msra.mxu0 %v1070
    %2885 = vmatprep.subr.mxu0 0.0
    %2886 = vmatpush1.msra.mxu0 0.0
    %2887 = vmatprep.subr.mxu0 0.0
    %2888 = vmatpush1.msra.mxu0 0.0
    %2889 = vmatprep.subr.mxu0 0.0
    %2890 = vmatpush1.msra.mxu0 0.0
    %2891 = vmatprep.subr.mxu0 0.0
    %2892 = vmatpush1.msra.mxu0 0.0
    %2893 = vmatprep.subr.mxu0 0.0
    %2894 = vmatpush1.msra.mxu0 0.0
    %2895 = vmatprep.subr.mxu0 0.0
    %2896 = vmatpush1.msra.mxu0 0.0
    %2897 = vmatprep.subr.mxu0 0.0
    %2898 = vmatpush1.msra.mxu0 0.0
    %2899 = vmatprep.subr.mxu0 0.0
    %2900 = vmatpush1.msra.mxu0 0.0
    %2901 = vmatprep.subr.mxu0 0.0
    %2902 = vmatpush1.msra.mxu0 0.0
    %2903 = vmatprep.subr.mxu0 0.0
    %2904 = vmatpush1.msra.mxu0 0.0
    %2905 = vmatprep.subr.mxu0 0.0
    %2906 = vmatpush1.msra.mxu0 0.0
    %2907 = vmatprep.subr.mxu0 0.0
    %2908 = vmatpush1.msra.mxu0 0.0
    %2909 = vmatprep.subr.mxu0 0.0
    %2910 = vmatpush1.msra.mxu0 0.0
    %2911 = vmatprep.subr.mxu0 0.0
    %2912 = vmatpush1.msra.mxu0 0.0
    %2913 = vmatprep.subr.mxu0 0.0
    %2914 = vmatpush1.msra.mxu0 0.0
    %2915 = vmatprep.subr.mxu0 0.0
    %2916 = vmatpush1.msra.mxu0 0.0
    %2917 = vmatprep.mubr.f32.mxu0 0.0
    %2918 = vmatmul.mubr.f32.gmra.mrb[0].mxu0 %v2781
    %v2919 = vpop.f32.mrb[0].mxu0
    %v2920 = vadd.f32 %v1085, %v2919
    %v2921 = vpop.f32.mrb[0].mxu0
    %v2922 = vadd.f32 %v1089, %v2921
    %2923 = vdwg.mxu0
    %2924 = vmatprep.subr.mxu0 %v1237
    %2925 = vmatpush1.msra.mxu0 %v1236
    %2926 = vmatprep.subr.mxu0 %v1241
    %2927 = vmatpush1.msra.mxu0 %v1240
    %2928 = vmatprep.subr.mxu0 %v1245
    %2929 = vmatpush1.msra.mxu0 %v1244
    %2930 = vmatprep.subr.mxu0 %v1249
    %2931 = vmatpush1.msra.mxu0 %v1248
    %2932 = vmatprep.subr.mxu0 %v1253
    %2933 = vmatpush1.msra.mxu0 %v1252
    %2934 = vmatprep.subr.mxu0 %v1257
    %2935 = vmatpush1.msra.mxu0 %v1256
    %2936 = vmatprep.subr.mxu0 %v1261
    %2937 = vmatpush1.msra.mxu0 %v1260
    %2938 = vmatprep.subr.mxu0 %v1265
    %2939 = vmatpush1.msra.mxu0 %v1264
    %2940 = vmatprep.subr.mxu0 %v1269
    %2941 = vmatpush1.msra.mxu0 %v1268
    %2942 = vmatprep.subr.mxu0 %v1273
    %2943 = vmatpush1.msra.mxu0 %v1272
    %2944 = vmatprep.subr.mxu0 %v1277
    %2945 = vmatpush1.msra.mxu0 %v1276
    %2946 = vmatprep.subr.mxu0 %v1281
    %2947 = vmatpush1.msra.mxu0 %v1280
    %2948 = vmatprep.subr.mxu0 %v1285
    %2949 = vmatpush1.msra.mxu0 %v1284
    %2950 = vmatprep.subr.mxu0 %v1289
    %2951 = vmatpush1.msra.mxu0 %v1288
    %2952 = vmatprep.subr.mxu0 %v1293
    %2953 = vmatpush1.msra.mxu0 %v1292
    %2954 = vmatprep.subr.mxu0 %v1297
    %2955 = vmatpush1.msra.mxu0 %v1296
    %2956 = vmatprep.subr.mxu0 0.0
    %2957 = vmatpush1.msra.mxu0 0.0
    %2958 = vmatprep.subr.mxu0 0.0
    %2959 = vmatpush1.msra.mxu0 0.0
    %2960 = vmatprep.subr.mxu0 0.0
    %2961 = vmatpush1.msra.mxu0 0.0
    %2962 = vmatprep.subr.mxu0 0.0
    %2963 = vmatpush1.msra.mxu0 0.0
    %2964 = vmatprep.subr.mxu0 0.0
    %2965 = vmatpush1.msra.mxu0 0.0
    %2966 = vmatprep.subr.mxu0 0.0
    %2967 = vmatpush1.msra.mxu0 0.0
    %2968 = vmatprep.subr.mxu0 0.0
    %2969 = vmatpush1.msra.mxu0 0.0
    %2970 = vmatprep.subr.mxu0 0.0
    %2971 = vmatpush1.msra.mxu0 0.0
    %2972 = vmatprep.subr.mxu0 0.0
    %2973 = vmatpush1.msra.mxu0 0.0
    %2974 = vmatprep.subr.mxu0 0.0
    %2975 = vmatpush1.msra.mxu0 0.0
    %2976 = vmatprep.subr.mxu0 0.0
    %2977 = vmatpush1.msra.mxu0 0.0
    %2978 = vmatprep.subr.mxu0 0.0
    %2979 = vmatpush1.msra.mxu0 0.0
    %2980 = vmatprep.subr.mxu0 0.0
    %2981 = vmatpush1.msra.mxu0 0.0
    %2982 = vmatprep.subr.mxu0 0.0
    %2983 = vmatpush1.msra.mxu0 0.0
    %2984 = vmatprep.subr.mxu0 0.0
    %2985 = vmatpush1.msra.mxu0 0.0
    %2986 = vmatprep.subr.mxu0 0.0
    %2987 = vmatpush1.msra.mxu0 0.0
    %2988 = vmatprep.mubr.f32.mxu0 0.0
    %2989 = vmatmul.mubr.f32.gmra.mrb[0].mxu0 %v2281
    %v2990 = vpop.f32.mrb[0].mxu0
    %v2991 = vadd.f32 0.0, %v2990
    %v2992 = vpop.f32.mrb[0].mxu0
    %v2993 = vadd.f32 0.0, %v2992
    %2994 = vdwg.mxu0
    %2995 = vmatprep.subr.mxu0 %v1239
    %2996 = vmatpush1.msra.mxu0 %v1238
    %2997 = vmatprep.subr.mxu0 %v1243
    %2998 = vmatpush1.msra.mxu0 %v1242
    %2999 = vmatprep.subr.mxu0 %v1247
    %3000 = vmatpush1.msra.mxu0 %v1246
    %3001 = vmatprep.subr.mxu0 %v1251
    %3002 = vmatpush1.msra.mxu0 %v1250
    %3003 = vmatprep.subr.mxu0 %v1255
    %3004 = vmatpush1.msra.mxu0 %v1254
    %3005 = vmatprep.subr.mxu0 %v1259
    %3006 = vmatpush1.msra.mxu0 %v1258
    %3007 = vmatprep.subr.mxu0 %v1263
    %3008 = vmatpush1.msra.mxu0 %v1262
    %3009 = vmatprep.subr.mxu0 %v1267
    %3010 = vmatpush1.msra.mxu0 %v1266
    %3011 = vmatprep.subr.mxu0 %v1271
    %3012 = vmatpush1.msra.mxu0 %v1270
    %3013 = vmatprep.subr.mxu0 %v1275
    %3014 = vmatpush1.msra.mxu0 %v1274
    %3015 = vmatprep.subr.mxu0 %v1279
    %3016 = vmatpush1.msra.mxu0 %v1278
    %3017 = vmatprep.subr.mxu0 %v1283
    %3018 = vmatpush1.msra.mxu0 %v1282
    %3019 = vmatprep.subr.mxu0 %v1287
    %3020 = vmatpush1.msra.mxu0 %v1286
    %3021 = vmatprep.subr.mxu0 %v1291
    %3022 = vmatpush1.msra.mxu0 %v1290
    %3023 = vmatprep.subr.mxu0 %v1295
    %3024 = vmatpush1.msra.mxu0 %v1294
    %3025 = vmatprep.subr.mxu0 %v1299
    %3026 = vmatpush1.msra.mxu0 %v1298
    %3027 = vmatprep.subr.mxu0 0.0
    %3028 = vmatpush1.msra.mxu0 0.0
    %3029 = vmatprep.subr.mxu0 0.0
    %3030 = vmatpush1.msra.mxu0 0.0
    %3031 = vmatprep.subr.mxu0 0.0
    %3032 = vmatpush1.msra.mxu0 0.0
    %3033 = vmatprep.subr.mxu0 0.0
    %3034 = vmatpush1.msra.mxu0 0.0
    %3035 = vmatprep.subr.mxu0 0.0
    %3036 = vmatpush1.msra.mxu0 0.0
    %3037 = vmatprep.subr.mxu0 0.0
    %3038 = vmatpush1.msra.mxu0 0.0
    %3039 = vmatprep.subr.mxu0 0.0
    %3040 = vmatpush1.msra.mxu0 0.0
    %3041 = vmatprep.subr.mxu0 0.0
    %3042 = vmatpush1.msra.mxu0 0.0
    %3043 = vmatprep.subr.mxu0 0.0
    %3044 = vmatpush1.msra.mxu0 0.0
    %3045 = vmatprep.subr.mxu0 0.0
    %3046 = vmatpush1.msra.mxu0 0.0
    %3047 = vmatprep.subr.mxu0 0.0
    %3048 = vmatpush1.msra.mxu0 0.0
    %3049 = vmatprep.subr.mxu0 0.0
    %3050 = vmatpush1.msra.mxu0 0.0
    %3051 = vmatprep.subr.mxu0 0.0
    %3052 = vmatpush1.msra.mxu0 0.0
    %3053 = vmatprep.subr.mxu0 0.0
    %3054 = vmatpush1.msra.mxu0 0.0
    %3055 = vmatprep.subr.mxu0 0.0
    %3056 = vmatpush1.msra.mxu0 0.0
    %3057 = vmatprep.subr.mxu0 0.0
    %3058 = vmatpush1.msra.mxu0 0.0
    %3059 = vmatprep.mubr.f32.mxu0 0.0
    %3060 = vmatmul.mubr.f32.gmra.mrb[0].mxu0 %v2281
    %v3061 = vpop.f32.mrb[0].mxu0
    %v3062 = vadd.f32 0.0, %v3061
    %v3063 = vpop.f32.mrb[0].mxu0
    %v3064 = vadd.f32 0.0, %v3063
    %3065 = vdwg.mxu0
    %v3066 = vadd.f32 %v2849, %v2991
    %v3067 = vadd.f32 %v2851, %v2993
    %v3068 = vadd.f32 %v2920, %v3062
    %v3069 = vadd.f32 %v2922, %v3064
    %v3070 = vxor.u32 %v3066, 2147483648
    %v3071 = vxor.u32 %v3067, 2147483648
    %v3072 = vxor.u32 %v3068, 2147483648
    %v3073 = vmul.f32 %v3070, 1.442695
    %v3074 = vpow.pop %v3073
    %v3075 = vmul.f32 %v3071, 1.442695
    %v3076 = vpow.pop %v3075
    %v3077 = vmul.f32 %v3072, 1.442695
    %v3078 = vpow.pop %v3077
    %v3079 = vadd.f32 %v3074, 1.0
    %v3080 = vadd.f32 %v3076, 1.0
    %v3081 = vadd.f32 %v3078, 1.0
    %v3082 = vrcp.pop %v3079
    %v3083 = vmul.f32 1.0, %v3082
    %v3084 = vrcp.pop %v3080
    %v3085 = vmul.f32 1.0, %v3084
    %v3086 = vrcp.pop %v3081
    %v3087 = vmul.f32 1.0, %v3086
    %v3088 = vtanh.pop %v3069
    %v3089 = vmul.f32 %v3085, %v2279
    %v3090 = vmul.f32 %v3083, %v3088
    %v3091 = vadd.f32 %v3089, %v3090
    %v3092 = vtanh.pop %v3091
    %v3093 = vmul.f32 %v3087, %v3092
    %3094 = vmatprep.subr.mxu0 %v313
    %3095 = vmatpush1.msra.mxu0 %v312
    %3096 = vmatprep.subr.mxu0 %v317
    %3097 = vmatpush1.msra.mxu0 %v316
    %3098 = vmatprep.subr.mxu0 %v321
    %3099 = vmatpush1.msra.mxu0 %v320
    %3100 = vmatprep.subr.mxu0 %v325
    %3101 = vmatpush1.msra.mxu0 %v324
    %3102 = vmatprep.subr.mxu0 %v329
    %3103 = vmatpush1.msra.mxu0 %v328
    %3104 = vmatprep.subr.mxu0 %v333
    %3105 = vmatpush1.msra.mxu0 %v332
    %3106 = vmatprep.subr.mxu0 %v337
    %3107 = vmatpush1.msra.mxu0 %v336
    %3108 = vmatprep.subr.mxu0 %v341
    %3109 = vmatpush1.msra.mxu0 %v340
    %3110 = vmatprep.subr.mxu0 %v345
    %3111 = vmatpush1.msra.mxu0 %v344
    %3112 = vmatprep.subr.mxu0 %v349
    %3113 = vmatpush1.msra.mxu0 %v348
    %3114 = vmatprep.subr.mxu0 %v353
    %3115 = vmatpush1.msra.mxu0 %v352
    %3116 = vmatprep.subr.mxu0 %v357
    %3117 = vmatpush1.msra.mxu0 %v356
    %3118 = vmatprep.subr.mxu0 %v361
    %3119 = vmatpush1.msra.mxu0 %v360
    %3120 = vmatprep.subr.mxu0 %v365
    %3121 = vmatpush1.msra.mxu0 %v364
    %3122 = vmatprep.subr.mxu0 %v369
    %3123 = vmatpush1.msra.mxu0 %v368
    %3124 = vmatprep.subr.mxu0 %v373
    %3125 = vmatpush1.msra.mxu0 %v372
    %3126 = vmatprep.subr.mxu0 0.0
    %3127 = vmatpush1.msra.mxu0 0.0
    %3128 = vmatprep.subr.mxu0 0.0
    %3129 = vmatpush1.msra.mxu0 0.0
    %3130 = vmatprep.subr.mxu0 0.0
    %3131 = vmatpush1.msra.mxu0 0.0
    %3132 = vmatprep.subr.mxu0 0.0
    %3133 = vmatpush1.msra.mxu0 0.0
    %3134 = vmatprep.subr.mxu0 0.0
    %3135 = vmatpush1.msra.mxu0 0.0
    %3136 = vmatprep.subr.mxu0 0.0
    %3137 = vmatpush1.msra.mxu0 0.0
    %3138 = vmatprep.subr.mxu0 0.0
    %3139 = vmatpush1.msra.mxu0 0.0
    %3140 = vmatprep.subr.mxu0 0.0
    %3141 = vmatpush1.msra.mxu0 0.0
    %3142 = vmatprep.subr.mxu0 0.0
    %3143 = vmatpush1.msra.mxu0 0.0
    %3144 = vmatprep.subr.mxu0 0.0
    %3145 = vmatpush1.msra.mxu0 0.0
    %3146 = vmatprep.subr.mxu0 0.0
    %3147 = vmatpush1.msra.mxu0 0.0
    %3148 = vmatprep.subr.mxu0 0.0
    %3149 = vmatpush1.msra.mxu0 0.0
    %3150 = vmatprep.subr.mxu0 0.0
    %3151 = vmatpush1.msra.mxu0 0.0
    %3152 = vmatprep.subr.mxu0 0.0
    %3153 = vmatpush1.msra.mxu0 0.0
    %3154 = vmatprep.subr.mxu0 0.0
    %3155 = vmatpush1.msra.mxu0 0.0
    %3156 = vmatprep.subr.mxu0 0.0
    %3157 = vmatpush1.msra.mxu0 0.0
    %3158 = vmatprep.mubr.f32.mxu0 0.0
    %3159 = vmatmul.mubr.f32.gmra.mrb[0].mxu0 %v2468
    %v3160 = vpop.f32.mrb[0].mxu0
    %v3161 = vadd.f32 0.0, %v3160
    %v3162 = vpop.f32.mrb[0].mxu0
    %v3163 = vadd.f32 0.0, %v3162
    %3164 = vdwg.mxu0
    %3165 = vmatprep.subr.mxu0 %v315
    %3166 = vmatpush1.msra.mxu0 %v314
    %3167 = vmatprep.subr.mxu0 %v319
    %3168 = vmatpush1.msra.mxu0 %v318
    %3169 = vmatprep.subr.mxu0 %v323
    %3170 = vmatpush1.msra.mxu0 %v322
    %3171 = vmatprep.subr.mxu0 %v327
    %3172 = vmatpush1.msra.mxu0 %v326
    %3173 = vmatprep.subr.mxu0 %v331
    %3174 = vmatpush1.msra.mxu0 %v330
    %3175 = vmatprep.subr.mxu0 %v335
    %3176 = vmatpush1.msra.mxu0 %v334
    %3177 = vmatprep.subr.mxu0 %v339
    %3178 = vmatpush1.msra.mxu0 %v338
    %3179 = vmatprep.subr.mxu0 %v343
    %3180 = vmatpush1.msra.mxu0 %v342
    %3181 = vmatprep.subr.mxu0 %v347
    %3182 = vmatpush1.msra.mxu0 %v346
    %3183 = vmatprep.subr.mxu0 %v351
    %3184 = vmatpush1.msra.mxu0 %v350
    %3185 = vmatprep.subr.mxu0 %v355
    %3186 = vmatpush1.msra.mxu0 %v354
    %3187 = vmatprep.subr.mxu0 %v359
    %3188 = vmatpush1.msra.mxu0 %v358
    %3189 = vmatprep.subr.mxu0 %v363
    %3190 = vmatpush1.msra.mxu0 %v362
    %3191 = vmatprep.subr.mxu0 %v367
    %3192 = vmatpush1.msra.mxu0 %v366
    %3193 = vmatprep.subr.mxu0 %v371
    %3194 = vmatpush1.msra.mxu0 %v370
    %3195 = vmatprep.subr.mxu0 %v375
    %3196 = vmatpush1.msra.mxu0 %v374
    %3197 = vmatprep.subr.mxu0 0.0
    %3198 = vmatpush1.msra.mxu0 0.0
    %3199 = vmatprep.subr.mxu0 0.0
    %3200 = vmatpush1.msra.mxu0 0.0
    %3201 = vmatprep.subr.mxu0 0.0
    %3202 = vmatpush1.msra.mxu0 0.0
    %3203 = vmatprep.subr.mxu0 0.0
    %3204 = vmatpush1.msra.mxu0 0.0
    %3205 = vmatprep.subr.mxu0 0.0
    %3206 = vmatpush1.msra.mxu0 0.0
    %3207 = vmatprep.subr.mxu0 0.0
    %3208 = vmatpush1.msra.mxu0 0.0
    %3209 = vmatprep.subr.mxu0 0.0
    %3210 = vmatpush1.msra.mxu0 0.0
    %3211 = vmatprep.subr.mxu0 0.0
    %3212 = vmatpush1.msra.mxu0 0.0
    %3213 = vmatprep.subr.mxu0 0.0
    %3214 = vmatpush1.msra.mxu0 0.0
    %3215 = vmatprep.subr.mxu0 0.0
    %3216 = vmatpush1.msra.mxu0 0.0
    %3217 = vmatprep.subr.mxu0 0.0
    %3218 = vmatpush1.msra.mxu0 0.0
    %3219 = vmatprep.subr.mxu0 0.0
    %3220 = vmatpush1.msra.mxu0 0.0
    %3221 = vmatprep.subr.mxu0 0.0
    %3222 = vmatpush1.msra.mxu0 0.0
    %3223 = vmatprep.subr.mxu0 0.0
    %3224 = vmatpush1.msra.mxu0 0.0
    %3225 = vmatprep.subr.mxu0 0.0
    %3226 = vmatpush1.msra.mxu0 0.0
    %3227 = vmatprep.subr.mxu0 0.0
    %3228 = vmatpush1.msra.mxu0 0.0
    %3229 = vmatprep.mubr.f32.mxu0 0.0
    %3230 = vmatmul.mubr.f32.gmra.mrb[0].mxu0 %v2468
    %v3231 = vpop.f32.mrb[0].mxu0
    %v3232 = vadd.f32 0.0, %v3231
    %v3233 = vpop.f32.mrb[0].mxu0
    %v3234 = vadd.f32 0.0, %v3233
    %3235 = vdwg.mxu0
    %v3240 = vrot.slane %v3161, 5
    %v3241 = vrot.slane %v3163, 5
    %v3242 = vrot.slane %v3232, 5
    %v3243 = vrot.slane %v3234, 5
    %v3248 = vadd.f32 %v237, %v3240
    %v3249 = vadd.f32 %v239, %v3241
    %v3250 = vadd.f32 %v308, %v3242
    %v3251 = vadd.f32 %v310, %v3243
    %v3252 = vxor.u32 %v3248, 2147483648
    %v3253 = vxor.u32 %v3249, 2147483648
    %v3254 = vxor.u32 %v3250, 2147483648
    %v3255 = vmul.f32 %v3252, 1.442695
    %v3256 = vpow.pop %v3255
    %v3257 = vmul.f32 %v3253, 1.442695
    %v3258 = vpow.pop %v3257
    %v3259 = vmul.f32 %v3254, 1.442695
    %v3260 = vpow.pop %v3259
    %v3261 = vadd.f32 %v3256, 1.0
    %v3262 = vadd.f32 %v3258, 1.0
    %v3263 = vadd.f32 %v3260, 1.0
    %v3264 = vrcp.pop %v3261
    %v3265 = vmul.f32 1.0, %v3264
    %v3266 = vrcp.pop %v3262
    %v3267 = vmul.f32 1.0, %v3266
    %v3268 = vrcp.pop %v3263
    %v3269 = vmul.f32 1.0, %v3268
    %v3270 = vtanh.pop %v3251
    %v3272 = vrot.slane %v2464, 7
    %v3274 = vmul.f32 %v3267, %v3272
    %v3275 = vmul.f32 %v3265, %v3270
    %v3276 = vadd.f32 %v3274, %v3275
    %v3277 = vtanh.pop %v3276
    %v3278 = vmul.f32 %v3269, %v3277
    %v3280 = vrot.slane %v3278, 3
    %3282 = vmatprep.subr.mxu0 %v547
    %3283 = vmatpush1.msra.mxu0 %v546
    %3284 = vmatprep.subr.mxu0 %v551
    %3285 = vmatpush1.msra.mxu0 %v550
    %3286 = vmatprep.subr.mxu0 %v555
    %3287 = vmatpush1.msra.mxu0 %v554
    %3288 = vmatprep.subr.mxu0 %v559
    %3289 = vmatpush1.msra.mxu0 %v558
    %3290 = vmatprep.subr.mxu0 %v563
    %3291 = vmatpush1.msra.mxu0 %v562
    %3292 = vmatprep.subr.mxu0 %v567
    %3293 = vmatpush1.msra.mxu0 %v566
    %3294 = vmatprep.subr.mxu0 %v571
    %3295 = vmatpush1.msra.mxu0 %v570
    %3296 = vmatprep.subr.mxu0 %v575
    %3297 = vmatpush1.msra.mxu0 %v574
    %3298 = vmatprep.subr.mxu0 %v579
    %3299 = vmatpush1.msra.mxu0 %v578
    %3300 = vmatprep.subr.mxu0 %v583
    %3301 = vmatpush1.msra.mxu0 %v582
    %3302 = vmatprep.subr.mxu0 %v587
    %3303 = vmatpush1.msra.mxu0 %v586
    %3304 = vmatprep.subr.mxu0 %v591
    %3305 = vmatpush1.msra.mxu0 %v590
    %3306 = vmatprep.subr.mxu0 %v595
    %3307 = vmatpush1.msra.mxu0 %v594
    %3308 = vmatprep.subr.mxu0 %v599
    %3309 = vmatpush1.msra.mxu0 %v598
    %3310 = vmatprep.subr.mxu0 %v603
    %3311 = vmatpush1.msra.mxu0 %v602
    %3312 = vmatprep.subr.mxu0 %v607
    %3313 = vmatpush1.msra.mxu0 %v606
    %3314 = vmatprep.subr.mxu0 0.0
    %3315 = vmatpush1.msra.mxu0 0.0
    %3316 = vmatprep.subr.mxu0 0.0
    %3317 = vmatpush1.msra.mxu0 0.0
    %3318 = vmatprep.subr.mxu0 0.0
    %3319 = vmatpush1.msra.mxu0 0.0
    %3320 = vmatprep.subr.mxu0 0.0
    %3321 = vmatpush1.msra.mxu0 0.0
    %3322 = vmatprep.subr.mxu0 0.0
    %3323 = vmatpush1.msra.mxu0 0.0
    %3324 = vmatprep.subr.mxu0 0.0
    %3325 = vmatpush1.msra.mxu0 0.0
    %3326 = vmatprep.subr.mxu0 0.0
    %3327 = vmatpush1.msra.mxu0 0.0
    %3328 = vmatprep.subr.mxu0 0.0
    %3329 = vmatpush1.msra.mxu0 0.0
    %3330 = vmatprep.subr.mxu0 0.0
    %3331 = vmatpush1.msra.mxu0 0.0
    %3332 = vmatprep.subr.mxu0 0.0
    %3333 = vmatpush1.msra.mxu0 0.0
    %3334 = vmatprep.subr.mxu0 0.0
    %3335 = vmatpush1.msra.mxu0 0.0
    %3336 = vmatprep.subr.mxu0 0.0
    %3337 = vmatpush1.msra.mxu0 0.0
    %3338 = vmatprep.subr.mxu0 0.0
    %3339 = vmatpush1.msra.mxu0 0.0
    %3340 = vmatprep.subr.mxu0 0.0
    %3341 = vmatpush1.msra.mxu0 0.0
    %3342 = vmatprep.subr.mxu0 0.0
    %3343 = vmatpush1.msra.mxu0 0.0
    %3344 = vmatprep.subr.mxu0 0.0
    %3345 = vmatpush1.msra.mxu0 0.0
    %3346 = vmatprep.mubr.f32.mxu0 0.0
    %3347 = vmatmul.mubr.f32.gmra.mrb[0].mxu0 %v3280
    %v3348 = vpop.f32.mrb[0].mxu0
    %v3349 = vadd.f32 %v615, %v3348
    %v3350 = vpop.f32.mrb[0].mxu0
    %v3351 = vadd.f32 %v619, %v3350
    %3352 = vdwg.mxu0
    %3353 = vmatprep.subr.mxu0 %v549
    %3354 = vmatpush1.msra.mxu0 %v548
    %3355 = vmatprep.subr.mxu0 %v553
    %3356 = vmatpush1.msra.mxu0 %v552
    %3357 = vmatprep.subr.mxu0 %v557
    %3358 = vmatpush1.msra.mxu0 %v556
    %3359 = vmatprep.subr.mxu0 %v561
    %3360 = vmatpush1.msra.mxu0 %v560
    %3361 = vmatprep.subr.mxu0 %v565
    %3362 = vmatpush1.msra.mxu0 %v564
    %3363 = vmatprep.subr.mxu0 %v569
    %3364 = vmatpush1.msra.mxu0 %v568
    %3365 = vmatprep.subr.mxu0 %v573
    %3366 = vmatpush1.msra.mxu0 %v572
    %3367 = vmatprep.subr.mxu0 %v577
    %3368 = vmatpush1.msra.mxu0 %v576
    %3369 = vmatprep.subr.mxu0 %v581
    %3370 = vmatpush1.msra.mxu0 %v580
    %3371 = vmatprep.subr.mxu0 %v585
    %3372 = vmatpush1.msra.mxu0 %v584
    %3373 = vmatprep.subr.mxu0 %v589
    %3374 = vmatpush1.msra.mxu0 %v588
    %3375 = vmatprep.subr.mxu0 %v593
    %3376 = vmatpush1.msra.mxu0 %v592
    %3377 = vmatprep.subr.mxu0 %v597
    %3378 = vmatpush1.msra.mxu0 %v596
    %3379 = vmatprep.subr.mxu0 %v601
    %3380 = vmatpush1.msra.mxu0 %v600
    %3381 = vmatprep.subr.mxu0 %v605
    %3382 = vmatpush1.msra.mxu0 %v604
    %3383 = vmatprep.subr.mxu0 %v609
    %3384 = vmatpush1.msra.mxu0 %v608
    %3385 = vmatprep.subr.mxu0 0.0
    %3386 = vmatpush1.msra.mxu0 0.0
    %3387 = vmatprep.subr.mxu0 0.0
    %3388 = vmatpush1.msra.mxu0 0.0
    %3389 = vmatprep.subr.mxu0 0.0
    %3390 = vmatpush1.msra.mxu0 0.0
    %3391 = vmatprep.subr.mxu0 0.0
    %3392 = vmatpush1.msra.mxu0 0.0
    %3393 = vmatprep.subr.mxu0 0.0
    %3394 = vmatpush1.msra.mxu0 0.0
    %3395 = vmatprep.subr.mxu0 0.0
    %3396 = vmatpush1.msra.mxu0 0.0
    %3397 = vmatprep.subr.mxu0 0.0
    %3398 = vmatpush1.msra.mxu0 0.0
    %3399 = vmatprep.subr.mxu0 0.0
    %3400 = vmatpush1.msra.mxu0 0.0
    %3401 = vmatprep.subr.mxu0 0.0
    %3402 = vmatpush1.msra.mxu0 0.0
    %3403 = vmatprep.subr.mxu0 0.0
    %3404 = vmatpush1.msra.mxu0 0.0
    %3405 = vmatprep.subr.mxu0 0.0
    %3406 = vmatpush1.msra.mxu0 0.0
    %3407 = vmatprep.subr.mxu0 0.0
    %3408 = vmatpush1.msra.mxu0 0.0
    %3409 = vmatprep.subr.mxu0 0.0
    %3410 = vmatpush1.msra.mxu0 0.0
    %3411 = vmatprep.subr.mxu0 0.0
    %3412 = vmatpush1.msra.mxu0 0.0
    %3413 = vmatprep.subr.mxu0 0.0
    %3414 = vmatpush1.msra.mxu0 0.0
    %3415 = vmatprep.subr.mxu0 0.0
    %3416 = vmatpush1.msra.mxu0 0.0
    %3417 = vmatprep.mubr.f32.mxu0 0.0
    %3418 = vmatmul.mubr.f32.gmra.mrb[0].mxu0 %v3280
    %v3419 = vpop.f32.mrb[0].mxu0
    %v3420 = vadd.f32 %v623, %v3419
    %v3421 = vpop.f32.mrb[0].mxu0
    %v3422 = vadd.f32 %v627, %v3421
    %3423 = vdwg.mxu0
    %3424 = vmatprep.subr.mxu0 %v775
    %3425 = vmatpush1.msra.mxu0 %v774
    %3426 = vmatprep.subr.mxu0 %v779
    %3427 = vmatpush1.msra.mxu0 %v778
    %3428 = vmatprep.subr.mxu0 %v783
    %3429 = vmatpush1.msra.mxu0 %v782
    %3430 = vmatprep.subr.mxu0 %v787
    %3431 = vmatpush1.msra.mxu0 %v786
    %3432 = vmatprep.subr.mxu0 %v791
    %3433 = vmatpush1.msra.mxu0 %v790
    %3434 = vmatprep.subr.mxu0 %v795
    %3435 = vmatpush1.msra.mxu0 %v794
    %3436 = vmatprep.subr.mxu0 %v799
    %3437 = vmatpush1.msra.mxu0 %v798
    %3438 = vmatprep.subr.mxu0 %v803
    %3439 = vmatpush1.msra.mxu0 %v802
    %3440 = vmatprep.subr.mxu0 %v807
    %3441 = vmatpush1.msra.mxu0 %v806
    %3442 = vmatprep.subr.mxu0 %v811
    %3443 = vmatpush1.msra.mxu0 %v810
    %3444 = vmatprep.subr.mxu0 %v815
    %3445 = vmatpush1.msra.mxu0 %v814
    %3446 = vmatprep.subr.mxu0 %v819
    %3447 = vmatpush1.msra.mxu0 %v818
    %3448 = vmatprep.subr.mxu0 %v823
    %3449 = vmatpush1.msra.mxu0 %v822
    %3450 = vmatprep.subr.mxu0 %v827
    %3451 = vmatpush1.msra.mxu0 %v826
    %3452 = vmatprep.subr.mxu0 %v831
    %3453 = vmatpush1.msra.mxu0 %v830
    %3454 = vmatprep.subr.mxu0 %v835
    %3455 = vmatpush1.msra.mxu0 %v834
    %3456 = vmatprep.subr.mxu0 0.0
    %3457 = vmatpush1.msra.mxu0 0.0
    %3458 = vmatprep.subr.mxu0 0.0
    %3459 = vmatpush1.msra.mxu0 0.0
    %3460 = vmatprep.subr.mxu0 0.0
    %3461 = vmatpush1.msra.mxu0 0.0
    %3462 = vmatprep.subr.mxu0 0.0
    %3463 = vmatpush1.msra.mxu0 0.0
    %3464 = vmatprep.subr.mxu0 0.0
    %3465 = vmatpush1.msra.mxu0 0.0
    %3466 = vmatprep.subr.mxu0 0.0
    %3467 = vmatpush1.msra.mxu0 0.0
    %3468 = vmatprep.subr.mxu0 0.0
    %3469 = vmatpush1.msra.mxu0 0.0
    %3470 = vmatprep.subr.mxu0 0.0
    %3471 = vmatpush1.msra.mxu0 0.0
    %3472 = vmatprep.subr.mxu0 0.0
    %3473 = vmatpush1.msra.mxu0 0.0
    %3474 = vmatprep.subr.mxu0 0.0
    %3475 = vmatpush1.msra.mxu0 0.0
    %3476 = vmatprep.subr.mxu0 0.0
    %3477 = vmatpush1.msra.mxu0 0.0
    %3478 = vmatprep.subr.mxu0 0.0
    %3479 = vmatpush1.msra.mxu0 0.0
    %3480 = vmatprep.subr.mxu0 0.0
    %3481 = vmatpush1.msra.mxu0 0.0
    %3482 = vmatprep.subr.mxu0 0.0
    %3483 = vmatpush1.msra.mxu0 0.0
    %3484 = vmatprep.subr.mxu0 0.0
    %3485 = vmatpush1.msra.mxu0 0.0
    %3486 = vmatprep.subr.mxu0 0.0
    %3487 = vmatpush1.msra.mxu0 0.0
    %3488 = vmatprep.mubr.f32.mxu0 0.0
    %3489 = vmatmul.mubr.f32.gmra.mrb[0].mxu0 %v2781
    %v3490 = vpop.f32.mrb[0].mxu0
    %v3491 = vadd.f32 0.0, %v3490
    %v3492 = vpop.f32.mrb[0].mxu0
    %v3493 = vadd.f32 0.0, %v3492
    %3494 = vdwg.mxu0
    %3495 = vmatprep.subr.mxu0 %v777
    %3496 = vmatpush1.msra.mxu0 %v776
    %3497 = vmatprep.subr.mxu0 %v781
    %3498 = vmatpush1.msra.mxu0 %v780
    %3499 = vmatprep.subr.mxu0 %v785
    %3500 = vmatpush1.msra.mxu0 %v784
    %3501 = vmatprep.subr.mxu0 %v789
    %3502 = vmatpush1.msra.mxu0 %v788
    %3503 = vmatprep.subr.mxu0 %v793
    %3504 = vmatpush1.msra.mxu0 %v792
    %3505 = vmatprep.subr.mxu0 %v797
    %3506 = vmatpush1.msra.mxu0 %v796
    %3507 = vmatprep.subr.mxu0 %v801
    %3508 = vmatpush1.msra.mxu0 %v800
    %3509 = vmatprep.subr.mxu0 %v805
    %3510 = vmatpush1.msra.mxu0 %v804
    %3511 = vmatprep.subr.mxu0 %v809
    %3512 = vmatpush1.msra.mxu0 %v808
    %3513 = vmatprep.subr.mxu0 %v813
    %3514 = vmatpush1.msra.mxu0 %v812
    %3515 = vmatprep.subr.mxu0 %v817
    %3516 = vmatpush1.msra.mxu0 %v816
    %3517 = vmatprep.subr.mxu0 %v821
    %3518 = vmatpush1.msra.mxu0 %v820
    %3519 = vmatprep.subr.mxu0 %v825
    %3520 = vmatpush1.msra.mxu0 %v824
    %3521 = vmatprep.subr.mxu0 %v829
    %3522 = vmatpush1.msra.mxu0 %v828
    %3523 = vmatprep.subr.mxu0 %v833
    %3524 = vmatpush1.msra.mxu0 %v832
    %3525 = vmatprep.subr.mxu0 %v837
    %3526 = vmatpush1.msra.mxu0 %v836
    %3527 = vmatprep.subr.mxu0 0.0
    %3528 = vmatpush1.msra.mxu0 0.0
    %3529 = vmatprep.subr.mxu0 0.0
    %3530 = vmatpush1.msra.mxu0 0.0
    %3531 = vmatprep.subr.mxu0 0.0
    %3532 = vmatpush1.msra.mxu0 0.0
    %3533 = vmatprep.subr.mxu0 0.0
    %3534 = vmatpush1.msra.mxu0 0.0
    %3535 = vmatprep.subr.mxu0 0.0
    %3536 = vmatpush1.msra.mxu0 0.0
    %3537 = vmatprep.subr.mxu0 0.0
    %3538 = vmatpush1.msra.mxu0 0.0
    %3539 = vmatprep.subr.mxu0 0.0
    %3540 = vmatpush1.msra.mxu0 0.0
    %3541 = vmatprep.subr.mxu0 0.0
    %3542 = vmatpush1.msra.mxu0 0.0
    %3543 = vmatprep.subr.mxu0 0.0
    %3544 = vmatpush1.msra.mxu0 0.0
    %3545 = vmatprep.subr.mxu0 0.0
    %3546 = vmatpush1.msra.mxu0 0.0
    %3547 = vmatprep.subr.mxu0 0.0
    %3548 = vmatpush1.msra.mxu0 0.0
    %3549 = vmatprep.subr.mxu0 0.0
    %3550 = vmatpush1.msra.mxu0 0.0
    %3551 = vmatprep.subr.mxu0 0.0
    %3552 = vmatpush1.msra.mxu0 0.0
    %3553 = vmatprep.subr.mxu0 0.0
    %3554 = vmatpush1.msra.mxu0 0.0
    %3555 = vmatprep.subr.mxu0 0.0
    %3556 = vmatpush1.msra.mxu0 0.0
    %3557 = vmatprep.subr.mxu0 0.0
    %3558 = vmatpush1.msra.mxu0 0.0
    %3559 = vmatprep.mubr.f32.mxu0 0.0
    %3560 = vmatmul.mubr.f32.gmra.mrb[0].mxu0 %v2781
    %v3561 = vpop.f32.mrb[0].mxu0
    %v3562 = vadd.f32 0.0, %v3561
    %v3563 = vpop.f32.mrb[0].mxu0
    %v3564 = vadd.f32 0.0, %v3563
    %3565 = vdwg.mxu0
    %v3566 = vadd.f32 %v3349, %v3491
    %v3567 = vadd.f32 %v3351, %v3493
    %v3568 = vadd.f32 %v3420, %v3562
    %v3569 = vadd.f32 %v3422, %v3564
    %v3570 = vxor.u32 %v3566, 2147483648
    %v3571 = vxor.u32 %v3567, 2147483648
    %v3572 = vxor.u32 %v3568, 2147483648
    %v3573 = vmul.f32 %v3570, 1.442695
    %v3574 = vpow.pop %v3573
    %v3575 = vmul.f32 %v3571, 1.442695
    %v3576 = vpow.pop %v3575
    %v3577 = vmul.f32 %v3572, 1.442695
    %v3578 = vpow.pop %v3577
    %v3579 = vadd.f32 %v3574, 1.0
    %v3580 = vadd.f32 %v3576, 1.0
    %v3581 = vadd.f32 %v3578, 1.0
    %v3582 = vrcp.pop %v3579
    %v3583 = vmul.f32 1.0, %v3582
    %v3584 = vrcp.pop %v3580
    %v3585 = vmul.f32 1.0, %v3584
    %v3586 = vrcp.pop %v3581
    %v3587 = vmul.f32 1.0, %v3586
    %v3588 = vtanh.pop %v3569
    %v3589 = vmul.f32 %v3585, %v2779
    %v3590 = vmul.f32 %v3583, %v3588
    %v3591 = vadd.f32 %v3589, %v3590
    %v3592 = vtanh.pop %v3591
    %v3593 = vmul.f32 %v3587, %v3592
    %3594 = vmatprep.subr.mxu0 %v1009
    %3595 = vmatpush1.msra.mxu0 %v1008
    %3596 = vmatprep.subr.mxu0 %v1013
    %3597 = vmatpush1.msra.mxu0 %v1012
    %3598 = vmatprep.subr.mxu0 %v1017
    %3599 = vmatpush1.msra.mxu0 %v1016
    %3600 = vmatprep.subr.mxu0 %v1021
    %3601 = vmatpush1.msra.mxu0 %v1020
    %3602 = vmatprep.subr.mxu0 %v1025
    %3603 = vmatpush1.msra.mxu0 %v1024
    %3604 = vmatprep.subr.mxu0 %v1029
    %3605 = vmatpush1.msra.mxu0 %v1028
    %3606 = vmatprep.subr.mxu0 %v1033
    %3607 = vmatpush1.msra.mxu0 %v1032
    %3608 = vmatprep.subr.mxu0 %v1037
    %3609 = vmatpush1.msra.mxu0 %v1036
    %3610 = vmatprep.subr.mxu0 %v1041
    %3611 = vmatpush1.msra.mxu0 %v1040
    %3612 = vmatprep.subr.mxu0 %v1045
    %3613 = vmatpush1.msra.mxu0 %v1044
    %3614 = vmatprep.subr.mxu0 %v1049
    %3615 = vmatpush1.msra.mxu0 %v1048
    %3616 = vmatprep.subr.mxu0 %v1053
    %3617 = vmatpush1.msra.mxu0 %v1052
    %3618 = vmatprep.subr.mxu0 %v1057
    %3619 = vmatpush1.msra.mxu0 %v1056
    %3620 = vmatprep.subr.mxu0 %v1061
    %3621 = vmatpush1.msra.mxu0 %v1060
    %3622 = vmatprep.subr.mxu0 %v1065
    %3623 = vmatpush1.msra.mxu0 %v1064
    %3624 = vmatprep.subr.mxu0 %v1069
    %3625 = vmatpush1.msra.mxu0 %v1068
    %3626 = vmatprep.subr.mxu0 0.0
    %3627 = vmatpush1.msra.mxu0 0.0
    %3628 = vmatprep.subr.mxu0 0.0
    %3629 = vmatpush1.msra.mxu0 0.0
    %3630 = vmatprep.subr.mxu0 0.0
    %3631 = vmatpush1.msra.mxu0 0.0
    %3632 = vmatprep.subr.mxu0 0.0
    %3633 = vmatpush1.msra.mxu0 0.0
    %3634 = vmatprep.subr.mxu0 0.0
    %3635 = vmatpush1.msra.mxu0 0.0
    %3636 = vmatprep.subr.mxu0 0.0
    %3637 = vmatpush1.msra.mxu0 0.0
    %3638 = vmatprep.subr.mxu0 0.0
    %3639 = vmatpush1.msra.mxu0 0.0
    %3640 = vmatprep.subr.mxu0 0.0
    %3641 = vmatpush1.msra.mxu0 0.0
    %3642 = vmatprep.subr.mxu0 0.0
    %3643 = vmatpush1.msra.mxu0 0.0
    %3644 = vmatprep.subr.mxu0 0.0
    %3645 = vmatpush1.msra.mxu0 0.0
    %3646 = vmatprep.subr.mxu0 0.0
    %3647 = vmatpush1.msra.mxu0 0.0
    %3648 = vmatprep.subr.mxu0 0.0
    %3649 = vmatpush1.msra.mxu0 0.0
    %3650 = vmatprep.subr.mxu0 0.0
    %3651 = vmatpush1.msra.mxu0 0.0
    %3652 = vmatprep.subr.mxu0 0.0
    %3653 = vmatpush1.msra.mxu0 0.0
    %3654 = vmatprep.subr.mxu0 0.0
    %3655 = vmatpush1.msra.mxu0 0.0
    %3656 = vmatprep.subr.mxu0 0.0
    %3657 = vmatpush1.msra.mxu0 0.0
    %3658 = vmatprep.mubr.f32.mxu0 0.0
    %3659 = vmatmul.mubr.f32.gmra.mrb[0].mxu0 %v3593
    %v3660 = vpop.f32.mrb[0].mxu0
    %v3661 = vadd.f32 %v1077, %v3660
    %v3662 = vpop.f32.mrb[0].mxu0
    %v3663 = vadd.f32 %v1081, %v3662
    %3664 = vdwg.mxu0
    %3665 = vmatprep.subr.mxu0 %v1011
    %3666 = vmatpush1.msra.mxu0 %v1010
    %3667 = vmatprep.subr.mxu0 %v1015
    %3668 = vmatpush1.msra.mxu0 %v1014
    %3669 = vmatprep.subr.mxu0 %v1019
    %3670 = vmatpush1.msra.mxu0 %v1018
    %3671 = vmatprep.subr.mxu0 %v1023
    %3672 = vmatpush1.msra.mxu0 %v1022
    %3673 = vmatprep.subr.mxu0 %v1027
    %3674 = vmatpush1.msra.mxu0 %v1026
    %3675 = vmatprep.subr.mxu0 %v1031
    %3676 = vmatpush1.msra.mxu0 %v1030
    %3677 = vmatprep.subr.mxu0 %v1035
    %3678 = vmatpush1.msra.mxu0 %v1034
    %3679 = vmatprep.subr.mxu0 %v1039
    %3680 = vmatpush1.msra.mxu0 %v1038
    %3681 = vmatprep.subr.mxu0 %v1043
    %3682 = vmatpush1.msra.mxu0 %v1042
    %3683 = vmatprep.subr.mxu0 %v1047
    %3684 = vmatpush1.msra.mxu0 %v1046
    %3685 = vmatprep.subr.mxu0 %v1051
    %3686 = vmatpush1.msra.mxu0 %v1050
    %3687 = vmatprep.subr.mxu0 %v1055
    %3688 = vmatpush1.msra.mxu0 %v1054
    %3689 = vmatprep.subr.mxu0 %v1059
    %3690 = vmatpush1.msra.mxu0 %v1058
    %3691 = vmatprep.subr.mxu0 %v1063
    %3692 = vmatpush1.msra.mxu0 %v1062
    %3693 = vmatprep.subr.mxu0 %v1067
    %3694 = vmatpush1.msra.mxu0 %v1066
    %3695 = vmatprep.subr.mxu0 %v1071
    %3696 = vmatpush1.msra.mxu0 %v1070
    %3697 = vmatprep.subr.mxu0 0.0
    %3698 = vmatpush1.msra.mxu0 0.0
    %3699 = vmatprep.subr.mxu0 0.0
    %3700 = vmatpush1.msra.mxu0 0.0
    %3701 = vmatprep.subr.mxu0 0.0
    %3702 = vmatpush1.msra.mxu0 0.0
    %3703 = vmatprep.subr.mxu0 0.0
    %3704 = vmatpush1.msra.mxu0 0.0
    %3705 = vmatprep.subr.mxu0 0.0
    %3706 = vmatpush1.msra.mxu0 0.0
    %3707 = vmatprep.subr.mxu0 0.0
    %3708 = vmatpush1.msra.mxu0 0.0
    %3709 = vmatprep.subr.mxu0 0.0
    %3710 = vmatpush1.msra.mxu0 0.0
    %3711 = vmatprep.subr.mxu0 0.0
    %3712 = vmatpush1.msra.mxu0 0.0
    %3713 = vmatprep.subr.mxu0 0.0
    %3714 = vmatpush1.msra.mxu0 0.0
    %3715 = vmatprep.subr.mxu0 0.0
    %3716 = vmatpush1.msra.mxu0 0.0
    %3717 = vmatprep.subr.mxu0 0.0
    %3718 = vmatpush1.msra.mxu0 0.0
    %3719 = vmatprep.subr.mxu0 0.0
    %3720 = vmatpush1.msra.mxu0 0.0
    %3721 = vmatprep.subr.mxu0 0.0
    %3722 = vmatpush1.msra.mxu0 0.0
    %3723 = vmatprep.subr.mxu0 0.0
    %3724 = vmatpush1.msra.mxu0 0.0
    %3725 = vmatprep.subr.mxu0 0.0
    %3726 = vmatpush1.msra.mxu0 0.0
    %3727 = vmatprep.subr.mxu0 0.0
    %3728 = vmatpush1.msra.mxu0 0.0
    %3729 = vmatprep.mubr.f32.mxu0 0.0
    %3730 = vmatmul.mubr.f32.gmra.mrb[0].mxu0 %v3593
    %v3731 = vpop.f32.mrb[0].mxu0
    %v3732 = vadd.f32 %v1085, %v3731
    %v3733 = vpop.f32.mrb[0].mxu0
    %v3734 = vadd.f32 %v1089, %v3733
    %3735 = vdwg.mxu0
    %3736 = vmatprep.subr.mxu0 %v1237
    %3737 = vmatpush1.msra.mxu0 %v1236
    %3738 = vmatprep.subr.mxu0 %v1241
    %3739 = vmatpush1.msra.mxu0 %v1240
    %3740 = vmatprep.subr.mxu0 %v1245
    %3741 = vmatpush1.msra.mxu0 %v1244
    %3742 = vmatprep.subr.mxu0 %v1249
    %3743 = vmatpush1.msra.mxu0 %v1248
    %3744 = vmatprep.subr.mxu0 %v1253
    %3745 = vmatpush1.msra.mxu0 %v1252
    %3746 = vmatprep.subr.mxu0 %v1257
    %3747 = vmatpush1.msra.mxu0 %v1256
    %3748 = vmatprep.subr.mxu0 %v1261
    %3749 = vmatpush1.msra.mxu0 %v1260
    %3750 = vmatprep.subr.mxu0 %v1265
    %3751 = vmatpush1.msra.mxu0 %v1264
    %3752 = vmatprep.subr.mxu0 %v1269
    %3753 = vmatpush1.msra.mxu0 %v1268
    %3754 = vmatprep.subr.mxu0 %v1273
    %3755 = vmatpush1.msra.mxu0 %v1272
    %3756 = vmatprep.subr.mxu0 %v1277
    %3757 = vmatpush1.msra.mxu0 %v1276
    %3758 = vmatprep.subr.mxu0 %v1281
    %3759 = vmatpush1.msra.mxu0 %v1280
    %3760 = vmatprep.subr.mxu0 %v1285
    %3761 = vmatpush1.msra.mxu0 %v1284
    %3762 = vmatprep.subr.mxu0 %v1289
    %3763 = vmatpush1.msra.mxu0 %v1288
    %3764 = vmatprep.subr.mxu0 %v1293
    %3765 = vmatpush1.msra.mxu0 %v1292
    %3766 = vmatprep.subr.mxu0 %v1297
    %3767 = vmatpush1.msra.mxu0 %v1296
    %3768 = vmatprep.subr.mxu0 0.0
    %3769 = vmatpush1.msra.mxu0 0.0
    %3770 = vmatprep.subr.mxu0 0.0
    %3771 = vmatpush1.msra.mxu0 0.0
    %3772 = vmatprep.subr.mxu0 0.0
    %3773 = vmatpush1.msra.mxu0 0.0
    %3774 = vmatprep.subr.mxu0 0.0
    %3775 = vmatpush1.msra.mxu0 0.0
    %3776 = vmatprep.subr.mxu0 0.0
    %3777 = vmatpush1.msra.mxu0 0.0
    %3778 = vmatprep.subr.mxu0 0.0
    %3779 = vmatpush1.msra.mxu0 0.0
    %3780 = vmatprep.subr.mxu0 0.0
    %3781 = vmatpush1.msra.mxu0 0.0
    %3782 = vmatprep.subr.mxu0 0.0
    %3783 = vmatpush1.msra.mxu0 0.0
    %3784 = vmatprep.subr.mxu0 0.0
    %3785 = vmatpush1.msra.mxu0 0.0
    %3786 = vmatprep.subr.mxu0 0.0
    %3787 = vmatpush1.msra.mxu0 0.0
    %3788 = vmatprep.subr.mxu0 0.0
    %3789 = vmatpush1.msra.mxu0 0.0
    %3790 = vmatprep.subr.mxu0 0.0
    %3791 = vmatpush1.msra.mxu0 0.0
    %3792 = vmatprep.subr.mxu0 0.0
    %3793 = vmatpush1.msra.mxu0 0.0
    %3794 = vmatprep.subr.mxu0 0.0
    %3795 = vmatpush1.msra.mxu0 0.0
    %3796 = vmatprep.subr.mxu0 0.0
    %3797 = vmatpush1.msra.mxu0 0.0
    %3798 = vmatprep.subr.mxu0 0.0
    %3799 = vmatpush1.msra.mxu0 0.0
    %3800 = vmatprep.mubr.f32.mxu0 0.0
    %3801 = vmatmul.mubr.f32.gmra.mrb[0].mxu0 %v3093
    %v3802 = vpop.f32.mrb[0].mxu0
    %v3803 = vadd.f32 0.0, %v3802
    %v3804 = vpop.f32.mrb[0].mxu0
    %v3805 = vadd.f32 0.0, %v3804
    %3806 = vdwg.mxu0
    %3807 = vmatprep.subr.mxu0 %v1239
    %3808 = vmatpush1.msra.mxu0 %v1238
    %3809 = vmatprep.subr.mxu0 %v1243
    %3810 = vmatpush1.msra.mxu0 %v1242
    %3811 = vmatprep.subr.mxu0 %v1247
    %3812 = vmatpush1.msra.mxu0 %v1246
    %3813 = vmatprep.subr.mxu0 %v1251
    %3814 = vmatpush1.msra.mxu0 %v1250
    %3815 = vmatprep.subr.mxu0 %v1255
    %3816 = vmatpush1.msra.mxu0 %v1254
    %3817 = vmatprep.subr.mxu0 %v1259
    %3818 = vmatpush1.msra.mxu0 %v1258
    %3819 = vmatprep.subr.mxu0 %v1263
    %3820 = vmatpush1.msra.mxu0 %v1262
    %3821 = vmatprep.subr.mxu0 %v1267
    %3822 = vmatpush1.msra.mxu0 %v1266
    %3823 = vmatprep.subr.mxu0 %v1271
    %3824 = vmatpush1.msra.mxu0 %v1270
    %3825 = vmatprep.subr.mxu0 %v1275
    %3826 = vmatpush1.msra.mxu0 %v1274
    %3827 = vmatprep.subr.mxu0 %v1279
    %3828 = vmatpush1.msra.mxu0 %v1278
    %3829 = vmatprep.subr.mxu0 %v1283
    %3830 = vmatpush1.msra.mxu0 %v1282
    %3831 = vmatprep.subr.mxu0 %v1287
    %3832 = vmatpush1.msra.mxu0 %v1286
    %3833 = vmatprep.subr.mxu0 %v1291
    %3834 = vmatpush1.msra.mxu0 %v1290
    %3835 = vmatprep.subr.mxu0 %v1295
    %3836 = vmatpush1.msra.mxu0 %v1294
    %3837 = vmatprep.subr.mxu0 %v1299
    %3838 = vmatpush1.msra.mxu0 %v1298
    %3839 = vmatprep.subr.mxu0 0.0
    %3840 = vmatpush1.msra.mxu0 0.0
    %3841 = vmatprep.subr.mxu0 0.0
    %3842 = vmatpush1.msra.mxu0 0.0
    %3843 = vmatprep.subr.mxu0 0.0
    %3844 = vmatpush1.msra.mxu0 0.0
    %3845 = vmatprep.subr.mxu0 0.0
    %3846 = vmatpush1.msra.mxu0 0.0
    %3847 = vmatprep.subr.mxu0 0.0
    %3848 = vmatpush1.msra.mxu0 0.0
    %3849 = vmatprep.subr.mxu0 0.0
    %3850 = vmatpush1.msra.mxu0 0.0
    %3851 = vmatprep.subr.mxu0 0.0
    %3852 = vmatpush1.msra.mxu0 0.0
    %3853 = vmatprep.subr.mxu0 0.0
    %3854 = vmatpush1.msra.mxu0 0.0
    %3855 = vmatprep.subr.mxu0 0.0
    %3856 = vmatpush1.msra.mxu0 0.0
    %3857 = vmatprep.subr.mxu0 0.0
    %3858 = vmatpush1.msra.mxu0 0.0
    %3859 = vmatprep.subr.mxu0 0.0
    %3860 = vmatpush1.msra.mxu0 0.0
    %3861 = vmatprep.subr.mxu0 0.0
    %3862 = vmatpush1.msra.mxu0 0.0
    %3863 = vmatprep.subr.mxu0 0.0
    %3864 = vmatpush1.msra.mxu0 0.0
    %3865 = vmatprep.subr.mxu0 0.0
    %3866 = vmatpush1.msra.mxu0 0.0
    %3867 = vmatprep.subr.mxu0 0.0
    %3868 = vmatpush1.msra.mxu0 0.0
    %3869 = vmatprep.subr.mxu0 0.0
    %3870 = vmatpush1.msra.mxu0 0.0
    %3871 = vmatprep.mubr.f32.mxu0 0.0
    %3872 = vmatmul.mubr.f32.gmra.mrb[0].mxu0 %v3093
    %v3873 = vpop.f32.mrb[0].mxu0
    %v3874 = vadd.f32 0.0, %v3873
    %v3875 = vpop.f32.mrb[0].mxu0
    %v3876 = vadd.f32 0.0, %v3875
    %3877 = vdwg.mxu0
    %v3878 = vadd.f32 %v3661, %v3803
    %v3879 = vadd.f32 %v3663, %v3805
    %v3880 = vadd.f32 %v3732, %v3874
    %v3881 = vadd.f32 %v3734, %v3876
    %v3882 = vxor.u32 %v3878, 2147483648
    %v3883 = vxor.u32 %v3879, 2147483648
    %v3884 = vxor.u32 %v3880, 2147483648
    %v3885 = vmul.f32 %v3882, 1.442695
    %v3886 = vpow.pop %v3885
    %v3887 = vmul.f32 %v3883, 1.442695
    %v3888 = vpow.pop %v3887
    %v3889 = vmul.f32 %v3884, 1.442695
    %v3890 = vpow.pop %v3889
    %v3891 = vadd.f32 %v3886, 1.0
    %v3892 = vadd.f32 %v3888, 1.0
    %v3893 = vadd.f32 %v3890, 1.0
    %v3894 = vrcp.pop %v3891
    %v3895 = vmul.f32 1.0, %v3894
    %v3896 = vrcp.pop %v3892
    %v3897 = vmul.f32 1.0, %v3896
    %v3898 = vrcp.pop %v3893
    %v3899 = vmul.f32 1.0, %v3898
    %v3900 = vtanh.pop %v3881
    %v3901 = vmul.f32 %v3897, %v3091
    %v3902 = vmul.f32 %v3895, %v3900
    %v3903 = vadd.f32 %v3901, %v3902
    %v3904 = vtanh.pop %v3903
    %v3905 = vmul.f32 %v3899, %v3904
    %3906 = vmatprep.subr.mxu0 %v313
    %3907 = vmatpush1.msra.mxu0 %v312
    %3908 = vmatprep.subr.mxu0 %v317
    %3909 = vmatpush1.msra.mxu0 %v316
    %3910 = vmatprep.subr.mxu0 %v321
    %3911 = vmatpush1.msra.mxu0 %v320
    %3912 = vmatprep.subr.mxu0 %v325
    %3913 = vmatpush1.msra.mxu0 %v324
    %3914 = vmatprep.subr.mxu0 %v329
    %3915 = vmatpush1.msra.mxu0 %v328
    %3916 = vmatprep.subr.mxu0 %v333
    %3917 = vmatpush1.msra.mxu0 %v332
    %3918 = vmatprep.subr.mxu0 %v337
    %3919 = vmatpush1.msra.mxu0 %v336
    %3920 = vmatprep.subr.mxu0 %v341
    %3921 = vmatpush1.msra.mxu0 %v340
    %3922 = vmatprep.subr.mxu0 %v345
    %3923 = vmatpush1.msra.mxu0 %v344
    %3924 = vmatprep.subr.mxu0 %v349
    %3925 = vmatpush1.msra.mxu0 %v348
    %3926 = vmatprep.subr.mxu0 %v353
    %3927 = vmatpush1.msra.mxu0 %v352
    %3928 = vmatprep.subr.mxu0 %v357
    %3929 = vmatpush1.msra.mxu0 %v356
    %3930 = vmatprep.subr.mxu0 %v361
    %3931 = vmatpush1.msra.mxu0 %v360
    %3932 = vmatprep.subr.mxu0 %v365
    %3933 = vmatpush1.msra.mxu0 %v364
    %3934 = vmatprep.subr.mxu0 %v369
    %3935 = vmatpush1.msra.mxu0 %v368
    %3936 = vmatprep.subr.mxu0 %v373
    %3937 = vmatpush1.msra.mxu0 %v372
    %3938 = vmatprep.subr.mxu0 0.0
    %3939 = vmatpush1.msra.mxu0 0.0
    %3940 = vmatprep.subr.mxu0 0.0
    %3941 = vmatpush1.msra.mxu0 0.0
    %3942 = vmatprep.subr.mxu0 0.0
    %3943 = vmatpush1.msra.mxu0 0.0
    %3944 = vmatprep.subr.mxu0 0.0
    %3945 = vmatpush1.msra.mxu0 0.0
    %3946 = vmatprep.subr.mxu0 0.0
    %3947 = vmatpush1.msra.mxu0 0.0
    %3948 = vmatprep.subr.mxu0 0.0
    %3949 = vmatpush1.msra.mxu0 0.0
    %3950 = vmatprep.subr.mxu0 0.0
    %3951 = vmatpush1.msra.mxu0 0.0
    %3952 = vmatprep.subr.mxu0 0.0
    %3953 = vmatpush1.msra.mxu0 0.0
    %3954 = vmatprep.subr.mxu0 0.0
    %3955 = vmatpush1.msra.mxu0 0.0
    %3956 = vmatprep.subr.mxu0 0.0
    %3957 = vmatpush1.msra.mxu0 0.0
    %3958 = vmatprep.subr.mxu0 0.0
    %3959 = vmatpush1.msra.mxu0 0.0
    %3960 = vmatprep.subr.mxu0 0.0
    %3961 = vmatpush1.msra.mxu0 0.0
    %3962 = vmatprep.subr.mxu0 0.0
    %3963 = vmatpush1.msra.mxu0 0.0
    %3964 = vmatprep.subr.mxu0 0.0
    %3965 = vmatpush1.msra.mxu0 0.0
    %3966 = vmatprep.subr.mxu0 0.0
    %3967 = vmatpush1.msra.mxu0 0.0
    %3968 = vmatprep.subr.mxu0 0.0
    %3969 = vmatpush1.msra.mxu0 0.0
    %3970 = vmatprep.mubr.f32.mxu0 0.0
    %3971 = vmatmul.mubr.f32.gmra.mrb[0].mxu0 %v3280
    %v3972 = vpop.f32.mrb[0].mxu0
    %v3973 = vadd.f32 0.0, %v3972
    %v3974 = vpop.f32.mrb[0].mxu0
    %v3975 = vadd.f32 0.0, %v3974
    %3976 = vdwg.mxu0
    %3977 = vmatprep.subr.mxu0 %v315
    %3978 = vmatpush1.msra.mxu0 %v314
    %3979 = vmatprep.subr.mxu0 %v319
    %3980 = vmatpush1.msra.mxu0 %v318
    %3981 = vmatprep.subr.mxu0 %v323
    %3982 = vmatpush1.msra.mxu0 %v322
    %3983 = vmatprep.subr.mxu0 %v327
    %3984 = vmatpush1.msra.mxu0 %v326
    %3985 = vmatprep.subr.mxu0 %v331
    %3986 = vmatpush1.msra.mxu0 %v330
    %3987 = vmatprep.subr.mxu0 %v335
    %3988 = vmatpush1.msra.mxu0 %v334
    %3989 = vmatprep.subr.mxu0 %v339
    %3990 = vmatpush1.msra.mxu0 %v338
    %3991 = vmatprep.subr.mxu0 %v343
    %3992 = vmatpush1.msra.mxu0 %v342
    %3993 = vmatprep.subr.mxu0 %v347
    %3994 = vmatpush1.msra.mxu0 %v346
    %3995 = vmatprep.subr.mxu0 %v351
    %3996 = vmatpush1.msra.mxu0 %v350
    %3997 = vmatprep.subr.mxu0 %v355
    %3998 = vmatpush1.msra.mxu0 %v354
    %3999 = vmatprep.subr.mxu0 %v359
    %4000 = vmatpush1.msra.mxu0 %v358
    %4001 = vmatprep.subr.mxu0 %v363
    %4002 = vmatpush1.msra.mxu0 %v362
    %4003 = vmatprep.subr.mxu0 %v367
    %4004 = vmatpush1.msra.mxu0 %v366
    %4005 = vmatprep.subr.mxu0 %v371
    %4006 = vmatpush1.msra.mxu0 %v370
    %4007 = vmatprep.subr.mxu0 %v375
    %4008 = vmatpush1.msra.mxu0 %v374
    %4009 = vmatprep.subr.mxu0 0.0
    %4010 = vmatpush1.msra.mxu0 0.0
    %4011 = vmatprep.subr.mxu0 0.0
    %4012 = vmatpush1.msra.mxu0 0.0
    %4013 = vmatprep.subr.mxu0 0.0
    %4014 = vmatpush1.msra.mxu0 0.0
    %4015 = vmatprep.subr.mxu0 0.0
    %4016 = vmatpush1.msra.mxu0 0.0
    %4017 = vmatprep.subr.mxu0 0.0
    %4018 = vmatpush1.msra.mxu0 0.0
    %4019 = vmatprep.subr.mxu0 0.0
    %4020 = vmatpush1.msra.mxu0 0.0
    %4021 = vmatprep.subr.mxu0 0.0
    %4022 = vmatpush1.msra.mxu0 0.0
    %4023 = vmatprep.subr.mxu0 0.0
    %4024 = vmatpush1.msra.mxu0 0.0
    %4025 = vmatprep.subr.mxu0 0.0
    %4026 = vmatpush1.msra.mxu0 0.0
    %4027 = vmatprep.subr.mxu0 0.0
    %4028 = vmatpush1.msra.mxu0 0.0
    %4029 = vmatprep.subr.mxu0 0.0
    %4030 = vmatpush1.msra.mxu0 0.0
    %4031 = vmatprep.subr.mxu0 0.0
    %4032 = vmatpush1.msra.mxu0 0.0
    %4033 = vmatprep.subr.mxu0 0.0
    %4034 = vmatpush1.msra.mxu0 0.0
    %4035 = vmatprep.subr.mxu0 0.0
    %4036 = vmatpush1.msra.mxu0 0.0
    %4037 = vmatprep.subr.mxu0 0.0
    %4038 = vmatpush1.msra.mxu0 0.0
    %4039 = vmatprep.subr.mxu0 0.0
    %4040 = vmatpush1.msra.mxu0 0.0
    %4041 = vmatprep.mubr.f32.mxu0 0.0
    %4042 = vmatmul.mubr.f32.gmra.mrb[0].mxu0 %v3280
    %v4043 = vpop.f32.mrb[0].mxu0
    %v4044 = vadd.f32 0.0, %v4043
    %v4045 = vpop.f32.mrb[0].mxu0
    %v4046 = vadd.f32 0.0, %v4045
    %4047 = vdwg.mxu0
    %v4052 = vrot.slane %v3973, 4
    %v4053 = vrot.slane %v3975, 4
    %v4054 = vrot.slane %v4044, 4
    %v4055 = vrot.slane %v4046, 4
    %v4060 = vadd.f32 %v237, %v4052
    %v4061 = vadd.f32 %v239, %v4053
    %v4062 = vadd.f32 %v308, %v4054
    %v4063 = vadd.f32 %v310, %v4055
    %v4064 = vxor.u32 %v4060, 2147483648
    %v4065 = vxor.u32 %v4061, 2147483648
    %v4066 = vxor.u32 %v4062, 2147483648
    %v4067 = vmul.f32 %v4064, 1.442695
    %v4068 = vpow.pop %v4067
    %v4069 = vmul.f32 %v4065, 1.442695
    %v4070 = vpow.pop %v4069
    %v4071 = vmul.f32 %v4066, 1.442695
    %v4072 = vpow.pop %v4071
    %v4073 = vadd.f32 %v4068, 1.0
    %v4074 = vadd.f32 %v4070, 1.0
    %v4075 = vadd.f32 %v4072, 1.0
    %v4076 = vrcp.pop %v4073
    %v4077 = vmul.f32 1.0, %v4076
    %v4078 = vrcp.pop %v4074
    %v4079 = vmul.f32 1.0, %v4078
    %v4080 = vrcp.pop %v4075
    %v4081 = vmul.f32 1.0, %v4080
    %v4082 = vtanh.pop %v4063
    %v4084 = vrot.slane %v3276, 7
    %v4086 = vmul.f32 %v4079, %v4084
    %v4087 = vmul.f32 %v4077, %v4082
    %v4088 = vadd.f32 %v4086, %v4087
    %v4089 = vtanh.pop %v4088
    %v4090 = vmul.f32 %v4081, %v4089
    %v4092 = vrot.slane %v4090, 4
    %4094 = vmatprep.subr.mxu0 %v547
    %4095 = vmatpush1.msra.mxu0 %v546
    %4096 = vmatprep.subr.mxu0 %v551
    %4097 = vmatpush1.msra.mxu0 %v550
    %4098 = vmatprep.subr.mxu0 %v555
    %4099 = vmatpush1.msra.mxu0 %v554
    %4100 = vmatprep.subr.mxu0 %v559
    %4101 = vmatpush1.msra.mxu0 %v558
    %4102 = vmatprep.subr.mxu0 %v563
    %4103 = vmatpush1.msra.mxu0 %v562
    %4104 = vmatprep.subr.mxu0 %v567
    %4105 = vmatpush1.msra.mxu0 %v566
    %4106 = vmatprep.subr.mxu0 %v571
    %4107 = vmatpush1.msra.mxu0 %v570
    %4108 = vmatprep.subr.mxu0 %v575
    %4109 = vmatpush1.msra.mxu0 %v574
    %4110 = vmatprep.subr.mxu0 %v579
    %4111 = vmatpush1.msra.mxu0 %v578
    %4112 = vmatprep.subr.mxu0 %v583
    %4113 = vmatpush1.msra.mxu0 %v582
    %4114 = vmatprep.subr.mxu0 %v587
    %4115 = vmatpush1.msra.mxu0 %v586
    %4116 = vmatprep.subr.mxu0 %v591
    %4117 = vmatpush1.msra.mxu0 %v590
    %4118 = vmatprep.subr.mxu0 %v595
    %4119 = vmatpush1.msra.mxu0 %v594
    %4120 = vmatprep.subr.mxu0 %v599
    %4121 = vmatpush1.msra.mxu0 %v598
    %4122 = vmatprep.subr.mxu0 %v603
    %4123 = vmatpush1.msra.mxu0 %v602
    %4124 = vmatprep.subr.mxu0 %v607
    %4125 = vmatpush1.msra.mxu0 %v606
    %4126 = vmatprep.subr.mxu0 0.0
    %4127 = vmatpush1.msra.mxu0 0.0
    %4128 = vmatprep.subr.mxu0 0.0
    %4129 = vmatpush1.msra.mxu0 0.0
    %4130 = vmatprep.subr.mxu0 0.0
    %4131 = vmatpush1.msra.mxu0 0.0
    %4132 = vmatprep.subr.mxu0 0.0
    %4133 = vmatpush1.msra.mxu0 0.0
    %4134 = vmatprep.subr.mxu0 0.0
    %4135 = vmatpush1.msra.mxu0 0.0
    %4136 = vmatprep.subr.mxu0 0.0
    %4137 = vmatpush1.msra.mxu0 0.0
    %4138 = vmatprep.subr.mxu0 0.0
    %4139 = vmatpush1.msra.mxu0 0.0
    %4140 = vmatprep.subr.mxu0 0.0
    %4141 = vmatpush1.msra.mxu0 0.0
    %4142 = vmatprep.subr.mxu0 0.0
    %4143 = vmatpush1.msra.mxu0 0.0
    %4144 = vmatprep.subr.mxu0 0.0
    %4145 = vmatpush1.msra.mxu0 0.0
    %4146 = vmatprep.subr.mxu0 0.0
    %4147 = vmatpush1.msra.mxu0 0.0
    %4148 = vmatprep.subr.mxu0 0.0
    %4149 = vmatpush1.msra.mxu0 0.0
    %4150 = vmatprep.subr.mxu0 0.0
    %4151 = vmatpush1.msra.mxu0 0.0
    %4152 = vmatprep.subr.mxu0 0.0
    %4153 = vmatpush1.msra.mxu0 0.0
    %4154 = vmatprep.subr.mxu0 0.0
    %4155 = vmatpush1.msra.mxu0 0.0
    %4156 = vmatprep.subr.mxu0 0.0
    %4157 = vmatpush1.msra.mxu0 0.0
    %4158 = vmatprep.mubr.f32.mxu0 0.0
    %4159 = vmatmul.mubr.f32.gmra.mrb[0].mxu0 %v4092
    %v4160 = vpop.f32.mrb[0].mxu0
    %v4161 = vadd.f32 %v615, %v4160
    %v4162 = vpop.f32.mrb[0].mxu0
    %v4163 = vadd.f32 %v619, %v4162
    %4164 = vdwg.mxu0
    %4165 = vmatprep.subr.mxu0 %v549
    %4166 = vmatpush1.msra.mxu0 %v548
    %4167 = vmatprep.subr.mxu0 %v553
    %4168 = vmatpush1.msra.mxu0 %v552
    %4169 = vmatprep.subr.mxu0 %v557
    %4170 = vmatpush1.msra.mxu0 %v556
    %4171 = vmatprep.subr.mxu0 %v561
    %4172 = vmatpush1.msra.mxu0 %v560
    %4173 = vmatprep.subr.mxu0 %v565
    %4174 = vmatpush1.msra.mxu0 %v564
    %4175 = vmatprep.subr.mxu0 %v569
    %4176 = vmatpush1.msra.mxu0 %v568
    %4177 = vmatprep.subr.mxu0 %v573
    %4178 = vmatpush1.msra.mxu0 %v572
    %4179 = vmatprep.subr.mxu0 %v577
    %4180 = vmatpush1.msra.mxu0 %v576
    %4181 = vmatprep.subr.mxu0 %v581
    %4182 = vmatpush1.msra.mxu0 %v580
    %4183 = vmatprep.subr.mxu0 %v585
    %4184 = vmatpush1.msra.mxu0 %v584
    %4185 = vmatprep.subr.mxu0 %v589
    %4186 = vmatpush1.msra.mxu0 %v588
    %4187 = vmatprep.subr.mxu0 %v593
    %4188 = vmatpush1.msra.mxu0 %v592
    %4189 = vmatprep.subr.mxu0 %v597
    %4190 = vmatpush1.msra.mxu0 %v596
    %4191 = vmatprep.subr.mxu0 %v601
    %4192 = vmatpush1.msra.mxu0 %v600
    %4193 = vmatprep.subr.mxu0 %v605
    %4194 = vmatpush1.msra.mxu0 %v604
    %4195 = vmatprep.subr.mxu0 %v609
    %4196 = vmatpush1.msra.mxu0 %v608
    %4197 = vmatprep.subr.mxu0 0.0
    %4198 = vmatpush1.msra.mxu0 0.0
    %4199 = vmatprep.subr.mxu0 0.0
    %4200 = vmatpush1.msra.mxu0 0.0
    %4201 = vmatprep.subr.mxu0 0.0
    %4202 = vmatpush1.msra.mxu0 0.0
    %4203 = vmatprep.subr.mxu0 0.0
    %4204 = vmatpush1.msra.mxu0 0.0
    %4205 = vmatprep.subr.mxu0 0.0
    %4206 = vmatpush1.msra.mxu0 0.0
    %4207 = vmatprep.subr.mxu0 0.0
    %4208 = vmatpush1.msra.mxu0 0.0
    %4209 = vmatprep.subr.mxu0 0.0
    %4210 = vmatpush1.msra.mxu0 0.0
    %4211 = vmatprep.subr.mxu0 0.0
    %4212 = vmatpush1.msra.mxu0 0.0
    %4213 = vmatprep.subr.mxu0 0.0
    %4214 = vmatpush1.msra.mxu0 0.0
    %4215 = vmatprep.subr.mxu0 0.0
    %4216 = vmatpush1.msra.mxu0 0.0
    %4217 = vmatprep.subr.mxu0 0.0
    %4218 = vmatpush1.msra.mxu0 0.0
    %4219 = vmatprep.subr.mxu0 0.0
    %4220 = vmatpush1.msra.mxu0 0.0
    %4221 = vmatprep.subr.mxu0 0.0
    %4222 = vmatpush1.msra.mxu0 0.0
    %4223 = vmatprep.subr.mxu0 0.0
    %4224 = vmatpush1.msra.mxu0 0.0
    %4225 = vmatprep.subr.mxu0 0.0
    %4226 = vmatpush1.msra.mxu0 0.0
    %4227 = vmatprep.subr.mxu0 0.0
    %4228 = vmatpush1.msra.mxu0 0.0
    %4229 = vmatprep.mubr.f32.mxu0 0.0
    %4230 = vmatmul.mubr.f32.gmra.mrb[0].mxu0 %v4092
    %v4231 = vpop.f32.mrb[0].mxu0
    %v4232 = vadd.f32 %v623, %v4231
    %v4233 = vpop.f32.mrb[0].mxu0
    %v4234 = vadd.f32 %v627, %v4233
    %4235 = vdwg.mxu0
    %4236 = vmatprep.subr.mxu0 %v775
    %4237 = vmatpush1.msra.mxu0 %v774
    %4238 = vmatprep.subr.mxu0 %v779
    %4239 = vmatpush1.msra.mxu0 %v778
    %4240 = vmatprep.subr.mxu0 %v783
    %4241 = vmatpush1.msra.mxu0 %v782
    %4242 = vmatprep.subr.mxu0 %v787
    %4243 = vmatpush1.msra.mxu0 %v786
    %4244 = vmatprep.subr.mxu0 %v791
    %4245 = vmatpush1.msra.mxu0 %v790
    %4246 = vmatprep.subr.mxu0 %v795
    %4247 = vmatpush1.msra.mxu0 %v794
    %4248 = vmatprep.subr.mxu0 %v799
    %4249 = vmatpush1.msra.mxu0 %v798
    %4250 = vmatprep.subr.mxu0 %v803
    %4251 = vmatpush1.msra.mxu0 %v802
    %4252 = vmatprep.subr.mxu0 %v807
    %4253 = vmatpush1.msra.mxu0 %v806
    %4254 = vmatprep.subr.mxu0 %v811
    %4255 = vmatpush1.msra.mxu0 %v810
    %4256 = vmatprep.subr.mxu0 %v815
    %4257 = vmatpush1.msra.mxu0 %v814
    %4258 = vmatprep.subr.mxu0 %v819
    %4259 = vmatpush1.msra.mxu0 %v818
    %4260 = vmatprep.subr.mxu0 %v823
    %4261 = vmatpush1.msra.mxu0 %v822
    %4262 = vmatprep.subr.mxu0 %v827
    %4263 = vmatpush1.msra.mxu0 %v826
    %4264 = vmatprep.subr.mxu0 %v831
    %4265 = vmatpush1.msra.mxu0 %v830
    %4266 = vmatprep.subr.mxu0 %v835
    %4267 = vmatpush1.msra.mxu0 %v834
    %4268 = vmatprep.subr.mxu0 0.0
    %4269 = vmatpush1.msra.mxu0 0.0
    %4270 = vmatprep.subr.mxu0 0.0
    %4271 = vmatpush1.msra.mxu0 0.0
    %4272 = vmatprep.subr.mxu0 0.0
    %4273 = vmatpush1.msra.mxu0 0.0
    %4274 = vmatprep.subr.mxu0 0.0
    %4275 = vmatpush1.msra.mxu0 0.0
    %4276 = vmatprep.subr.mxu0 0.0
    %4277 = vmatpush1.msra.mxu0 0.0
    %4278 = vmatprep.subr.mxu0 0.0
    %4279 = vmatpush1.msra.mxu0 0.0
    %4280 = vmatprep.subr.mxu0 0.0
    %4281 = vmatpush1.msra.mxu0 0.0
    %4282 = vmatprep.subr.mxu0 0.0
    %4283 = vmatpush1.msra.mxu0 0.0
    %4284 = vmatprep.subr.mxu0 0.0
    %4285 = vmatpush1.msra.mxu0 0.0
    %4286 = vmatprep.subr.mxu0 0.0
    %4287 = vmatpush1.msra.mxu0 0.0
    %4288 = vmatprep.subr.mxu0 0.0
    %4289 = vmatpush1.msra.mxu0 0.0
    %4290 = vmatprep.subr.mxu0 0.0
    %4291 = vmatpush1.msra.mxu0 0.0
    %4292 = vmatprep.subr.mxu0 0.0
    %4293 = vmatpush1.msra.mxu0 0.0
    %4294 = vmatprep.subr.mxu0 0.0
    %4295 = vmatpush1.msra.mxu0 0.0
    %4296 = vmatprep.subr.mxu0 0.0
    %4297 = vmatpush1.msra.mxu0 0.0
    %4298 = vmatprep.subr.mxu0 0.0
    %4299 = vmatpush1.msra.mxu0 0.0
    %4300 = vmatprep.mubr.f32.mxu0 0.0
    %4301 = vmatmul.mubr.f32.gmra.mrb[0].mxu0 %v3593
    %v4302 = vpop.f32.mrb[0].mxu0
    %v4303 = vadd.f32 0.0, %v4302
    %v4304 = vpop.f32.mrb[0].mxu0
    %v4305 = vadd.f32 0.0, %v4304
    %4306 = vdwg.mxu0
    %4307 = vmatprep.subr.mxu0 %v777
    %4308 = vmatpush1.msra.mxu0 %v776
    %4309 = vmatprep.subr.mxu0 %v781
    %4310 = vmatpush1.msra.mxu0 %v780
    %4311 = vmatprep.subr.mxu0 %v785
    %4312 = vmatpush1.msra.mxu0 %v784
    %4313 = vmatprep.subr.mxu0 %v789
    %4314 = vmatpush1.msra.mxu0 %v788
    %4315 = vmatprep.subr.mxu0 %v793
    %4316 = vmatpush1.msra.mxu0 %v792
    %4317 = vmatprep.subr.mxu0 %v797
    %4318 = vmatpush1.msra.mxu0 %v796
    %4319 = vmatprep.subr.mxu0 %v801
    %4320 = vmatpush1.msra.mxu0 %v800
    %4321 = vmatprep.subr.mxu0 %v805
    %4322 = vmatpush1.msra.mxu0 %v804
    %4323 = vmatprep.subr.mxu0 %v809
    %4324 = vmatpush1.msra.mxu0 %v808
    %4325 = vmatprep.subr.mxu0 %v813
    %4326 = vmatpush1.msra.mxu0 %v812
    %4327 = vmatprep.subr.mxu0 %v817
    %4328 = vmatpush1.msra.mxu0 %v816
    %4329 = vmatprep.subr.mxu0 %v821
    %4330 = vmatpush1.msra.mxu0 %v820
    %4331 = vmatprep.subr.mxu0 %v825
    %4332 = vmatpush1.msra.mxu0 %v824
    %4333 = vmatprep.subr.mxu0 %v829
    %4334 = vmatpush1.msra.mxu0 %v828
    %4335 = vmatprep.subr.mxu0 %v833
    %4336 = vmatpush1.msra.mxu0 %v832
    %4337 = vmatprep.subr.mxu0 %v837
    %4338 = vmatpush1.msra.mxu0 %v836
    %4339 = vmatprep.subr.mxu0 0.0
    %4340 = vmatpush1.msra.mxu0 0.0
    %4341 = vmatprep.subr.mxu0 0.0
    %4342 = vmatpush1.msra.mxu0 0.0
    %4343 = vmatprep.subr.mxu0 0.0
    %4344 = vmatpush1.msra.mxu0 0.0
    %4345 = vmatprep.subr.mxu0 0.0
    %4346 = vmatpush1.msra.mxu0 0.0
    %4347 = vmatprep.subr.mxu0 0.0
    %4348 = vmatpush1.msra.mxu0 0.0
    %4349 = vmatprep.subr.mxu0 0.0
    %4350 = vmatpush1.msra.mxu0 0.0
    %4351 = vmatprep.subr.mxu0 0.0
    %4352 = vmatpush1.msra.mxu0 0.0
    %4353 = vmatprep.subr.mxu0 0.0
    %4354 = vmatpush1.msra.mxu0 0.0
    %4355 = vmatprep.subr.mxu0 0.0
    %4356 = vmatpush1.msra.mxu0 0.0
    %4357 = vmatprep.subr.mxu0 0.0
    %4358 = vmatpush1.msra.mxu0 0.0
    %4359 = vmatprep.subr.mxu0 0.0
    %4360 = vmatpush1.msra.mxu0 0.0
    %4361 = vmatprep.subr.mxu0 0.0
    %4362 = vmatpush1.msra.mxu0 0.0
    %4363 = vmatprep.subr.mxu0 0.0
    %4364 = vmatpush1.msra.mxu0 0.0
    %4365 = vmatprep.subr.mxu0 0.0
    %4366 = vmatpush1.msra.mxu0 0.0
    %4367 = vmatprep.subr.mxu0 0.0
    %4368 = vmatpush1.msra.mxu0 0.0
    %4369 = vmatprep.subr.mxu0 0.0
    %4370 = vmatpush1.msra.mxu0 0.0
    %4371 = vmatprep.mubr.f32.mxu0 0.0
    %4372 = vmatmul.mubr.f32.gmra.mrb[0].mxu0 %v3593
    %v4373 = vpop.f32.mrb[0].mxu0
    %v4374 = vadd.f32 0.0, %v4373
    %v4375 = vpop.f32.mrb[0].mxu0
    %v4376 = vadd.f32 0.0, %v4375
    %4377 = vdwg.mxu0
    %v4378 = vadd.f32 %v4161, %v4303
    %v4379 = vadd.f32 %v4163, %v4305
    %v4380 = vadd.f32 %v4232, %v4374
    %v4381 = vadd.f32 %v4234, %v4376
    %v4382 = vxor.u32 %v4378, 2147483648
    %v4383 = vxor.u32 %v4379, 2147483648
    %v4384 = vxor.u32 %v4380, 2147483648
    %v4385 = vmul.f32 %v4382, 1.442695
    %v4386 = vpow.pop %v4385
    %v4387 = vmul.f32 %v4383, 1.442695
    %v4388 = vpow.pop %v4387
    %v4389 = vmul.f32 %v4384, 1.442695
    %v4390 = vpow.pop %v4389
    %v4391 = vadd.f32 %v4386, 1.0
    %v4392 = vadd.f32 %v4388, 1.0
    %v4393 = vadd.f32 %v4390, 1.0
    %v4394 = vrcp.pop %v4391
    %v4395 = vmul.f32 1.0, %v4394
    %v4396 = vrcp.pop %v4392
    %v4397 = vmul.f32 1.0, %v4396
    %v4398 = vrcp.pop %v4393
    %v4399 = vmul.f32 1.0, %v4398
    %v4400 = vtanh.pop %v4381
    %v4401 = vmul.f32 %v4397, %v3591
    %v4402 = vmul.f32 %v4395, %v4400
    %v4403 = vadd.f32 %v4401, %v4402
    %v4404 = vtanh.pop %v4403
    %v4405 = vmul.f32 %v4399, %v4404
    %4406 = vmatprep.subr.mxu0 %v1009
    %4407 = vmatpush1.msra.mxu0 %v1008
    %4408 = vmatprep.subr.mxu0 %v1013
    %4409 = vmatpush1.msra.mxu0 %v1012
    %4410 = vmatprep.subr.mxu0 %v1017
    %4411 = vmatpush1.msra.mxu0 %v1016
    %4412 = vmatprep.subr.mxu0 %v1021
    %4413 = vmatpush1.msra.mxu0 %v1020
    %4414 = vmatprep.subr.mxu0 %v1025
    %4415 = vmatpush1.msra.mxu0 %v1024
    %4416 = vmatprep.subr.mxu0 %v1029
    %4417 = vmatpush1.msra.mxu0 %v1028
    %4418 = vmatprep.subr.mxu0 %v1033
    %4419 = vmatpush1.msra.mxu0 %v1032
    %4420 = vmatprep.subr.mxu0 %v1037
    %4421 = vmatpush1.msra.mxu0 %v1036
    %4422 = vmatprep.subr.mxu0 %v1041
    %4423 = vmatpush1.msra.mxu0 %v1040
    %4424 = vmatprep.subr.mxu0 %v1045
    %4425 = vmatpush1.msra.mxu0 %v1044
    %4426 = vmatprep.subr.mxu0 %v1049
    %4427 = vmatpush1.msra.mxu0 %v1048
    %4428 = vmatprep.subr.mxu0 %v1053
    %4429 = vmatpush1.msra.mxu0 %v1052
    %4430 = vmatprep.subr.mxu0 %v1057
    %4431 = vmatpush1.msra.mxu0 %v1056
    %4432 = vmatprep.subr.mxu0 %v1061
    %4433 = vmatpush1.msra.mxu0 %v1060
    %4434 = vmatprep.subr.mxu0 %v1065
    %4435 = vmatpush1.msra.mxu0 %v1064
    %4436 = vmatprep.subr.mxu0 %v1069
    %4437 = vmatpush1.msra.mxu0 %v1068
    %4438 = vmatprep.subr.mxu0 0.0
    %4439 = vmatpush1.msra.mxu0 0.0
    %4440 = vmatprep.subr.mxu0 0.0
    %4441 = vmatpush1.msra.mxu0 0.0
    %4442 = vmatprep.subr.mxu0 0.0
    %4443 = vmatpush1.msra.mxu0 0.0
    %4444 = vmatprep.subr.mxu0 0.0
    %4445 = vmatpush1.msra.mxu0 0.0
    %4446 = vmatprep.subr.mxu0 0.0
    %4447 = vmatpush1.msra.mxu0 0.0
    %4448 = vmatprep.subr.mxu0 0.0
    %4449 = vmatpush1.msra.mxu0 0.0
    %4450 = vmatprep.subr.mxu0 0.0
    %4451 = vmatpush1.msra.mxu0 0.0
    %4452 = vmatprep.subr.mxu0 0.0
    %4453 = vmatpush1.msra.mxu0 0.0
    %4454 = vmatprep.subr.mxu0 0.0
    %4455 = vmatpush1.msra.mxu0 0.0
    %4456 = vmatprep.subr.mxu0 0.0
    %4457 = vmatpush1.msra.mxu0 0.0
    %4458 = vmatprep.subr.mxu0 0.0
    %4459 = vmatpush1.msra.mxu0 0.0
    %4460 = vmatprep.subr.mxu0 0.0
    %4461 = vmatpush1.msra.mxu0 0.0
    %4462 = vmatprep.subr.mxu0 0.0
    %4463 = vmatpush1.msra.mxu0 0.0
    %4464 = vmatprep.subr.mxu0 0.0
    %4465 = vmatpush1.msra.mxu0 0.0
    %4466 = vmatprep.subr.mxu0 0.0
    %4467 = vmatpush1.msra.mxu0 0.0
    %4468 = vmatprep.subr.mxu0 0.0
    %4469 = vmatpush1.msra.mxu0 0.0
    %4470 = vmatprep.mubr.f32.mxu0 0.0
    %4471 = vmatmul.mubr.f32.gmra.mrb[0].mxu0 %v4405
    %v4472 = vpop.f32.mrb[0].mxu0
    %v4473 = vadd.f32 %v1077, %v4472
    %v4474 = vpop.f32.mrb[0].mxu0
    %v4475 = vadd.f32 %v1081, %v4474
    %4476 = vdwg.mxu0
    %4477 = vmatprep.subr.mxu0 %v1011
    %4478 = vmatpush1.msra.mxu0 %v1010
    %4479 = vmatprep.subr.mxu0 %v1015
    %4480 = vmatpush1.msra.mxu0 %v1014
    %4481 = vmatprep.subr.mxu0 %v1019
    %4482 = vmatpush1.msra.mxu0 %v1018
    %4483 = vmatprep.subr.mxu0 %v1023
    %4484 = vmatpush1.msra.mxu0 %v1022
    %4485 = vmatprep.subr.mxu0 %v1027
    %4486 = vmatpush1.msra.mxu0 %v1026
    %4487 = vmatprep.subr.mxu0 %v1031
    %4488 = vmatpush1.msra.mxu0 %v1030
    %4489 = vmatprep.subr.mxu0 %v1035
    %4490 = vmatpush1.msra.mxu0 %v1034
    %4491 = vmatprep.subr.mxu0 %v1039
    %4492 = vmatpush1.msra.mxu0 %v1038
    %4493 = vmatprep.subr.mxu0 %v1043
    %4494 = vmatpush1.msra.mxu0 %v1042
    %4495 = vmatprep.subr.mxu0 %v1047
    %4496 = vmatpush1.msra.mxu0 %v1046
    %4497 = vmatprep.subr.mxu0 %v1051
    %4498 = vmatpush1.msra.mxu0 %v1050
    %4499 = vmatprep.subr.mxu0 %v1055
    %4500 = vmatpush1.msra.mxu0 %v1054
    %4501 = vmatprep.subr.mxu0 %v1059
    %4502 = vmatpush1.msra.mxu0 %v1058
    %4503 = vmatprep.subr.mxu0 %v1063
    %4504 = vmatpush1.msra.mxu0 %v1062
    %4505 = vmatprep.subr.mxu0 %v1067
    %4506 = vmatpush1.msra.mxu0 %v1066
    %4507 = vmatprep.subr.mxu0 %v1071
    %4508 = vmatpush1.msra.mxu0 %v1070
    %4509 = vmatprep.subr.mxu0 0.0
    %4510 = vmatpush1.msra.mxu0 0.0
    %4511 = vmatprep.subr.mxu0 0.0
    %4512 = vmatpush1.msra.mxu0 0.0
    %4513 = vmatprep.subr.mxu0 0.0
    %4514 = vmatpush1.msra.mxu0 0.0
    %4515 = vmatprep.subr.mxu0 0.0
    %4516 = vmatpush1.msra.mxu0 0.0
    %4517 = vmatprep.subr.mxu0 0.0
    %4518 = vmatpush1.msra.mxu0 0.0
    %4519 = vmatprep.subr.mxu0 0.0
    %4520 = vmatpush1.msra.mxu0 0.0
    %4521 = vmatprep.subr.mxu0 0.0
    %4522 = vmatpush1.msra.mxu0 0.0
    %4523 = vmatprep.subr.mxu0 0.0
    %4524 = vmatpush1.msra.mxu0 0.0
    %4525 = vmatprep.subr.mxu0 0.0
    %4526 = vmatpush1.msra.mxu0 0.0
    %4527 = vmatprep.subr.mxu0 0.0
    %4528 = vmatpush1.msra.mxu0 0.0
    %4529 = vmatprep.subr.mxu0 0.0
    %4530 = vmatpush1.msra.mxu0 0.0
    %4531 = vmatprep.subr.mxu0 0.0
    %4532 = vmatpush1.msra.mxu0 0.0
    %4533 = vmatprep.subr.mxu0 0.0
    %4534 = vmatpush1.msra.mxu0 0.0
    %4535 = vmatprep.subr.mxu0 0.0
    %4536 = vmatpush1.msra.mxu0 0.0
    %4537 = vmatprep.subr.mxu0 0.0
    %4538 = vmatpush1.msra.mxu0 0.0
    %4539 = vmatprep.subr.mxu0 0.0
    %4540 = vmatpush1.msra.mxu0 0.0
    %4541 = vmatprep.mubr.f32.mxu0 0.0
    %4542 = vmatmul.mubr.f32.gmra.mrb[0].mxu0 %v4405
    %v4543 = vpop.f32.mrb[0].mxu0
    %v4544 = vadd.f32 %v1085, %v4543
    %v4545 = vpop.f32.mrb[0].mxu0
    %v4546 = vadd.f32 %v1089, %v4545
    %4547 = vdwg.mxu0
    %4548 = vmatprep.subr.mxu0 %v1237
    %4549 = vmatpush1.msra.mxu0 %v1236
    %4550 = vmatprep.subr.mxu0 %v1241
    %4551 = vmatpush1.msra.mxu0 %v1240
    %4552 = vmatprep.subr.mxu0 %v1245
    %4553 = vmatpush1.msra.mxu0 %v1244
    %4554 = vmatprep.subr.mxu0 %v1249
    %4555 = vmatpush1.msra.mxu0 %v1248
    %4556 = vmatprep.subr.mxu0 %v1253
    %4557 = vmatpush1.msra.mxu0 %v1252
    %4558 = vmatprep.subr.mxu0 %v1257
    %4559 = vmatpush1.msra.mxu0 %v1256
    %4560 = vmatprep.subr.mxu0 %v1261
    %4561 = vmatpush1.msra.mxu0 %v1260
    %4562 = vmatprep.subr.mxu0 %v1265
    %4563 = vmatpush1.msra.mxu0 %v1264
    %4564 = vmatprep.subr.mxu0 %v1269
    %4565 = vmatpush1.msra.mxu0 %v1268
    %4566 = vmatprep.subr.mxu0 %v1273
    %4567 = vmatpush1.msra.mxu0 %v1272
    %4568 = vmatprep.subr.mxu0 %v1277
    %4569 = vmatpush1.msra.mxu0 %v1276
    %4570 = vmatprep.subr.mxu0 %v1281
    %4571 = vmatpush1.msra.mxu0 %v1280
    %4572 = vmatprep.subr.mxu0 %v1285
    %4573 = vmatpush1.msra.mxu0 %v1284
    %4574 = vmatprep.subr.mxu0 %v1289
    %4575 = vmatpush1.msra.mxu0 %v1288
    %4576 = vmatprep.subr.mxu0 %v1293
    %4577 = vmatpush1.msra.mxu0 %v1292
    %4578 = vmatprep.subr.mxu0 %v1297
    %4579 = vmatpush1.msra.mxu0 %v1296
    %4580 = vmatprep.subr.mxu0 0.0
    %4581 = vmatpush1.msra.mxu0 0.0
    %4582 = vmatprep.subr.mxu0 0.0
    %4583 = vmatpush1.msra.mxu0 0.0
    %4584 = vmatprep.subr.mxu0 0.0
    %4585 = vmatpush1.msra.mxu0 0.0
    %4586 = vmatprep.subr.mxu0 0.0
    %4587 = vmatpush1.msra.mxu0 0.0
    %4588 = vmatprep.subr.mxu0 0.0
    %4589 = vmatpush1.msra.mxu0 0.0
    %4590 = vmatprep.subr.mxu0 0.0
    %4591 = vmatpush1.msra.mxu0 0.0
    %4592 = vmatprep.subr.mxu0 0.0
    %4593 = vmatpush1.msra.mxu0 0.0
    %4594 = vmatprep.subr.mxu0 0.0
    %4595 = vmatpush1.msra.mxu0 0.0
    %4596 = vmatprep.subr.mxu0 0.0
    %4597 = vmatpush1.msra.mxu0 0.0
    %4598 = vmatprep.subr.mxu0 0.0
    %4599 = vmatpush1.msra.mxu0 0.0
    %4600 = vmatprep.subr.mxu0 0.0
    %4601 = vmatpush1.msra.mxu0 0.0
    %4602 = vmatprep.subr.mxu0 0.0
    %4603 = vmatpush1.msra.mxu0 0.0
    %4604 = vmatprep.subr.mxu0 0.0
    %4605 = vmatpush1.msra.mxu0 0.0
    %4606 = vmatprep.subr.mxu0 0.0
    %4607 = vmatpush1.msra.mxu0 0.0
    %4608 = vmatprep.subr.mxu0 0.0
    %4609 = vmatpush1.msra.mxu0 0.0
    %4610 = vmatprep.subr.mxu0 0.0
    %4611 = vmatpush1.msra.mxu0 0.0
    %4612 = vmatprep.mubr.f32.mxu0 0.0
    %4613 = vmatmul.mubr.f32.gmra.mrb[0].mxu0 %v3905
    %v4614 = vpop.f32.mrb[0].mxu0
    %v4615 = vadd.f32 0.0, %v4614
    %v4616 = vpop.f32.mrb[0].mxu0
    %v4617 = vadd.f32 0.0, %v4616
    %4618 = vdwg.mxu0
    %4619 = vmatprep.subr.mxu0 %v1239
    %4620 = vmatpush1.msra.mxu0 %v1238
    %4621 = vmatprep.subr.mxu0 %v1243
    %4622 = vmatpush1.msra.mxu0 %v1242
    %4623 = vmatprep.subr.mxu0 %v1247
    %4624 = vmatpush1.msra.mxu0 %v1246
    %4625 = vmatprep.subr.mxu0 %v1251
    %4626 = vmatpush1.msra.mxu0 %v1250
    %4627 = vmatprep.subr.mxu0 %v1255
    %4628 = vmatpush1.msra.mxu0 %v1254
    %4629 = vmatprep.subr.mxu0 %v1259
    %4630 = vmatpush1.msra.mxu0 %v1258
    %4631 = vmatprep.subr.mxu0 %v1263
    %4632 = vmatpush1.msra.mxu0 %v1262
    %4633 = vmatprep.subr.mxu0 %v1267
    %4634 = vmatpush1.msra.mxu0 %v1266
    %4635 = vmatprep.subr.mxu0 %v1271
    %4636 = vmatpush1.msra.mxu0 %v1270
    %4637 = vmatprep.subr.mxu0 %v1275
    %4638 = vmatpush1.msra.mxu0 %v1274
    %4639 = vmatprep.subr.mxu0 %v1279
    %4640 = vmatpush1.msra.mxu0 %v1278
    %4641 = vmatprep.subr.mxu0 %v1283
    %4642 = vmatpush1.msra.mxu0 %v1282
    %4643 = vmatprep.subr.mxu0 %v1287
    %4644 = vmatpush1.msra.mxu0 %v1286
    %4645 = vmatprep.subr.mxu0 %v1291
    %4646 = vmatpush1.msra.mxu0 %v1290
    %4647 = vmatprep.subr.mxu0 %v1295
    %4648 = vmatpush1.msra.mxu0 %v1294
    %4649 = vmatprep.subr.mxu0 %v1299
    %4650 = vmatpush1.msra.mxu0 %v1298
    %4651 = vmatprep.subr.mxu0 0.0
    %4652 = vmatpush1.msra.mxu0 0.0
    %4653 = vmatprep.subr.mxu0 0.0
    %4654 = vmatpush1.msra.mxu0 0.0
    %4655 = vmatprep.subr.mxu0 0.0
    %4656 = vmatpush1.msra.mxu0 0.0
    %4657 = vmatprep.subr.mxu0 0.0
    %4658 = vmatpush1.msra.mxu0 0.0
    %4659 = vmatprep.subr.mxu0 0.0
    %4660 = vmatpush1.msra.mxu0 0.0
    %4661 = vmatprep.subr.mxu0 0.0
    %4662 = vmatpush1.msra.mxu0 0.0
    %4663 = vmatprep.subr.mxu0 0.0
    %4664 = vmatpush1.msra.mxu0 0.0
    %4665 = vmatprep.subr.mxu0 0.0
    %4666 = vmatpush1.msra.mxu0 0.0
    %4667 = vmatprep.subr.mxu0 0.0
    %4668 = vmatpush1.msra.mxu0 0.0
    %4669 = vmatprep.subr.mxu0 0.0
    %4670 = vmatpush1.msra.mxu0 0.0
    %4671 = vmatprep.subr.mxu0 0.0
    %4672 = vmatpush1.msra.mxu0 0.0
    %4673 = vmatprep.subr.mxu0 0.0
    %4674 = vmatpush1.msra.mxu0 0.0
    %4675 = vmatprep.subr.mxu0 0.0
    %4676 = vmatpush1.msra.mxu0 0.0
    %4677 = vmatprep.subr.mxu0 0.0
    %4678 = vmatpush1.msra.mxu0 0.0
    %4679 = vmatprep.subr.mxu0 0.0
    %4680 = vmatpush1.msra.mxu0 0.0
    %4681 = vmatprep.subr.mxu0 0.0
    %4682 = vmatpush1.msra.mxu0 0.0
    %4683 = vmatprep.mubr.f32.mxu0 0.0
    %4684 = vmatmul.mubr.f32.gmra.mrb[0].mxu0 %v3905
    %v4685 = vpop.f32.mrb[0].mxu0
    %v4686 = vadd.f32 0.0, %v4685
    %v4687 = vpop.f32.mrb[0].mxu0
    %v4688 = vadd.f32 0.0, %v4687
    %4689 = vdwg.mxu0
    %v4690 = vadd.f32 %v4473, %v4615
    %v4691 = vadd.f32 %v4475, %v4617
    %v4692 = vadd.f32 %v4544, %v4686
    %v4693 = vadd.f32 %v4546, %v4688
    %v4694 = vxor.u32 %v4690, 2147483648
    %v4695 = vxor.u32 %v4691, 2147483648
    %v4696 = vxor.u32 %v4692, 2147483648
    %v4697 = vmul.f32 %v4694, 1.442695
    %v4698 = vpow.pop %v4697
    %v4699 = vmul.f32 %v4695, 1.442695
    %v4700 = vpow.pop %v4699
    %v4701 = vmul.f32 %v4696, 1.442695
    %v4702 = vpow.pop %v4701
    %v4703 = vadd.f32 %v4698, 1.0
    %v4704 = vadd.f32 %v4700, 1.0
    %v4705 = vadd.f32 %v4702, 1.0
    %v4706 = vrcp.pop %v4703
    %v4707 = vmul.f32 1.0, %v4706
    %v4708 = vrcp.pop %v4704
    %v4709 = vmul.f32 1.0, %v4708
    %v4710 = vrcp.pop %v4705
    %v4711 = vmul.f32 1.0, %v4710
    %v4712 = vtanh.pop %v4693
    %v4713 = vmul.f32 %v4709, %v3903
    %v4714 = vmul.f32 %v4707, %v4712
    %v4715 = vadd.f32 %v4713, %v4714
    %v4716 = vtanh.pop %v4715
    %v4717 = vmul.f32 %v4711, %v4716
    %4718 = vmatprep.subr.mxu0 %v313
    %4719 = vmatpush1.msra.mxu0 %v312
    %4720 = vmatprep.subr.mxu0 %v317
    %4721 = vmatpush1.msra.mxu0 %v316
    %4722 = vmatprep.subr.mxu0 %v321
    %4723 = vmatpush1.msra.mxu0 %v320
    %4724 = vmatprep.subr.mxu0 %v325
    %4725 = vmatpush1.msra.mxu0 %v324
    %4726 = vmatprep.subr.mxu0 %v329
    %4727 = vmatpush1.msra.mxu0 %v328
    %4728 = vmatprep.subr.mxu0 %v333
    %4729 = vmatpush1.msra.mxu0 %v332
    %4730 = vmatprep.subr.mxu0 %v337
    %4731 = vmatpush1.msra.mxu0 %v336
    %4732 = vmatprep.subr.mxu0 %v341
    %4733 = vmatpush1.msra.mxu0 %v340
    %4734 = vmatprep.subr.mxu0 %v345
    %4735 = vmatpush1.msra.mxu0 %v344
    %4736 = vmatprep.subr.mxu0 %v349
    %4737 = vmatpush1.msra.mxu0 %v348
    %4738 = vmatprep.subr.mxu0 %v353
    %4739 = vmatpush1.msra.mxu0 %v352
    %4740 = vmatprep.subr.mxu0 %v357
    %4741 = vmatpush1.msra.mxu0 %v356
    %4742 = vmatprep.subr.mxu0 %v361
    %4743 = vmatpush1.msra.mxu0 %v360
    %4744 = vmatprep.subr.mxu0 %v365
    %4745 = vmatpush1.msra.mxu0 %v364
    %4746 = vmatprep.subr.mxu0 %v369
    %4747 = vmatpush1.msra.mxu0 %v368
    %4748 = vmatprep.subr.mxu0 %v373
    %4749 = vmatpush1.msra.mxu0 %v372
    %4750 = vmatprep.subr.mxu0 0.0
    %4751 = vmatpush1.msra.mxu0 0.0
    %4752 = vmatprep.subr.mxu0 0.0
    %4753 = vmatpush1.msra.mxu0 0.0
    %4754 = vmatprep.subr.mxu0 0.0
    %4755 = vmatpush1.msra.mxu0 0.0
    %4756 = vmatprep.subr.mxu0 0.0
    %4757 = vmatpush1.msra.mxu0 0.0
    %4758 = vmatprep.subr.mxu0 0.0
    %4759 = vmatpush1.msra.mxu0 0.0
    %4760 = vmatprep.subr.mxu0 0.0
    %4761 = vmatpush1.msra.mxu0 0.0
    %4762 = vmatprep.subr.mxu0 0.0
    %4763 = vmatpush1.msra.mxu0 0.0
    %4764 = vmatprep.subr.mxu0 0.0
    %4765 = vmatpush1.msra.mxu0 0.0
    %4766 = vmatprep.subr.mxu0 0.0
    %4767 = vmatpush1.msra.mxu0 0.0
    %4768 = vmatprep.subr.mxu0 0.0
    %4769 = vmatpush1.msra.mxu0 0.0
    %4770 = vmatprep.subr.mxu0 0.0
    %4771 = vmatpush1.msra.mxu0 0.0
    %4772 = vmatprep.subr.mxu0 0.0
    %4773 = vmatpush1.msra.mxu0 0.0
    %4774 = vmatprep.subr.mxu0 0.0
    %4775 = vmatpush1.msra.mxu0 0.0
    %4776 = vmatprep.subr.mxu0 0.0
    %4777 = vmatpush1.msra.mxu0 0.0
    %4778 = vmatprep.subr.mxu0 0.0
    %4779 = vmatpush1.msra.mxu0 0.0
    %4780 = vmatprep.subr.mxu0 0.0
    %4781 = vmatpush1.msra.mxu0 0.0
    %4782 = vmatprep.mubr.f32.mxu0 0.0
    %4783 = vmatmul.mubr.f32.gmra.mrb[0].mxu0 %v4092
    %v4784 = vpop.f32.mrb[0].mxu0
    %v4785 = vadd.f32 0.0, %v4784
    %v4786 = vpop.f32.mrb[0].mxu0
    %v4787 = vadd.f32 0.0, %v4786
    %4788 = vdwg.mxu0
    %4789 = vmatprep.subr.mxu0 %v315
    %4790 = vmatpush1.msra.mxu0 %v314
    %4791 = vmatprep.subr.mxu0 %v319
    %4792 = vmatpush1.msra.mxu0 %v318
    %4793 = vmatprep.subr.mxu0 %v323
    %4794 = vmatpush1.msra.mxu0 %v322
    %4795 = vmatprep.subr.mxu0 %v327
    %4796 = vmatpush1.msra.mxu0 %v326
    %4797 = vmatprep.subr.mxu0 %v331
    %4798 = vmatpush1.msra.mxu0 %v330
    %4799 = vmatprep.subr.mxu0 %v335
    %4800 = vmatpush1.msra.mxu0 %v334
    %4801 = vmatprep.subr.mxu0 %v339
    %4802 = vmatpush1.msra.mxu0 %v338
    %4803 = vmatprep.subr.mxu0 %v343
    %4804 = vmatpush1.msra.mxu0 %v342
    %4805 = vmatprep.subr.mxu0 %v347
    %4806 = vmatpush1.msra.mxu0 %v346
    %4807 = vmatprep.subr.mxu0 %v351
    %4808 = vmatpush1.msra.mxu0 %v350
    %4809 = vmatprep.subr.mxu0 %v355
    %4810 = vmatpush1.msra.mxu0 %v354
    %4811 = vmatprep.subr.mxu0 %v359
    %4812 = vmatpush1.msra.mxu0 %v358
    %4813 = vmatprep.subr.mxu0 %v363
    %4814 = vmatpush1.msra.mxu0 %v362
    %4815 = vmatprep.subr.mxu0 %v367
    %4816 = vmatpush1.msra.mxu0 %v366
    %4817 = vmatprep.subr.mxu0 %v371
    %4818 = vmatpush1.msra.mxu0 %v370
    %4819 = vmatprep.subr.mxu0 %v375
    %4820 = vmatpush1.msra.mxu0 %v374
    %4821 = vmatprep.subr.mxu0 0.0
    %4822 = vmatpush1.msra.mxu0 0.0
    %4823 = vmatprep.subr.mxu0 0.0
    %4824 = vmatpush1.msra.mxu0 0.0
    %4825 = vmatprep.subr.mxu0 0.0
    %4826 = vmatpush1.msra.mxu0 0.0
    %4827 = vmatprep.subr.mxu0 0.0
    %4828 = vmatpush1.msra.mxu0 0.0
    %4829 = vmatprep.subr.mxu0 0.0
    %4830 = vmatpush1.msra.mxu0 0.0
    %4831 = vmatprep.subr.mxu0 0.0
    %4832 = vmatpush1.msra.mxu0 0.0
    %4833 = vmatprep.subr.mxu0 0.0
    %4834 = vmatpush1.msra.mxu0 0.0
    %4835 = vmatprep.subr.mxu0 0.0
    %4836 = vmatpush1.msra.mxu0 0.0
    %4837 = vmatprep.subr.mxu0 0.0
    %4838 = vmatpush1.msra.mxu0 0.0
    %4839 = vmatprep.subr.mxu0 0.0
    %4840 = vmatpush1.msra.mxu0 0.0
    %4841 = vmatprep.subr.mxu0 0.0
    %4842 = vmatpush1.msra.mxu0 0.0
    %4843 = vmatprep.subr.mxu0 0.0
    %4844 = vmatpush1.msra.mxu0 0.0
    %4845 = vmatprep.subr.mxu0 0.0
    %4846 = vmatpush1.msra.mxu0 0.0
    %4847 = vmatprep.subr.mxu0 0.0
    %4848 = vmatpush1.msra.mxu0 0.0
    %4849 = vmatprep.subr.mxu0 0.0
    %4850 = vmatpush1.msra.mxu0 0.0
    %4851 = vmatprep.subr.mxu0 0.0
    %4852 = vmatpush1.msra.mxu0 0.0
    %4853 = vmatprep.mubr.f32.mxu0 0.0
    %4854 = vmatmul.mubr.f32.gmra.mrb[0].mxu0 %v4092
    %v4855 = vpop.f32.mrb[0].mxu0
    %v4856 = vadd.f32 0.0, %v4855
    %v4857 = vpop.f32.mrb[0].mxu0
    %v4858 = vadd.f32 0.0, %v4857
    %4859 = vdwg.mxu0
    %v4864 = vrot.slane %v4785, 3
    %v4865 = vrot.slane %v4787, 3
    %v4866 = vrot.slane %v4856, 3
    %v4867 = vrot.slane %v4858, 3
    %v4872 = vadd.f32 %v237, %v4864
    %v4873 = vadd.f32 %v239, %v4865
    %v4874 = vadd.f32 %v308, %v4866
    %v4875 = vadd.f32 %v310, %v4867
    %v4876 = vxor.u32 %v4872, 2147483648
    %v4877 = vxor.u32 %v4873, 2147483648
    %v4878 = vxor.u32 %v4874, 2147483648
    %v4879 = vmul.f32 %v4876, 1.442695
    %v4880 = vpow.pop %v4879
    %v4881 = vmul.f32 %v4877, 1.442695
    %v4882 = vpow.pop %v4881
    %v4883 = vmul.f32 %v4878, 1.442695
    %v4884 = vpow.pop %v4883
    %v4885 = vadd.f32 %v4880, 1.0
    %v4886 = vadd.f32 %v4882, 1.0
    %v4887 = vadd.f32 %v4884, 1.0
    %v4888 = vrcp.pop %v4885
    %v4889 = vmul.f32 1.0, %v4888
    %v4890 = vrcp.pop %v4886
    %v4891 = vmul.f32 1.0, %v4890
    %v4892 = vrcp.pop %v4887
    %v4893 = vmul.f32 1.0, %v4892
    %v4894 = vtanh.pop %v4875
    %v4896 = vrot.slane %v4088, 7
    %v4898 = vmul.f32 %v4891, %v4896
    %v4899 = vmul.f32 %v4889, %v4894
    %v4900 = vadd.f32 %v4898, %v4899
    %v4901 = vtanh.pop %v4900
    %v4902 = vmul.f32 %v4893, %v4901
    %v4904 = vrot.slane %v4902, 5
    %4906 = vmatprep.subr.mxu0 %v547
    %4907 = vmatpush1.msra.mxu0 %v546
    %4908 = vmatprep.subr.mxu0 %v551
    %4909 = vmatpush1.msra.mxu0 %v550
    %4910 = vmatprep.subr.mxu0 %v555
    %4911 = vmatpush1.msra.mxu0 %v554
    %4912 = vmatprep.subr.mxu0 %v559
    %4913 = vmatpush1.msra.mxu0 %v558
    %4914 = vmatprep.subr.mxu0 %v563
    %4915 = vmatpush1.msra.mxu0 %v562
    %4916 = vmatprep.subr.mxu0 %v567
    %4917 = vmatpush1.msra.mxu0 %v566
    %4918 = vmatprep.subr.mxu0 %v571
    %4919 = vmatpush1.msra.mxu0 %v570
    %4920 = vmatprep.subr.mxu0 %v575
    %4921 = vmatpush1.msra.mxu0 %v574
    %4922 = vmatprep.subr.mxu0 %v579
    %4923 = vmatpush1.msra.mxu0 %v578
    %4924 = vmatprep.subr.mxu0 %v583
    %4925 = vmatpush1.msra.mxu0 %v582
    %4926 = vmatprep.subr.mxu0 %v587
    %4927 = vmatpush1.msra.mxu0 %v586
    %4928 = vmatprep.subr.mxu0 %v591
    %4929 = vmatpush1.msra.mxu0 %v590
    %4930 = vmatprep.subr.mxu0 %v595
    %4931 = vmatpush1.msra.mxu0 %v594
    %4932 = vmatprep.subr.mxu0 %v599
    %4933 = vmatpush1.msra.mxu0 %v598
    %4934 = vmatprep.subr.mxu0 %v603
    %4935 = vmatpush1.msra.mxu0 %v602
    %4936 = vmatprep.subr.mxu0 %v607
    %4937 = vmatpush1.msra.mxu0 %v606
    %4938 = vmatprep.subr.mxu0 0.0
    %4939 = vmatpush1.msra.mxu0 0.0
    %4940 = vmatprep.subr.mxu0 0.0
    %4941 = vmatpush1.msra.mxu0 0.0
    %4942 = vmatprep.subr.mxu0 0.0
    %4943 = vmatpush1.msra.mxu0 0.0
    %4944 = vmatprep.subr.mxu0 0.0
    %4945 = vmatpush1.msra.mxu0 0.0
    %4946 = vmatprep.subr.mxu0 0.0
    %4947 = vmatpush1.msra.mxu0 0.0
    %4948 = vmatprep.subr.mxu0 0.0
    %4949 = vmatpush1.msra.mxu0 0.0
    %4950 = vmatprep.subr.mxu0 0.0
    %4951 = vmatpush1.msra.mxu0 0.0
    %4952 = vmatprep.subr.mxu0 0.0
    %4953 = vmatpush1.msra.mxu0 0.0
    %4954 = vmatprep.subr.mxu0 0.0
    %4955 = vmatpush1.msra.mxu0 0.0
    %4956 = vmatprep.subr.mxu0 0.0
    %4957 = vmatpush1.msra.mxu0 0.0
    %4958 = vmatprep.subr.mxu0 0.0
    %4959 = vmatpush1.msra.mxu0 0.0
    %4960 = vmatprep.subr.mxu0 0.0
    %4961 = vmatpush1.msra.mxu0 0.0
    %4962 = vmatprep.subr.mxu0 0.0
    %4963 = vmatpush1.msra.mxu0 0.0
    %4964 = vmatprep.subr.mxu0 0.0
    %4965 = vmatpush1.msra.mxu0 0.0
    %4966 = vmatprep.subr.mxu0 0.0
    %4967 = vmatpush1.msra.mxu0 0.0
    %4968 = vmatprep.subr.mxu0 0.0
    %4969 = vmatpush1.msra.mxu0 0.0
    %4970 = vmatprep.mubr.f32.mxu0 0.0
    %4971 = vmatmul.mubr.f32.gmra.mrb[0].mxu0 %v4904
    %v4972 = vpop.f32.mrb[0].mxu0
    %v4973 = vadd.f32 %v615, %v4972
    %v4974 = vpop.f32.mrb[0].mxu0
    %v4975 = vadd.f32 %v619, %v4974
    %4976 = vdwg.mxu0
    %4977 = vmatprep.subr.mxu0 %v549
    %4978 = vmatpush1.msra.mxu0 %v548
    %4979 = vmatprep.subr.mxu0 %v553
    %4980 = vmatpush1.msra.mxu0 %v552
    %4981 = vmatprep.subr.mxu0 %v557
    %4982 = vmatpush1.msra.mxu0 %v556
    %4983 = vmatprep.subr.mxu0 %v561
    %4984 = vmatpush1.msra.mxu0 %v560
    %4985 = vmatprep.subr.mxu0 %v565
    %4986 = vmatpush1.msra.mxu0 %v564
    %4987 = vmatprep.subr.mxu0 %v569
    %4988 = vmatpush1.msra.mxu0 %v568
    %4989 = vmatprep.subr.mxu0 %v573
    %4990 = vmatpush1.msra.mxu0 %v572
    %4991 = vmatprep.subr.mxu0 %v577
    %4992 = vmatpush1.msra.mxu0 %v576
    %4993 = vmatprep.subr.mxu0 %v581
    %4994 = vmatpush1.msra.mxu0 %v580
    %4995 = vmatprep.subr.mxu0 %v585
    %4996 = vmatpush1.msra.mxu0 %v584
    %4997 = vmatprep.subr.mxu0 %v589
    %4998 = vmatpush1.msra.mxu0 %v588
    %4999 = vmatprep.subr.mxu0 %v593
    %5000 = vmatpush1.msra.mxu0 %v592
    %5001 = vmatprep.subr.mxu0 %v597
    %5002 = vmatpush1.msra.mxu0 %v596
    %5003 = vmatprep.subr.mxu0 %v601
    %5004 = vmatpush1.msra.mxu0 %v600
    %5005 = vmatprep.subr.mxu0 %v605
    %5006 = vmatpush1.msra.mxu0 %v604
    %5007 = vmatprep.subr.mxu0 %v609
    %5008 = vmatpush1.msra.mxu0 %v608
    %5009 = vmatprep.subr.mxu0 0.0
    %5010 = vmatpush1.msra.mxu0 0.0
    %5011 = vmatprep.subr.mxu0 0.0
    %5012 = vmatpush1.msra.mxu0 0.0
    %5013 = vmatprep.subr.mxu0 0.0
    %5014 = vmatpush1.msra.mxu0 0.0
    %5015 = vmatprep.subr.mxu0 0.0
    %5016 = vmatpush1.msra.mxu0 0.0
    %5017 = vmatprep.subr.mxu0 0.0
    %5018 = vmatpush1.msra.mxu0 0.0
    %5019 = vmatprep.subr.mxu0 0.0
    %5020 = vmatpush1.msra.mxu0 0.0
    %5021 = vmatprep.subr.mxu0 0.0
    %5022 = vmatpush1.msra.mxu0 0.0
    %5023 = vmatprep.subr.mxu0 0.0
    %5024 = vmatpush1.msra.mxu0 0.0
    %5025 = vmatprep.subr.mxu0 0.0
    %5026 = vmatpush1.msra.mxu0 0.0
    %5027 = vmatprep.subr.mxu0 0.0
    %5028 = vmatpush1.msra.mxu0 0.0
    %5029 = vmatprep.subr.mxu0 0.0
    %5030 = vmatpush1.msra.mxu0 0.0
    %5031 = vmatprep.subr.mxu0 0.0
    %5032 = vmatpush1.msra.mxu0 0.0
    %5033 = vmatprep.subr.mxu0 0.0
    %5034 = vmatpush1.msra.mxu0 0.0
    %5035 = vmatprep.subr.mxu0 0.0
    %5036 = vmatpush1.msra.mxu0 0.0
    %5037 = vmatprep.subr.mxu0 0.0
    %5038 = vmatpush1.msra.mxu0 0.0
    %5039 = vmatprep.subr.mxu0 0.0
    %5040 = vmatpush1.msra.mxu0 0.0
    %5041 = vmatprep.mubr.f32.mxu0 0.0
    %5042 = vmatmul.mubr.f32.gmra.mrb[0].mxu0 %v4904
    %v5043 = vpop.f32.mrb[0].mxu0
    %v5044 = vadd.f32 %v623, %v5043
    %v5045 = vpop.f32.mrb[0].mxu0
    %v5046 = vadd.f32 %v627, %v5045
    %5047 = vdwg.mxu0
    %5048 = vmatprep.subr.mxu0 %v775
    %5049 = vmatpush1.msra.mxu0 %v774
    %5050 = vmatprep.subr.mxu0 %v779
    %5051 = vmatpush1.msra.mxu0 %v778
    %5052 = vmatprep.subr.mxu0 %v783
    %5053 = vmatpush1.msra.mxu0 %v782
    %5054 = vmatprep.subr.mxu0 %v787
    %5055 = vmatpush1.msra.mxu0 %v786
    %5056 = vmatprep.subr.mxu0 %v791
    %5057 = vmatpush1.msra.mxu0 %v790
    %5058 = vmatprep.subr.mxu0 %v795
    %5059 = vmatpush1.msra.mxu0 %v794
    %5060 = vmatprep.subr.mxu0 %v799
    %5061 = vmatpush1.msra.mxu0 %v798
    %5062 = vmatprep.subr.mxu0 %v803
    %5063 = vmatpush1.msra.mxu0 %v802
    %5064 = vmatprep.subr.mxu0 %v807
    %5065 = vmatpush1.msra.mxu0 %v806
    %5066 = vmatprep.subr.mxu0 %v811
    %5067 = vmatpush1.msra.mxu0 %v810
    %5068 = vmatprep.subr.mxu0 %v815
    %5069 = vmatpush1.msra.mxu0 %v814
    %5070 = vmatprep.subr.mxu0 %v819
    %5071 = vmatpush1.msra.mxu0 %v818
    %5072 = vmatprep.subr.mxu0 %v823
    %5073 = vmatpush1.msra.mxu0 %v822
    %5074 = vmatprep.subr.mxu0 %v827
    %5075 = vmatpush1.msra.mxu0 %v826
    %5076 = vmatprep.subr.mxu0 %v831
    %5077 = vmatpush1.msra.mxu0 %v830
    %5078 = vmatprep.subr.mxu0 %v835
    %5079 = vmatpush1.msra.mxu0 %v834
    %5080 = vmatprep.subr.mxu0 0.0
    %5081 = vmatpush1.msra.mxu0 0.0
    %5082 = vmatprep.subr.mxu0 0.0
    %5083 = vmatpush1.msra.mxu0 0.0
    %5084 = vmatprep.subr.mxu0 0.0
    %5085 = vmatpush1.msra.mxu0 0.0
    %5086 = vmatprep.subr.mxu0 0.0
    %5087 = vmatpush1.msra.mxu0 0.0
    %5088 = vmatprep.subr.mxu0 0.0
    %5089 = vmatpush1.msra.mxu0 0.0
    %5090 = vmatprep.subr.mxu0 0.0
    %5091 = vmatpush1.msra.mxu0 0.0
    %5092 = vmatprep.subr.mxu0 0.0
    %5093 = vmatpush1.msra.mxu0 0.0
    %5094 = vmatprep.subr.mxu0 0.0
    %5095 = vmatpush1.msra.mxu0 0.0
    %5096 = vmatprep.subr.mxu0 0.0
    %5097 = vmatpush1.msra.mxu0 0.0
    %5098 = vmatprep.subr.mxu0 0.0
    %5099 = vmatpush1.msra.mxu0 0.0
    %5100 = vmatprep.subr.mxu0 0.0
    %5101 = vmatpush1.msra.mxu0 0.0
    %5102 = vmatprep.subr.mxu0 0.0
    %5103 = vmatpush1.msra.mxu0 0.0
    %5104 = vmatprep.subr.mxu0 0.0
    %5105 = vmatpush1.msra.mxu0 0.0
    %5106 = vmatprep.subr.mxu0 0.0
    %5107 = vmatpush1.msra.mxu0 0.0
    %5108 = vmatprep.subr.mxu0 0.0
    %5109 = vmatpush1.msra.mxu0 0.0
    %5110 = vmatprep.subr.mxu0 0.0
    %5111 = vmatpush1.msra.mxu0 0.0
    %5112 = vmatprep.mubr.f32.mxu0 0.0
    %5113 = vmatmul.mubr.f32.gmra.mrb[0].mxu0 %v4405
    %v5114 = vpop.f32.mrb[0].mxu0
    %v5115 = vadd.f32 0.0, %v5114
    %v5116 = vpop.f32.mrb[0].mxu0
    %v5117 = vadd.f32 0.0, %v5116
    %5118 = vdwg.mxu0
    %5119 = vmatprep.subr.mxu0 %v777
    %5120 = vmatpush1.msra.mxu0 %v776
    %5121 = vmatprep.subr.mxu0 %v781
    %5122 = vmatpush1.msra.mxu0 %v780
    %5123 = vmatprep.subr.mxu0 %v785
    %5124 = vmatpush1.msra.mxu0 %v784
    %5125 = vmatprep.subr.mxu0 %v789
    %5126 = vmatpush1.msra.mxu0 %v788
    %5127 = vmatprep.subr.mxu0 %v793
    %5128 = vmatpush1.msra.mxu0 %v792
    %5129 = vmatprep.subr.mxu0 %v797
    %5130 = vmatpush1.msra.mxu0 %v796
    %5131 = vmatprep.subr.mxu0 %v801
    %5132 = vmatpush1.msra.mxu0 %v800
    %5133 = vmatprep.subr.mxu0 %v805
    %5134 = vmatpush1.msra.mxu0 %v804
    %5135 = vmatprep.subr.mxu0 %v809
    %5136 = vmatpush1.msra.mxu0 %v808
    %5137 = vmatprep.subr.mxu0 %v813
    %5138 = vmatpush1.msra.mxu0 %v812
    %5139 = vmatprep.subr.mxu0 %v817
    %5140 = vmatpush1.msra.mxu0 %v816
    %5141 = vmatprep.subr.mxu0 %v821
    %5142 = vmatpush1.msra.mxu0 %v820
    %5143 = vmatprep.subr.mxu0 %v825
    %5144 = vmatpush1.msra.mxu0 %v824
    %5145 = vmatprep.subr.mxu0 %v829
    %5146 = vmatpush1.msra.mxu0 %v828
    %5147 = vmatprep.subr.mxu0 %v833
    %5148 = vmatpush1.msra.mxu0 %v832
    %5149 = vmatprep.subr.mxu0 %v837
    %5150 = vmatpush1.msra.mxu0 %v836
    %5151 = vmatprep.subr.mxu0 0.0
    %5152 = vmatpush1.msra.mxu0 0.0
    %5153 = vmatprep.subr.mxu0 0.0
    %5154 = vmatpush1.msra.mxu0 0.0
    %5155 = vmatprep.subr.mxu0 0.0
    %5156 = vmatpush1.msra.mxu0 0.0
    %5157 = vmatprep.subr.mxu0 0.0
    %5158 = vmatpush1.msra.mxu0 0.0
    %5159 = vmatprep.subr.mxu0 0.0
    %5160 = vmatpush1.msra.mxu0 0.0
    %5161 = vmatprep.subr.mxu0 0.0
    %5162 = vmatpush1.msra.mxu0 0.0
    %5163 = vmatprep.subr.mxu0 0.0
    %5164 = vmatpush1.msra.mxu0 0.0
    %5165 = vmatprep.subr.mxu0 0.0
    %5166 = vmatpush1.msra.mxu0 0.0
    %5167 = vmatprep.subr.mxu0 0.0
    %5168 = vmatpush1.msra.mxu0 0.0
    %5169 = vmatprep.subr.mxu0 0.0
    %5170 = vmatpush1.msra.mxu0 0.0
    %5171 = vmatprep.subr.mxu0 0.0
    %5172 = vmatpush1.msra.mxu0 0.0
    %5173 = vmatprep.subr.mxu0 0.0
    %5174 = vmatpush1.msra.mxu0 0.0
    %5175 = vmatprep.subr.mxu0 0.0
    %5176 = vmatpush1.msra.mxu0 0.0
    %5177 = vmatprep.subr.mxu0 0.0
    %5178 = vmatpush1.msra.mxu0 0.0
    %5179 = vmatprep.subr.mxu0 0.0
    %5180 = vmatpush1.msra.mxu0 0.0
    %5181 = vmatprep.subr.mxu0 0.0
    %5182 = vmatpush1.msra.mxu0 0.0
    %5183 = vmatprep.mubr.f32.mxu0 0.0
    %5184 = vmatmul.mubr.f32.gmra.mrb[0].mxu0 %v4405
    %v5185 = vpop.f32.mrb[0].mxu0
    %v5186 = vadd.f32 0.0, %v5185
    %v5187 = vpop.f32.mrb[0].mxu0
    %v5188 = vadd.f32 0.0, %v5187
    %5189 = vdwg.mxu0
    %v5190 = vadd.f32 %v4973, %v5115
    %v5191 = vadd.f32 %v4975, %v5117
    %v5192 = vadd.f32 %v5044, %v5186
    %v5193 = vadd.f32 %v5046, %v5188
    %v5194 = vxor.u32 %v5190, 2147483648
    %v5195 = vxor.u32 %v5191, 2147483648
    %v5196 = vxor.u32 %v5192, 2147483648
    %v5197 = vmul.f32 %v5194, 1.442695
    %v5198 = vpow.pop %v5197
    %v5199 = vmul.f32 %v5195, 1.442695
    %v5200 = vpow.pop %v5199
    %v5201 = vmul.f32 %v5196, 1.442695
    %v5202 = vpow.pop %v5201
    %v5203 = vadd.f32 %v5198, 1.0
    %v5204 = vadd.f32 %v5200, 1.0
    %v5205 = vadd.f32 %v5202, 1.0
    %v5206 = vrcp.pop %v5203
    %v5207 = vmul.f32 1.0, %v5206
    %v5208 = vrcp.pop %v5204
    %v5209 = vmul.f32 1.0, %v5208
    %v5210 = vrcp.pop %v5205
    %v5211 = vmul.f32 1.0, %v5210
    %v5212 = vtanh.pop %v5193
    %v5213 = vmul.f32 %v5209, %v4403
    %v5214 = vmul.f32 %v5207, %v5212
    %v5215 = vadd.f32 %v5213, %v5214
    %v5216 = vtanh.pop %v5215
    %v5217 = vmul.f32 %v5211, %v5216
    %5218 = vmatprep.subr.mxu0 %v1009
    %5219 = vmatpush1.msra.mxu0 %v1008
    %5220 = vmatprep.subr.mxu0 %v1013
    %5221 = vmatpush1.msra.mxu0 %v1012
    %5222 = vmatprep.subr.mxu0 %v1017
    %5223 = vmatpush1.msra.mxu0 %v1016
    %5224 = vmatprep.subr.mxu0 %v1021
    %5225 = vmatpush1.msra.mxu0 %v1020
    %5226 = vmatprep.subr.mxu0 %v1025
    %5227 = vmatpush1.msra.mxu0 %v1024
    %5228 = vmatprep.subr.mxu0 %v1029
    %5229 = vmatpush1.msra.mxu0 %v1028
    %5230 = vmatprep.subr.mxu0 %v1033
    %5231 = vmatpush1.msra.mxu0 %v1032
    %5232 = vmatprep.subr.mxu0 %v1037
    %5233 = vmatpush1.msra.mxu0 %v1036
    %5234 = vmatprep.subr.mxu0 %v1041
    %5235 = vmatpush1.msra.mxu0 %v1040
    %5236 = vmatprep.subr.mxu0 %v1045
    %5237 = vmatpush1.msra.mxu0 %v1044
    %5238 = vmatprep.subr.mxu0 %v1049
    %5239 = vmatpush1.msra.mxu0 %v1048
    %5240 = vmatprep.subr.mxu0 %v1053
    %5241 = vmatpush1.msra.mxu0 %v1052
    %5242 = vmatprep.subr.mxu0 %v1057
    %5243 = vmatpush1.msra.mxu0 %v1056
    %5244 = vmatprep.subr.mxu0 %v1061
    %5245 = vmatpush1.msra.mxu0 %v1060
    %5246 = vmatprep.subr.mxu0 %v1065
    %5247 = vmatpush1.msra.mxu0 %v1064
    %5248 = vmatprep.subr.mxu0 %v1069
    %5249 = vmatpush1.msra.mxu0 %v1068
    %5250 = vmatprep.subr.mxu0 0.0
    %5251 = vmatpush1.msra.mxu0 0.0
    %5252 = vmatprep.subr.mxu0 0.0
    %5253 = vmatpush1.msra.mxu0 0.0
    %5254 = vmatprep.subr.mxu0 0.0
    %5255 = vmatpush1.msra.mxu0 0.0
    %5256 = vmatprep.subr.mxu0 0.0
    %5257 = vmatpush1.msra.mxu0 0.0
    %5258 = vmatprep.subr.mxu0 0.0
    %5259 = vmatpush1.msra.mxu0 0.0
    %5260 = vmatprep.subr.mxu0 0.0
    %5261 = vmatpush1.msra.mxu0 0.0
    %5262 = vmatprep.subr.mxu0 0.0
    %5263 = vmatpush1.msra.mxu0 0.0
    %5264 = vmatprep.subr.mxu0 0.0
    %5265 = vmatpush1.msra.mxu0 0.0
    %5266 = vmatprep.subr.mxu0 0.0
    %5267 = vmatpush1.msra.mxu0 0.0
    %5268 = vmatprep.subr.mxu0 0.0
    %5269 = vmatpush1.msra.mxu0 0.0
    %5270 = vmatprep.subr.mxu0 0.0
    %5271 = vmatpush1.msra.mxu0 0.0
    %5272 = vmatprep.subr.mxu0 0.0
    %5273 = vmatpush1.msra.mxu0 0.0
    %5274 = vmatprep.subr.mxu0 0.0
    %5275 = vmatpush1.msra.mxu0 0.0
    %5276 = vmatprep.subr.mxu0 0.0
    %5277 = vmatpush1.msra.mxu0 0.0
    %5278 = vmatprep.subr.mxu0 0.0
    %5279 = vmatpush1.msra.mxu0 0.0
    %5280 = vmatprep.subr.mxu0 0.0
    %5281 = vmatpush1.msra.mxu0 0.0
    %5282 = vmatprep.mubr.f32.mxu0 0.0
    %5283 = vmatmul.mubr.f32.gmra.mrb[0].mxu0 %v5217
    %v5284 = vpop.f32.mrb[0].mxu0
    %v5285 = vadd.f32 %v1077, %v5284
    %v5286 = vpop.f32.mrb[0].mxu0
    %v5287 = vadd.f32 %v1081, %v5286
    %5288 = vdwg.mxu0
    %5289 = vmatprep.subr.mxu0 %v1011
    %5290 = vmatpush1.msra.mxu0 %v1010
    %5291 = vmatprep.subr.mxu0 %v1015
    %5292 = vmatpush1.msra.mxu0 %v1014
    %5293 = vmatprep.subr.mxu0 %v1019
    %5294 = vmatpush1.msra.mxu0 %v1018
    %5295 = vmatprep.subr.mxu0 %v1023
    %5296 = vmatpush1.msra.mxu0 %v1022
    %5297 = vmatprep.subr.mxu0 %v1027
    %5298 = vmatpush1.msra.mxu0 %v1026
    %5299 = vmatprep.subr.mxu0 %v1031
    %5300 = vmatpush1.msra.mxu0 %v1030
    %5301 = vmatprep.subr.mxu0 %v1035
    %5302 = vmatpush1.msra.mxu0 %v1034
    %5303 = vmatprep.subr.mxu0 %v1039
    %5304 = vmatpush1.msra.mxu0 %v1038
    %5305 = vmatprep.subr.mxu0 %v1043
    %5306 = vmatpush1.msra.mxu0 %v1042
    %5307 = vmatprep.subr.mxu0 %v1047
    %5308 = vmatpush1.msra.mxu0 %v1046
    %5309 = vmatprep.subr.mxu0 %v1051
    %5310 = vmatpush1.msra.mxu0 %v1050
    %5311 = vmatprep.subr.mxu0 %v1055
    %5312 = vmatpush1.msra.mxu0 %v1054
    %5313 = vmatprep.subr.mxu0 %v1059
    %5314 = vmatpush1.msra.mxu0 %v1058
    %5315 = vmatprep.subr.mxu0 %v1063
    %5316 = vmatpush1.msra.mxu0 %v1062
    %5317 = vmatprep.subr.mxu0 %v1067
    %5318 = vmatpush1.msra.mxu0 %v1066
    %5319 = vmatprep.subr.mxu0 %v1071
    %5320 = vmatpush1.msra.mxu0 %v1070
    %5321 = vmatprep.subr.mxu0 0.0
    %5322 = vmatpush1.msra.mxu0 0.0
    %5323 = vmatprep.subr.mxu0 0.0
    %5324 = vmatpush1.msra.mxu0 0.0
    %5325 = vmatprep.subr.mxu0 0.0
    %5326 = vmatpush1.msra.mxu0 0.0
    %5327 = vmatprep.subr.mxu0 0.0
    %5328 = vmatpush1.msra.mxu0 0.0
    %5329 = vmatprep.subr.mxu0 0.0
    %5330 = vmatpush1.msra.mxu0 0.0
    %5331 = vmatprep.subr.mxu0 0.0
    %5332 = vmatpush1.msra.mxu0 0.0
    %5333 = vmatprep.subr.mxu0 0.0
    %5334 = vmatpush1.msra.mxu0 0.0
    %5335 = vmatprep.subr.mxu0 0.0
    %5336 = vmatpush1.msra.mxu0 0.0
    %5337 = vmatprep.subr.mxu0 0.0
    %5338 = vmatpush1.msra.mxu0 0.0
    %5339 = vmatprep.subr.mxu0 0.0
    %5340 = vmatpush1.msra.mxu0 0.0
    %5341 = vmatprep.subr.mxu0 0.0
    %5342 = vmatpush1.msra.mxu0 0.0
    %5343 = vmatprep.subr.mxu0 0.0
    %5344 = vmatpush1.msra.mxu0 0.0
    %5345 = vmatprep.subr.mxu0 0.0
    %5346 = vmatpush1.msra.mxu0 0.0
    %5347 = vmatprep.subr.mxu0 0.0
    %5348 = vmatpush1.msra.mxu0 0.0
    %5349 = vmatprep.subr.mxu0 0.0
    %5350 = vmatpush1.msra.mxu0 0.0
    %5351 = vmatprep.subr.mxu0 0.0
    %5352 = vmatpush1.msra.mxu0 0.0
    %5353 = vmatprep.mubr.f32.mxu0 0.0
    %5354 = vmatmul.mubr.f32.gmra.mrb[0].mxu0 %v5217
    %v5355 = vpop.f32.mrb[0].mxu0
    %v5356 = vadd.f32 %v1085, %v5355
    %v5357 = vpop.f32.mrb[0].mxu0
    %v5358 = vadd.f32 %v1089, %v5357
    %5359 = vdwg.mxu0
    %5360 = vmatprep.subr.mxu0 %v1237
    %5361 = vmatpush1.msra.mxu0 %v1236
    %5362 = vmatprep.subr.mxu0 %v1241
    %5363 = vmatpush1.msra.mxu0 %v1240
    %5364 = vmatprep.subr.mxu0 %v1245
    %5365 = vmatpush1.msra.mxu0 %v1244
    %5366 = vmatprep.subr.mxu0 %v1249
    %5367 = vmatpush1.msra.mxu0 %v1248
    %5368 = vmatprep.subr.mxu0 %v1253
    %5369 = vmatpush1.msra.mxu0 %v1252
    %5370 = vmatprep.subr.mxu0 %v1257
    %5371 = vmatpush1.msra.mxu0 %v1256
    %5372 = vmatprep.subr.mxu0 %v1261
    %5373 = vmatpush1.msra.mxu0 %v1260
    %5374 = vmatprep.subr.mxu0 %v1265
    %5375 = vmatpush1.msra.mxu0 %v1264
    %5376 = vmatprep.subr.mxu0 %v1269
    %5377 = vmatpush1.msra.mxu0 %v1268
    %5378 = vmatprep.subr.mxu0 %v1273
    %5379 = vmatpush1.msra.mxu0 %v1272
    %5380 = vmatprep.subr.mxu0 %v1277
    %5381 = vmatpush1.msra.mxu0 %v1276
    %5382 = vmatprep.subr.mxu0 %v1281
    %5383 = vmatpush1.msra.mxu0 %v1280
    %5384 = vmatprep.subr.mxu0 %v1285
    %5385 = vmatpush1.msra.mxu0 %v1284
    %5386 = vmatprep.subr.mxu0 %v1289
    %5387 = vmatpush1.msra.mxu0 %v1288
    %5388 = vmatprep.subr.mxu0 %v1293
    %5389 = vmatpush1.msra.mxu0 %v1292
    %5390 = vmatprep.subr.mxu0 %v1297
    %5391 = vmatpush1.msra.mxu0 %v1296
    %5392 = vmatprep.subr.mxu0 0.0
    %5393 = vmatpush1.msra.mxu0 0.0
    %5394 = vmatprep.subr.mxu0 0.0
    %5395 = vmatpush1.msra.mxu0 0.0
    %5396 = vmatprep.subr.mxu0 0.0
    %5397 = vmatpush1.msra.mxu0 0.0
    %5398 = vmatprep.subr.mxu0 0.0
    %5399 = vmatpush1.msra.mxu0 0.0
    %5400 = vmatprep.subr.mxu0 0.0
    %5401 = vmatpush1.msra.mxu0 0.0
    %5402 = vmatprep.subr.mxu0 0.0
    %5403 = vmatpush1.msra.mxu0 0.0
    %5404 = vmatprep.subr.mxu0 0.0
    %5405 = vmatpush1.msra.mxu0 0.0
    %5406 = vmatprep.subr.mxu0 0.0
    %5407 = vmatpush1.msra.mxu0 0.0
    %5408 = vmatprep.subr.mxu0 0.0
    %5409 = vmatpush1.msra.mxu0 0.0
    %5410 = vmatprep.subr.mxu0 0.0
    %5411 = vmatpush1.msra.mxu0 0.0
    %5412 = vmatprep.subr.mxu0 0.0
    %5413 = vmatpush1.msra.mxu0 0.0
    %5414 = vmatprep.subr.mxu0 0.0
    %5415 = vmatpush1.msra.mxu0 0.0
    %5416 = vmatprep.subr.mxu0 0.0
    %5417 = vmatpush1.msra.mxu0 0.0
    %5418 = vmatprep.subr.mxu0 0.0
    %5419 = vmatpush1.msra.mxu0 0.0
    %5420 = vmatprep.subr.mxu0 0.0
    %5421 = vmatpush1.msra.mxu0 0.0
    %5422 = vmatprep.subr.mxu0 0.0
    %5423 = vmatpush1.msra.mxu0 0.0
    %5424 = vmatprep.mubr.f32.mxu0 0.0
    %5425 = vmatmul.mubr.f32.gmra.mrb[0].mxu0 %v4717
    %v5426 = vpop.f32.mrb[0].mxu0
    %v5427 = vadd.f32 0.0, %v5426
    %v5428 = vpop.f32.mrb[0].mxu0
    %v5429 = vadd.f32 0.0, %v5428
    %5430 = vdwg.mxu0
    %5431 = vmatprep.subr.mxu0 %v1239
    %5432 = vmatpush1.msra.mxu0 %v1238
    %5433 = vmatprep.subr.mxu0 %v1243
    %5434 = vmatpush1.msra.mxu0 %v1242
    %5435 = vmatprep.subr.mxu0 %v1247
    %5436 = vmatpush1.msra.mxu0 %v1246
    %5437 = vmatprep.subr.mxu0 %v1251
    %5438 = vmatpush1.msra.mxu0 %v1250
    %5439 = vmatprep.subr.mxu0 %v1255
    %5440 = vmatpush1.msra.mxu0 %v1254
    %5441 = vmatprep.subr.mxu0 %v1259
    %5442 = vmatpush1.msra.mxu0 %v1258
    %5443 = vmatprep.subr.mxu0 %v1263
    %5444 = vmatpush1.msra.mxu0 %v1262
    %5445 = vmatprep.subr.mxu0 %v1267
    %5446 = vmatpush1.msra.mxu0 %v1266
    %5447 = vmatprep.subr.mxu0 %v1271
    %5448 = vmatpush1.msra.mxu0 %v1270
    %5449 = vmatprep.subr.mxu0 %v1275
    %5450 = vmatpush1.msra.mxu0 %v1274
    %5451 = vmatprep.subr.mxu0 %v1279
    %5452 = vmatpush1.msra.mxu0 %v1278
    %5453 = vmatprep.subr.mxu0 %v1283
    %5454 = vmatpush1.msra.mxu0 %v1282
    %5455 = vmatprep.subr.mxu0 %v1287
    %5456 = vmatpush1.msra.mxu0 %v1286
    %5457 = vmatprep.subr.mxu0 %v1291
    %5458 = vmatpush1.msra.mxu0 %v1290
    %5459 = vmatprep.subr.mxu0 %v1295
    %5460 = vmatpush1.msra.mxu0 %v1294
    %5461 = vmatprep.subr.mxu0 %v1299
    %5462 = vmatpush1.msra.mxu0 %v1298
    %5463 = vmatprep.subr.mxu0 0.0
    %5464 = vmatpush1.msra.mxu0 0.0
    %5465 = vmatprep.subr.mxu0 0.0
    %5466 = vmatpush1.msra.mxu0 0.0
    %5467 = vmatprep.subr.mxu0 0.0
    %5468 = vmatpush1.msra.mxu0 0.0
    %5469 = vmatprep.subr.mxu0 0.0
    %5470 = vmatpush1.msra.mxu0 0.0
    %5471 = vmatprep.subr.mxu0 0.0
    %5472 = vmatpush1.msra.mxu0 0.0
    %5473 = vmatprep.subr.mxu0 0.0
    %5474 = vmatpush1.msra.mxu0 0.0
    %5475 = vmatprep.subr.mxu0 0.0
    %5476 = vmatpush1.msra.mxu0 0.0
    %5477 = vmatprep.subr.mxu0 0.0
    %5478 = vmatpush1.msra.mxu0 0.0
    %5479 = vmatprep.subr.mxu0 0.0
    %5480 = vmatpush1.msra.mxu0 0.0
    %5481 = vmatprep.subr.mxu0 0.0
    %5482 = vmatpush1.msra.mxu0 0.0
    %5483 = vmatprep.subr.mxu0 0.0
    %5484 = vmatpush1.msra.mxu0 0.0
    %5485 = vmatprep.subr.mxu0 0.0
    %5486 = vmatpush1.msra.mxu0 0.0
    %5487 = vmatprep.subr.mxu0 0.0
    %5488 = vmatpush1.msra.mxu0 0.0
    %5489 = vmatprep.subr.mxu0 0.0
    %5490 = vmatpush1.msra.mxu0 0.0
    %5491 = vmatprep.subr.mxu0 0.0
    %5492 = vmatpush1.msra.mxu0 0.0
    %5493 = vmatprep.subr.mxu0 0.0
    %5494 = vmatpush1.msra.mxu0 0.0
    %5495 = vmatprep.mubr.f32.mxu0 0.0
    %5496 = vmatmul.mubr.f32.gmra.mrb[0].mxu0 %v4717
    %v5497 = vpop.f32.mrb[0].mxu0
    %v5498 = vadd.f32 0.0, %v5497
    %v5499 = vpop.f32.mrb[0].mxu0
    %v5500 = vadd.f32 0.0, %v5499
    %5501 = vdwg.mxu0
    %v5502 = vadd.f32 %v5285, %v5427
    %v5503 = vadd.f32 %v5287, %v5429
    %v5504 = vadd.f32 %v5356, %v5498
    %v5505 = vadd.f32 %v5358, %v5500
    %v5506 = vxor.u32 %v5502, 2147483648
    %v5507 = vxor.u32 %v5503, 2147483648
    %v5508 = vxor.u32 %v5504, 2147483648
    %v5509 = vmul.f32 %v5506, 1.442695
    %v5510 = vpow.pop %v5509
    %v5511 = vmul.f32 %v5507, 1.442695
    %v5512 = vpow.pop %v5511
    %v5513 = vmul.f32 %v5508, 1.442695
    %v5514 = vpow.pop %v5513
    %v5515 = vadd.f32 %v5510, 1.0
    %v5516 = vadd.f32 %v5512, 1.0
    %v5517 = vadd.f32 %v5514, 1.0
    %v5518 = vrcp.pop %v5515
    %v5519 = vmul.f32 1.0, %v5518
    %v5520 = vrcp.pop %v5516
    %v5521 = vmul.f32 1.0, %v5520
    %v5522 = vrcp.pop %v5517
    %v5523 = vmul.f32 1.0, %v5522
    %v5524 = vtanh.pop %v5505
    %v5525 = vmul.f32 %v5521, %v4715
    %v5526 = vmul.f32 %v5519, %v5524
    %v5527 = vadd.f32 %v5525, %v5526
    %v5528 = vtanh.pop %v5527
    %v5529 = vmul.f32 %v5523, %v5528
    %5530 = vmatprep.subr.mxu0 %v313
    %5531 = vmatpush1.msra.mxu0 %v312
    %5532 = vmatprep.subr.mxu0 %v317
    %5533 = vmatpush1.msra.mxu0 %v316
    %5534 = vmatprep.subr.mxu0 %v321
    %5535 = vmatpush1.msra.mxu0 %v320
    %5536 = vmatprep.subr.mxu0 %v325
    %5537 = vmatpush1.msra.mxu0 %v324
    %5538 = vmatprep.subr.mxu0 %v329
    %5539 = vmatpush1.msra.mxu0 %v328
    %5540 = vmatprep.subr.mxu0 %v333
    %5541 = vmatpush1.msra.mxu0 %v332
    %5542 = vmatprep.subr.mxu0 %v337
    %5543 = vmatpush1.msra.mxu0 %v336
    %5544 = vmatprep.subr.mxu0 %v341
    %5545 = vmatpush1.msra.mxu0 %v340
    %5546 = vmatprep.subr.mxu0 %v345
    %5547 = vmatpush1.msra.mxu0 %v344
    %5548 = vmatprep.subr.mxu0 %v349
    %5549 = vmatpush1.msra.mxu0 %v348
    %5550 = vmatprep.subr.mxu0 %v353
    %5551 = vmatpush1.msra.mxu0 %v352
    %5552 = vmatprep.subr.mxu0 %v357
    %5553 = vmatpush1.msra.mxu0 %v356
    %5554 = vmatprep.subr.mxu0 %v361
    %5555 = vmatpush1.msra.mxu0 %v360
    %5556 = vmatprep.subr.mxu0 %v365
    %5557 = vmatpush1.msra.mxu0 %v364
    %5558 = vmatprep.subr.mxu0 %v369
    %5559 = vmatpush1.msra.mxu0 %v368
    %5560 = vmatprep.subr.mxu0 %v373
    %5561 = vmatpush1.msra.mxu0 %v372
    %5562 = vmatprep.subr.mxu0 0.0
    %5563 = vmatpush1.msra.mxu0 0.0
    %5564 = vmatprep.subr.mxu0 0.0
    %5565 = vmatpush1.msra.mxu0 0.0
    %5566 = vmatprep.subr.mxu0 0.0
    %5567 = vmatpush1.msra.mxu0 0.0
    %5568 = vmatprep.subr.mxu0 0.0
    %5569 = vmatpush1.msra.mxu0 0.0
    %5570 = vmatprep.subr.mxu0 0.0
    %5571 = vmatpush1.msra.mxu0 0.0
    %5572 = vmatprep.subr.mxu0 0.0
    %5573 = vmatpush1.msra.mxu0 0.0
    %5574 = vmatprep.subr.mxu0 0.0
    %5575 = vmatpush1.msra.mxu0 0.0
    %5576 = vmatprep.subr.mxu0 0.0
    %5577 = vmatpush1.msra.mxu0 0.0
    %5578 = vmatprep.subr.mxu0 0.0
    %5579 = vmatpush1.msra.mxu0 0.0
    %5580 = vmatprep.subr.mxu0 0.0
    %5581 = vmatpush1.msra.mxu0 0.0
    %5582 = vmatprep.subr.mxu0 0.0
    %5583 = vmatpush1.msra.mxu0 0.0
    %5584 = vmatprep.subr.mxu0 0.0
    %5585 = vmatpush1.msra.mxu0 0.0
    %5586 = vmatprep.subr.mxu0 0.0
    %5587 = vmatpush1.msra.mxu0 0.0
    %5588 = vmatprep.subr.mxu0 0.0
    %5589 = vmatpush1.msra.mxu0 0.0
    %5590 = vmatprep.subr.mxu0 0.0
    %5591 = vmatpush1.msra.mxu0 0.0
    %5592 = vmatprep.subr.mxu0 0.0
    %5593 = vmatpush1.msra.mxu0 0.0
    %5594 = vmatprep.mubr.f32.mxu0 0.0
    %5595 = vmatmul.mubr.f32.gmra.mrb[0].mxu0 %v4904
    %v5596 = vpop.f32.mrb[0].mxu0
    %v5597 = vadd.f32 0.0, %v5596
    %v5598 = vpop.f32.mrb[0].mxu0
    %v5599 = vadd.f32 0.0, %v5598
    %5600 = vdwg.mxu0
    %5601 = vmatprep.subr.mxu0 %v315
    %5602 = vmatpush1.msra.mxu0 %v314
    %5603 = vmatprep.subr.mxu0 %v319
    %5604 = vmatpush1.msra.mxu0 %v318
    %5605 = vmatprep.subr.mxu0 %v323
    %5606 = vmatpush1.msra.mxu0 %v322
    %5607 = vmatprep.subr.mxu0 %v327
    %5608 = vmatpush1.msra.mxu0 %v326
    %5609 = vmatprep.subr.mxu0 %v331
    %5610 = vmatpush1.msra.mxu0 %v330
    %5611 = vmatprep.subr.mxu0 %v335
    %5612 = vmatpush1.msra.mxu0 %v334
    %5613 = vmatprep.subr.mxu0 %v339
    %5614 = vmatpush1.msra.mxu0 %v338
    %5615 = vmatprep.subr.mxu0 %v343
    %5616 = vmatpush1.msra.mxu0 %v342
    %5617 = vmatprep.subr.mxu0 %v347
    %5618 = vmatpush1.msra.mxu0 %v346
    %5619 = vmatprep.subr.mxu0 %v351
    %5620 = vmatpush1.msra.mxu0 %v350
    %5621 = vmatprep.subr.mxu0 %v355
    %5622 = vmatpush1.msra.mxu0 %v354
    %5623 = vmatprep.subr.mxu0 %v359
    %5624 = vmatpush1.msra.mxu0 %v358
    %5625 = vmatprep.subr.mxu0 %v363
    %5626 = vmatpush1.msra.mxu0 %v362
    %5627 = vmatprep.subr.mxu0 %v367
    %5628 = vmatpush1.msra.mxu0 %v366
    %5629 = vmatprep.subr.mxu0 %v371
    %5630 = vmatpush1.msra.mxu0 %v370
    %5631 = vmatprep.subr.mxu0 %v375
    %5632 = vmatpush1.msra.mxu0 %v374
    %5633 = vmatprep.subr.mxu0 0.0
    %5634 = vmatpush1.msra.mxu0 0.0
    %5635 = vmatprep.subr.mxu0 0.0
    %5636 = vmatpush1.msra.mxu0 0.0
    %5637 = vmatprep.subr.mxu0 0.0
    %5638 = vmatpush1.msra.mxu0 0.0
    %5639 = vmatprep.subr.mxu0 0.0
    %5640 = vmatpush1.msra.mxu0 0.0
    %5641 = vmatprep.subr.mxu0 0.0
    %5642 = vmatpush1.msra.mxu0 0.0
    %5643 = vmatprep.subr.mxu0 0.0
    %5644 = vmatpush1.msra.mxu0 0.0
    %5645 = vmatprep.subr.mxu0 0.0
    %5646 = vmatpush1.msra.mxu0 0.0
    %5647 = vmatprep.subr.mxu0 0.0
    %5648 = vmatpush1.msra.mxu0 0.0
    %5649 = vmatprep.subr.mxu0 0.0
    %5650 = vmatpush1.msra.mxu0 0.0
    %5651 = vmatprep.subr.mxu0 0.0
    %5652 = vmatpush1.msra.mxu0 0.0
    %5653 = vmatprep.subr.mxu0 0.0
    %5654 = vmatpush1.msra.mxu0 0.0
    %5655 = vmatprep.subr.mxu0 0.0
    %5656 = vmatpush1.msra.mxu0 0.0
    %5657 = vmatprep.subr.mxu0 0.0
    %5658 = vmatpush1.msra.mxu0 0.0
    %5659 = vmatprep.subr.mxu0 0.0
    %5660 = vmatpush1.msra.mxu0 0.0
    %5661 = vmatprep.subr.mxu0 0.0
    %5662 = vmatpush1.msra.mxu0 0.0
    %5663 = vmatprep.subr.mxu0 0.0
    %5664 = vmatpush1.msra.mxu0 0.0
    %5665 = vmatprep.mubr.f32.mxu0 0.0
    %5666 = vmatmul.mubr.f32.gmra.mrb[0].mxu0 %v4904
    %v5667 = vpop.f32.mrb[0].mxu0
    %v5668 = vadd.f32 0.0, %v5667
    %v5669 = vpop.f32.mrb[0].mxu0
    %v5670 = vadd.f32 0.0, %v5669
    %5671 = vdwg.mxu0
    %v5676 = vrot.slane %v5597, 2
    %v5677 = vrot.slane %v5599, 2
    %v5678 = vrot.slane %v5668, 2
    %v5679 = vrot.slane %v5670, 2
    %v5684 = vadd.f32 %v237, %v5676
    %v5685 = vadd.f32 %v239, %v5677
    %v5686 = vadd.f32 %v308, %v5678
    %v5687 = vadd.f32 %v310, %v5679
    %v5688 = vxor.u32 %v5684, 2147483648
    %v5689 = vxor.u32 %v5685, 2147483648
    %v5690 = vxor.u32 %v5686, 2147483648
    %v5691 = vmul.f32 %v5688, 1.442695
    %v5692 = vpow.pop %v5691
    %v5693 = vmul.f32 %v5689, 1.442695
    %v5694 = vpow.pop %v5693
    %v5695 = vmul.f32 %v5690, 1.442695
    %v5696 = vpow.pop %v5695
    %v5697 = vadd.f32 %v5692, 1.0
    %v5698 = vadd.f32 %v5694, 1.0
    %v5699 = vadd.f32 %v5696, 1.0
    %v5700 = vrcp.pop %v5697
    %v5701 = vmul.f32 1.0, %v5700
    %v5702 = vrcp.pop %v5698
    %v5703 = vmul.f32 1.0, %v5702
    %v5704 = vrcp.pop %v5699
    %v5705 = vmul.f32 1.0, %v5704
    %v5706 = vtanh.pop %v5687
    %v5708 = vrot.slane %v4900, 7
    %v5710 = vmul.f32 %v5703, %v5708
    %v5711 = vmul.f32 %v5701, %v5706
    %v5712 = vadd.f32 %v5710, %v5711
    %v5713 = vtanh.pop %v5712
    %v5714 = vmul.f32 %v5705, %v5713
    %v5716 = vrot.slane %v5714, 6
    %5718 = vmatprep.subr.mxu0 %v547
    %5719 = vmatpush1.msra.mxu0 %v546
    %5720 = vmatprep.subr.mxu0 %v551
    %5721 = vmatpush1.msra.mxu0 %v550
    %5722 = vmatprep.subr.mxu0 %v555
    %5723 = vmatpush1.msra.mxu0 %v554
    %5724 = vmatprep.subr.mxu0 %v559
    %5725 = vmatpush1.msra.mxu0 %v558
    %5726 = vmatprep.subr.mxu0 %v563
    %5727 = vmatpush1.msra.mxu0 %v562
    %5728 = vmatprep.subr.mxu0 %v567
    %5729 = vmatpush1.msra.mxu0 %v566
    %5730 = vmatprep.subr.mxu0 %v571
    %5731 = vmatpush1.msra.mxu0 %v570
    %5732 = vmatprep.subr.mxu0 %v575
    %5733 = vmatpush1.msra.mxu0 %v574
    %5734 = vmatprep.subr.mxu0 %v579
    %5735 = vmatpush1.msra.mxu0 %v578
    %5736 = vmatprep.subr.mxu0 %v583
    %5737 = vmatpush1.msra.mxu0 %v582
    %5738 = vmatprep.subr.mxu0 %v587
    %5739 = vmatpush1.msra.mxu0 %v586
    %5740 = vmatprep.subr.mxu0 %v591
    %5741 = vmatpush1.msra.mxu0 %v590
    %5742 = vmatprep.subr.mxu0 %v595
    %5743 = vmatpush1.msra.mxu0 %v594
    %5744 = vmatprep.subr.mxu0 %v599
    %5745 = vmatpush1.msra.mxu0 %v598
    %5746 = vmatprep.subr.mxu0 %v603
    %5747 = vmatpush1.msra.mxu0 %v602
    %5748 = vmatprep.subr.mxu0 %v607
    %5749 = vmatpush1.msra.mxu0 %v606
    %5750 = vmatprep.subr.mxu0 0.0
    %5751 = vmatpush1.msra.mxu0 0.0
    %5752 = vmatprep.subr.mxu0 0.0
    %5753 = vmatpush1.msra.mxu0 0.0
    %5754 = vmatprep.subr.mxu0 0.0
    %5755 = vmatpush1.msra.mxu0 0.0
    %5756 = vmatprep.subr.mxu0 0.0
    %5757 = vmatpush1.msra.mxu0 0.0
    %5758 = vmatprep.subr.mxu0 0.0
    %5759 = vmatpush1.msra.mxu0 0.0
    %5760 = vmatprep.subr.mxu0 0.0
    %5761 = vmatpush1.msra.mxu0 0.0
    %5762 = vmatprep.subr.mxu0 0.0
    %5763 = vmatpush1.msra.mxu0 0.0
    %5764 = vmatprep.subr.mxu0 0.0
    %5765 = vmatpush1.msra.mxu0 0.0
    %5766 = vmatprep.subr.mxu0 0.0
    %5767 = vmatpush1.msra.mxu0 0.0
    %5768 = vmatprep.subr.mxu0 0.0
    %5769 = vmatpush1.msra.mxu0 0.0
    %5770 = vmatprep.subr.mxu0 0.0
    %5771 = vmatpush1.msra.mxu0 0.0
    %5772 = vmatprep.subr.mxu0 0.0
    %5773 = vmatpush1.msra.mxu0 0.0
    %5774 = vmatprep.subr.mxu0 0.0
    %5775 = vmatpush1.msra.mxu0 0.0
    %5776 = vmatprep.subr.mxu0 0.0
    %5777 = vmatpush1.msra.mxu0 0.0
    %5778 = vmatprep.subr.mxu0 0.0
    %5779 = vmatpush1.msra.mxu0 0.0
    %5780 = vmatprep.subr.mxu0 0.0
    %5781 = vmatpush1.msra.mxu0 0.0
    %5782 = vmatprep.mubr.f32.mxu0 0.0
    %5783 = vmatmul.mubr.f32.gmra.mrb[0].mxu0 %v5716
    %v5784 = vpop.f32.mrb[0].mxu0
    %v5785 = vadd.f32 %v615, %v5784
    %v5786 = vpop.f32.mrb[0].mxu0
    %v5787 = vadd.f32 %v619, %v5786
    %5788 = vdwg.mxu0
    %5789 = vmatprep.subr.mxu0 %v549
    %5790 = vmatpush1.msra.mxu0 %v548
    %5791 = vmatprep.subr.mxu0 %v553
    %5792 = vmatpush1.msra.mxu0 %v552
    %5793 = vmatprep.subr.mxu0 %v557
    %5794 = vmatpush1.msra.mxu0 %v556
    %5795 = vmatprep.subr.mxu0 %v561
    %5796 = vmatpush1.msra.mxu0 %v560
    %5797 = vmatprep.subr.mxu0 %v565
    %5798 = vmatpush1.msra.mxu0 %v564
    %5799 = vmatprep.subr.mxu0 %v569
    %5800 = vmatpush1.msra.mxu0 %v568
    %5801 = vmatprep.subr.mxu0 %v573
    %5802 = vmatpush1.msra.mxu0 %v572
    %5803 = vmatprep.subr.mxu0 %v577
    %5804 = vmatpush1.msra.mxu0 %v576
    %5805 = vmatprep.subr.mxu0 %v581
    %5806 = vmatpush1.msra.mxu0 %v580
    %5807 = vmatprep.subr.mxu0 %v585
    %5808 = vmatpush1.msra.mxu0 %v584
    %5809 = vmatprep.subr.mxu0 %v589
    %5810 = vmatpush1.msra.mxu0 %v588
    %5811 = vmatprep.subr.mxu0 %v593
    %5812 = vmatpush1.msra.mxu0 %v592
    %5813 = vmatprep.subr.mxu0 %v597
    %5814 = vmatpush1.msra.mxu0 %v596
    %5815 = vmatprep.subr.mxu0 %v601
    %5816 = vmatpush1.msra.mxu0 %v600
    %5817 = vmatprep.subr.mxu0 %v605
    %5818 = vmatpush1.msra.mxu0 %v604
    %5819 = vmatprep.subr.mxu0 %v609
    %5820 = vmatpush1.msra.mxu0 %v608
    %5821 = vmatprep.subr.mxu0 0.0
    %5822 = vmatpush1.msra.mxu0 0.0
    %5823 = vmatprep.subr.mxu0 0.0
    %5824 = vmatpush1.msra.mxu0 0.0
    %5825 = vmatprep.subr.mxu0 0.0
    %5826 = vmatpush1.msra.mxu0 0.0
    %5827 = vmatprep.subr.mxu0 0.0
    %5828 = vmatpush1.msra.mxu0 0.0
    %5829 = vmatprep.subr.mxu0 0.0
    %5830 = vmatpush1.msra.mxu0 0.0
    %5831 = vmatprep.subr.mxu0 0.0
    %5832 = vmatpush1.msra.mxu0 0.0
    %5833 = vmatprep.subr.mxu0 0.0
    %5834 = vmatpush1.msra.mxu0 0.0
    %5835 = vmatprep.subr.mxu0 0.0
    %5836 = vmatpush1.msra.mxu0 0.0
    %5837 = vmatprep.subr.mxu0 0.0
    %5838 = vmatpush1.msra.mxu0 0.0
    %5839 = vmatprep.subr.mxu0 0.0
    %5840 = vmatpush1.msra.mxu0 0.0
    %5841 = vmatprep.subr.mxu0 0.0
    %5842 = vmatpush1.msra.mxu0 0.0
    %5843 = vmatprep.subr.mxu0 0.0
    %5844 = vmatpush1.msra.mxu0 0.0
    %5845 = vmatprep.subr.mxu0 0.0
    %5846 = vmatpush1.msra.mxu0 0.0
    %5847 = vmatprep.subr.mxu0 0.0
    %5848 = vmatpush1.msra.mxu0 0.0
    %5849 = vmatprep.subr.mxu0 0.0
    %5850 = vmatpush1.msra.mxu0 0.0
    %5851 = vmatprep.subr.mxu0 0.0
    %5852 = vmatpush1.msra.mxu0 0.0
    %5853 = vmatprep.mubr.f32.mxu0 0.0
    %5854 = vmatmul.mubr.f32.gmra.mrb[0].mxu0 %v5716
    %v5855 = vpop.f32.mrb[0].mxu0
    %v5856 = vadd.f32 %v623, %v5855
    %v5857 = vpop.f32.mrb[0].mxu0
    %v5858 = vadd.f32 %v627, %v5857
    %5859 = vdwg.mxu0
    %5860 = vmatprep.subr.mxu0 %v775
    %5861 = vmatpush1.msra.mxu0 %v774
    %5862 = vmatprep.subr.mxu0 %v779
    %5863 = vmatpush1.msra.mxu0 %v778
    %5864 = vmatprep.subr.mxu0 %v783
    %5865 = vmatpush1.msra.mxu0 %v782
    %5866 = vmatprep.subr.mxu0 %v787
    %5867 = vmatpush1.msra.mxu0 %v786
    %5868 = vmatprep.subr.mxu0 %v791
    %5869 = vmatpush1.msra.mxu0 %v790
    %5870 = vmatprep.subr.mxu0 %v795
    %5871 = vmatpush1.msra.mxu0 %v794
    %5872 = vmatprep.subr.mxu0 %v799
    %5873 = vmatpush1.msra.mxu0 %v798
    %5874 = vmatprep.subr.mxu0 %v803
    %5875 = vmatpush1.msra.mxu0 %v802
    %5876 = vmatprep.subr.mxu0 %v807
    %5877 = vmatpush1.msra.mxu0 %v806
    %5878 = vmatprep.subr.mxu0 %v811
    %5879 = vmatpush1.msra.mxu0 %v810
    %5880 = vmatprep.subr.mxu0 %v815
    %5881 = vmatpush1.msra.mxu0 %v814
    %5882 = vmatprep.subr.mxu0 %v819
    %5883 = vmatpush1.msra.mxu0 %v818
    %5884 = vmatprep.subr.mxu0 %v823
    %5885 = vmatpush1.msra.mxu0 %v822
    %5886 = vmatprep.subr.mxu0 %v827
    %5887 = vmatpush1.msra.mxu0 %v826
    %5888 = vmatprep.subr.mxu0 %v831
    %5889 = vmatpush1.msra.mxu0 %v830
    %5890 = vmatprep.subr.mxu0 %v835
    %5891 = vmatpush1.msra.mxu0 %v834
    %5892 = vmatprep.subr.mxu0 0.0
    %5893 = vmatpush1.msra.mxu0 0.0
    %5894 = vmatprep.subr.mxu0 0.0
    %5895 = vmatpush1.msra.mxu0 0.0
    %5896 = vmatprep.subr.mxu0 0.0
    %5897 = vmatpush1.msra.mxu0 0.0
    %5898 = vmatprep.subr.mxu0 0.0
    %5899 = vmatpush1.msra.mxu0 0.0
    %5900 = vmatprep.subr.mxu0 0.0
    %5901 = vmatpush1.msra.mxu0 0.0
    %5902 = vmatprep.subr.mxu0 0.0
    %5903 = vmatpush1.msra.mxu0 0.0
    %5904 = vmatprep.subr.mxu0 0.0
    %5905 = vmatpush1.msra.mxu0 0.0
    %5906 = vmatprep.subr.mxu0 0.0
    %5907 = vmatpush1.msra.mxu0 0.0
    %5908 = vmatprep.subr.mxu0 0.0
    %5909 = vmatpush1.msra.mxu0 0.0
    %5910 = vmatprep.subr.mxu0 0.0
    %5911 = vmatpush1.msra.mxu0 0.0
    %5912 = vmatprep.subr.mxu0 0.0
    %5913 = vmatpush1.msra.mxu0 0.0
    %5914 = vmatprep.subr.mxu0 0.0
    %5915 = vmatpush1.msra.mxu0 0.0
    %5916 = vmatprep.subr.mxu0 0.0
    %5917 = vmatpush1.msra.mxu0 0.0
    %5918 = vmatprep.subr.mxu0 0.0
    %5919 = vmatpush1.msra.mxu0 0.0
    %5920 = vmatprep.subr.mxu0 0.0
    %5921 = vmatpush1.msra.mxu0 0.0
    %5922 = vmatprep.subr.mxu0 0.0
    %5923 = vmatpush1.msra.mxu0 0.0
    %5924 = vmatprep.mubr.f32.mxu0 0.0
    %5925 = vmatmul.mubr.f32.gmra.mrb[0].mxu0 %v5217
    %v5926 = vpop.f32.mrb[0].mxu0
    %v5927 = vadd.f32 0.0, %v5926
    %v5928 = vpop.f32.mrb[0].mxu0
    %v5929 = vadd.f32 0.0, %v5928
    %5930 = vdwg.mxu0
    %5931 = vmatprep.subr.mxu0 %v777
    %5932 = vmatpush1.msra.mxu0 %v776
    %5933 = vmatprep.subr.mxu0 %v781
    %5934 = vmatpush1.msra.mxu0 %v780
    %5935 = vmatprep.subr.mxu0 %v785
    %5936 = vmatpush1.msra.mxu0 %v784
    %5937 = vmatprep.subr.mxu0 %v789
    %5938 = vmatpush1.msra.mxu0 %v788
    %5939 = vmatprep.subr.mxu0 %v793
    %5940 = vmatpush1.msra.mxu0 %v792
    %5941 = vmatprep.subr.mxu0 %v797
    %5942 = vmatpush1.msra.mxu0 %v796
    %5943 = vmatprep.subr.mxu0 %v801
    %5944 = vmatpush1.msra.mxu0 %v800
    %5945 = vmatprep.subr.mxu0 %v805
    %5946 = vmatpush1.msra.mxu0 %v804
    %5947 = vmatprep.subr.mxu0 %v809
    %5948 = vmatpush1.msra.mxu0 %v808
    %5949 = vmatprep.subr.mxu0 %v813
    %5950 = vmatpush1.msra.mxu0 %v812
    %5951 = vmatprep.subr.mxu0 %v817
    %5952 = vmatpush1.msra.mxu0 %v816
    %5953 = vmatprep.subr.mxu0 %v821
    %5954 = vmatpush1.msra.mxu0 %v820
    %5955 = vmatprep.subr.mxu0 %v825
    %5956 = vmatpush1.msra.mxu0 %v824
    %5957 = vmatprep.subr.mxu0 %v829
    %5958 = vmatpush1.msra.mxu0 %v828
    %5959 = vmatprep.subr.mxu0 %v833
    %5960 = vmatpush1.msra.mxu0 %v832
    %5961 = vmatprep.subr.mxu0 %v837
    %5962 = vmatpush1.msra.mxu0 %v836
    %5963 = vmatprep.subr.mxu0 0.0
    %5964 = vmatpush1.msra.mxu0 0.0
    %5965 = vmatprep.subr.mxu0 0.0
    %5966 = vmatpush1.msra.mxu0 0.0
    %5967 = vmatprep.subr.mxu0 0.0
    %5968 = vmatpush1.msra.mxu0 0.0
    %5969 = vmatprep.subr.mxu0 0.0
    %5970 = vmatpush1.msra.mxu0 0.0
    %5971 = vmatprep.subr.mxu0 0.0
    %5972 = vmatpush1.msra.mxu0 0.0
    %5973 = vmatprep.subr.mxu0 0.0
    %5974 = vmatpush1.msra.mxu0 0.0
    %5975 = vmatprep.subr.mxu0 0.0
    %5976 = vmatpush1.msra.mxu0 0.0
    %5977 = vmatprep.subr.mxu0 0.0
    %5978 = vmatpush1.msra.mxu0 0.0
    %5979 = vmatprep.subr.mxu0 0.0
    %5980 = vmatpush1.msra.mxu0 0.0
    %5981 = vmatprep.subr.mxu0 0.0
    %5982 = vmatpush1.msra.mxu0 0.0
    %5983 = vmatprep.subr.mxu0 0.0
    %5984 = vmatpush1.msra.mxu0 0.0
    %5985 = vmatprep.subr.mxu0 0.0
    %5986 = vmatpush1.msra.mxu0 0.0
    %5987 = vmatprep.subr.mxu0 0.0
    %5988 = vmatpush1.msra.mxu0 0.0
    %5989 = vmatprep.subr.mxu0 0.0
    %5990 = vmatpush1.msra.mxu0 0.0
    %5991 = vmatprep.subr.mxu0 0.0
    %5992 = vmatpush1.msra.mxu0 0.0
    %5993 = vmatprep.subr.mxu0 0.0
    %5994 = vmatpush1.msra.mxu0 0.0
    %5995 = vmatprep.mubr.f32.mxu0 0.0
    %5996 = vmatmul.mubr.f32.gmra.mrb[0].mxu0 %v5217
    %v5997 = vpop.f32.mrb[0].mxu0
    %v5998 = vadd.f32 0.0, %v5997
    %v5999 = vpop.f32.mrb[0].mxu0
    %v6000 = vadd.f32 0.0, %v5999
    %6001 = vdwg.mxu0
    %v6002 = vadd.f32 %v5785, %v5927
    %v6003 = vadd.f32 %v5787, %v5929
    %v6004 = vadd.f32 %v5856, %v5998
    %v6005 = vadd.f32 %v5858, %v6000
    %v6006 = vxor.u32 %v6002, 2147483648
    %v6007 = vxor.u32 %v6003, 2147483648
    %v6008 = vxor.u32 %v6004, 2147483648
    %v6009 = vmul.f32 %v6006, 1.442695
    %v6010 = vpow.pop %v6009
    %v6011 = vmul.f32 %v6007, 1.442695
    %v6012 = vpow.pop %v6011
    %v6013 = vmul.f32 %v6008, 1.442695
    %v6014 = vpow.pop %v6013
    %v6015 = vadd.f32 %v6010, 1.0
    %v6016 = vadd.f32 %v6012, 1.0
    %v6017 = vadd.f32 %v6014, 1.0
    %v6018 = vrcp.pop %v6015
    %v6019 = vmul.f32 1.0, %v6018
    %v6020 = vrcp.pop %v6016
    %v6021 = vmul.f32 1.0, %v6020
    %v6022 = vrcp.pop %v6017
    %v6023 = vmul.f32 1.0, %v6022
    %v6024 = vtanh.pop %v6005
    %v6025 = vmul.f32 %v6021, %v5215
    %v6026 = vmul.f32 %v6019, %v6024
    %v6027 = vadd.f32 %v6025, %v6026
    %v6028 = vtanh.pop %v6027
    %v6029 = vmul.f32 %v6023, %v6028
    %6030 = vmatprep.subr.mxu0 %v1009
    %6031 = vmatpush1.msra.mxu0 %v1008
    %6032 = vmatprep.subr.mxu0 %v1013
    %6033 = vmatpush1.msra.mxu0 %v1012
    %6034 = vmatprep.subr.mxu0 %v1017
    %6035 = vmatpush1.msra.mxu0 %v1016
    %6036 = vmatprep.subr.mxu0 %v1021
    %6037 = vmatpush1.msra.mxu0 %v1020
    %6038 = vmatprep.subr.mxu0 %v1025
    %6039 = vmatpush1.msra.mxu0 %v1024
    %6040 = vmatprep.subr.mxu0 %v1029
    %6041 = vmatpush1.msra.mxu0 %v1028
    %6042 = vmatprep.subr.mxu0 %v1033
    %6043 = vmatpush1.msra.mxu0 %v1032
    %6044 = vmatprep.subr.mxu0 %v1037
    %6045 = vmatpush1.msra.mxu0 %v1036
    %6046 = vmatprep.subr.mxu0 %v1041
    %6047 = vmatpush1.msra.mxu0 %v1040
    %6048 = vmatprep.subr.mxu0 %v1045
    %6049 = vmatpush1.msra.mxu0 %v1044
    %6050 = vmatprep.subr.mxu0 %v1049
    %6051 = vmatpush1.msra.mxu0 %v1048
    %6052 = vmatprep.subr.mxu0 %v1053
    %6053 = vmatpush1.msra.mxu0 %v1052
    %6054 = vmatprep.subr.mxu0 %v1057
    %6055 = vmatpush1.msra.mxu0 %v1056
    %6056 = vmatprep.subr.mxu0 %v1061
    %6057 = vmatpush1.msra.mxu0 %v1060
    %6058 = vmatprep.subr.mxu0 %v1065
    %6059 = vmatpush1.msra.mxu0 %v1064
    %6060 = vmatprep.subr.mxu0 %v1069
    %6061 = vmatpush1.msra.mxu0 %v1068
    %6062 = vmatprep.subr.mxu0 0.0
    %6063 = vmatpush1.msra.mxu0 0.0
    %6064 = vmatprep.subr.mxu0 0.0
    %6065 = vmatpush1.msra.mxu0 0.0
    %6066 = vmatprep.subr.mxu0 0.0
    %6067 = vmatpush1.msra.mxu0 0.0
    %6068 = vmatprep.subr.mxu0 0.0
    %6069 = vmatpush1.msra.mxu0 0.0
    %6070 = vmatprep.subr.mxu0 0.0
    %6071 = vmatpush1.msra.mxu0 0.0
    %6072 = vmatprep.subr.mxu0 0.0
    %6073 = vmatpush1.msra.mxu0 0.0
    %6074 = vmatprep.subr.mxu0 0.0
    %6075 = vmatpush1.msra.mxu0 0.0
    %6076 = vmatprep.subr.mxu0 0.0
    %6077 = vmatpush1.msra.mxu0 0.0
    %6078 = vmatprep.subr.mxu0 0.0
    %6079 = vmatpush1.msra.mxu0 0.0
    %6080 = vmatprep.subr.mxu0 0.0
    %6081 = vmatpush1.msra.mxu0 0.0
    %6082 = vmatprep.subr.mxu0 0.0
    %6083 = vmatpush1.msra.mxu0 0.0
    %6084 = vmatprep.subr.mxu0 0.0
    %6085 = vmatpush1.msra.mxu0 0.0
    %6086 = vmatprep.subr.mxu0 0.0
    %6087 = vmatpush1.msra.mxu0 0.0
    %6088 = vmatprep.subr.mxu0 0.0
    %6089 = vmatpush1.msra.mxu0 0.0
    %6090 = vmatprep.subr.mxu0 0.0
    %6091 = vmatpush1.msra.mxu0 0.0
    %6092 = vmatprep.subr.mxu0 0.0
    %6093 = vmatpush1.msra.mxu0 0.0
    %6094 = vmatprep.mubr.f32.mxu0 0.0
    %6095 = vmatmul.mubr.f32.gmra.mrb[0].mxu0 %v6029
    %v6096 = vpop.f32.mrb[0].mxu0
    %v6097 = vadd.f32 %v1077, %v6096
    %v6098 = vpop.f32.mrb[0].mxu0
    %v6099 = vadd.f32 %v1081, %v6098
    %6100 = vdwg.mxu0
    %6101 = vmatprep.subr.mxu0 %v1011
    %6102 = vmatpush1.msra.mxu0 %v1010
    %6103 = vmatprep.subr.mxu0 %v1015
    %6104 = vmatpush1.msra.mxu0 %v1014
    %6105 = vmatprep.subr.mxu0 %v1019
    %6106 = vmatpush1.msra.mxu0 %v1018
    %6107 = vmatprep.subr.mxu0 %v1023
    %6108 = vmatpush1.msra.mxu0 %v1022
    %6109 = vmatprep.subr.mxu0 %v1027
    %6110 = vmatpush1.msra.mxu0 %v1026
    %6111 = vmatprep.subr.mxu0 %v1031
    %6112 = vmatpush1.msra.mxu0 %v1030
    %6113 = vmatprep.subr.mxu0 %v1035
    %6114 = vmatpush1.msra.mxu0 %v1034
    %6115 = vmatprep.subr.mxu0 %v1039
    %6116 = vmatpush1.msra.mxu0 %v1038
    %6117 = vmatprep.subr.mxu0 %v1043
    %6118 = vmatpush1.msra.mxu0 %v1042
    %6119 = vmatprep.subr.mxu0 %v1047
    %6120 = vmatpush1.msra.mxu0 %v1046
    %6121 = vmatprep.subr.mxu0 %v1051
    %6122 = vmatpush1.msra.mxu0 %v1050
    %6123 = vmatprep.subr.mxu0 %v1055
    %6124 = vmatpush1.msra.mxu0 %v1054
    %6125 = vmatprep.subr.mxu0 %v1059
    %6126 = vmatpush1.msra.mxu0 %v1058
    %6127 = vmatprep.subr.mxu0 %v1063
    %6128 = vmatpush1.msra.mxu0 %v1062
    %6129 = vmatprep.subr.mxu0 %v1067
    %6130 = vmatpush1.msra.mxu0 %v1066
    %6131 = vmatprep.subr.mxu0 %v1071
    %6132 = vmatpush1.msra.mxu0 %v1070
    %6133 = vmatprep.subr.mxu0 0.0
    %6134 = vmatpush1.msra.mxu0 0.0
    %6135 = vmatprep.subr.mxu0 0.0
    %6136 = vmatpush1.msra.mxu0 0.0
    %6137 = vmatprep.subr.mxu0 0.0
    %6138 = vmatpush1.msra.mxu0 0.0
    %6139 = vmatprep.subr.mxu0 0.0
    %6140 = vmatpush1.msra.mxu0 0.0
    %6141 = vmatprep.subr.mxu0 0.0
    %6142 = vmatpush1.msra.mxu0 0.0
    %6143 = vmatprep.subr.mxu0 0.0
    %6144 = vmatpush1.msra.mxu0 0.0
    %6145 = vmatprep.subr.mxu0 0.0
    %6146 = vmatpush1.msra.mxu0 0.0
    %6147 = vmatprep.subr.mxu0 0.0
    %6148 = vmatpush1.msra.mxu0 0.0
    %6149 = vmatprep.subr.mxu0 0.0
    %6150 = vmatpush1.msra.mxu0 0.0
    %6151 = vmatprep.subr.mxu0 0.0
    %6152 = vmatpush1.msra.mxu0 0.0
    %6153 = vmatprep.subr.mxu0 0.0
    %6154 = vmatpush1.msra.mxu0 0.0
    %6155 = vmatprep.subr.mxu0 0.0
    %6156 = vmatpush1.msra.mxu0 0.0
    %6157 = vmatprep.subr.mxu0 0.0
    %6158 = vmatpush1.msra.mxu0 0.0
    %6159 = vmatprep.subr.mxu0 0.0
    %6160 = vmatpush1.msra.mxu0 0.0
    %6161 = vmatprep.subr.mxu0 0.0
    %6162 = vmatpush1.msra.mxu0 0.0
    %6163 = vmatprep.subr.mxu0 0.0
    %6164 = vmatpush1.msra.mxu0 0.0
    %6165 = vmatprep.mubr.f32.mxu0 0.0
    %6166 = vmatmul.mubr.f32.gmra.mrb[0].mxu0 %v6029
    %v6167 = vpop.f32.mrb[0].mxu0
    %v6168 = vadd.f32 %v1085, %v6167
    %v6169 = vpop.f32.mrb[0].mxu0
    %v6170 = vadd.f32 %v1089, %v6169
    %6171 = vdwg.mxu0
    %6172 = vmatprep.subr.mxu0 %v1237
    %6173 = vmatpush1.msra.mxu0 %v1236
    %6174 = vmatprep.subr.mxu0 %v1241
    %6175 = vmatpush1.msra.mxu0 %v1240
    %6176 = vmatprep.subr.mxu0 %v1245
    %6177 = vmatpush1.msra.mxu0 %v1244
    %6178 = vmatprep.subr.mxu0 %v1249
    %6179 = vmatpush1.msra.mxu0 %v1248
    %6180 = vmatprep.subr.mxu0 %v1253
    %6181 = vmatpush1.msra.mxu0 %v1252
    %6182 = vmatprep.subr.mxu0 %v1257
    %6183 = vmatpush1.msra.mxu0 %v1256
    %6184 = vmatprep.subr.mxu0 %v1261
    %6185 = vmatpush1.msra.mxu0 %v1260
    %6186 = vmatprep.subr.mxu0 %v1265
    %6187 = vmatpush1.msra.mxu0 %v1264
    %6188 = vmatprep.subr.mxu0 %v1269
    %6189 = vmatpush1.msra.mxu0 %v1268
    %6190 = vmatprep.subr.mxu0 %v1273
    %6191 = vmatpush1.msra.mxu0 %v1272
    %6192 = vmatprep.subr.mxu0 %v1277
    %6193 = vmatpush1.msra.mxu0 %v1276
    %6194 = vmatprep.subr.mxu0 %v1281
    %6195 = vmatpush1.msra.mxu0 %v1280
    %6196 = vmatprep.subr.mxu0 %v1285
    %6197 = vmatpush1.msra.mxu0 %v1284
    %6198 = vmatprep.subr.mxu0 %v1289
    %6199 = vmatpush1.msra.mxu0 %v1288
    %6200 = vmatprep.subr.mxu0 %v1293
    %6201 = vmatpush1.msra.mxu0 %v1292
    %6202 = vmatprep.subr.mxu0 %v1297
    %6203 = vmatpush1.msra.mxu0 %v1296
    %6204 = vmatprep.subr.mxu0 0.0
    %6205 = vmatpush1.msra.mxu0 0.0
    %6206 = vmatprep.subr.mxu0 0.0
    %6207 = vmatpush1.msra.mxu0 0.0
    %6208 = vmatprep.subr.mxu0 0.0
    %6209 = vmatpush1.msra.mxu0 0.0
    %6210 = vmatprep.subr.mxu0 0.0
    %6211 = vmatpush1.msra.mxu0 0.0
    %6212 = vmatprep.subr.mxu0 0.0
    %6213 = vmatpush1.msra.mxu0 0.0
    %6214 = vmatprep.subr.mxu0 0.0
    %6215 = vmatpush1.msra.mxu0 0.0
    %6216 = vmatprep.subr.mxu0 0.0
    %6217 = vmatpush1.msra.mxu0 0.0
    %6218 = vmatprep.subr.mxu0 0.0
    %6219 = vmatpush1.msra.mxu0 0.0
    %6220 = vmatprep.subr.mxu0 0.0
    %6221 = vmatpush1.msra.mxu0 0.0
    %6222 = vmatprep.subr.mxu0 0.0
    %6223 = vmatpush1.msra.mxu0 0.0
    %6224 = vmatprep.subr.mxu0 0.0
    %6225 = vmatpush1.msra.mxu0 0.0
    %6226 = vmatprep.subr.mxu0 0.0
    %6227 = vmatpush1.msra.mxu0 0.0
    %6228 = vmatprep.subr.mxu0 0.0
    %6229 = vmatpush1.msra.mxu0 0.0
    %6230 = vmatprep.subr.mxu0 0.0
    %6231 = vmatpush1.msra.mxu0 0.0
    %6232 = vmatprep.subr.mxu0 0.0
    %6233 = vmatpush1.msra.mxu0 0.0
    %6234 = vmatprep.subr.mxu0 0.0
    %6235 = vmatpush1.msra.mxu0 0.0
    %6236 = vmatprep.mubr.f32.mxu0 0.0
    %6237 = vmatmul.mubr.f32.gmra.mrb[0].mxu0 %v5529
    %v6238 = vpop.f32.mrb[0].mxu0
    %v6239 = vadd.f32 0.0, %v6238
    %v6240 = vpop.f32.mrb[0].mxu0
    %v6241 = vadd.f32 0.0, %v6240
    %6242 = vdwg.mxu0
    %6243 = vmatprep.subr.mxu0 %v1239
    %6244 = vmatpush1.msra.mxu0 %v1238
    %6245 = vmatprep.subr.mxu0 %v1243
    %6246 = vmatpush1.msra.mxu0 %v1242
    %6247 = vmatprep.subr.mxu0 %v1247
    %6248 = vmatpush1.msra.mxu0 %v1246
    %6249 = vmatprep.subr.mxu0 %v1251
    %6250 = vmatpush1.msra.mxu0 %v1250
    %6251 = vmatprep.subr.mxu0 %v1255
    %6252 = vmatpush1.msra.mxu0 %v1254
    %6253 = vmatprep.subr.mxu0 %v1259
    %6254 = vmatpush1.msra.mxu0 %v1258
    %6255 = vmatprep.subr.mxu0 %v1263
    %6256 = vmatpush1.msra.mxu0 %v1262
    %6257 = vmatprep.subr.mxu0 %v1267
    %6258 = vmatpush1.msra.mxu0 %v1266
    %6259 = vmatprep.subr.mxu0 %v1271
    %6260 = vmatpush1.msra.mxu0 %v1270
    %6261 = vmatprep.subr.mxu0 %v1275
    %6262 = vmatpush1.msra.mxu0 %v1274
    %6263 = vmatprep.subr.mxu0 %v1279
    %6264 = vmatpush1.msra.mxu0 %v1278
    %6265 = vmatprep.subr.mxu0 %v1283
    %6266 = vmatpush1.msra.mxu0 %v1282
    %6267 = vmatprep.subr.mxu0 %v1287
    %6268 = vmatpush1.msra.mxu0 %v1286
    %6269 = vmatprep.subr.mxu0 %v1291
    %6270 = vmatpush1.msra.mxu0 %v1290
    %6271 = vmatprep.subr.mxu0 %v1295
    %6272 = vmatpush1.msra.mxu0 %v1294
    %6273 = vmatprep.subr.mxu0 %v1299
    %6274 = vmatpush1.msra.mxu0 %v1298
    %6275 = vmatprep.subr.mxu0 0.0
    %6276 = vmatpush1.msra.mxu0 0.0
    %6277 = vmatprep.subr.mxu0 0.0
    %6278 = vmatpush1.msra.mxu0 0.0
    %6279 = vmatprep.subr.mxu0 0.0
    %6280 = vmatpush1.msra.mxu0 0.0
    %6281 = vmatprep.subr.mxu0 0.0
    %6282 = vmatpush1.msra.mxu0 0.0
    %6283 = vmatprep.subr.mxu0 0.0
    %6284 = vmatpush1.msra.mxu0 0.0
    %6285 = vmatprep.subr.mxu0 0.0
    %6286 = vmatpush1.msra.mxu0 0.0
    %6287 = vmatprep.subr.mxu0 0.0
    %6288 = vmatpush1.msra.mxu0 0.0
    %6289 = vmatprep.subr.mxu0 0.0
    %6290 = vmatpush1.msra.mxu0 0.0
    %6291 = vmatprep.subr.mxu0 0.0
    %6292 = vmatpush1.msra.mxu0 0.0
    %6293 = vmatprep.subr.mxu0 0.0
    %6294 = vmatpush1.msra.mxu0 0.0
    %6295 = vmatprep.subr.mxu0 0.0
    %6296 = vmatpush1.msra.mxu0 0.0
    %6297 = vmatprep.subr.mxu0 0.0
    %6298 = vmatpush1.msra.mxu0 0.0
    %6299 = vmatprep.subr.mxu0 0.0
    %6300 = vmatpush1.msra.mxu0 0.0
    %6301 = vmatprep.subr.mxu0 0.0
    %6302 = vmatpush1.msra.mxu0 0.0
    %6303 = vmatprep.subr.mxu0 0.0
    %6304 = vmatpush1.msra.mxu0 0.0
    %6305 = vmatprep.subr.mxu0 0.0
    %6306 = vmatpush1.msra.mxu0 0.0
    %6307 = vmatprep.mubr.f32.mxu0 0.0
    %6308 = vmatmul.mubr.f32.gmra.mrb[0].mxu0 %v5529
    %v6309 = vpop.f32.mrb[0].mxu0
    %v6310 = vadd.f32 0.0, %v6309
    %v6311 = vpop.f32.mrb[0].mxu0
    %v6312 = vadd.f32 0.0, %v6311
    %6313 = vdwg.mxu0
    %v6314 = vadd.f32 %v6097, %v6239
    %v6315 = vadd.f32 %v6099, %v6241
    %v6316 = vadd.f32 %v6168, %v6310
    %v6317 = vadd.f32 %v6170, %v6312
    %v6318 = vxor.u32 %v6314, 2147483648
    %v6319 = vxor.u32 %v6315, 2147483648
    %v6320 = vxor.u32 %v6316, 2147483648
    %v6321 = vmul.f32 %v6318, 1.442695
    %v6322 = vpow.pop %v6321
    %v6323 = vmul.f32 %v6319, 1.442695
    %v6324 = vpow.pop %v6323
    %v6325 = vmul.f32 %v6320, 1.442695
    %v6326 = vpow.pop %v6325
    %v6327 = vadd.f32 %v6322, 1.0
    %v6328 = vadd.f32 %v6324, 1.0
    %v6329 = vadd.f32 %v6326, 1.0
    %v6330 = vrcp.pop %v6327
    %v6331 = vmul.f32 1.0, %v6330
    %v6332 = vrcp.pop %v6328
    %v6333 = vmul.f32 1.0, %v6332
    %v6334 = vrcp.pop %v6329
    %v6335 = vmul.f32 1.0, %v6334
    %v6336 = vtanh.pop %v6317
    %v6337 = vmul.f32 %v6333, %v5527
    %v6338 = vmul.f32 %v6331, %v6336
    %v6339 = vadd.f32 %v6337, %v6338
    %v6340 = vtanh.pop %v6339
    %v6341 = vmul.f32 %v6335, %v6340
    %6342 = vmatprep.subr.mxu0 %v313
    %6343 = vmatpush1.msra.mxu0 %v312
    %6344 = vmatprep.subr.mxu0 %v317
    %6345 = vmatpush1.msra.mxu0 %v316
    %6346 = vmatprep.subr.mxu0 %v321
    %6347 = vmatpush1.msra.mxu0 %v320
    %6348 = vmatprep.subr.mxu0 %v325
    %6349 = vmatpush1.msra.mxu0 %v324
    %6350 = vmatprep.subr.mxu0 %v329
    %6351 = vmatpush1.msra.mxu0 %v328
    %6352 = vmatprep.subr.mxu0 %v333
    %6353 = vmatpush1.msra.mxu0 %v332
    %6354 = vmatprep.subr.mxu0 %v337
    %6355 = vmatpush1.msra.mxu0 %v336
    %6356 = vmatprep.subr.mxu0 %v341
    %6357 = vmatpush1.msra.mxu0 %v340
    %6358 = vmatprep.subr.mxu0 %v345
    %6359 = vmatpush1.msra.mxu0 %v344
    %6360 = vmatprep.subr.mxu0 %v349
    %6361 = vmatpush1.msra.mxu0 %v348
    %6362 = vmatprep.subr.mxu0 %v353
    %6363 = vmatpush1.msra.mxu0 %v352
    %6364 = vmatprep.subr.mxu0 %v357
    %6365 = vmatpush1.msra.mxu0 %v356
    %6366 = vmatprep.subr.mxu0 %v361
    %6367 = vmatpush1.msra.mxu0 %v360
    %6368 = vmatprep.subr.mxu0 %v365
    %6369 = vmatpush1.msra.mxu0 %v364
    %6370 = vmatprep.subr.mxu0 %v369
    %6371 = vmatpush1.msra.mxu0 %v368
    %6372 = vmatprep.subr.mxu0 %v373
    %6373 = vmatpush1.msra.mxu0 %v372
    %6374 = vmatprep.subr.mxu0 0.0
    %6375 = vmatpush1.msra.mxu0 0.0
    %6376 = vmatprep.subr.mxu0 0.0
    %6377 = vmatpush1.msra.mxu0 0.0
    %6378 = vmatprep.subr.mxu0 0.0
    %6379 = vmatpush1.msra.mxu0 0.0
    %6380 = vmatprep.subr.mxu0 0.0
    %6381 = vmatpush1.msra.mxu0 0.0
    %6382 = vmatprep.subr.mxu0 0.0
    %6383 = vmatpush1.msra.mxu0 0.0
    %6384 = vmatprep.subr.mxu0 0.0
    %6385 = vmatpush1.msra.mxu0 0.0
    %6386 = vmatprep.subr.mxu0 0.0
    %6387 = vmatpush1.msra.mxu0 0.0
    %6388 = vmatprep.subr.mxu0 0.0
    %6389 = vmatpush1.msra.mxu0 0.0
    %6390 = vmatprep.subr.mxu0 0.0
    %6391 = vmatpush1.msra.mxu0 0.0
    %6392 = vmatprep.subr.mxu0 0.0
    %6393 = vmatpush1.msra.mxu0 0.0
    %6394 = vmatprep.subr.mxu0 0.0
    %6395 = vmatpush1.msra.mxu0 0.0
    %6396 = vmatprep.subr.mxu0 0.0
    %6397 = vmatpush1.msra.mxu0 0.0
    %6398 = vmatprep.subr.mxu0 0.0
    %6399 = vmatpush1.msra.mxu0 0.0
    %6400 = vmatprep.subr.mxu0 0.0
    %6401 = vmatpush1.msra.mxu0 0.0
    %6402 = vmatprep.subr.mxu0 0.0
    %6403 = vmatpush1.msra.mxu0 0.0
    %6404 = vmatprep.subr.mxu0 0.0
    %6405 = vmatpush1.msra.mxu0 0.0
    %6406 = vmatprep.mubr.f32.mxu0 0.0
    %6407 = vmatmul.mubr.f32.gmra.mrb[0].mxu0 %v5716
    %v6408 = vpop.f32.mrb[0].mxu0
    %v6409 = vadd.f32 0.0, %v6408
    %v6410 = vpop.f32.mrb[0].mxu0
    %v6411 = vadd.f32 0.0, %v6410
    %6412 = vdwg.mxu0
    %6413 = vmatprep.subr.mxu0 %v315
    %6414 = vmatpush1.msra.mxu0 %v314
    %6415 = vmatprep.subr.mxu0 %v319
    %6416 = vmatpush1.msra.mxu0 %v318
    %6417 = vmatprep.subr.mxu0 %v323
    %6418 = vmatpush1.msra.mxu0 %v322
    %6419 = vmatprep.subr.mxu0 %v327
    %6420 = vmatpush1.msra.mxu0 %v326
    %6421 = vmatprep.subr.mxu0 %v331
    %6422 = vmatpush1.msra.mxu0 %v330
    %6423 = vmatprep.subr.mxu0 %v335
    %6424 = vmatpush1.msra.mxu0 %v334
    %6425 = vmatprep.subr.mxu0 %v339
    %6426 = vmatpush1.msra.mxu0 %v338
    %6427 = vmatprep.subr.mxu0 %v343
    %6428 = vmatpush1.msra.mxu0 %v342
    %6429 = vmatprep.subr.mxu0 %v347
    %6430 = vmatpush1.msra.mxu0 %v346
    %6431 = vmatprep.subr.mxu0 %v351
    %6432 = vmatpush1.msra.mxu0 %v350
    %6433 = vmatprep.subr.mxu0 %v355
    %6434 = vmatpush1.msra.mxu0 %v354
    %6435 = vmatprep.subr.mxu0 %v359
    %6436 = vmatpush1.msra.mxu0 %v358
    %6437 = vmatprep.subr.mxu0 %v363
    %6438 = vmatpush1.msra.mxu0 %v362
    %6439 = vmatprep.subr.mxu0 %v367
    %6440 = vmatpush1.msra.mxu0 %v366
    %6441 = vmatprep.subr.mxu0 %v371
    %6442 = vmatpush1.msra.mxu0 %v370
    %6443 = vmatprep.subr.mxu0 %v375
    %6444 = vmatpush1.msra.mxu0 %v374
    %6445 = vmatprep.subr.mxu0 0.0
    %6446 = vmatpush1.msra.mxu0 0.0
    %6447 = vmatprep.subr.mxu0 0.0
    %6448 = vmatpush1.msra.mxu0 0.0
    %6449 = vmatprep.subr.mxu0 0.0
    %6450 = vmatpush1.msra.mxu0 0.0
    %6451 = vmatprep.subr.mxu0 0.0
    %6452 = vmatpush1.msra.mxu0 0.0
    %6453 = vmatprep.subr.mxu0 0.0
    %6454 = vmatpush1.msra.mxu0 0.0
    %6455 = vmatprep.subr.mxu0 0.0
    %6456 = vmatpush1.msra.mxu0 0.0
    %6457 = vmatprep.subr.mxu0 0.0
    %6458 = vmatpush1.msra.mxu0 0.0
    %6459 = vmatprep.subr.mxu0 0.0
    %6460 = vmatpush1.msra.mxu0 0.0
    %6461 = vmatprep.subr.mxu0 0.0
    %6462 = vmatpush1.msra.mxu0 0.0
    %6463 = vmatprep.subr.mxu0 0.0
    %6464 = vmatpush1.msra.mxu0 0.0
    %6465 = vmatprep.subr.mxu0 0.0
    %6466 = vmatpush1.msra.mxu0 0.0
    %6467 = vmatprep.subr.mxu0 0.0
    %6468 = vmatpush1.msra.mxu0 0.0
    %6469 = vmatprep.subr.mxu0 0.0
    %6470 = vmatpush1.msra.mxu0 0.0
    %6471 = vmatprep.subr.mxu0 0.0
    %6472 = vmatpush1.msra.mxu0 0.0
    %6473 = vmatprep.subr.mxu0 0.0
    %6474 = vmatpush1.msra.mxu0 0.0
    %6475 = vmatprep.subr.mxu0 0.0
    %6476 = vmatpush1.msra.mxu0 0.0
    %6477 = vmatprep.mubr.f32.mxu0 0.0
    %6478 = vmatmul.mubr.f32.gmra.mrb[0].mxu0 %v5716
    %v6479 = vpop.f32.mrb[0].mxu0
    %v6480 = vadd.f32 0.0, %v6479
    %v6481 = vpop.f32.mrb[0].mxu0
    %v6482 = vadd.f32 0.0, %v6481
    %6483 = vdwg.mxu0
    %v6488 = vrot.slane %v6409, 1
    %v6489 = vrot.slane %v6411, 1
    %v6490 = vrot.slane %v6480, 1
    %v6491 = vrot.slane %v6482, 1
    %v6496 = vadd.f32 %v237, %v6488
    %v6497 = vadd.f32 %v239, %v6489
    %v6498 = vadd.f32 %v308, %v6490
    %v6499 = vadd.f32 %v310, %v6491
    %v6500 = vxor.u32 %v6496, 2147483648
    %v6501 = vxor.u32 %v6497, 2147483648
    %v6502 = vxor.u32 %v6498, 2147483648
    %v6503 = vmul.f32 %v6500, 1.442695
    %v6504 = vpow.pop %v6503
    %v6505 = vmul.f32 %v6501, 1.442695
    %v6506 = vpow.pop %v6505
    %v6507 = vmul.f32 %v6502, 1.442695
    %v6508 = vpow.pop %v6507
    %v6509 = vadd.f32 %v6504, 1.0
    %v6510 = vadd.f32 %v6506, 1.0
    %v6511 = vadd.f32 %v6508, 1.0
    %v6512 = vrcp.pop %v6509
    %v6513 = vmul.f32 1.0, %v6512
    %v6514 = vrcp.pop %v6510
    %v6515 = vmul.f32 1.0, %v6514
    %v6516 = vrcp.pop %v6511
    %v6517 = vmul.f32 1.0, %v6516
    %v6518 = vtanh.pop %v6499
    %v6520 = vrot.slane %v5712, 7
    %v6522 = vmul.f32 %v6515, %v6520
    %v6523 = vmul.f32 %v6513, %v6518
    %v6524 = vadd.f32 %v6522, %v6523
    %v6525 = vtanh.pop %v6524
    %v6526 = vmul.f32 %v6517, %v6525
    %v6528 = vrot.slane %v6526, 7
    %6530 = vmatprep.subr.mxu0 %v547
    %6531 = vmatpush1.msra.mxu0 %v546
    %6532 = vmatprep.subr.mxu0 %v551
    %6533 = vmatpush1.msra.mxu0 %v550
    %6534 = vmatprep.subr.mxu0 %v555
    %6535 = vmatpush1.msra.mxu0 %v554
    %6536 = vmatprep.subr.mxu0 %v559
    %6537 = vmatpush1.msra.mxu0 %v558
    %6538 = vmatprep.subr.mxu0 %v563
    %6539 = vmatpush1.msra.mxu0 %v562
    %6540 = vmatprep.subr.mxu0 %v567
    %6541 = vmatpush1.msra.mxu0 %v566
    %6542 = vmatprep.subr.mxu0 %v571
    %6543 = vmatpush1.msra.mxu0 %v570
    %6544 = vmatprep.subr.mxu0 %v575
    %6545 = vmatpush1.msra.mxu0 %v574
    %6546 = vmatprep.subr.mxu0 %v579
    %6547 = vmatpush1.msra.mxu0 %v578
    %6548 = vmatprep.subr.mxu0 %v583
    %6549 = vmatpush1.msra.mxu0 %v582
    %6550 = vmatprep.subr.mxu0 %v587
    %6551 = vmatpush1.msra.mxu0 %v586
    %6552 = vmatprep.subr.mxu0 %v591
    %6553 = vmatpush1.msra.mxu0 %v590
    %6554 = vmatprep.subr.mxu0 %v595
    %6555 = vmatpush1.msra.mxu0 %v594
    %6556 = vmatprep.subr.mxu0 %v599
    %6557 = vmatpush1.msra.mxu0 %v598
    %6558 = vmatprep.subr.mxu0 %v603
    %6559 = vmatpush1.msra.mxu0 %v602
    %6560 = vmatprep.subr.mxu0 %v607
    %6561 = vmatpush1.msra.mxu0 %v606
    %6562 = vmatprep.subr.mxu0 0.0
    %6563 = vmatpush1.msra.mxu0 0.0
    %6564 = vmatprep.subr.mxu0 0.0
    %6565 = vmatpush1.msra.mxu0 0.0
    %6566 = vmatprep.subr.mxu0 0.0
    %6567 = vmatpush1.msra.mxu0 0.0
    %6568 = vmatprep.subr.mxu0 0.0
    %6569 = vmatpush1.msra.mxu0 0.0
    %6570 = vmatprep.subr.mxu0 0.0
    %6571 = vmatpush1.msra.mxu0 0.0
    %6572 = vmatprep.subr.mxu0 0.0
    %6573 = vmatpush1.msra.mxu0 0.0
    %6574 = vmatprep.subr.mxu0 0.0
    %6575 = vmatpush1.msra.mxu0 0.0
    %6576 = vmatprep.subr.mxu0 0.0
    %6577 = vmatpush1.msra.mxu0 0.0
    %6578 = vmatprep.subr.mxu0 0.0
    %6579 = vmatpush1.msra.mxu0 0.0
    %6580 = vmatprep.subr.mxu0 0.0
    %6581 = vmatpush1.msra.mxu0 0.0
    %6582 = vmatprep.subr.mxu0 0.0
    %6583 = vmatpush1.msra.mxu0 0.0
    %6584 = vmatprep.subr.mxu0 0.0
    %6585 = vmatpush1.msra.mxu0 0.0
    %6586 = vmatprep.subr.mxu0 0.0
    %6587 = vmatpush1.msra.mxu0 0.0
    %6588 = vmatprep.subr.mxu0 0.0
    %6589 = vmatpush1.msra.mxu0 0.0
    %6590 = vmatprep.subr.mxu0 0.0
    %6591 = vmatpush1.msra.mxu0 0.0
    %6592 = vmatprep.subr.mxu0 0.0
    %6593 = vmatpush1.msra.mxu0 0.0
    %6594 = vmatprep.mubr.f32.mxu0 0.0
    %6595 = vmatmul.mubr.f32.gmra.mrb[0].mxu0 %v6528
    %v6596 = vpop.f32.mrb[0].mxu0
    %v6597 = vadd.f32 %v615, %v6596
    %v6598 = vpop.f32.mrb[0].mxu0
    %v6599 = vadd.f32 %v619, %v6598
    %6600 = vdwg.mxu0
    %6601 = vmatprep.subr.mxu0 %v549
    %6602 = vmatpush1.msra.mxu0 %v548
    %6603 = vmatprep.subr.mxu0 %v553
    %6604 = vmatpush1.msra.mxu0 %v552
    %6605 = vmatprep.subr.mxu0 %v557
    %6606 = vmatpush1.msra.mxu0 %v556
    %6607 = vmatprep.subr.mxu0 %v561
    %6608 = vmatpush1.msra.mxu0 %v560
    %6609 = vmatprep.subr.mxu0 %v565
    %6610 = vmatpush1.msra.mxu0 %v564
    %6611 = vmatprep.subr.mxu0 %v569
    %6612 = vmatpush1.msra.mxu0 %v568
    %6613 = vmatprep.subr.mxu0 %v573
    %6614 = vmatpush1.msra.mxu0 %v572
    %6615 = vmatprep.subr.mxu0 %v577
    %6616 = vmatpush1.msra.mxu0 %v576
    %6617 = vmatprep.subr.mxu0 %v581
    %6618 = vmatpush1.msra.mxu0 %v580
    %6619 = vmatprep.subr.mxu0 %v585
    %6620 = vmatpush1.msra.mxu0 %v584
    %6621 = vmatprep.subr.mxu0 %v589
    %6622 = vmatpush1.msra.mxu0 %v588
    %6623 = vmatprep.subr.mxu0 %v593
    %6624 = vmatpush1.msra.mxu0 %v592
    %6625 = vmatprep.subr.mxu0 %v597
    %6626 = vmatpush1.msra.mxu0 %v596
    %6627 = vmatprep.subr.mxu0 %v601
    %6628 = vmatpush1.msra.mxu0 %v600
    %6629 = vmatprep.subr.mxu0 %v605
    %6630 = vmatpush1.msra.mxu0 %v604
    %6631 = vmatprep.subr.mxu0 %v609
    %6632 = vmatpush1.msra.mxu0 %v608
    %6633 = vmatprep.subr.mxu0 0.0
    %6634 = vmatpush1.msra.mxu0 0.0
    %6635 = vmatprep.subr.mxu0 0.0
    %6636 = vmatpush1.msra.mxu0 0.0
    %6637 = vmatprep.subr.mxu0 0.0
    %6638 = vmatpush1.msra.mxu0 0.0
    %6639 = vmatprep.subr.mxu0 0.0
    %6640 = vmatpush1.msra.mxu0 0.0
    %6641 = vmatprep.subr.mxu0 0.0
    %6642 = vmatpush1.msra.mxu0 0.0
    %6643 = vmatprep.subr.mxu0 0.0
    %6644 = vmatpush1.msra.mxu0 0.0
    %6645 = vmatprep.subr.mxu0 0.0
    %6646 = vmatpush1.msra.mxu0 0.0
    %6647 = vmatprep.subr.mxu0 0.0
    %6648 = vmatpush1.msra.mxu0 0.0
    %6649 = vmatprep.subr.mxu0 0.0
    %6650 = vmatpush1.msra.mxu0 0.0
    %6651 = vmatprep.subr.mxu0 0.0
    %6652 = vmatpush1.msra.mxu0 0.0
    %6653 = vmatprep.subr.mxu0 0.0
    %6654 = vmatpush1.msra.mxu0 0.0
    %6655 = vmatprep.subr.mxu0 0.0
    %6656 = vmatpush1.msra.mxu0 0.0
    %6657 = vmatprep.subr.mxu0 0.0
    %6658 = vmatpush1.msra.mxu0 0.0
    %6659 = vmatprep.subr.mxu0 0.0
    %6660 = vmatpush1.msra.mxu0 0.0
    %6661 = vmatprep.subr.mxu0 0.0
    %6662 = vmatpush1.msra.mxu0 0.0
    %6663 = vmatprep.subr.mxu0 0.0
    %6664 = vmatpush1.msra.mxu0 0.0
    %6665 = vmatprep.mubr.f32.mxu0 0.0
    %6666 = vmatmul.mubr.f32.gmra.mrb[0].mxu0 %v6528
    %v6667 = vpop.f32.mrb[0].mxu0
    %v6668 = vadd.f32 %v623, %v6667
    %v6669 = vpop.f32.mrb[0].mxu0
    %v6670 = vadd.f32 %v627, %v6669
    %6671 = vdwg.mxu0
    %6672 = vmatprep.subr.mxu0 %v775
    %6673 = vmatpush1.msra.mxu0 %v774
    %6674 = vmatprep.subr.mxu0 %v779
    %6675 = vmatpush1.msra.mxu0 %v778
    %6676 = vmatprep.subr.mxu0 %v783
    %6677 = vmatpush1.msra.mxu0 %v782
    %6678 = vmatprep.subr.mxu0 %v787
    %6679 = vmatpush1.msra.mxu0 %v786
    %6680 = vmatprep.subr.mxu0 %v791
    %6681 = vmatpush1.msra.mxu0 %v790
    %6682 = vmatprep.subr.mxu0 %v795
    %6683 = vmatpush1.msra.mxu0 %v794
    %6684 = vmatprep.subr.mxu0 %v799
    %6685 = vmatpush1.msra.mxu0 %v798
    %6686 = vmatprep.subr.mxu0 %v803
    %6687 = vmatpush1.msra.mxu0 %v802
    %6688 = vmatprep.subr.mxu0 %v807
    %6689 = vmatpush1.msra.mxu0 %v806
    %6690 = vmatprep.subr.mxu0 %v811
    %6691 = vmatpush1.msra.mxu0 %v810
    %6692 = vmatprep.subr.mxu0 %v815
    %6693 = vmatpush1.msra.mxu0 %v814
    %6694 = vmatprep.subr.mxu0 %v819
    %6695 = vmatpush1.msra.mxu0 %v818
    %6696 = vmatprep.subr.mxu0 %v823
    %6697 = vmatpush1.msra.mxu0 %v822
    %6698 = vmatprep.subr.mxu0 %v827
    %6699 = vmatpush1.msra.mxu0 %v826
    %6700 = vmatprep.subr.mxu0 %v831
    %6701 = vmatpush1.msra.mxu0 %v830
    %6702 = vmatprep.subr.mxu0 %v835
    %6703 = vmatpush1.msra.mxu0 %v834
    %6704 = vmatprep.subr.mxu0 0.0
    %6705 = vmatpush1.msra.mxu0 0.0
    %6706 = vmatprep.subr.mxu0 0.0
    %6707 = vmatpush1.msra.mxu0 0.0
    %6708 = vmatprep.subr.mxu0 0.0
    %6709 = vmatpush1.msra.mxu0 0.0
    %6710 = vmatprep.subr.mxu0 0.0
    %6711 = vmatpush1.msra.mxu0 0.0
    %6712 = vmatprep.subr.mxu0 0.0
    %6713 = vmatpush1.msra.mxu0 0.0
    %6714 = vmatprep.subr.mxu0 0.0
    %6715 = vmatpush1.msra.mxu0 0.0
    %6716 = vmatprep.subr.mxu0 0.0
    %6717 = vmatpush1.msra.mxu0 0.0
    %6718 = vmatprep.subr.mxu0 0.0
    %6719 = vmatpush1.msra.mxu0 0.0
    %6720 = vmatprep.subr.mxu0 0.0
    %6721 = vmatpush1.msra.mxu0 0.0
    %6722 = vmatprep.subr.mxu0 0.0
    %6723 = vmatpush1.msra.mxu0 0.0
    %6724 = vmatprep.subr.mxu0 0.0
    %6725 = vmatpush1.msra.mxu0 0.0
    %6726 = vmatprep.subr.mxu0 0.0
    %6727 = vmatpush1.msra.mxu0 0.0
    %6728 = vmatprep.subr.mxu0 0.0
    %6729 = vmatpush1.msra.mxu0 0.0
    %6730 = vmatprep.subr.mxu0 0.0
    %6731 = vmatpush1.msra.mxu0 0.0
    %6732 = vmatprep.subr.mxu0 0.0
    %6733 = vmatpush1.msra.mxu0 0.0
    %6734 = vmatprep.subr.mxu0 0.0
    %6735 = vmatpush1.msra.mxu0 0.0
    %6736 = vmatprep.mubr.f32.mxu0 0.0
    %6737 = vmatmul.mubr.f32.gmra.mrb[0].mxu0 %v6029
    %v6738 = vpop.f32.mrb[0].mxu0
    %v6739 = vadd.f32 0.0, %v6738
    %v6740 = vpop.f32.mrb[0].mxu0
    %v6741 = vadd.f32 0.0, %v6740
    %6742 = vdwg.mxu0
    %6743 = vmatprep.subr.mxu0 %v777
    %6744 = vmatpush1.msra.mxu0 %v776
    %6745 = vmatprep.subr.mxu0 %v781
    %6746 = vmatpush1.msra.mxu0 %v780
    %6747 = vmatprep.subr.mxu0 %v785
    %6748 = vmatpush1.msra.mxu0 %v784
    %6749 = vmatprep.subr.mxu0 %v789
    %6750 = vmatpush1.msra.mxu0 %v788
    %6751 = vmatprep.subr.mxu0 %v793
    %6752 = vmatpush1.msra.mxu0 %v792
    %6753 = vmatprep.subr.mxu0 %v797
    %6754 = vmatpush1.msra.mxu0 %v796
    %6755 = vmatprep.subr.mxu0 %v801
    %6756 = vmatpush1.msra.mxu0 %v800
    %6757 = vmatprep.subr.mxu0 %v805
    %6758 = vmatpush1.msra.mxu0 %v804
    %6759 = vmatprep.subr.mxu0 %v809
    %6760 = vmatpush1.msra.mxu0 %v808
    %6761 = vmatprep.subr.mxu0 %v813
    %6762 = vmatpush1.msra.mxu0 %v812
    %6763 = vmatprep.subr.mxu0 %v817
    %6764 = vmatpush1.msra.mxu0 %v816
    %6765 = vmatprep.subr.mxu0 %v821
    %6766 = vmatpush1.msra.mxu0 %v820
    %6767 = vmatprep.subr.mxu0 %v825
    %6768 = vmatpush1.msra.mxu0 %v824
    %6769 = vmatprep.subr.mxu0 %v829
    %6770 = vmatpush1.msra.mxu0 %v828
    %6771 = vmatprep.subr.mxu0 %v833
    %6772 = vmatpush1.msra.mxu0 %v832
    %6773 = vmatprep.subr.mxu0 %v837
    %6774 = vmatpush1.msra.mxu0 %v836
    %6775 = vmatprep.subr.mxu0 0.0
    %6776 = vmatpush1.msra.mxu0 0.0
    %6777 = vmatprep.subr.mxu0 0.0
    %6778 = vmatpush1.msra.mxu0 0.0
    %6779 = vmatprep.subr.mxu0 0.0
    %6780 = vmatpush1.msra.mxu0 0.0
    %6781 = vmatprep.subr.mxu0 0.0
    %6782 = vmatpush1.msra.mxu0 0.0
    %6783 = vmatprep.subr.mxu0 0.0
    %6784 = vmatpush1.msra.mxu0 0.0
    %6785 = vmatprep.subr.mxu0 0.0
    %6786 = vmatpush1.msra.mxu0 0.0
    %6787 = vmatprep.subr.mxu0 0.0
    %6788 = vmatpush1.msra.mxu0 0.0
    %6789 = vmatprep.subr.mxu0 0.0
    %6790 = vmatpush1.msra.mxu0 0.0
    %6791 = vmatprep.subr.mxu0 0.0
    %6792 = vmatpush1.msra.mxu0 0.0
    %6793 = vmatprep.subr.mxu0 0.0
    %6794 = vmatpush1.msra.mxu0 0.0
    %6795 = vmatprep.subr.mxu0 0.0
    %6796 = vmatpush1.msra.mxu0 0.0
    %6797 = vmatprep.subr.mxu0 0.0
    %6798 = vmatpush1.msra.mxu0 0.0
    %6799 = vmatprep.subr.mxu0 0.0
    %6800 = vmatpush1.msra.mxu0 0.0
    %6801 = vmatprep.subr.mxu0 0.0
    %6802 = vmatpush1.msra.mxu0 0.0
    %6803 = vmatprep.subr.mxu0 0.0
    %6804 = vmatpush1.msra.mxu0 0.0
    %6805 = vmatprep.subr.mxu0 0.0
    %6806 = vmatpush1.msra.mxu0 0.0
    %6807 = vmatprep.mubr.f32.mxu0 0.0
    %6808 = vmatmul.mubr.f32.gmra.mrb[0].mxu0 %v6029
    %v6809 = vpop.f32.mrb[0].mxu0
    %v6810 = vadd.f32 0.0, %v6809
    %v6811 = vpop.f32.mrb[0].mxu0
    %v6812 = vadd.f32 0.0, %v6811
    %6813 = vdwg.mxu0
    %v6814 = vadd.f32 %v6597, %v6739
    %v6815 = vadd.f32 %v6599, %v6741
    %v6816 = vadd.f32 %v6668, %v6810
    %v6817 = vadd.f32 %v6670, %v6812
    %v6818 = vxor.u32 %v6814, 2147483648
    %v6819 = vxor.u32 %v6815, 2147483648
    %v6820 = vxor.u32 %v6816, 2147483648
    %v6821 = vmul.f32 %v6818, 1.442695
    %v6822 = vpow.pop %v6821
    %v6823 = vmul.f32 %v6819, 1.442695
    %v6824 = vpow.pop %v6823
    %v6825 = vmul.f32 %v6820, 1.442695
    %v6826 = vpow.pop %v6825
    %v6827 = vadd.f32 %v6822, 1.0
    %v6828 = vadd.f32 %v6824, 1.0
    %v6829 = vadd.f32 %v6826, 1.0
    %v6830 = vrcp.pop %v6827
    %v6831 = vmul.f32 1.0, %v6830
    %v6832 = vrcp.pop %v6828
    %v6833 = vmul.f32 1.0, %v6832
    %v6834 = vrcp.pop %v6829
    %v6835 = vmul.f32 1.0, %v6834
    %v6836 = vtanh.pop %v6817
    %v6837 = vmul.f32 %v6833, %v6027
    %v6838 = vmul.f32 %v6831, %v6836
    %v6839 = vadd.f32 %v6837, %v6838
    %v6840 = vtanh.pop %v6839
    %v6841 = vmul.f32 %v6835, %v6840
    %6842 = vmatprep.subr.mxu0 %v1009
    %6843 = vmatpush1.msra.mxu0 %v1008
    %6844 = vmatprep.subr.mxu0 %v1013
    %6845 = vmatpush1.msra.mxu0 %v1012
    %6846 = vmatprep.subr.mxu0 %v1017
    %6847 = vmatpush1.msra.mxu0 %v1016
    %6848 = vmatprep.subr.mxu0 %v1021
    %6849 = vmatpush1.msra.mxu0 %v1020
    %6850 = vmatprep.subr.mxu0 %v1025
    %6851 = vmatpush1.msra.mxu0 %v1024
    %6852 = vmatprep.subr.mxu0 %v1029
    %6853 = vmatpush1.msra.mxu0 %v1028
    %6854 = vmatprep.subr.mxu0 %v1033
    %6855 = vmatpush1.msra.mxu0 %v1032
    %6856 = vmatprep.subr.mxu0 %v1037
    %6857 = vmatpush1.msra.mxu0 %v1036
    %6858 = vmatprep.subr.mxu0 %v1041
    %6859 = vmatpush1.msra.mxu0 %v1040
    %6860 = vmatprep.subr.mxu0 %v1045
    %6861 = vmatpush1.msra.mxu0 %v1044
    %6862 = vmatprep.subr.mxu0 %v1049
    %6863 = vmatpush1.msra.mxu0 %v1048
    %6864 = vmatprep.subr.mxu0 %v1053
    %6865 = vmatpush1.msra.mxu0 %v1052
    %6866 = vmatprep.subr.mxu0 %v1057
    %6867 = vmatpush1.msra.mxu0 %v1056
    %6868 = vmatprep.subr.mxu0 %v1061
    %6869 = vmatpush1.msra.mxu0 %v1060
    %6870 = vmatprep.subr.mxu0 %v1065
    %6871 = vmatpush1.msra.mxu0 %v1064
    %6872 = vmatprep.subr.mxu0 %v1069
    %6873 = vmatpush1.msra.mxu0 %v1068
    %6874 = vmatprep.subr.mxu0 0.0
    %6875 = vmatpush1.msra.mxu0 0.0
    %6876 = vmatprep.subr.mxu0 0.0
    %6877 = vmatpush1.msra.mxu0 0.0
    %6878 = vmatprep.subr.mxu0 0.0
    %6879 = vmatpush1.msra.mxu0 0.0
    %6880 = vmatprep.subr.mxu0 0.0
    %6881 = vmatpush1.msra.mxu0 0.0
    %6882 = vmatprep.subr.mxu0 0.0
    %6883 = vmatpush1.msra.mxu0 0.0
    %6884 = vmatprep.subr.mxu0 0.0
    %6885 = vmatpush1.msra.mxu0 0.0
    %6886 = vmatprep.subr.mxu0 0.0
    %6887 = vmatpush1.msra.mxu0 0.0
    %6888 = vmatprep.subr.mxu0 0.0
    %6889 = vmatpush1.msra.mxu0 0.0
    %6890 = vmatprep.subr.mxu0 0.0
    %6891 = vmatpush1.msra.mxu0 0.0
    %6892 = vmatprep.subr.mxu0 0.0
    %6893 = vmatpush1.msra.mxu0 0.0
    %6894 = vmatprep.subr.mxu0 0.0
    %6895 = vmatpush1.msra.mxu0 0.0
    %6896 = vmatprep.subr.mxu0 0.0
    %6897 = vmatpush1.msra.mxu0 0.0
    %6898 = vmatprep.subr.mxu0 0.0
    %6899 = vmatpush1.msra.mxu0 0.0
    %6900 = vmatprep.subr.mxu0 0.0
    %6901 = vmatpush1.msra.mxu0 0.0
    %6902 = vmatprep.subr.mxu0 0.0
    %6903 = vmatpush1.msra.mxu0 0.0
    %6904 = vmatprep.subr.mxu0 0.0
    %6905 = vmatpush1.msra.mxu0 0.0
    %6906 = vmatprep.mubr.f32.mxu0 0.0
    %6907 = vmatmul.mubr.f32.gmra.mrb[0].mxu0 %v6841
    %v6908 = vpop.f32.mrb[0].mxu0
    %v6909 = vadd.f32 %v1077, %v6908
    %v6910 = vpop.f32.mrb[0].mxu0
    %v6911 = vadd.f32 %v1081, %v6910
    %6912 = vdwg.mxu0
    %6913 = vmatprep.subr.mxu0 %v1011
    %6914 = vmatpush1.msra.mxu0 %v1010
    %6915 = vmatprep.subr.mxu0 %v1015
    %6916 = vmatpush1.msra.mxu0 %v1014
    %6917 = vmatprep.subr.mxu0 %v1019
    %6918 = vmatpush1.msra.mxu0 %v1018
    %6919 = vmatprep.subr.mxu0 %v1023
    %6920 = vmatpush1.msra.mxu0 %v1022
    %6921 = vmatprep.subr.mxu0 %v1027
    %6922 = vmatpush1.msra.mxu0 %v1026
    %6923 = vmatprep.subr.mxu0 %v1031
    %6924 = vmatpush1.msra.mxu0 %v1030
    %6925 = vmatprep.subr.mxu0 %v1035
    %6926 = vmatpush1.msra.mxu0 %v1034
    %6927 = vmatprep.subr.mxu0 %v1039
    %6928 = vmatpush1.msra.mxu0 %v1038
    %6929 = vmatprep.subr.mxu0 %v1043
    %6930 = vmatpush1.msra.mxu0 %v1042
    %6931 = vmatprep.subr.mxu0 %v1047
    %6932 = vmatpush1.msra.mxu0 %v1046
    %6933 = vmatprep.subr.mxu0 %v1051
    %6934 = vmatpush1.msra.mxu0 %v1050
    %6935 = vmatprep.subr.mxu0 %v1055
    %6936 = vmatpush1.msra.mxu0 %v1054
    %6937 = vmatprep.subr.mxu0 %v1059
    %6938 = vmatpush1.msra.mxu0 %v1058
    %6939 = vmatprep.subr.mxu0 %v1063
    %6940 = vmatpush1.msra.mxu0 %v1062
    %6941 = vmatprep.subr.mxu0 %v1067
    %6942 = vmatpush1.msra.mxu0 %v1066
    %6943 = vmatprep.subr.mxu0 %v1071
    %6944 = vmatpush1.msra.mxu0 %v1070
    %6945 = vmatprep.subr.mxu0 0.0
    %6946 = vmatpush1.msra.mxu0 0.0
    %6947 = vmatprep.subr.mxu0 0.0
    %6948 = vmatpush1.msra.mxu0 0.0
    %6949 = vmatprep.subr.mxu0 0.0
    %6950 = vmatpush1.msra.mxu0 0.0
    %6951 = vmatprep.subr.mxu0 0.0
    %6952 = vmatpush1.msra.mxu0 0.0
    %6953 = vmatprep.subr.mxu0 0.0
    %6954 = vmatpush1.msra.mxu0 0.0
    %6955 = vmatprep.subr.mxu0 0.0
    %6956 = vmatpush1.msra.mxu0 0.0
    %6957 = vmatprep.subr.mxu0 0.0
    %6958 = vmatpush1.msra.mxu0 0.0
    %6959 = vmatprep.subr.mxu0 0.0
    %6960 = vmatpush1.msra.mxu0 0.0
    %6961 = vmatprep.subr.mxu0 0.0
    %6962 = vmatpush1.msra.mxu0 0.0
    %6963 = vmatprep.subr.mxu0 0.0
    %6964 = vmatpush1.msra.mxu0 0.0
    %6965 = vmatprep.subr.mxu0 0.0
    %6966 = vmatpush1.msra.mxu0 0.0
    %6967 = vmatprep.subr.mxu0 0.0
    %6968 = vmatpush1.msra.mxu0 0.0
    %6969 = vmatprep.subr.mxu0 0.0
    %6970 = vmatpush1.msra.mxu0 0.0
    %6971 = vmatprep.subr.mxu0 0.0
    %6972 = vmatpush1.msra.mxu0 0.0
    %6973 = vmatprep.subr.mxu0 0.0
    %6974 = vmatpush1.msra.mxu0 0.0
    %6975 = vmatprep.subr.mxu0 0.0
    %6976 = vmatpush1.msra.mxu0 0.0
    %6977 = vmatprep.mubr.f32.mxu0 0.0
    %6978 = vmatmul.mubr.f32.gmra.mrb[0].mxu0 %v6841
    %v6979 = vpop.f32.mrb[0].mxu0
    %v6980 = vadd.f32 %v1085, %v6979
    %v6981 = vpop.f32.mrb[0].mxu0
    %v6982 = vadd.f32 %v1089, %v6981
    %6983 = vdwg.mxu0
    %6984 = vmatprep.subr.mxu0 %v1237
    %6985 = vmatpush1.msra.mxu0 %v1236
    %6986 = vmatprep.subr.mxu0 %v1241
    %6987 = vmatpush1.msra.mxu0 %v1240
    %6988 = vmatprep.subr.mxu0 %v1245
    %6989 = vmatpush1.msra.mxu0 %v1244
    %6990 = vmatprep.subr.mxu0 %v1249
    %6991 = vmatpush1.msra.mxu0 %v1248
    %6992 = vmatprep.subr.mxu0 %v1253
    %6993 = vmatpush1.msra.mxu0 %v1252
    %6994 = vmatprep.subr.mxu0 %v1257
    %6995 = vmatpush1.msra.mxu0 %v1256
    %6996 = vmatprep.subr.mxu0 %v1261
    %6997 = vmatpush1.msra.mxu0 %v1260
    %6998 = vmatprep.subr.mxu0 %v1265
    %6999 = vmatpush1.msra.mxu0 %v1264
    %7000 = vmatprep.subr.mxu0 %v1269
    %7001 = vmatpush1.msra.mxu0 %v1268
    %7002 = vmatprep.subr.mxu0 %v1273
    %7003 = vmatpush1.msra.mxu0 %v1272
    %7004 = vmatprep.subr.mxu0 %v1277
    %7005 = vmatpush1.msra.mxu0 %v1276
    %7006 = vmatprep.subr.mxu0 %v1281
    %7007 = vmatpush1.msra.mxu0 %v1280
    %7008 = vmatprep.subr.mxu0 %v1285
    %7009 = vmatpush1.msra.mxu0 %v1284
    %7010 = vmatprep.subr.mxu0 %v1289
    %7011 = vmatpush1.msra.mxu0 %v1288
    %7012 = vmatprep.subr.mxu0 %v1293
    %7013 = vmatpush1.msra.mxu0 %v1292
    %7014 = vmatprep.subr.mxu0 %v1297
    %7015 = vmatpush1.msra.mxu0 %v1296
    %7016 = vmatprep.subr.mxu0 0.0
    %7017 = vmatpush1.msra.mxu0 0.0
    %7018 = vmatprep.subr.mxu0 0.0
    %7019 = vmatpush1.msra.mxu0 0.0
    %7020 = vmatprep.subr.mxu0 0.0
    %7021 = vmatpush1.msra.mxu0 0.0
    %7022 = vmatprep.subr.mxu0 0.0
    %7023 = vmatpush1.msra.mxu0 0.0
    %7024 = vmatprep.subr.mxu0 0.0
    %7025 = vmatpush1.msra.mxu0 0.0
    %7026 = vmatprep.subr.mxu0 0.0
    %7027 = vmatpush1.msra.mxu0 0.0
    %7028 = vmatprep.subr.mxu0 0.0
    %7029 = vmatpush1.msra.mxu0 0.0
    %7030 = vmatprep.subr.mxu0 0.0
    %7031 = vmatpush1.msra.mxu0 0.0
    %7032 = vmatprep.subr.mxu0 0.0
    %7033 = vmatpush1.msra.mxu0 0.0
    %7034 = vmatprep.subr.mxu0 0.0
    %7035 = vmatpush1.msra.mxu0 0.0
    %7036 = vmatprep.subr.mxu0 0.0
    %7037 = vmatpush1.msra.mxu0 0.0
    %7038 = vmatprep.subr.mxu0 0.0
    %7039 = vmatpush1.msra.mxu0 0.0
    %7040 = vmatprep.subr.mxu0 0.0
    %7041 = vmatpush1.msra.mxu0 0.0
    %7042 = vmatprep.subr.mxu0 0.0
    %7043 = vmatpush1.msra.mxu0 0.0
    %7044 = vmatprep.subr.mxu0 0.0
    %7045 = vmatpush1.msra.mxu0 0.0
    %7046 = vmatprep.subr.mxu0 0.0
    %7047 = vmatpush1.msra.mxu0 0.0
    %7048 = vmatprep.mubr.f32.mxu0 0.0
    %7049 = vmatmul.mubr.f32.gmra.mrb[0].mxu0 %v6341
    %v7050 = vpop.f32.mrb[0].mxu0
    %v7051 = vadd.f32 0.0, %v7050
    %v7052 = vpop.f32.mrb[0].mxu0
    %v7053 = vadd.f32 0.0, %v7052
    %7054 = vdwg.mxu0
    %7055 = vmatprep.subr.mxu0 %v1239
    %7056 = vmatpush1.msra.mxu0 %v1238
    %7057 = vmatprep.subr.mxu0 %v1243
    %7058 = vmatpush1.msra.mxu0 %v1242
    %7059 = vmatprep.subr.mxu0 %v1247
    %7060 = vmatpush1.msra.mxu0 %v1246
    %7061 = vmatprep.subr.mxu0 %v1251
    %7062 = vmatpush1.msra.mxu0 %v1250
    %7063 = vmatprep.subr.mxu0 %v1255
    %7064 = vmatpush1.msra.mxu0 %v1254
    %7065 = vmatprep.subr.mxu0 %v1259
    %7066 = vmatpush1.msra.mxu0 %v1258
    %7067 = vmatprep.subr.mxu0 %v1263
    %7068 = vmatpush1.msra.mxu0 %v1262
    %7069 = vmatprep.subr.mxu0 %v1267
    %7070 = vmatpush1.msra.mxu0 %v1266
    %7071 = vmatprep.subr.mxu0 %v1271
    %7072 = vmatpush1.msra.mxu0 %v1270
    %7073 = vmatprep.subr.mxu0 %v1275
    %7074 = vmatpush1.msra.mxu0 %v1274
    %7075 = vmatprep.subr.mxu0 %v1279
    %7076 = vmatpush1.msra.mxu0 %v1278
    %7077 = vmatprep.subr.mxu0 %v1283
    %7078 = vmatpush1.msra.mxu0 %v1282
    %7079 = vmatprep.subr.mxu0 %v1287
    %7080 = vmatpush1.msra.mxu0 %v1286
    %7081 = vmatprep.subr.mxu0 %v1291
    %7082 = vmatpush1.msra.mxu0 %v1290
    %7083 = vmatprep.subr.mxu0 %v1295
    %7084 = vmatpush1.msra.mxu0 %v1294
    %7085 = vmatprep.subr.mxu0 %v1299
    %7086 = vmatpush1.msra.mxu0 %v1298
    %7087 = vmatprep.subr.mxu0 0.0
    %7088 = vmatpush1.msra.mxu0 0.0
    %7089 = vmatprep.subr.mxu0 0.0
    %7090 = vmatpush1.msra.mxu0 0.0
    %7091 = vmatprep.subr.mxu0 0.0
    %7092 = vmatpush1.msra.mxu0 0.0
    %7093 = vmatprep.subr.mxu0 0.0
    %7094 = vmatpush1.msra.mxu0 0.0
    %7095 = vmatprep.subr.mxu0 0.0
    %7096 = vmatpush1.msra.mxu0 0.0
    %7097 = vmatprep.subr.mxu0 0.0
    %7098 = vmatpush1.msra.mxu0 0.0
    %7099 = vmatprep.subr.mxu0 0.0
    %7100 = vmatpush1.msra.mxu0 0.0
    %7101 = vmatprep.subr.mxu0 0.0
    %7102 = vmatpush1.msra.mxu0 0.0
    %7103 = vmatprep.subr.mxu0 0.0
    %7104 = vmatpush1.msra.mxu0 0.0
    %7105 = vmatprep.subr.mxu0 0.0
    %7106 = vmatpush1.msra.mxu0 0.0
    %7107 = vmatprep.subr.mxu0 0.0
    %7108 = vmatpush1.msra.mxu0 0.0
    %7109 = vmatprep.subr.mxu0 0.0
    %7110 = vmatpush1.msra.mxu0 0.0
    %7111 = vmatprep.subr.mxu0 0.0
    %7112 = vmatpush1.msra.mxu0 0.0
    %7113 = vmatprep.subr.mxu0 0.0
    %7114 = vmatpush1.msra.mxu0 0.0
    %7115 = vmatprep.subr.mxu0 0.0
    %7116 = vmatpush1.msra.mxu0 0.0
    %7117 = vmatprep.subr.mxu0 0.0
    %7118 = vmatpush1.msra.mxu0 0.0
    %7119 = vmatprep.mubr.f32.mxu0 0.0
    %7120 = vmatmul.mubr.f32.gmra.mrb[0].mxu0 %v6341
    %v7121 = vpop.f32.mrb[0].mxu0
    %v7122 = vadd.f32 0.0, %v7121
    %v7123 = vpop.f32.mrb[0].mxu0
    %v7124 = vadd.f32 0.0, %v7123
    %7125 = vdwg.mxu0
    %v7126 = vadd.f32 %v6909, %v7051
    %v7127 = vadd.f32 %v6911, %v7053
    %v7128 = vadd.f32 %v6980, %v7122
    %v7129 = vadd.f32 %v6982, %v7124
    %v7130 = vxor.u32 %v7126, 2147483648
    %v7131 = vxor.u32 %v7127, 2147483648
    %v7132 = vxor.u32 %v7128, 2147483648
    %v7133 = vmul.f32 %v7130, 1.442695
    %v7134 = vpow.pop %v7133
    %v7135 = vmul.f32 %v7131, 1.442695
    %v7136 = vpow.pop %v7135
    %v7137 = vmul.f32 %v7132, 1.442695
    %v7138 = vpow.pop %v7137
    %v7139 = vadd.f32 %v7134, 1.0
    %v7140 = vadd.f32 %v7136, 1.0
    %v7141 = vadd.f32 %v7138, 1.0
    %v7142 = vrcp.pop %v7139
    %v7143 = vmul.f32 1.0, %v7142
    %v7144 = vrcp.pop %v7140
    %v7145 = vmul.f32 1.0, %v7144
    %v7146 = vrcp.pop %v7141
    %v7147 = vmul.f32 1.0, %v7146
    %v7148 = vtanh.pop %v7129
    %v7149 = vmul.f32 %v7145, %v6339
    %v7150 = vmul.f32 %v7143, %v7148
    %v7151 = vadd.f32 %v7149, %v7150
    %v7152 = vtanh.pop %v7151
    %v7153 = vmul.f32 %v7147, %v7152
    %v7155 = vrot.slane %v2281, 7
    %v7158 = vrot.slane %v3093, 6
    %v7161 = vrot.slane %v3905, 5
    %v7164 = vrot.slane %v4717, 4
    %v7167 = vrot.slane %v5529, 3
    %v7170 = vrot.slane %v6341, 2
    %v7173 = vrot.slane %v7153, 1
    %vm7175 = vcmask 1040384
    %v7176 = vsel %vm7175, %v1469, %v7155
    %vm7177 = vcmask 1041408
    %v7178 = vsel %vm7177, %v7176, %v7158
    %vm7179 = vcmask 1042432
    %v7180 = vsel %vm7179, %v7178, %v7161
    %vm7181 = vcmask 1043456
    %v7182 = vsel %vm7181, %v7180, %v7164
    %vm7183 = vcmask 1044480
    %v7184 = vsel %vm7183, %v7182, %v7167
    %vm7185 = vcmask 1045504
    %v7186 = vsel %vm7185, %v7184, %v7170
    %vm7187 = vcmask 1046528
    %v7188 = vsel %vm7187, %v7186, %v7173
    %v7189 = vld [vmem:[%s10] sm:$0x1]
    %v7190 = vld [vmem:[#allocation2] sm:$0x1]
    %7192 = vset.pattern.permute.xlu0 0
    %7193 = vperm.xlu0 %7192, %v7190
    %v7194 = vpop.permute.xlu0 %7193
    %v7196 = vlaneseq
    %v7197 = vshrl.u32 %v7196, 7
    %v7198 = vsub.s32 0, %v7197
    %v7199 = vrot.slane %v7194, %v7198
    %7200 = vmatprep.subr.mxu0 0.0
    %7201 = vmatpush1.xpose.msra.mxu0 %v7188
    %7202 = vmatprep.subr.mxu0 0.0
    %7203 = vmatpush1.xpose.msra.mxu0 0.0
    %7204 = vmatprep.subr.mxu0 0.0
    %7205 = vmatpush1.xpose.msra.mxu0 0.0
    %7206 = vmatprep.subr.mxu0 0.0
    %7207 = vmatpush1.xpose.msra.mxu0 0.0
    %7208 = vmatprep.subr.mxu0 0.0
    %7209 = vmatpush1.xpose.msra.mxu0 0.0
    %7210 = vmatprep.subr.mxu0 0.0
    %7211 = vmatpush1.xpose.msra.mxu0 0.0
    %7212 = vmatprep.subr.mxu0 0.0
    %7213 = vmatpush1.xpose.msra.mxu0 0.0
    %7214 = vmatprep.subr.mxu0 0.0
    %7215 = vmatpush1.xpose.msra.mxu0 0.0
    %7216 = vmatprep.subr.mxu0 0.0
    %7217 = vmatpush1.xpose.msra.mxu0 0.0
    %7218 = vmatprep.subr.mxu0 0.0
    %7219 = vmatpush1.xpose.msra.mxu0 0.0
    %7220 = vmatprep.subr.mxu0 0.0
    %7221 = vmatpush1.xpose.msra.mxu0 0.0
    %7222 = vmatprep.subr.mxu0 0.0
    %7223 = vmatpush1.xpose.msra.mxu0 0.0
    %7224 = vmatprep.subr.mxu0 0.0
    %7225 = vmatpush1.xpose.msra.mxu0 0.0
    %7226 = vmatprep.subr.mxu0 0.0
    %7227 = vmatpush1.xpose.msra.mxu0 0.0
    %7228 = vmatprep.subr.mxu0 0.0
    %7229 = vmatpush1.xpose.msra.mxu0 0.0
    %7230 = vmatprep.subr.mxu0 0.0
    %7231 = vmatpush1.xpose.msra.mxu0 0.0
    %7232 = vmatprep.subr.mxu0 0.0
    %7233 = vmatpush1.xpose.msra.mxu0 0.0
    %7234 = vmatprep.subr.mxu0 0.0
    %7235 = vmatpush1.xpose.msra.mxu0 0.0
    %7236 = vmatprep.subr.mxu0 0.0
    %7237 = vmatpush1.xpose.msra.mxu0 0.0
    %7238 = vmatprep.subr.mxu0 0.0
    %7239 = vmatpush1.xpose.msra.mxu0 0.0
    %7240 = vmatprep.subr.mxu0 0.0
    %7241 = vmatpush1.xpose.msra.mxu0 0.0
    %7242 = vmatprep.subr.mxu0 0.0
    %7243 = vmatpush1.xpose.msra.mxu0 0.0
    %7244 = vmatprep.subr.mxu0 0.0
    %7245 = vmatpush1.xpose.msra.mxu0 0.0
    %7246 = vmatprep.subr.mxu0 0.0
    %7247 = vmatpush1.xpose.msra.mxu0 0.0
    %7248 = vmatprep.subr.mxu0 0.0
    %7249 = vmatpush1.xpose.msra.mxu0 0.0
    %7250 = vmatprep.subr.mxu0 0.0
    %7251 = vmatpush1.xpose.msra.mxu0 0.0
    %7252 = vmatprep.subr.mxu0 0.0
    %7253 = vmatpush1.xpose.msra.mxu0 0.0
    %7254 = vmatprep.subr.mxu0 0.0
    %7255 = vmatpush1.xpose.msra.mxu0 0.0
    %7256 = vmatprep.subr.mxu0 0.0
    %7257 = vmatpush1.xpose.msra.mxu0 0.0
    %7258 = vmatprep.subr.mxu0 0.0
    %7259 = vmatpush1.xpose.msra.mxu0 0.0
    %7260 = vmatprep.subr.mxu0 0.0
    %7261 = vmatpush1.xpose.msra.mxu0 0.0
    %7262 = vmatprep.subr.mxu0 0.0
    %7263 = vmatpush1.xpose.msra.mxu0 0.0
    %7264 = vmatprep.mubr.f32.mxu0 0.0
    %7265 = vmatmul.mubr.f32.gmra.mrb[0].mxu0 %v7189
    %v7266 = vpop.f32.mrb[0].mxu0
    %v7267 = vadd.f32 %v7199, %v7266
    %v7268 = vpop.f32.mrb[0].mxu0
    %7269 = vdwg.mxu0
    %vm7270 = vcmask 57344
    %7271 = vst.msk [vmem:[#allocation15] sm:$0x1] %vm7270, %v7267
    %7272 = vst [vmem:[#allocation16] sm:$0x1] %v7153
    %7273 = vst [vmem:[#allocation18] sm:$0x1] %v7151
    // Predicated region
    $region78: #{tpu_custom_call.1} parent=1 // pred_check
      _
    $region79: #{tpu_custom_call.1} parent=1 // pred_check_branch
      %7275 = sbr.rel (0) target = $region81
    $region80: #{tpu_custom_call.1} parent=1 // pred_region
      %s7277 = ssub.s32 16, 16
      %7278 = vsyncadd [#allocation5], %s7277
      %s7280 = sshll.u32 [#allocation15], 4
      %s7281 = int_to_ptr.vmem [resolvable:$true] %s7280
      %7283 = dma.vmem_to_hbm [thread:$0]  %s7281, 16, %s12, [#allocation5]
    $region81: #{tpu_custom_call.1} parent=1 // pred_fallthru
      _
    // Predicated region
    $region82: #{tpu_custom_call.1} parent=1 // pred_check
      _
    $region83: #{tpu_custom_call.1} parent=1 // pred_check_branch
      %7285 = sbr.rel (0) target = $region85
    $region84: #{tpu_custom_call.1} parent=1 // pred_region
      %s7287 = ssub.s32 16, 16
      %7288 = vsyncadd [#allocation17], %s7287
      %s7290 = sshll.u32 [#allocation16], 4
      %s7291 = int_to_ptr.vmem [resolvable:$true] %s7290
      %7293 = dma.vmem_to_hbm [thread:$0]  %s7291, 16, %s13, [#allocation17]
    $region85: #{tpu_custom_call.1} parent=1 // pred_fallthru
      _
    // Predicated region
    $region86: #{tpu_custom_call.1} parent=1 // pred_check
      _
    $region87: #{tpu_custom_call.1} parent=1 // pred_check_branch
      %7295 = sbr.rel (0) target = $region89
    $region88: #{tpu_custom_call.1} parent=1 // pred_region
      %s7297 = ssub.s32 16, 16
      %7298 = vsyncadd [#allocation17], %s7297
      %s7300 = sshll.u32 [#allocation18], 4
      %s7301 = int_to_ptr.vmem [resolvable:$true] %s7300
      %7303 = dma.vmem_to_hbm [thread:$0]  %s7301, 16, %s14, [#allocation17]
    $region89: #{tpu_custom_call.1} parent=1 // pred_fallthru
      _
    // Predicated region
    $region90: #{tpu_custom_call.1} parent=1 // pred_check
      _
    $region91: #{tpu_custom_call.1} parent=1 // pred_check_branch
      %7305 = sbr.rel (0) target = $region93
    $region92: #{tpu_custom_call.1} parent=1 // pred_region
      %7306 = dma.done [#allocation5], 16
    $region93: #{tpu_custom_call.1} parent=1 // pred_fallthru
      _
    // Predicated region
    $region94: #{tpu_custom_call.1} parent=1 // pred_check
      _
    $region95: #{tpu_custom_call.1} parent=1 // pred_check_branch
      %7308 = sbr.rel (0) target = $region97
    $region96: #{tpu_custom_call.1} parent=1 // pred_region
      %7309 = dma.done [#allocation17], 16
    $region97: #{tpu_custom_call.1} parent=1 // pred_fallthru
      _
    // Predicated region
    $region98: #{tpu_custom_call.1} parent=1 // pred_check
      _
    $region99: #{tpu_custom_call.1} parent=1 // pred_check_branch
      %7311 = sbr.rel (0) target = $region101
    $region100: #{tpu_custom_call.1} parent=1 // pred_region
      %7312 = dma.done [#allocation17], 16
    $region101: #{tpu_custom_call.1} parent=1 // pred_fallthru
      _
    %7313 = vsyncpa [#allocation4], 1
    %7314 = vsyncpa [#allocation7], 1
    %7315 = vsyncpa [#allocation10], 1
    %7316 = vsyncpa [#allocation13], 1
    %7317 = vsyncpa [#allocation5], 1
    %7318 = vsyncpa [#allocation17], 1

</llo_original>
